<compile_context>
chip_gen: v5e
topology: v5e:2x2
jax: 0.10.0
libtpu: 0.0.40
codegen_flags: <defaults>
</compile_context>

<pallas_src>
from functools import partial

import numpy as np
import jax
import jax.numpy as jnp
from jax.experimental import pallas as pl
from jax.experimental.pallas import tpu as pltpu


def _round_up(x, m):
    return (x + m - 1) // m * m


def _make_conv_kernel(relu, has_res, has_mask):
    """Single-shot conv-as-matmul kernel with fused bias/residual/ReLU/mask."""

    def kernel(*refs):
        p_ref, w_ref, bias_ref = refs[0:3]
        pos = 3
        res_ref = None
        mask_ref = None
        if has_res:
            res_ref = refs[pos]
            pos += 1
        if has_mask:
            mask_ref = refs[pos]
            pos += 1
        out_ref = refs[pos]

        # One well-fed MXU matmul: (tm, K) @ (K, Cout), K = kh*kw*Cin.
        z = jnp.dot(p_ref[...], w_ref[...], preferred_element_type=jnp.float32)
        z = z + bias_ref[...]          # folded-BN shift / conv bias
        if has_res:
            z = z + res_ref[...]       # residual identity (already masked)
        if relu:
            z = jnp.maximum(z, 0.0)
        if has_mask:
            z = z * mask_ref[...]      # SubM active-site mask
        out_ref[...] = z.astype(out_ref.dtype)

    return kernel


def conv_bn_act(x, w, scale, shift, *, stride=1, pad=0, relu=True,
                mask=None, residual=None, target_rows=1024):
    """x: (N, H, W, Cin) NHWC; w: (kh, kw, Cin, Cout) HWIO.

    Glue (zero padding, im2col tap extraction, reshapes) stays in plain JAX.
    The single fused matmul + bias + residual + ReLU + masking run inside the
    Pallas kernel, tiled over rows with a parallel grid axis.
    """
    N, H, W, Cin = x.shape
    kh, kw, _, Cout = w.shape
    if pad:
        x = jnp.pad(x, ((0, 0), (pad, pad), (pad, pad), (0, 0)))
    Hp, Wp = x.shape[1], x.shape[2]
    Ho = (Hp - kh) // stride + 1
    Wo = (Wp - kw) // stride + 1
    M = N * Ho * Wo
    K = kh * kw * Cin

    # im2col: concatenate the kh*kw taps along the contraction axis -> (M, K).
    taps = []
    for i in range(kh):
        for j in range(kw):
            sl = x[:, i:i + (Ho - 1) * stride + 1:stride,
                   j:j + (Wo - 1) * stride + 1:stride, :]
            taps.append(sl.reshape(M, Cin))
    patches = jnp.concatenate(taps, axis=-1)                    # (M, K)

    # Fold BN scale into the weight columns; keep only the shift in-kernel.
    w_fold = (w.reshape(K, Cout).astype(jnp.float32)
              * scale.reshape(1, Cout).astype(jnp.float32))     # (K, Cout)
    bias2 = shift.reshape(1, Cout).astype(jnp.float32)          # (1, Cout)

    # Row tiling: multiple of 8; split only when there is enough work.  The
    # big 28x28 layers (M = N*784) get >=2 parallel steps (v7x megacore) with
    # tm dividing M exactly; tiny tail layers stay as one grid step.
    grid_m = max(1, pl.cdiv(M, target_rows))
    tm = _round_up(pl.cdiv(M, grid_m), 8)
    Mp = tm * grid_m

    def pad_rows(a):
        if a.shape[0] == Mp:
            return a
        return jnp.pad(a, ((0, Mp - a.shape[0]), (0, 0)))

    args = [pad_rows(patches), w_fold, bias2]
    in_specs = [
        pl.BlockSpec((tm, K), lambda i: (i, 0)),        # row tile of patches
        pl.BlockSpec((K, Cout), lambda i: (0, 0)),      # full weight (resident)
        pl.BlockSpec((1, Cout), lambda i: (0, 0)),      # BN shift / bias
    ]
    if residual is not None:
        args.append(pad_rows(residual.reshape(M, Cout)))
        in_specs.append(pl.BlockSpec((tm, Cout), lambda i: (i, 0)))
    if mask is not None:
        args.append(pad_rows(mask.reshape(M, 1)))
        in_specs.append(pl.BlockSpec((tm, 1), lambda i: (i, 0)))

    grid_spec = pltpu.PrefetchScalarGridSpec(
        num_scalar_prefetch=0,
        grid=(grid_m,),
        in_specs=in_specs,
        out_specs=pl.BlockSpec((tm, Cout), lambda i: (i, 0)),
    )
    out = pl.pallas_call(
        _make_conv_kernel(relu, residual is not None, mask is not None),
        out_shape=jax.ShapeDtypeStruct((Mp, Cout), jnp.float32),
        grid_spec=grid_spec,
        compiler_params=pltpu.CompilerParams(
            dimension_semantics=("parallel",)),
    )(*args)
    return out[:M].reshape(N, Ho, Wo, Cout)


def _bn_fold(c, eps=1e-5):
    # nn.BatchNorm1d default init: gamma=1, beta=0, running_mean=0, running_var=1.
    gamma = jnp.ones((c,), jnp.float32)
    beta = jnp.zeros((c,), jnp.float32)
    mean = jnp.zeros((c,), jnp.float32)
    var = jnp.ones((c,), jnp.float32)
    scale = gamma / jnp.sqrt(var + eps)
    shift = beta - mean * scale
    return scale, shift


def init_params(key):
    ks = jax.random.split(key, 9)

    def conv_w(k, kh, kw, cin, cout):
        std = 1.0 / np.sqrt(kh * kw * cin)
        return (jax.random.normal(k, (kh, kw, cin, cout), jnp.float32) * std)

    p = {}
    p["w1"] = conv_w(ks[0], 3, 3, 1, 32)      # SubMConvBNReLU(1, 32, 3)
    p["s1"], p["h1"] = _bn_fold(32)
    p["wb1"] = conv_w(ks[1], 3, 3, 32, 32)    # SparseBasicBlock conv1
    p["sb1"], p["hb1"] = _bn_fold(32)
    p["wb2"] = conv_w(ks[2], 3, 3, 32, 32)    # SparseBasicBlock conv2
    p["sb2"], p["hb2"] = _bn_fold(32)
    p["w3"] = conv_w(ks[3], 3, 3, 32, 64)     # SubMConvBNReLU(32, 64, 3)
    p["s3"], p["h3"] = _bn_fold(64)
    p["w4"] = conv_w(ks[4], 2, 2, 64, 64)     # SparseConvBNReLU(64, 64, 2, 2)
    p["s4"], p["h4"] = _bn_fold(64)
    p["w5"] = conv_w(ks[5], 2, 2, 64, 64)     # SparseConvBNReLU(64, 64, 2, 2)
    p["s5"], p["h5"] = _bn_fold(64)
    p["w6"] = conv_w(ks[6], 3, 3, 64, 64)     # SparseConvBNReLU(64, 64, 3, 2, 1)
    p["s6"], p["h6"] = _bn_fold(64)
    p["w7"] = conv_w(ks[7], 4, 4, 64, 10)     # SparseConv2d(64, 10, 4, 4), bias=True
    p["b7"] = jax.random.normal(ks[8], (10,), jnp.float32) * 0.01
    return p


@partial(jax.jit, static_argnums=(2,))
def residual_net_ptq_forward(features, indices, batch_size, p):
    # Densify the sparse input (features, indices) onto a 28x28 NHWC grid.
    H = W = 28
    b, yy, xx = indices[:, 0], indices[:, 1], indices[:, 2]
    x = jnp.zeros((batch_size, H, W, 1), jnp.float32).at[b, yy, xx, 0].set(features[:, 0])
    m0 = jnp.zeros((batch_size, H, W, 1), jnp.float32).at[b, yy, xx, 0].set(1.0)

    # SubMConvBNReLU(1, 32, 3)
    y = conv_bn_act(x, p["w1"], p["s1"], p["h1"], stride=1, pad=1, relu=True, mask=m0)
    # SparseBasicBlock(32, 32): conv1_bn_relu -> conv2_bn -> relu(out + identity)
    t = conv_bn_act(y, p["wb1"], p["sb1"], p["hb1"], stride=1, pad=1, relu=True, mask=m0)
    y = conv_bn_act(t, p["wb2"], p["sb2"], p["hb2"], stride=1, pad=1, relu=True,
                    mask=m0, residual=y)
    # SubMConvBNReLU(32, 64, 3)
    y = conv_bn_act(y, p["w3"], p["s3"], p["h3"], stride=1, pad=1, relu=True, mask=m0)
    # SparseConvBNReLU(64, 64, 2, 2): 28 -> 14
    y = conv_bn_act(y, p["w4"], p["s4"], p["h4"], stride=2, pad=0, relu=True)
    # SparseConvBNReLU(64, 64, 2, 2): 14 -> 7
    y = conv_bn_act(y, p["w5"], p["s5"], p["h5"], stride=2, pad=0, relu=True)
    # SparseConvBNReLU(64, 64, 3, 2, 1): 7 -> 4
    y = conv_bn_act(y, p["w6"], p["s6"], p["h6"], stride=2, pad=1, relu=True)
    # SparseConv2d(64, 10, 4, 4): 4 -> 1 (bias=True, no BN / ReLU)
    y = conv_bn_act(y, p["w7"], jnp.ones((10,), jnp.float32), p["b7"],
                    stride=4, pad=0, relu=False)
    return y   # (batch, 1, 1, 10): dense equivalent of the output SparseConvTensor


if __name__ == "__main__":
    key = jax.random.PRNGKey(0)
    k_img, k_par = jax.random.split(key)

    batch_size = 2
    n_active = 64   # active pixels per image (MNIST-like sparsity)

    img = jax.random.uniform(k_img, (batch_size, 28, 28), dtype=jnp.float32)
    img_np = np.asarray(img)
    feats, idxs = [], []
    for b in range(batch_size):
        flat = img_np[b].reshape(-1)
        sel = np.sort(np.argsort(flat)[-n_active:])
        ys, xs = np.divmod(sel, 28)
        idxs.append(np.stack([np.full(n_active, b), ys, xs], axis=1))
        feats.append(flat[sel])
    indices = jnp.asarray(np.concatenate(idxs, axis=0).astype(np.int32))     # (128, 3)
    features = jnp.asarray(np.concatenate(feats).reshape(-1, 1).astype(np.float32))  # (128, 1)

    params = init_params(k_par)

    out = residual_net_ptq_forward(features, indices, batch_size, params)
    out = jax.block_until_ready(out)

    assert out.shape == (batch_size, 1, 1, 10), out.shape
    assert bool(jnp.all(jnp.isfinite(out)))
    print("KERNEL_OK")
</pallas_src>

<mosaic_0001>
module attributes {stable_mosaic.version = 11 : i64} {
  func.func @kernel(%arg0: i32, %arg1: memref<784x9xf32, #tpu.memory_space<vmem>>, %arg2: memref<9x32xf32, #tpu.memory_space<vmem>>, %arg3: memref<1x32xf32, #tpu.memory_space<vmem>>, %arg4: memref<784x1xf32, #tpu.memory_space<vmem>>, %arg5: memref<784x32xf32, #tpu.memory_space<vmem>>) attributes {dimension_semantics = [#tpu.dimension_semantics<parallel>], iteration_bounds = array<i64: 2>, scalar_prefetch = 0 : i64, scratch_operands = 0 : i64, tpu.core_type = #tpu.core_type<tc>, window_params = [{transform_indices = @transform_0, window_bounds = array<i64: 784, 9>}, {pipeline_mode = #tpu.pipeline_mode<synchronous>, transform_indices = @transform_1, window_bounds = array<i64: 9, 32>}, {pipeline_mode = #tpu.pipeline_mode<synchronous>, transform_indices = @transform_2, window_bounds = array<i64: 1, 32>}, {transform_indices = @transform_3, window_bounds = array<i64: 784, 1>}, {transform_indices = @transform_4, window_bounds = array<i64: 784, 32>}]} {
    %c0 = arith.constant 0 : index
    %c0_0 = arith.constant 0 : index
    %0 = vector.load %arg1[%c0, %c0_0] : memref<784x9xf32, #tpu.memory_space<vmem>>, vector<784x9xf32>
    %c0_1 = arith.constant 0 : index
    %c0_2 = arith.constant 0 : index
    %1 = vector.load %arg2[%c0_1, %c0_2] : memref<9x32xf32, #tpu.memory_space<vmem>>, vector<9x32xf32>
    %cst = arith.constant dense<0.000000e+00> : vector<784x32xf32>
    %2 = tpu.matmul %0, %1, %cst {dimension_numbers = #tpu.dot_dimension_numbers<[1], [0], [0], [1], [0, 0, 1, 1], [], []>} : vector<784x9xf32>, vector<9x32xf32>, vector<784x32xf32> -> vector<784x32xf32>
    %c0_3 = arith.constant 0 : index
    %c0_4 = arith.constant 0 : index
    %3 = vector.load %arg3[%c0_3, %c0_4] : memref<1x32xf32, #tpu.memory_space<vmem>>, vector<1x32xf32>
    %4 = vector.broadcast %3 : vector<1x32xf32> to vector<784x32xf32>
    %5 = arith.addf %2, %4 : vector<784x32xf32>
    %cst_5 = arith.constant 0.000000e+00 : f32
    %6 = vector.broadcast %cst_5 : f32 to vector<784x32xf32>
    %7 = arith.maximumf %5, %6 : vector<784x32xf32>
    %c0_6 = arith.constant 0 : index
    %c0_7 = arith.constant 0 : index
    %8 = vector.load %arg4[%c0_6, %c0_7] : memref<784x1xf32, #tpu.memory_space<vmem>>, vector<784x1xf32>
    %9 = vector.broadcast %8 : vector<784x1xf32> to vector<784x32xf32>
    %10 = arith.mulf %7, %9 : vector<784x32xf32>
    %c0_8 = arith.constant 0 : index
    %c0_9 = arith.constant 0 : index
    %11 = vector.load %arg5[%c0_8, %c0_9] : memref<784x32xf32, #tpu.memory_space<vmem>>, vector<784x32xf32>
    tpu.vector_store %arg5[%c0_8, %c0_9], %10 {strides = array<i32>} : memref<784x32xf32, #tpu.memory_space<vmem>>, vector<784x32xf32>,
    return
  }
  func.func @transform_0(%arg0: i32) -> (i32, i32) {
    %c0_i32 = arith.constant 0 : i32
    %c0_i32_0 = arith.constant 0 : i32
    return %arg0, %c0_i32 : i32, i32
  }
  func.func @transform_1(%arg0: i32) -> (i32, i32) {
    %c0_i32 = arith.constant 0 : i32
    %c0_i32_0 = arith.constant 0 : i32
    %c0_i32_1 = arith.constant 0 : i32
    return %c0_i32, %c0_i32_0 : i32, i32
  }
  func.func @transform_2(%arg0: i32) -> (i32, i32) {
    %c0_i32 = arith.constant 0 : i32
    %c0_i32_0 = arith.constant 0 : i32
    %c0_i32_1 = arith.constant 0 : i32
    return %c0_i32, %c0_i32_0 : i32, i32
  }
  func.func @transform_3(%arg0: i32) -> (i32, i32) {
    %c0_i32 = arith.constant 0 : i32
    %c0_i32_0 = arith.constant 0 : i32
    return %arg0, %c0_i32 : i32, i32
  }
  func.func @transform_4(%arg0: i32) -> (i32, i32) {
    %c0_i32 = arith.constant 0 : i32
    %c0_i32_0 = arith.constant 0 : i32
    return %arg0, %c0_i32 : i32, i32
  }
}

module attributes {stable_mosaic.version = 11 : i64} {
  func.func @kernel(%arg0: i32, %arg1: memref<784x288xf32, #tpu.memory_space<vmem>>, %arg2: memref<288x32xf32, #tpu.memory_space<vmem>>, %arg3: memref<1x32xf32, #tpu.memory_space<vmem>>, %arg4: memref<784x1xf32, #tpu.memory_space<vmem>>, %arg5: memref<784x32xf32, #tpu.memory_space<vmem>>) attributes {dimension_semantics = [#tpu.dimension_semantics<parallel>], iteration_bounds = array<i64: 2>, scalar_prefetch = 0 : i64, scratch_operands = 0 : i64, tpu.core_type = #tpu.core_type<tc>, window_params = [{transform_indices = @transform_0, window_bounds = array<i64: 784, 288>}, {pipeline_mode = #tpu.pipeline_mode<synchronous>, transform_indices = @transform_1, window_bounds = array<i64: 288, 32>}, {pipeline_mode = #tpu.pipeline_mode<synchronous>, transform_indices = @transform_2, window_bounds = array<i64: 1, 32>}, {transform_indices = @transform_3, window_bounds = array<i64: 784, 1>}, {transform_indices = @transform_4, window_bounds = array<i64: 784, 32>}]} {
    %c0 = arith.constant 0 : index
    %c0_0 = arith.constant 0 : index
    %0 = vector.load %arg1[%c0, %c0_0] : memref<784x288xf32, #tpu.memory_space<vmem>>, vector<784x288xf32>
    %c0_1 = arith.constant 0 : index
    %c0_2 = arith.constant 0 : index
    %1 = vector.load %arg2[%c0_1, %c0_2] : memref<288x32xf32, #tpu.memory_space<vmem>>, vector<288x32xf32>
    %cst = arith.constant dense<0.000000e+00> : vector<784x32xf32>
    %2 = tpu.matmul %0, %1, %cst {dimension_numbers = #tpu.dot_dimension_numbers<[1], [0], [0], [1], [0, 0, 1, 1], [], []>} : vector<784x288xf32>, vector<288x32xf32>, vector<784x32xf32> -> vector<784x32xf32>
    %c0_3 = arith.constant 0 : index
    %c0_4 = arith.constant 0 : index
    %3 = vector.load %arg3[%c0_3, %c0_4] : memref<1x32xf32, #tpu.memory_space<vmem>>, vector<1x32xf32>
    %4 = vector.broadcast %3 : vector<1x32xf32> to vector<784x32xf32>
    %5 = arith.addf %2, %4 : vector<784x32xf32>
    %cst_5 = arith.constant 0.000000e+00 : f32
    %6 = vector.broadcast %cst_5 : f32 to vector<784x32xf32>
    %7 = arith.maximumf %5, %6 : vector<784x32xf32>
    %c0_6 = arith.constant 0 : index
    %c0_7 = arith.constant 0 : index
    %8 = vector.load %arg4[%c0_6, %c0_7] : memref<784x1xf32, #tpu.memory_space<vmem>>, vector<784x1xf32>
    %9 = vector.broadcast %8 : vector<784x1xf32> to vector<784x32xf32>
    %10 = arith.mulf %7, %9 : vector<784x32xf32>
    %c0_8 = arith.constant 0 : index
    %c0_9 = arith.constant 0 : index
    %11 = vector.load %arg5[%c0_8, %c0_9] : memref<784x32xf32, #tpu.memory_space<vmem>>, vector<784x32xf32>
    tpu.vector_store %arg5[%c0_8, %c0_9], %10 {strides = array<i32>} : memref<784x32xf32, #tpu.memory_space<vmem>>, vector<784x32xf32>,
    return
  }
  func.func @transform_0(%arg0: i32) -> (i32, i32) {
    %c0_i32 = arith.constant 0 : i32
    %c0_i32_0 = arith.constant 0 : i32
    return %arg0, %c0_i32 : i32, i32
  }
  func.func @transform_1(%arg0: i32) -> (i32, i32) {
    %c0_i32 = arith.constant 0 : i32
    %c0_i32_0 = arith.constant 0 : i32
    %c0_i32_1 = arith.constant 0 : i32
    return %c0_i32, %c0_i32_0 : i32, i32
  }
  func.func @transform_2(%arg0: i32) -> (i32, i32) {
    %c0_i32 = arith.constant 0 : i32
    %c0_i32_0 = arith.constant 0 : i32
    %c0_i32_1 = arith.constant 0 : i32
    return %c0_i32, %c0_i32_0 : i32, i32
  }
  func.func @transform_3(%arg0: i32) -> (i32, i32) {
    %c0_i32 = arith.constant 0 : i32
    %c0_i32_0 = arith.constant 0 : i32
    return %arg0, %c0_i32 : i32, i32
  }
  func.func @transform_4(%arg0: i32) -> (i32, i32) {
    %c0_i32 = arith.constant 0 : i32
    %c0_i32_0 = arith.constant 0 : i32
    return %arg0, %c0_i32 : i32, i32
  }
}

module attributes {stable_mosaic.version = 11 : i64} {
  func.func @kernel(%arg0: i32, %arg1: memref<784x288xf32, #tpu.memory_space<vmem>>, %arg2: memref<288x32xf32, #tpu.memory_space<vmem>>, %arg3: memref<1x32xf32, #tpu.memory_space<vmem>>, %arg4: memref<784x32xf32, #tpu.memory_space<vmem>>, %arg5: memref<784x1xf32, #tpu.memory_space<vmem>>, %arg6: memref<784x32xf32, #tpu.memory_space<vmem>>) attributes {dimension_semantics = [#tpu.dimension_semantics<parallel>], iteration_bounds = array<i64: 2>, scalar_prefetch = 0 : i64, scratch_operands = 0 : i64, tpu.core_type = #tpu.core_type<tc>, window_params = [{transform_indices = @transform_0, window_bounds = array<i64: 784, 288>}, {pipeline_mode = #tpu.pipeline_mode<synchronous>, transform_indices = @transform_1, window_bounds = array<i64: 288, 32>}, {pipeline_mode = #tpu.pipeline_mode<synchronous>, transform_indices = @transform_2, window_bounds = array<i64: 1, 32>}, {transform_indices = @transform_3, window_bounds = array<i64: 784, 32>}, {transform_indices = @transform_4, window_bounds = array<i64: 784, 1>}, {transform_indices = @transform_5, window_bounds = array<i64: 784, 32>}]} {
    %c0 = arith.constant 0 : index
    %c0_0 = arith.constant 0 : index
    %0 = vector.load %arg1[%c0, %c0_0] : memref<784x288xf32, #tpu.memory_space<vmem>>, vector<784x288xf32>
    %c0_1 = arith.constant 0 : index
    %c0_2 = arith.constant 0 : index
    %1 = vector.load %arg2[%c0_1, %c0_2] : memref<288x32xf32, #tpu.memory_space<vmem>>, vector<288x32xf32>
    %cst = arith.constant dense<0.000000e+00> : vector<784x32xf32>
    %2 = tpu.matmul %0, %1, %cst {dimension_numbers = #tpu.dot_dimension_numbers<[1], [0], [0], [1], [0, 0, 1, 1], [], []>} : vector<784x288xf32>, vector<288x32xf32>, vector<784x32xf32> -> vector<784x32xf32>
    %c0_3 = arith.constant 0 : index
    %c0_4 = arith.constant 0 : index
    %3 = vector.load %arg3[%c0_3, %c0_4] : memref<1x32xf32, #tpu.memory_space<vmem>>, vector<1x32xf32>
    %4 = vector.broadcast %3 : vector<1x32xf32> to vector<784x32xf32>
    %5 = arith.addf %2, %4 : vector<784x32xf32>
    %c0_5 = arith.constant 0 : index
    %c0_6 = arith.constant 0 : index
    %6 = vector.load %arg4[%c0_5, %c0_6] : memref<784x32xf32, #tpu.memory_space<vmem>>, vector<784x32xf32>
    %7 = arith.addf %5, %6 : vector<784x32xf32>
    %cst_7 = arith.constant 0.000000e+00 : f32
    %8 = vector.broadcast %cst_7 : f32 to vector<784x32xf32>
    %9 = arith.maximumf %7, %8 : vector<784x32xf32>
    %c0_8 = arith.constant 0 : index
    %c0_9 = arith.constant 0 : index
    %10 = vector.load %arg5[%c0_8, %c0_9] : memref<784x1xf32, #tpu.memory_space<vmem>>, vector<784x1xf32>
    %11 = vector.broadcast %10 : vector<784x1xf32> to vector<784x32xf32>
    %12 = arith.mulf %9, %11 : vector<784x32xf32>
    %c0_10 = arith.constant 0 : index
    %c0_11 = arith.constant 0 : index
    %13 = vector.load %arg6[%c0_10, %c0_11] : memref<784x32xf32, #tpu.memory_space<vmem>>, vector<784x32xf32>
    tpu.vector_store %arg6[%c0_10, %c0_11], %12 {strides = array<i32>} : memref<784x32xf32, #tpu.memory_space<vmem>>, vector<784x32xf32>,
    return
  }
  func.func @transform_0(%arg0: i32) -> (i32, i32) {
    %c0_i32 = arith.constant 0 : i32
    %c0_i32_0 = arith.constant 0 : i32
    return %arg0, %c0_i32 : i32, i32
  }
  func.func @transform_1(%arg0: i32) -> (i32, i32) {
    %c0_i32 = arith.constant 0 : i32
    %c0_i32_0 = arith.constant 0 : i32
    %c0_i32_1 = arith.constant 0 : i32
    return %c0_i32, %c0_i32_0 : i32, i32
  }
  func.func @transform_2(%arg0: i32) -> (i32, i32) {
    %c0_i32 = arith.constant 0 : i32
    %c0_i32_0 = arith.constant 0 : i32
    %c0_i32_1 = arith.constant 0 : i32
    return %c0_i32, %c0_i32_0 : i32, i32
  }
  func.func @transform_3(%arg0: i32) -> (i32, i32) {
    %c0_i32 = arith.constant 0 : i32
    %c0_i32_0 = arith.constant 0 : i32
    return %arg0, %c0_i32 : i32, i32
  }
  func.func @transform_4(%arg0: i32) -> (i32, i32) {
    %c0_i32 = arith.constant 0 : i32
    %c0_i32_0 = arith.constant 0 : i32
    return %arg0, %c0_i32 : i32, i32
  }
  func.func @transform_5(%arg0: i32) -> (i32, i32) {
    %c0_i32 = arith.constant 0 : i32
    %c0_i32_0 = arith.constant 0 : i32
    return %arg0, %c0_i32 : i32, i32
  }
}

module attributes {stable_mosaic.version = 11 : i64} {
  func.func @kernel(%arg0: i32, %arg1: memref<784x288xf32, #tpu.memory_space<vmem>>, %arg2: memref<288x64xf32, #tpu.memory_space<vmem>>, %arg3: memref<1x64xf32, #tpu.memory_space<vmem>>, %arg4: memref<784x1xf32, #tpu.memory_space<vmem>>, %arg5: memref<784x64xf32, #tpu.memory_space<vmem>>) attributes {dimension_semantics = [#tpu.dimension_semantics<parallel>], iteration_bounds = array<i64: 2>, scalar_prefetch = 0 : i64, scratch_operands = 0 : i64, tpu.core_type = #tpu.core_type<tc>, window_params = [{transform_indices = @transform_0, window_bounds = array<i64: 784, 288>}, {pipeline_mode = #tpu.pipeline_mode<synchronous>, transform_indices = @transform_1, window_bounds = array<i64: 288, 64>}, {pipeline_mode = #tpu.pipeline_mode<synchronous>, transform_indices = @transform_2, window_bounds = array<i64: 1, 64>}, {transform_indices = @transform_3, window_bounds = array<i64: 784, 1>}, {transform_indices = @transform_4, window_bounds = array<i64: 784, 64>}]} {
    %c0 = arith.constant 0 : index
    %c0_0 = arith.constant 0 : index
    %0 = vector.load %arg1[%c0, %c0_0] : memref<784x288xf32, #tpu.memory_space<vmem>>, vector<784x288xf32>
    %c0_1 = arith.constant 0 : index
    %c0_2 = arith.constant 0 : index
    %1 = vector.load %arg2[%c0_1, %c0_2] : memref<288x64xf32, #tpu.memory_space<vmem>>, vector<288x64xf32>
    %cst = arith.constant dense<0.000000e+00> : vector<784x64xf32>
    %2 = tpu.matmul %0, %1, %cst {dimension_numbers = #tpu.dot_dimension_numbers<[1], [0], [0], [1], [0, 0, 1, 1], [], []>} : vector<784x288xf32>, vector<288x64xf32>, vector<784x64xf32> -> vector<784x64xf32>
    %c0_3 = arith.constant 0 : index
    %c0_4 = arith.constant 0 : index
    %3 = vector.load %arg3[%c0_3, %c0_4] : memref<1x64xf32, #tpu.memory_space<vmem>>, vector<1x64xf32>
    %4 = vector.broadcast %3 : vector<1x64xf32> to vector<784x64xf32>
    %5 = arith.addf %2, %4 : vector<784x64xf32>
    %cst_5 = arith.constant 0.000000e+00 : f32
    %6 = vector.broadcast %cst_5 : f32 to vector<784x64xf32>
    %7 = arith.maximumf %5, %6 : vector<784x64xf32>
    %c0_6 = arith.constant 0 : index
    %c0_7 = arith.constant 0 : index
    %8 = vector.load %arg4[%c0_6, %c0_7] : memref<784x1xf32, #tpu.memory_space<vmem>>, vector<784x1xf32>
    %9 = vector.broadcast %8 : vector<784x1xf32> to vector<784x64xf32>
    %10 = arith.mulf %7, %9 : vector<784x64xf32>
    %c0_8 = arith.constant 0 : index
    %c0_9 = arith.constant 0 : index
    %11 = vector.load %arg5[%c0_8, %c0_9] : memref<784x64xf32, #tpu.memory_space<vmem>>, vector<784x64xf32>
    tpu.vector_store %arg5[%c0_8, %c0_9], %10 {strides = array<i32>} : memref<784x64xf32, #tpu.memory_space<vmem>>, vector<784x64xf32>,
    return
  }
  func.func @transform_0(%arg0: i32) -> (i32, i32) {
    %c0_i32 = arith.constant 0 : i32
    %c0_i32_0 = arith.constant 0 : i32
    return %arg0, %c0_i32 : i32, i32
  }
  func.func @transform_1(%arg0: i32) -> (i32, i32) {
    %c0_i32 = arith.constant 0 : i32
    %c0_i32_0 = arith.constant 0 : i32
    %c0_i32_1 = arith.constant 0 : i32
    return %c0_i32, %c0_i32_0 : i32, i32
  }
  func.func @transform_2(%arg0: i32) -> (i32, i32) {
    %c0_i32 = arith.constant 0 : i32
    %c0_i32_0 = arith.constant 0 : i32
    %c0_i32_1 = arith.constant 0 : i32
    return %c0_i32, %c0_i32_0 : i32, i32
  }
  func.func @transform_3(%arg0: i32) -> (i32, i32) {
    %c0_i32 = arith.constant 0 : i32
    %c0_i32_0 = arith.constant 0 : i32
    return %arg0, %c0_i32 : i32, i32
  }
  func.func @transform_4(%arg0: i32) -> (i32, i32) {
    %c0_i32 = arith.constant 0 : i32
    %c0_i32_0 = arith.constant 0 : i32
    return %arg0, %c0_i32 : i32, i32
  }
}

module attributes {stable_mosaic.version = 11 : i64} {
  func.func @kernel(%arg0: i32, %arg1: memref<392x256xf32, #tpu.memory_space<vmem>>, %arg2: memref<256x64xf32, #tpu.memory_space<vmem>>, %arg3: memref<1x64xf32, #tpu.memory_space<vmem>>, %arg4: memref<392x64xf32, #tpu.memory_space<vmem>>) attributes {dimension_semantics = [#tpu.dimension_semantics<parallel>], iteration_bounds = array<i64: 1>, scalar_prefetch = 0 : i64, scratch_operands = 0 : i64, tpu.core_type = #tpu.core_type<tc>, window_params = [{transform_indices = @transform_0, window_bounds = array<i64: 392, 256>}, {pipeline_mode = #tpu.pipeline_mode<synchronous>, transform_indices = @transform_1, window_bounds = array<i64: 256, 64>}, {pipeline_mode = #tpu.pipeline_mode<synchronous>, transform_indices = @transform_2, window_bounds = array<i64: 1, 64>}, {transform_indices = @transform_3, window_bounds = array<i64: 392, 64>}]} {
    %c0 = arith.constant 0 : index
    %c0_0 = arith.constant 0 : index
    %0 = vector.load %arg1[%c0, %c0_0] : memref<392x256xf32, #tpu.memory_space<vmem>>, vector<392x256xf32>
    %c0_1 = arith.constant 0 : index
    %c0_2 = arith.constant 0 : index
    %1 = vector.load %arg2[%c0_1, %c0_2] : memref<256x64xf32, #tpu.memory_space<vmem>>, vector<256x64xf32>
    %cst = arith.constant dense<0.000000e+00> : vector<392x64xf32>
    %2 = tpu.matmul %0, %1, %cst {dimension_numbers = #tpu.dot_dimension_numbers<[1], [0], [0], [1], [0, 0, 1, 1], [], []>} : vector<392x256xf32>, vector<256x64xf32>, vector<392x64xf32> -> vector<392x64xf32>
    %c0_3 = arith.constant 0 : index
    %c0_4 = arith.constant 0 : index
    %3 = vector.load %arg3[%c0_3, %c0_4] : memref<1x64xf32, #tpu.memory_space<vmem>>, vector<1x64xf32>
    %4 = vector.broadcast %3 : vector<1x64xf32> to vector<392x64xf32>
    %5 = arith.addf %2, %4 : vector<392x64xf32>
    %cst_5 = arith.constant 0.000000e+00 : f32
    %6 = vector.broadcast %cst_5 : f32 to vector<392x64xf32>
    %7 = arith.maximumf %5, %6 : vector<392x64xf32>
    %c0_6 = arith.constant 0 : index
    %c0_7 = arith.constant 0 : index
    %8 = vector.load %arg4[%c0_6, %c0_7] : memref<392x64xf32, #tpu.memory_space<vmem>>, vector<392x64xf32>
    tpu.vector_store %arg4[%c0_6, %c0_7], %7 {strides = array<i32>} : memref<392x64xf32, #tpu.memory_space<vmem>>, vector<392x64xf32>,
    return
  }
  func.func @transform_0(%arg0: i32) -> (i32, i32) {
    %c0_i32 = arith.constant 0 : i32
    %c0_i32_0 = arith.constant 0 : i32
    return %arg0, %c0_i32 : i32, i32
  }
  func.func @transform_1(%arg0: i32) -> (i32, i32) {
    %c0_i32 = arith.constant 0 : i32
    %c0_i32_0 = arith.constant 0 : i32
    %c0_i32_1 = arith.constant 0 : i32
    return %c0_i32, %c0_i32_0 : i32, i32
  }
  func.func @transform_2(%arg0: i32) -> (i32, i32) {
    %c0_i32 = arith.constant 0 : i32
    %c0_i32_0 = arith.constant 0 : i32
    %c0_i32_1 = arith.constant 0 : i32
    return %c0_i32, %c0_i32_0 : i32, i32
  }
  func.func @transform_3(%arg0: i32) -> (i32, i32) {
    %c0_i32 = arith.constant 0 : i32
    %c0_i32_0 = arith.constant 0 : i32
    return %arg0, %c0_i32 : i32, i32
  }
}

module attributes {stable_mosaic.version = 11 : i64} {
  func.func @kernel(%arg0: i32, %arg1: memref<104x256xf32, #tpu.memory_space<vmem>>, %arg2: memref<256x64xf32, #tpu.memory_space<vmem>>, %arg3: memref<1x64xf32, #tpu.memory_space<vmem>>, %arg4: memref<104x64xf32, #tpu.memory_space<vmem>>) attributes {dimension_semantics = [#tpu.dimension_semantics<parallel>], iteration_bounds = array<i64: 1>, scalar_prefetch = 0 : i64, scratch_operands = 0 : i64, tpu.core_type = #tpu.core_type<tc>, window_params = [{transform_indices = @transform_0, window_bounds = array<i64: 104, 256>}, {pipeline_mode = #tpu.pipeline_mode<synchronous>, transform_indices = @transform_1, window_bounds = array<i64: 256, 64>}, {pipeline_mode = #tpu.pipeline_mode<synchronous>, transform_indices = @transform_2, window_bounds = array<i64: 1, 64>}, {transform_indices = @transform_3, window_bounds = array<i64: 104, 64>}]} {
    %c0 = arith.constant 0 : index
    %c0_0 = arith.constant 0 : index
    %0 = vector.load %arg1[%c0, %c0_0] : memref<104x256xf32, #tpu.memory_space<vmem>>, vector<104x256xf32>
    %c0_1 = arith.constant 0 : index
    %c0_2 = arith.constant 0 : index
    %1 = vector.load %arg2[%c0_1, %c0_2] : memref<256x64xf32, #tpu.memory_space<vmem>>, vector<256x64xf32>
    %cst = arith.constant dense<0.000000e+00> : vector<104x64xf32>
    %2 = tpu.matmul %0, %1, %cst {dimension_numbers = #tpu.dot_dimension_numbers<[1], [0], [0], [1], [0, 0, 1, 1], [], []>} : vector<104x256xf32>, vector<256x64xf32>, vector<104x64xf32> -> vector<104x64xf32>
    %c0_3 = arith.constant 0 : index
    %c0_4 = arith.constant 0 : index
    %3 = vector.load %arg3[%c0_3, %c0_4] : memref<1x64xf32, #tpu.memory_space<vmem>>, vector<1x64xf32>
    %4 = vector.broadcast %3 : vector<1x64xf32> to vector<104x64xf32>
    %5 = arith.addf %2, %4 : vector<104x64xf32>
    %cst_5 = arith.constant 0.000000e+00 : f32
    %6 = vector.broadcast %cst_5 : f32 to vector<104x64xf32>
    %7 = arith.maximumf %5, %6 : vector<104x64xf32>
    %c0_6 = arith.constant 0 : index
    %c0_7 = arith.constant 0 : index
    %8 = vector.load %arg4[%c0_6, %c0_7] : memref<104x64xf32, #tpu.memory_space<vmem>>, vector<104x64xf32>
    tpu.vector_store %arg4[%c0_6, %c0_7], %7 {strides = array<i32>} : memref<104x64xf32, #tpu.memory_space<vmem>>, vector<104x64xf32>,
    return
  }
  func.func @transform_0(%arg0: i32) -> (i32, i32) {
    %c0_i32 = arith.constant 0 : i32
    %c0_i32_0 = arith.constant 0 : i32
    return %arg0, %c0_i32 : i32, i32
  }
  func.func @transform_1(%arg0: i32) -> (i32, i32) {
    %c0_i32 = arith.constant 0 : i32
    %c0_i32_0 = arith.constant 0 : i32
    %c0_i32_1 = arith.constant 0 : i32
    return %c0_i32, %c0_i32_0 : i32, i32
  }
  func.func @transform_2(%arg0: i32) -> (i32, i32) {
    %c0_i32 = arith.constant 0 : i32
    %c0_i32_0 = arith.constant 0 : i32
    %c0_i32_1 = arith.constant 0 : i32
    return %c0_i32, %c0_i32_0 : i32, i32
  }
  func.func @transform_3(%arg0: i32) -> (i32, i32) {
    %c0_i32 = arith.constant 0 : i32
    %c0_i32_0 = arith.constant 0 : i32
    return %arg0, %c0_i32 : i32, i32
  }
}

module attributes {stable_mosaic.version = 11 : i64} {
  func.func @kernel(%arg0: i32, %arg1: memref<8x1024xf32, #tpu.memory_space<vmem>>, %arg2: memref<1024x10xf32, #tpu.memory_space<vmem>>, %arg3: memref<1x10xf32, #tpu.memory_space<vmem>>, %arg4: memref<8x10xf32, #tpu.memory_space<vmem>>) attributes {dimension_semantics = [#tpu.dimension_semantics<parallel>], iteration_bounds = array<i64: 1>, scalar_prefetch = 0 : i64, scratch_operands = 0 : i64, tpu.core_type = #tpu.core_type<tc>, window_params = [{transform_indices = @transform_0, window_bounds = array<i64: 8, 1024>}, {pipeline_mode = #tpu.pipeline_mode<synchronous>, transform_indices = @transform_1, window_bounds = array<i64: 1024, 10>}, {pipeline_mode = #tpu.pipeline_mode<synchronous>, transform_indices = @transform_2, window_bounds = array<i64: 1, 10>}, {transform_indices = @transform_3, window_bounds = array<i64: 8, 10>}]} {
    %c0 = arith.constant 0 : index
    %c0_0 = arith.constant 0 : index
    %0 = vector.load %arg1[%c0, %c0_0] : memref<8x1024xf32, #tpu.memory_space<vmem>>, vector<8x1024xf32>
    %c0_1 = arith.constant 0 : index
    %c0_2 = arith.constant 0 : index
    %1 = vector.load %arg2[%c0_1, %c0_2] : memref<1024x10xf32, #tpu.memory_space<vmem>>, vector<1024x10xf32>
    %cst = arith.constant dense<0.000000e+00> : vector<8x10xf32>
    %2 = tpu.matmul %0, %1, %cst {dimension_numbers = #tpu.dot_dimension_numbers<[1], [0], [0], [1], [0, 0, 1, 1], [], []>} : vector<8x1024xf32>, vector<1024x10xf32>, vector<8x10xf32> -> vector<8x10xf32>
    %c0_3 = arith.constant 0 : index
    %c0_4 = arith.constant 0 : index
    %3 = vector.load %arg3[%c0_3, %c0_4] : memref<1x10xf32, #tpu.memory_space<vmem>>, vector<1x10xf32>
    %4 = vector.broadcast %3 : vector<1x10xf32> to vector<8x10xf32>
    %5 = arith.addf %2, %4 : vector<8x10xf32>
    %c0_5 = arith.constant 0 : index
    %c0_6 = arith.constant 0 : index
    %6 = vector.load %arg4[%c0_5, %c0_6] : memref<8x10xf32, #tpu.memory_space<vmem>>, vector<8x10xf32>
    tpu.vector_store %arg4[%c0_5, %c0_6], %5 {strides = array<i32>} : memref<8x10xf32, #tpu.memory_space<vmem>>, vector<8x10xf32>,
    return
  }
  func.func @transform_0(%arg0: i32) -> (i32, i32) {
    %c0_i32 = arith.constant 0 : i32
    %c0_i32_0 = arith.constant 0 : i32
    return %arg0, %c0_i32 : i32, i32
  }
  func.func @transform_1(%arg0: i32) -> (i32, i32) {
    %c0_i32 = arith.constant 0 : i32
    %c0_i32_0 = arith.constant 0 : i32
    %c0_i32_1 = arith.constant 0 : i32
    return %c0_i32, %c0_i32_0 : i32, i32
  }
  func.func @transform_2(%arg0: i32) -> (i32, i32) {
    %c0_i32 = arith.constant 0 : i32
    %c0_i32_0 = arith.constant 0 : i32
    %c0_i32_1 = arith.constant 0 : i32
    return %c0_i32, %c0_i32_0 : i32, i32
  }
  func.func @transform_3(%arg0: i32) -> (i32, i32) {
    %c0_i32 = arith.constant 0 : i32
    %c0_i32_0 = arith.constant 0 : i32
    return %arg0, %c0_i32 : i32, i32
  }
}

module attributes {stable_mosaic.version = 11 : i64} {
  func.func @kernel(%arg0: i32, %arg1: memref<32x576xf32, #tpu.memory_space<vmem>>, %arg2: memref<576x64xf32, #tpu.memory_space<vmem>>, %arg3: memref<1x64xf32, #tpu.memory_space<vmem>>, %arg4: memref<32x64xf32, #tpu.memory_space<vmem>>) attributes {dimension_semantics = [#tpu.dimension_semantics<parallel>], iteration_bounds = array<i64: 1>, scalar_prefetch = 0 : i64, scratch_operands = 0 : i64, tpu.core_type = #tpu.core_type<tc>, window_params = [{transform_indices = @transform_0, window_bounds = array<i64: 32, 576>}, {pipeline_mode = #tpu.pipeline_mode<synchronous>, transform_indices = @transform_1, window_bounds = array<i64: 576, 64>}, {pipeline_mode = #tpu.pipeline_mode<synchronous>, transform_indices = @transform_2, window_bounds = array<i64: 1, 64>}, {transform_indices = @transform_3, window_bounds = array<i64: 32, 64>}]} {
    %c0 = arith.constant 0 : index
    %c0_0 = arith.constant 0 : index
    %0 = vector.load %arg1[%c0, %c0_0] : memref<32x576xf32, #tpu.memory_space<vmem>>, vector<32x576xf32>
    %c0_1 = arith.constant 0 : index
    %c0_2 = arith.constant 0 : index
    %1 = vector.load %arg2[%c0_1, %c0_2] : memref<576x64xf32, #tpu.memory_space<vmem>>, vector<576x64xf32>
    %cst = arith.constant dense<0.000000e+00> : vector<32x64xf32>
    %2 = tpu.matmul %0, %1, %cst {dimension_numbers = #tpu.dot_dimension_numbers<[1], [0], [0], [1], [0, 0, 1, 1], [], []>} : vector<32x576xf32>, vector<576x64xf32>, vector<32x64xf32> -> vector<32x64xf32>
    %c0_3 = arith.constant 0 : index
    %c0_4 = arith.constant 0 : index
    %3 = vector.load %arg3[%c0_3, %c0_4] : memref<1x64xf32, #tpu.memory_space<vmem>>, vector<1x64xf32>
    %4 = vector.broadcast %3 : vector<1x64xf32> to vector<32x64xf32>
    %5 = arith.addf %2, %4 : vector<32x64xf32>
    %cst_5 = arith.constant 0.000000e+00 : f32
    %6 = vector.broadcast %cst_5 : f32 to vector<32x64xf32>
    %7 = arith.maximumf %5, %6 : vector<32x64xf32>
    %c0_6 = arith.constant 0 : index
    %c0_7 = arith.constant 0 : index
    %8 = vector.load %arg4[%c0_6, %c0_7] : memref<32x64xf32, #tpu.memory_space<vmem>>, vector<32x64xf32>
    tpu.vector_store %arg4[%c0_6, %c0_7], %7 {strides = array<i32>} : memref<32x64xf32, #tpu.memory_space<vmem>>, vector<32x64xf32>,
    return
  }
  func.func @transform_0(%arg0: i32) -> (i32, i32) {
    %c0_i32 = arith.constant 0 : i32
    %c0_i32_0 = arith.constant 0 : i32
    return %arg0, %c0_i32 : i32, i32
  }
  func.func @transform_1(%arg0: i32) -> (i32, i32) {
    %c0_i32 = arith.constant 0 : i32
    %c0_i32_0 = arith.constant 0 : i32
    %c0_i32_1 = arith.constant 0 : i32
    return %c0_i32, %c0_i32_0 : i32, i32
  }
  func.func @transform_2(%arg0: i32) -> (i32, i32) {
    %c0_i32 = arith.constant 0 : i32
    %c0_i32_0 = arith.constant 0 : i32
    %c0_i32_1 = arith.constant 0 : i32
    return %c0_i32, %c0_i32_0 : i32, i32
  }
  func.func @transform_3(%arg0: i32) -> (i32, i32) {
    %c0_i32 = arith.constant 0 : i32
    %c0_i32_0 = arith.constant 0 : i32
    return %arg0, %c0_i32 : i32, i32
  }
}

</mosaic_0001>

<llo_original>
// kernel: residual_net_ptq_forward.8
$region0: #{residual_net_ptq_forward.8}
  #allocation0 [shape = 'u32[]', space=smem, size = 0x4, offset = 0x4, fixed_abs, tag = 'smem constant byte address 0x4 - core index']
  #allocation1 [shape = 'u32[72,128]{1,0:T(1,128)}', space=vmem, size = 0x9000, scoped, tag = 'internal scratch']
  %s0 = inlined_call_operand.vmem [shape: f32[1568,9], index: 0, kind: input, shape index: {}]
  %s1 = inlined_call_operand.vmem [shape: f32[9,32], index: 1, kind: input, shape index: {}]
  %s2 = inlined_call_operand.vmem [shape: f32[1,32], index: 2, kind: input, shape index: {}]
  %s3 = inlined_call_operand.vmem [shape: f32[1568,1], index: 3, kind: input, shape index: {}]
  %s4 = inlined_call_operand.vmem [shape: f32[1568,32], index: 4, kind: output, shape index: {}]
  %s5 = sld [smem:[#allocation0]]
  $region49: #{residual_net_ptq_forward.8} parent=0
    _
  %s7 = ssub.s32 1, %s5
  %s8 = scalar_select 0, %s7, %s5
  loop: start=0, step=1, limit=4
  $region2: #{residual_net_ptq_forward.8} parent=0 // loop_pre_header
    _
  $region3: #{residual_net_ptq_forward.8} parent=0 // loop_header
    %s10 = sphi 0, %s14
    %p11 = scmp.ge.s32.totalorder %s10, 4
    %s20 = sphi 0, %s22
    %s23 = sphi 0, %s20
    %s24 = sphi 0, %s23
    %s40 = sphi 0, %s24
    %s44 = sphi 0, %s44
    %s46 = sphi 0, %s44
    %s47 = sphi 0, %s46
    %s61 = sphi 0, %s47
    %s65 = sphi 0, %s65
    %s67 = sphi 0, %s65
    %s68 = sphi 0, %s67
    %s82 = sphi 0, %s68
    %s88 = sphi 0, %s90
    %s91 = sphi 0, %s88
    %s92 = sphi 0, %s91
    %s108 = sphi 0, %s92
    %s114 = sphi 0, %s116
    %s117 = sphi 0, %s114
    %s118 = sphi 0, %s117
    %s134 = sphi 0, %s118
  $region4: #{residual_net_ptq_forward.8} parent=0 // loop_header_branch
    %13 = sbr.rel (%p11) target = $region8
  $region5: #{residual_net_ptq_forward.8} parent=0 // loop_body
    %s15 = ssub.s32 %s10, 1
    %s16 = ssub.s32 %s10, 2
    %s17 = sadd.s32 %s10, 1
    %s18 = ssub.s32 %s10, %s17
    %p19 = scmp.eq.s32.totalorder %s18, 0
    %s21 = sadd.s32 %s20, 1
    %s22 = scalar_select %p19, %s20, %s21
    %p25 = pneg %p19
    %p26 = scmp.eq.s32.totalorder %s10, 1
    %p27 = por %p25, %p26
    %p28 = scmp.ne.s32.totalorder %s20, %s23
    %p29 = scmp.eq.s32.totalorder %s10, 0
    %p30 = por %p28, %p29
    %p31 = scmp.ne.s32.totalorder %s20, %s23
    %p32 = scmp.eq.s32.totalorder %s15, 1
    %p33 = por %p31, %p32
    %p34 = scmp.ne.s32.totalorder %s23, %s24
    %p35 = scmp.eq.s32.totalorder %s15, 0
    %p36 = por %p34, %p35
    %p37 = scmp.ne.s32.totalorder %s23, %s24
    %p38 = scmp.eq.s32.totalorder %s16, 1
    %p39 = por %p37, %p38
    %p41 = scmp.ne.s32.totalorder %s24, %s40
    %p42 = scmp.eq.s32.totalorder %s16, 0
    %p43 = por %p41, %p42
    %s45 = sadd.s32 %s44, 1
    %p48 = scmp.eq.s32.totalorder %s10, 1
    %p49 = scmp.ne.s32.totalorder %s44, %s46
    %p50 = scmp.eq.s32.totalorder %s10, 0
    %p51 = por %p49, %p50
    %p52 = scmp.ne.s32.totalorder %s44, %s46
    %p53 = scmp.eq.s32.totalorder %s15, 1
    %p54 = por %p52, %p53
    %p55 = scmp.ne.s32.totalorder %s46, %s47
    %p56 = scmp.eq.s32.totalorder %s15, 0
    %p57 = por %p55, %p56
    %p58 = scmp.ne.s32.totalorder %s46, %s47
    %p59 = scmp.eq.s32.totalorder %s16, 1
    %p60 = por %p58, %p59
    %p62 = scmp.ne.s32.totalorder %s47, %s61
    %p63 = scmp.eq.s32.totalorder %s16, 0
    %p64 = por %p62, %p63
    %s66 = sadd.s32 %s65, 1
    %p69 = scmp.eq.s32.totalorder %s10, 1
    %p70 = scmp.ne.s32.totalorder %s65, %s67
    %p71 = scmp.eq.s32.totalorder %s10, 0
    %p72 = por %p70, %p71
    %p73 = scmp.ne.s32.totalorder %s65, %s67
    %p74 = scmp.eq.s32.totalorder %s15, 1
    %p75 = por %p73, %p74
    %p76 = scmp.ne.s32.totalorder %s67, %s68
    %p77 = scmp.eq.s32.totalorder %s15, 0
    %p78 = por %p76, %p77
    %p79 = scmp.ne.s32.totalorder %s67, %s68
    %p80 = scmp.eq.s32.totalorder %s16, 1
    %p81 = por %p79, %p80
    %p83 = scmp.ne.s32.totalorder %s68, %s82
    %p84 = scmp.eq.s32.totalorder %s16, 0
    %p85 = por %p83, %p84
    %s86 = ssub.s32 %s10, %s17
    %p87 = scmp.eq.s32.totalorder %s86, 0
    %s89 = sadd.s32 %s88, 1
    %s90 = scalar_select %p87, %s88, %s89
    %p93 = pneg %p87
    %p94 = scmp.eq.s32.totalorder %s10, 1
    %p95 = por %p93, %p94
    %p96 = scmp.ne.s32.totalorder %s88, %s91
    %p97 = scmp.eq.s32.totalorder %s10, 0
    %p98 = por %p96, %p97
    %p99 = scmp.ne.s32.totalorder %s88, %s91
    %p100 = scmp.eq.s32.totalorder %s15, 1
    %p101 = por %p99, %p100
    %p102 = scmp.ne.s32.totalorder %s91, %s92
    %p103 = scmp.eq.s32.totalorder %s15, 0
    %p104 = por %p102, %p103
    %p105 = scmp.ne.s32.totalorder %s91, %s92
    %p106 = scmp.eq.s32.totalorder %s16, 1
    %p107 = por %p105, %p106
    %p109 = scmp.ne.s32.totalorder %s92, %s108
    %p110 = scmp.eq.s32.totalorder %s16, 0
    %p111 = por %p109, %p110
    %s112 = ssub.s32 %s10, %s17
    %p113 = scmp.eq.s32.totalorder %s112, 0
    %s115 = sadd.s32 %s114, 1
    %s116 = scalar_select %p113, %s114, %s115
    %p119 = pneg %p113
    %p120 = scmp.eq.s32.totalorder %s10, 1
    %p121 = por %p119, %p120
    %p122 = scmp.ne.s32.totalorder %s114, %s117
    %p123 = scmp.eq.s32.totalorder %s10, 0
    %p124 = por %p122, %p123
    %p125 = scmp.ne.s32.totalorder %s114, %s117
    %p126 = scmp.eq.s32.totalorder %s15, 1
    %p127 = por %p125, %p126
    %p128 = scmp.ne.s32.totalorder %s117, %s118
    %p129 = scmp.eq.s32.totalorder %s15, 0
    %p130 = por %p128, %p129
    %p131 = scmp.ne.s32.totalorder %s117, %s118
    %p132 = scmp.eq.s32.totalorder %s16, 1
    %p133 = por %p131, %p132
    %p135 = scmp.ne.s32.totalorder %s118, %s134
    %p136 = scmp.eq.s32.totalorder %s16, 0
    %p137 = por %p135, %p136
    %p138 = scmp.le.s32.totalorder 1, %s10
    %p139 = scmp.lt.s32.totalorder %s10, 3
    %p140 = pnand %p138, %p139
    %p141 = pneg %p140
    // Predicated region
    $region9: #{residual_net_ptq_forward.8} parent=5 // pred_check
      _
    $region10: #{residual_net_ptq_forward.8} parent=5 // pred_check_branch
      %143 = sbr.rel (%p140) target = $region12
    $region11: #{residual_net_ptq_forward.8} parent=5 // pred_region
      %s144 = ssub.s32 %s10, 1
      // Predicated region
      $region13: #{residual_net_ptq_forward.8} parent=11 // pred_check
        %p145 = pneg %p57
      $region14: #{residual_net_ptq_forward.8} parent=11 // pred_check_branch
        %147 = sbr.rel (%p145) target = $region16
      $region15: #{residual_net_ptq_forward.8} parent=11 // pred_region
        _
      $region16: #{residual_net_ptq_forward.8} parent=11 // pred_fallthru
        _
      // Predicated region
      $region17: #{residual_net_ptq_forward.8} parent=11 // pred_check
        %p148 = pneg %p78
      $region18: #{residual_net_ptq_forward.8} parent=11 // pred_check_branch
        %150 = sbr.rel (%p148) target = $region20
      $region19: #{residual_net_ptq_forward.8} parent=11 // pred_region
        _
      $region20: #{residual_net_ptq_forward.8} parent=11 // pred_fallthru
        _
    $region12: #{residual_net_ptq_forward.8} parent=5 // pred_fallthru
      _
    %p151 = scmp.lt.s32.totalorder %s10, 2
    // Predicated region
    $region21: #{residual_net_ptq_forward.8} parent=5 // pred_check
      %p152 = pneg %p151
    $region22: #{residual_net_ptq_forward.8} parent=5 // pred_check_branch
      %154 = sbr.rel (%p152) target = $region24
    $region23: #{residual_net_ptq_forward.8} parent=5 // pred_region
      // Predicated region
      $region25: #{residual_net_ptq_forward.8} parent=23 // pred_check
        %p155 = pneg %p30
      $region26: #{residual_net_ptq_forward.8} parent=23 // pred_check_branch
        %157 = sbr.rel (%p155) target = $region28
      $region27: #{residual_net_ptq_forward.8} parent=23 // pred_region
        %s158 = smul.u32 98, %s10
        %p159 = scmp.lt.s32.totalorder %s158, 195
        %s160 = scalar_select %p159, %s158, 195
        %s161 = smul.addr %s160, 8
        %s162 = scalar_lea.vmem %s0, %s161
        %s163 = smul.u32 98, %s10
      $region28: #{residual_net_ptq_forward.8} parent=23 // pred_fallthru
        _
      // Predicated region
      $region29: #{residual_net_ptq_forward.8} parent=23 // pred_check
        %p164 = pneg %p98
      $region30: #{residual_net_ptq_forward.8} parent=23 // pred_check_branch
        %166 = sbr.rel (%p164) target = $region32
      $region31: #{residual_net_ptq_forward.8} parent=23 // pred_region
        %s167 = smul.u32 98, %s10
        %p168 = scmp.lt.s32.totalorder %s167, 195
        %s169 = scalar_select %p168, %s167, 195
        %s170 = smul.addr %s169, 8
        %s171 = scalar_lea.vmem %s3, %s170
        %s172 = smul.u32 98, %s10
      $region32: #{residual_net_ptq_forward.8} parent=23 // pred_fallthru
        _
    $region24: #{residual_net_ptq_forward.8} parent=5 // pred_fallthru
      _
    %p173 = scmp.le.s32.totalorder 1, %s10
    %p174 = scmp.lt.s32.totalorder %s10, 3
    %p175 = pnand %p173, %p174
    %p176 = pneg %p175
    // Predicated region
    $region33: #{residual_net_ptq_forward.8} parent=5 // pred_check
      _
    $region34: #{residual_net_ptq_forward.8} parent=5 // pred_check_branch
      %178 = sbr.rel (%p175) target = $region36
    $region35: #{residual_net_ptq_forward.8} parent=5 // pred_region
      %s179 = ssub.s32 %s10, 1
      %s180 = smul.u32 98, %s15
      %p181 = scmp.lt.s32.totalorder %s180, 195
      %s182 = scalar_select %p181, %s180, 195
      %s183 = smul.addr %s182, 8
      %s184 = scalar_lea.vmem %s0, %s183
      %p185 = pneg %p36
      %p186 = pneg %p33
      %p187 = pneg %p57
      %p188 = pneg %p54
      %p189 = pneg %p78
      %p190 = pneg %p75
      %s191 = smul.u32 98, %s15
      %p192 = scmp.lt.s32.totalorder %s191, 195
      %s193 = scalar_select %p192, %s191, 195
      %s194 = smul.addr %s193, 8
      %s195 = scalar_lea.vmem %s3, %s194
      %p196 = pneg %p104
      %p197 = pneg %p101
      %p198 = pneg %p130
      %p199 = pneg %p127
      %s200 = smul.u32 98, %s15
      %p201 = scmp.lt.s32.totalorder %s200, 195
      %s202 = scalar_select %p201, %s200, 195
      %s203 = smul.addr %s202, 8
      %s204 = scalar_lea.vmem %s4, %s203
      %s205 = smul.u32 98, %s15
      %p206 = scmp.lt.s32.totalorder %s205, 195
      %s207 = scalar_select %p206, %s205, 195
      %s208 = smul.addr %s207, 8
      %s209 = scalar_lea.vmem %s0, %s208
      %s210 = smul.u32 98, %s15
      %s211 = smul.u32 98, %s15
      %p212 = scmp.lt.s32.totalorder %s211, 195
      %s213 = scalar_select %p212, %s211, 195
      %s214 = smul.addr %s213, 8
      %s215 = scalar_lea.vmem %s3, %s214
      %s216 = smul.u32 98, %s15
      %s217 = smul.u32 98, %s15
      %p218 = scmp.lt.s32.totalorder %s217, 195
      %s219 = scalar_select %p218, %s217, 195
      %s220 = smul.addr %s219, 8
      %s221 = scalar_lea.vmem %s4, %s220
      %s222 = smul.u32 98, %s15
      %v223 = vld [vmem:[%s209] sm:$0xff]
      %v224 = vld [vmem:[%s209 + $0x8] sm:$0xff]
      %v225 = vld [vmem:[%s209 + $0x10] sm:$0xff]
      %v226 = vld [vmem:[%s209 + $0x18] sm:$0xff]
      %v227 = vld [vmem:[%s209 + $0x20] sm:$0xff]
      %v228 = vld [vmem:[%s209 + $0x28] sm:$0xff]
      %v229 = vld [vmem:[%s209 + $0x30] sm:$0xff]
      %v230 = vld [vmem:[%s209 + $0x38] sm:$0xff]
      %v231 = vld [vmem:[%s209 + $0x40] sm:$0xff]
      %v232 = vld [vmem:[%s209 + $0x48] sm:$0xff]
      %v233 = vld [vmem:[%s209 + $0x50] sm:$0xff]
      %v234 = vld [vmem:[%s209 + $0x58] sm:$0xff]
      %v235 = vld [vmem:[%s209 + $0x60] sm:$0xff]
      %v236 = vld [vmem:[%s209 + $0x68] sm:$0xff]
      %v237 = vld [vmem:[%s209 + $0x70] sm:$0xff]
      %v238 = vld [vmem:[%s209 + $0x78] sm:$0xff]
      %v239 = vld [vmem:[%s209 + $0x80] sm:$0xff]
      %v240 = vld [vmem:[%s209 + $0x88] sm:$0xff]
      %v241 = vld [vmem:[%s209 + $0x90] sm:$0xff]
      %v242 = vld [vmem:[%s209 + $0x98] sm:$0xff]
      %v243 = vld [vmem:[%s209 + $0xa0] sm:$0xff]
      %v244 = vld [vmem:[%s209 + $0xa8] sm:$0xff]
      %v245 = vld [vmem:[%s209 + $0xb0] sm:$0xff]
      %v246 = vld [vmem:[%s209 + $0xb8] sm:$0xff]
      %v247 = vld [vmem:[%s209 + $0xc0] sm:$0xff]
      %v248 = vld [vmem:[%s209 + $0xc8] sm:$0xff]
      %v249 = vld [vmem:[%s209 + $0xd0] sm:$0xff]
      %v250 = vld [vmem:[%s209 + $0xd8] sm:$0xff]
      %v251 = vld [vmem:[%s209 + $0xe0] sm:$0xff]
      %v252 = vld [vmem:[%s209 + $0xe8] sm:$0xff]
      %v253 = vld [vmem:[%s209 + $0xf0] sm:$0xff]
      %v254 = vld [vmem:[%s209 + $0xf8] sm:$0xff]
      %v255 = vld [vmem:[%s209 + $0x100] sm:$0xff]
      %v256 = vld [vmem:[%s209 + $0x108] sm:$0xff]
      %v257 = vld [vmem:[%s209 + $0x110] sm:$0xff]
      %v258 = vld [vmem:[%s209 + $0x118] sm:$0xff]
      %v259 = vld [vmem:[%s209 + $0x120] sm:$0xff]
      %v260 = vld [vmem:[%s209 + $0x128] sm:$0xff]
      %v261 = vld [vmem:[%s209 + $0x130] sm:$0xff]
      %v262 = vld [vmem:[%s209 + $0x138] sm:$0xff]
      %v263 = vld [vmem:[%s209 + $0x140] sm:$0xff]
      %v264 = vld [vmem:[%s209 + $0x148] sm:$0xff]
      %v265 = vld [vmem:[%s209 + $0x150] sm:$0xff]
      %v266 = vld [vmem:[%s209 + $0x158] sm:$0xff]
      %v267 = vld [vmem:[%s209 + $0x160] sm:$0xff]
      %v268 = vld [vmem:[%s209 + $0x168] sm:$0xff]
      %v269 = vld [vmem:[%s209 + $0x170] sm:$0xff]
      %v270 = vld [vmem:[%s209 + $0x178] sm:$0xff]
      %v271 = vld [vmem:[%s209 + $0x180] sm:$0xff]
      %v272 = vld [vmem:[%s209 + $0x188] sm:$0xff]
      %v273 = vld [vmem:[%s209 + $0x190] sm:$0xff]
      %v274 = vld [vmem:[%s209 + $0x198] sm:$0xff]
      %v275 = vld [vmem:[%s209 + $0x1a0] sm:$0xff]
      %v276 = vld [vmem:[%s209 + $0x1a8] sm:$0xff]
      %v277 = vld [vmem:[%s209 + $0x1b0] sm:$0xff]
      %v278 = vld [vmem:[%s209 + $0x1b8] sm:$0xff]
      %v279 = vld [vmem:[%s209 + $0x1c0] sm:$0xff]
      %v280 = vld [vmem:[%s209 + $0x1c8] sm:$0xff]
      %v281 = vld [vmem:[%s209 + $0x1d0] sm:$0xff]
      %v282 = vld [vmem:[%s209 + $0x1d8] sm:$0xff]
      %v283 = vld [vmem:[%s209 + $0x1e0] sm:$0xff]
      %v284 = vld [vmem:[%s209 + $0x1e8] sm:$0xff]
      %v285 = vld [vmem:[%s209 + $0x1f0] sm:$0xff]
      %v286 = vld [vmem:[%s209 + $0x1f8] sm:$0xff]
      %v287 = vld [vmem:[%s209 + $0x200] sm:$0xff]
      %v288 = vld [vmem:[%s209 + $0x208] sm:$0xff]
      %v289 = vld [vmem:[%s209 + $0x210] sm:$0xff]
      %v290 = vld [vmem:[%s209 + $0x218] sm:$0xff]
      %v291 = vld [vmem:[%s209 + $0x220] sm:$0xff]
      %v292 = vld [vmem:[%s209 + $0x228] sm:$0xff]
      %v293 = vld [vmem:[%s209 + $0x230] sm:$0xff]
      %v294 = vld [vmem:[%s209 + $0x238] sm:$0xff]
      %v295 = vld [vmem:[%s209 + $0x240] sm:$0xff]
      %v296 = vld [vmem:[%s209 + $0x248] sm:$0xff]
      %v297 = vld [vmem:[%s209 + $0x250] sm:$0xff]
      %v298 = vld [vmem:[%s209 + $0x258] sm:$0xff]
      %v299 = vld [vmem:[%s209 + $0x260] sm:$0xff]
      %v300 = vld [vmem:[%s209 + $0x268] sm:$0xff]
      %v301 = vld [vmem:[%s209 + $0x270] sm:$0xff]
      %v302 = vld [vmem:[%s209 + $0x278] sm:$0xff]
      %v303 = vld [vmem:[%s209 + $0x280] sm:$0xff]
      %v304 = vld [vmem:[%s209 + $0x288] sm:$0xff]
      %v305 = vld [vmem:[%s209 + $0x290] sm:$0xff]
      %v306 = vld [vmem:[%s209 + $0x298] sm:$0xff]
      %v307 = vld [vmem:[%s209 + $0x2a0] sm:$0xff]
      %v308 = vld [vmem:[%s209 + $0x2a8] sm:$0xff]
      %v309 = vld [vmem:[%s209 + $0x2b0] sm:$0xff]
      %v310 = vld [vmem:[%s209 + $0x2b8] sm:$0xff]
      %v311 = vld [vmem:[%s209 + $0x2c0] sm:$0xff]
      %v312 = vld [vmem:[%s209 + $0x2c8] sm:$0xff]
      %v313 = vld [vmem:[%s209 + $0x2d0] sm:$0xff]
      %v314 = vld [vmem:[%s209 + $0x2d8] sm:$0xff]
      %v315 = vld [vmem:[%s209 + $0x2e0] sm:$0xff]
      %v316 = vld [vmem:[%s209 + $0x2e8] sm:$0xff]
      %v317 = vld [vmem:[%s209 + $0x2f0] sm:$0xff]
      %v318 = vld [vmem:[%s209 + $0x2f8] sm:$0xff]
      %v319 = vld [vmem:[%s209 + $0x300] sm:$0xff]
      %v320 = vld [vmem:[%s209 + $0x308] sm:$0xff]
      %v321 = vld [vmem:[%s1] sm:$0xff]
      %v322 = vld [vmem:[%s1 + $0x8] sm:$0x1]
      %v323 = vld [vmem:[%s2] sm:$0x1]
      %v325 = vperm.slane %v323, 0
      %vm327 = vcmask 72704
      %v329 = vsel %vm327, %v223, 0
      %v332 = vsel %vm327, %v224, 0
      %v335 = vsel %vm327, %v225, 0
      %v338 = vsel %vm327, %v226, 0
      %v341 = vsel %vm327, %v227, 0
      %v344 = vsel %vm327, %v228, 0
      %v347 = vsel %vm327, %v229, 0
      %v350 = vsel %vm327, %v230, 0
      %v353 = vsel %vm327, %v231, 0
      %v356 = vsel %vm327, %v232, 0
      %v359 = vsel %vm327, %v233, 0
      %v362 = vsel %vm327, %v234, 0
      %v365 = vsel %vm327, %v235, 0
      %v368 = vsel %vm327, %v236, 0
      %v371 = vsel %vm327, %v237, 0
      %v374 = vsel %vm327, %v238, 0
      %v377 = vsel %vm327, %v239, 0
      %v380 = vsel %vm327, %v240, 0
      %v383 = vsel %vm327, %v241, 0
      %v386 = vsel %vm327, %v242, 0
      %v389 = vsel %vm327, %v243, 0
      %v392 = vsel %vm327, %v244, 0
      %v395 = vsel %vm327, %v245, 0
      %v398 = vsel %vm327, %v246, 0
      %v401 = vsel %vm327, %v247, 0
      %v404 = vsel %vm327, %v248, 0
      %v407 = vsel %vm327, %v249, 0
      %v410 = vsel %vm327, %v250, 0
      %v413 = vsel %vm327, %v251, 0
      %v416 = vsel %vm327, %v252, 0
      %v419 = vsel %vm327, %v253, 0
      %v422 = vsel %vm327, %v254, 0
      %v425 = vsel %vm327, %v255, 0
      %v428 = vsel %vm327, %v256, 0
      %v431 = vsel %vm327, %v257, 0
      %v434 = vsel %vm327, %v258, 0
      %v437 = vsel %vm327, %v259, 0
      %v440 = vsel %vm327, %v260, 0
      %v443 = vsel %vm327, %v261, 0
      %v446 = vsel %vm327, %v262, 0
      %v449 = vsel %vm327, %v263, 0
      %v452 = vsel %vm327, %v264, 0
      %v455 = vsel %vm327, %v265, 0
      %v458 = vsel %vm327, %v266, 0
      %v461 = vsel %vm327, %v267, 0
      %v464 = vsel %vm327, %v268, 0
      %v467 = vsel %vm327, %v269, 0
      %v470 = vsel %vm327, %v270, 0
      %v473 = vsel %vm327, %v271, 0
      %v476 = vsel %vm327, %v272, 0
      %v479 = vsel %vm327, %v273, 0
      %v482 = vsel %vm327, %v274, 0
      %v485 = vsel %vm327, %v275, 0
      %v488 = vsel %vm327, %v276, 0
      %v491 = vsel %vm327, %v277, 0
      %v494 = vsel %vm327, %v278, 0
      %v497 = vsel %vm327, %v279, 0
      %v500 = vsel %vm327, %v280, 0
      %v503 = vsel %vm327, %v281, 0
      %v506 = vsel %vm327, %v282, 0
      %v509 = vsel %vm327, %v283, 0
      %v512 = vsel %vm327, %v284, 0
      %v515 = vsel %vm327, %v285, 0
      %v518 = vsel %vm327, %v286, 0
      %v521 = vsel %vm327, %v287, 0
      %v524 = vsel %vm327, %v288, 0
      %v527 = vsel %vm327, %v289, 0
      %v530 = vsel %vm327, %v290, 0
      %v533 = vsel %vm327, %v291, 0
      %v536 = vsel %vm327, %v292, 0
      %v539 = vsel %vm327, %v293, 0
      %v542 = vsel %vm327, %v294, 0
      %v545 = vsel %vm327, %v295, 0
      %v548 = vsel %vm327, %v296, 0
      %v551 = vsel %vm327, %v297, 0
      %v554 = vsel %vm327, %v298, 0
      %v557 = vsel %vm327, %v299, 0
      %v560 = vsel %vm327, %v300, 0
      %v563 = vsel %vm327, %v301, 0
      %v566 = vsel %vm327, %v302, 0
      %v569 = vsel %vm327, %v303, 0
      %v572 = vsel %vm327, %v304, 0
      %v575 = vsel %vm327, %v305, 0
      %v578 = vsel %vm327, %v306, 0
      %v581 = vsel %vm327, %v307, 0
      %v584 = vsel %vm327, %v308, 0
      %v587 = vsel %vm327, %v309, 0
      %v590 = vsel %vm327, %v310, 0
      %v593 = vsel %vm327, %v311, 0
      %v596 = vsel %vm327, %v312, 0
      %v599 = vsel %vm327, %v313, 0
      %v602 = vsel %vm327, %v314, 0
      %v605 = vsel %vm327, %v315, 0
      %v608 = vsel %vm327, %v316, 0
      %v611 = vsel %vm327, %v317, 0
      %v614 = vsel %vm327, %v318, 0
      %v617 = vsel %vm327, %v319, 0
      %v620 = vsel %vm327, %v320, 0
      %vm622 = vcmask 1040384
      %v624 = vsel %vm622, %v322, 0
      %626 = vmatpush.msra.mxu0 0.0
      %627 = vmatpush.msra.mxu0 0.0
      %628 = vmatpush.msra.mxu0 0.0
      %629 = vmatpush.msra.mxu0 0.0
      %630 = vmatpush.msra.mxu0 0.0
      %631 = vmatpush.msra.mxu0 0.0
      %632 = vmatpush.msra.mxu0 0.0
      %633 = vmatpush.msra.mxu0 0.0
      %634 = vmatpush.msra.mxu0 0.0
      %635 = vmatpush.msra.mxu0 0.0
      %636 = vmatpush.msra.mxu0 0.0
      %637 = vmatpush.msra.mxu0 0.0
      %638 = vmatpush.msra.mxu0 0.0
      %639 = vmatpush.msra.mxu0 0.0
      %640 = vmatpush.msra.mxu0 %v624
      %641 = vmatpush.msra.mxu0 %v321
      %642 = vmatmul.f32.gmra.mxu0 %v329
      %v643 = vpop.f32.mrf.mxu0
      %v644 = vadd.f32 %v325, %v643
      %645 = vmatmul.f32.gmra.mxu0 %v332
      %v646 = vpop.f32.mrf.mxu0
      %v647 = vadd.f32 %v325, %v646
      %648 = vmatmul.f32.gmra.mxu0 %v335
      %v649 = vpop.f32.mrf.mxu0
      %v650 = vadd.f32 %v325, %v649
      %651 = vmatmul.f32.gmra.mxu0 %v338
      %v652 = vpop.f32.mrf.mxu0
      %v653 = vadd.f32 %v325, %v652
      %654 = vmatmul.f32.gmra.mxu0 %v341
      %v655 = vpop.f32.mrf.mxu0
      %v656 = vadd.f32 %v325, %v655
      %657 = vmatmul.f32.gmra.mxu0 %v344
      %v658 = vpop.f32.mrf.mxu0
      %v659 = vadd.f32 %v325, %v658
      %660 = vmatmul.f32.gmra.mxu0 %v347
      %v661 = vpop.f32.mrf.mxu0
      %v662 = vadd.f32 %v325, %v661
      %663 = vmatmul.f32.gmra.mxu0 %v350
      %v664 = vpop.f32.mrf.mxu0
      %v665 = vadd.f32 %v325, %v664
      %666 = vmatmul.f32.gmra.mxu0 %v353
      %v667 = vpop.f32.mrf.mxu0
      %v668 = vadd.f32 %v325, %v667
      %669 = vmatmul.f32.gmra.mxu0 %v356
      %v670 = vpop.f32.mrf.mxu0
      %v671 = vadd.f32 %v325, %v670
      %672 = vmatmul.f32.gmra.mxu0 %v359
      %v673 = vpop.f32.mrf.mxu0
      %v674 = vadd.f32 %v325, %v673
      %675 = vmatmul.f32.gmra.mxu0 %v362
      %v676 = vpop.f32.mrf.mxu0
      %v677 = vadd.f32 %v325, %v676
      %678 = vmatmul.f32.gmra.mxu0 %v365
      %v679 = vpop.f32.mrf.mxu0
      %v680 = vadd.f32 %v325, %v679
      %681 = vmatmul.f32.gmra.mxu0 %v368
      %v682 = vpop.f32.mrf.mxu0
      %v683 = vadd.f32 %v325, %v682
      %684 = vmatmul.f32.gmra.mxu0 %v371
      %v685 = vpop.f32.mrf.mxu0
      %v686 = vadd.f32 %v325, %v685
      %687 = vmatmul.f32.gmra.mxu0 %v374
      %v688 = vpop.f32.mrf.mxu0
      %v689 = vadd.f32 %v325, %v688
      %690 = vmatmul.f32.gmra.mxu0 %v377
      %v691 = vpop.f32.mrf.mxu0
      %v692 = vadd.f32 %v325, %v691
      %693 = vmatmul.f32.gmra.mxu0 %v380
      %v694 = vpop.f32.mrf.mxu0
      %v695 = vadd.f32 %v325, %v694
      %696 = vmatmul.f32.gmra.mxu0 %v383
      %v697 = vpop.f32.mrf.mxu0
      %v698 = vadd.f32 %v325, %v697
      %699 = vmatmul.f32.gmra.mxu0 %v386
      %v700 = vpop.f32.mrf.mxu0
      %v701 = vadd.f32 %v325, %v700
      %702 = vmatmul.f32.gmra.mxu0 %v389
      %v703 = vpop.f32.mrf.mxu0
      %v704 = vadd.f32 %v325, %v703
      %705 = vmatmul.f32.gmra.mxu0 %v392
      %v706 = vpop.f32.mrf.mxu0
      %v707 = vadd.f32 %v325, %v706
      %708 = vmatmul.f32.gmra.mxu0 %v395
      %v709 = vpop.f32.mrf.mxu0
      %v710 = vadd.f32 %v325, %v709
      %711 = vmatmul.f32.gmra.mxu0 %v398
      %v712 = vpop.f32.mrf.mxu0
      %v713 = vadd.f32 %v325, %v712
      %714 = vmatmul.f32.gmra.mxu0 %v401
      %v715 = vpop.f32.mrf.mxu0
      %v716 = vadd.f32 %v325, %v715
      %717 = vmatmul.f32.gmra.mxu0 %v404
      %v718 = vpop.f32.mrf.mxu0
      %v719 = vadd.f32 %v325, %v718
      %720 = vmatmul.f32.gmra.mxu0 %v407
      %v721 = vpop.f32.mrf.mxu0
      %v722 = vadd.f32 %v325, %v721
      %723 = vmatmul.f32.gmra.mxu0 %v410
      %v724 = vpop.f32.mrf.mxu0
      %v725 = vadd.f32 %v325, %v724
      %726 = vmatmul.f32.gmra.mxu0 %v413
      %v727 = vpop.f32.mrf.mxu0
      %v728 = vadd.f32 %v325, %v727
      %729 = vmatmul.f32.gmra.mxu0 %v416
      %v730 = vpop.f32.mrf.mxu0
      %v731 = vadd.f32 %v325, %v730
      %732 = vmatmul.f32.gmra.mxu0 %v419
      %v733 = vpop.f32.mrf.mxu0
      %v734 = vadd.f32 %v325, %v733
      %735 = vmatmul.f32.gmra.mxu0 %v422
      %v736 = vpop.f32.mrf.mxu0
      %v737 = vadd.f32 %v325, %v736
      %738 = vmatmul.f32.gmra.mxu0 %v425
      %v739 = vpop.f32.mrf.mxu0
      %v740 = vadd.f32 %v325, %v739
      %741 = vmatmul.f32.gmra.mxu0 %v428
      %v742 = vpop.f32.mrf.mxu0
      %v743 = vadd.f32 %v325, %v742
      %744 = vmatmul.f32.gmra.mxu0 %v431
      %v745 = vpop.f32.mrf.mxu0
      %v746 = vadd.f32 %v325, %v745
      %747 = vmatmul.f32.gmra.mxu0 %v434
      %v748 = vpop.f32.mrf.mxu0
      %v749 = vadd.f32 %v325, %v748
      %750 = vmatmul.f32.gmra.mxu0 %v437
      %v751 = vpop.f32.mrf.mxu0
      %v752 = vadd.f32 %v325, %v751
      %753 = vmatmul.f32.gmra.mxu0 %v440
      %v754 = vpop.f32.mrf.mxu0
      %v755 = vadd.f32 %v325, %v754
      %756 = vmatmul.f32.gmra.mxu0 %v443
      %v757 = vpop.f32.mrf.mxu0
      %v758 = vadd.f32 %v325, %v757
      %759 = vmatmul.f32.gmra.mxu0 %v446
      %v760 = vpop.f32.mrf.mxu0
      %v761 = vadd.f32 %v325, %v760
      %762 = vmatmul.f32.gmra.mxu0 %v449
      %v763 = vpop.f32.mrf.mxu0
      %v764 = vadd.f32 %v325, %v763
      %765 = vmatmul.f32.gmra.mxu0 %v452
      %v766 = vpop.f32.mrf.mxu0
      %v767 = vadd.f32 %v325, %v766
      %768 = vmatmul.f32.gmra.mxu0 %v455
      %v769 = vpop.f32.mrf.mxu0
      %v770 = vadd.f32 %v325, %v769
      %771 = vmatmul.f32.gmra.mxu0 %v458
      %v772 = vpop.f32.mrf.mxu0
      %v773 = vadd.f32 %v325, %v772
      %774 = vmatmul.f32.gmra.mxu0 %v461
      %v775 = vpop.f32.mrf.mxu0
      %v776 = vadd.f32 %v325, %v775
      %777 = vmatmul.f32.gmra.mxu0 %v464
      %v778 = vpop.f32.mrf.mxu0
      %v779 = vadd.f32 %v325, %v778
      %780 = vmatmul.f32.gmra.mxu0 %v467
      %v781 = vpop.f32.mrf.mxu0
      %v782 = vadd.f32 %v325, %v781
      %783 = vmatmul.f32.gmra.mxu0 %v470
      %v784 = vpop.f32.mrf.mxu0
      %v785 = vadd.f32 %v325, %v784
      %786 = vmatmul.f32.gmra.mxu0 %v473
      %v787 = vpop.f32.mrf.mxu0
      %v788 = vadd.f32 %v325, %v787
      %789 = vmatmul.f32.gmra.mxu0 %v476
      %v790 = vpop.f32.mrf.mxu0
      %v791 = vadd.f32 %v325, %v790
      %792 = vmatmul.f32.gmra.mxu0 %v479
      %v793 = vpop.f32.mrf.mxu0
      %v794 = vadd.f32 %v325, %v793
      %795 = vmatmul.f32.gmra.mxu0 %v482
      %v796 = vpop.f32.mrf.mxu0
      %v797 = vadd.f32 %v325, %v796
      %798 = vmatmul.f32.gmra.mxu0 %v485
      %v799 = vpop.f32.mrf.mxu0
      %v800 = vadd.f32 %v325, %v799
      %801 = vmatmul.f32.gmra.mxu0 %v488
      %v802 = vpop.f32.mrf.mxu0
      %v803 = vadd.f32 %v325, %v802
      %804 = vmatmul.f32.gmra.mxu0 %v491
      %v805 = vpop.f32.mrf.mxu0
      %v806 = vadd.f32 %v325, %v805
      %807 = vmatmul.f32.gmra.mxu0 %v494
      %v808 = vpop.f32.mrf.mxu0
      %v809 = vadd.f32 %v325, %v808
      %810 = vmatmul.f32.gmra.mxu0 %v497
      %v811 = vpop.f32.mrf.mxu0
      %v812 = vadd.f32 %v325, %v811
      %813 = vmatmul.f32.gmra.mxu0 %v500
      %v814 = vpop.f32.mrf.mxu0
      %v815 = vadd.f32 %v325, %v814
      %816 = vmatmul.f32.gmra.mxu0 %v503
      %v817 = vpop.f32.mrf.mxu0
      %v818 = vadd.f32 %v325, %v817
      %819 = vmatmul.f32.gmra.mxu0 %v506
      %v820 = vpop.f32.mrf.mxu0
      %v821 = vadd.f32 %v325, %v820
      %822 = vmatmul.f32.gmra.mxu0 %v509
      %v823 = vpop.f32.mrf.mxu0
      %v824 = vadd.f32 %v325, %v823
      %825 = vmatmul.f32.gmra.mxu0 %v512
      %v826 = vpop.f32.mrf.mxu0
      %v827 = vadd.f32 %v325, %v826
      %828 = vmatmul.f32.gmra.mxu0 %v515
      %v829 = vpop.f32.mrf.mxu0
      %v830 = vadd.f32 %v325, %v829
      %831 = vmatmul.f32.gmra.mxu0 %v518
      %v832 = vpop.f32.mrf.mxu0
      %v833 = vadd.f32 %v325, %v832
      %834 = vmatmul.f32.gmra.mxu0 %v521
      %v835 = vpop.f32.mrf.mxu0
      %v836 = vadd.f32 %v325, %v835
      %837 = vmatmul.f32.gmra.mxu0 %v524
      %v838 = vpop.f32.mrf.mxu0
      %v839 = vadd.f32 %v325, %v838
      %840 = vmatmul.f32.gmra.mxu0 %v527
      %v841 = vpop.f32.mrf.mxu0
      %v842 = vadd.f32 %v325, %v841
      %843 = vmatmul.f32.gmra.mxu0 %v530
      %v844 = vpop.f32.mrf.mxu0
      %v845 = vadd.f32 %v325, %v844
      %846 = vmatmul.f32.gmra.mxu0 %v533
      %v847 = vpop.f32.mrf.mxu0
      %v848 = vadd.f32 %v325, %v847
      %849 = vmatmul.f32.gmra.mxu0 %v536
      %v850 = vpop.f32.mrf.mxu0
      %v851 = vadd.f32 %v325, %v850
      %852 = vmatmul.f32.gmra.mxu0 %v539
      %v853 = vpop.f32.mrf.mxu0
      %v854 = vadd.f32 %v325, %v853
      %855 = vmatmul.f32.gmra.mxu0 %v542
      %v856 = vpop.f32.mrf.mxu0
      %v857 = vadd.f32 %v325, %v856
      %858 = vmatmul.f32.gmra.mxu0 %v545
      %v859 = vpop.f32.mrf.mxu0
      %v860 = vadd.f32 %v325, %v859
      %861 = vmatmul.f32.gmra.mxu0 %v548
      %v862 = vpop.f32.mrf.mxu0
      %v863 = vadd.f32 %v325, %v862
      %864 = vmatmul.f32.gmra.mxu0 %v551
      %v865 = vpop.f32.mrf.mxu0
      %v866 = vadd.f32 %v325, %v865
      %867 = vmatmul.f32.gmra.mxu0 %v554
      %v868 = vpop.f32.mrf.mxu0
      %v869 = vadd.f32 %v325, %v868
      %870 = vmatmul.f32.gmra.mxu0 %v557
      %v871 = vpop.f32.mrf.mxu0
      %v872 = vadd.f32 %v325, %v871
      %873 = vmatmul.f32.gmra.mxu0 %v560
      %v874 = vpop.f32.mrf.mxu0
      %v875 = vadd.f32 %v325, %v874
      %876 = vmatmul.f32.gmra.mxu0 %v563
      %v877 = vpop.f32.mrf.mxu0
      %v878 = vadd.f32 %v325, %v877
      %879 = vmatmul.f32.gmra.mxu0 %v566
      %v880 = vpop.f32.mrf.mxu0
      %v881 = vadd.f32 %v325, %v880
      %882 = vmatmul.f32.gmra.mxu0 %v569
      %v883 = vpop.f32.mrf.mxu0
      %v884 = vadd.f32 %v325, %v883
      %885 = vmatmul.f32.gmra.mxu0 %v572
      %v886 = vpop.f32.mrf.mxu0
      %v887 = vadd.f32 %v325, %v886
      %888 = vmatmul.f32.gmra.mxu0 %v575
      %v889 = vpop.f32.mrf.mxu0
      %v890 = vadd.f32 %v325, %v889
      %891 = vmatmul.f32.gmra.mxu0 %v578
      %v892 = vpop.f32.mrf.mxu0
      %v893 = vadd.f32 %v325, %v892
      %894 = vmatmul.f32.gmra.mxu0 %v581
      %v895 = vpop.f32.mrf.mxu0
      %v896 = vadd.f32 %v325, %v895
      %897 = vmatmul.f32.gmra.mxu0 %v584
      %v898 = vpop.f32.mrf.mxu0
      %v899 = vadd.f32 %v325, %v898
      %900 = vmatmul.f32.gmra.mxu0 %v587
      %v901 = vpop.f32.mrf.mxu0
      %v902 = vadd.f32 %v325, %v901
      %903 = vmatmul.f32.gmra.mxu0 %v590
      %v904 = vpop.f32.mrf.mxu0
      %v905 = vadd.f32 %v325, %v904
      %906 = vmatmul.f32.gmra.mxu0 %v593
      %v907 = vpop.f32.mrf.mxu0
      %v908 = vadd.f32 %v325, %v907
      %909 = vmatmul.f32.gmra.mxu0 %v596
      %v910 = vpop.f32.mrf.mxu0
      %v911 = vadd.f32 %v325, %v910
      %912 = vmatmul.f32.gmra.mxu0 %v599
      %v913 = vpop.f32.mrf.mxu0
      %v914 = vadd.f32 %v325, %v913
      %915 = vmatmul.f32.gmra.mxu0 %v602
      %v916 = vpop.f32.mrf.mxu0
      %v917 = vadd.f32 %v325, %v916
      %918 = vmatmul.f32.gmra.mxu0 %v605
      %v919 = vpop.f32.mrf.mxu0
      %v920 = vadd.f32 %v325, %v919
      %921 = vmatmul.f32.gmra.mxu0 %v608
      %v922 = vpop.f32.mrf.mxu0
      %v923 = vadd.f32 %v325, %v922
      %924 = vmatmul.f32.gmra.mxu0 %v611
      %v925 = vpop.f32.mrf.mxu0
      %v926 = vadd.f32 %v325, %v925
      %927 = vmatmul.f32.gmra.mxu0 %v614
      %v928 = vpop.f32.mrf.mxu0
      %v929 = vadd.f32 %v325, %v928
      %930 = vmatmul.f32.gmra.mxu0 %v617
      %v931 = vpop.f32.mrf.mxu0
      %v932 = vadd.f32 %v325, %v931
      %933 = vmatmul.f32.gmra.mxu0 %v620
      %v934 = vpop.f32.mrf.mxu0
      %v935 = vadd.f32 %v325, %v934
      %936 = vdwg.mxu0
      %v937 = vmax.f32 %v644, 0.0
      %v938 = vmax.f32 %v647, 0.0
      %v939 = vmax.f32 %v650, 0.0
      %v940 = vmax.f32 %v653, 0.0
      %v941 = vmax.f32 %v656, 0.0
      %v942 = vmax.f32 %v659, 0.0
      %v943 = vmax.f32 %v662, 0.0
      %v944 = vmax.f32 %v665, 0.0
      %v945 = vmax.f32 %v668, 0.0
      %v946 = vmax.f32 %v671, 0.0
      %v947 = vmax.f32 %v674, 0.0
      %v948 = vmax.f32 %v677, 0.0
      %v949 = vmax.f32 %v680, 0.0
      %v950 = vmax.f32 %v683, 0.0
      %v951 = vmax.f32 %v686, 0.0
      %v952 = vmax.f32 %v689, 0.0
      %v953 = vmax.f32 %v692, 0.0
      %v954 = vmax.f32 %v695, 0.0
      %v955 = vmax.f32 %v698, 0.0
      %v956 = vmax.f32 %v701, 0.0
      %v957 = vmax.f32 %v704, 0.0
      %v958 = vmax.f32 %v707, 0.0
      %v959 = vmax.f32 %v710, 0.0
      %v960 = vmax.f32 %v713, 0.0
      %v961 = vmax.f32 %v716, 0.0
      %v962 = vmax.f32 %v719, 0.0
      %v963 = vmax.f32 %v722, 0.0
      %v964 = vmax.f32 %v725, 0.0
      %v965 = vmax.f32 %v728, 0.0
      %v966 = vmax.f32 %v731, 0.0
      %v967 = vmax.f32 %v734, 0.0
      %v968 = vmax.f32 %v737, 0.0
      %v969 = vmax.f32 %v740, 0.0
      %v970 = vmax.f32 %v743, 0.0
      %v971 = vmax.f32 %v746, 0.0
      %v972 = vmax.f32 %v749, 0.0
      %v973 = vmax.f32 %v752, 0.0
      %v974 = vmax.f32 %v755, 0.0
      %v975 = vmax.f32 %v758, 0.0
      %v976 = vmax.f32 %v761, 0.0
      %v977 = vmax.f32 %v764, 0.0
      %v978 = vmax.f32 %v767, 0.0
      %v979 = vmax.f32 %v770, 0.0
      %v980 = vmax.f32 %v773, 0.0
      %v981 = vmax.f32 %v776, 0.0
      %v982 = vmax.f32 %v779, 0.0
      %v983 = vmax.f32 %v782, 0.0
      %v984 = vmax.f32 %v785, 0.0
      %v985 = vmax.f32 %v788, 0.0
      %v986 = vmax.f32 %v791, 0.0
      %v987 = vmax.f32 %v794, 0.0
      %v988 = vmax.f32 %v797, 0.0
      %v989 = vmax.f32 %v800, 0.0
      %v990 = vmax.f32 %v803, 0.0
      %v991 = vmax.f32 %v806, 0.0
      %v992 = vmax.f32 %v809, 0.0
      %v993 = vmax.f32 %v812, 0.0
      %v994 = vmax.f32 %v815, 0.0
      %v995 = vmax.f32 %v818, 0.0
      %v996 = vmax.f32 %v821, 0.0
      %v997 = vmax.f32 %v824, 0.0
      %v998 = vmax.f32 %v827, 0.0
      %v999 = vmax.f32 %v830, 0.0
      %v1000 = vmax.f32 %v833, 0.0
      %v1001 = vmax.f32 %v836, 0.0
      %v1002 = vmax.f32 %v839, 0.0
      %v1003 = vmax.f32 %v842, 0.0
      %v1004 = vmax.f32 %v845, 0.0
      %v1005 = vmax.f32 %v848, 0.0
      %v1006 = vmax.f32 %v851, 0.0
      %v1007 = vmax.f32 %v854, 0.0
      %v1008 = vmax.f32 %v857, 0.0
      %v1009 = vmax.f32 %v860, 0.0
      %v1010 = vmax.f32 %v863, 0.0
      %v1011 = vmax.f32 %v866, 0.0
      %v1012 = vmax.f32 %v869, 0.0
      %v1013 = vmax.f32 %v872, 0.0
      %v1014 = vmax.f32 %v875, 0.0
      %v1015 = vmax.f32 %v878, 0.0
      %v1016 = vmax.f32 %v881, 0.0
      %v1017 = vmax.f32 %v884, 0.0
      %v1018 = vmax.f32 %v887, 0.0
      %v1019 = vmax.f32 %v890, 0.0
      %v1020 = vmax.f32 %v893, 0.0
      %v1021 = vmax.f32 %v896, 0.0
      %v1022 = vmax.f32 %v899, 0.0
      %v1023 = vmax.f32 %v902, 0.0
      %v1024 = vmax.f32 %v905, 0.0
      %v1025 = vmax.f32 %v908, 0.0
      %v1026 = vmax.f32 %v911, 0.0
      %v1027 = vmax.f32 %v914, 0.0
      %v1028 = vmax.f32 %v917, 0.0
      %v1029 = vmax.f32 %v920, 0.0
      %v1030 = vmax.f32 %v923, 0.0
      %v1031 = vmax.f32 %v926, 0.0
      %v1032 = vmax.f32 %v929, 0.0
      %v1033 = vmax.f32 %v932, 0.0
      %v1034 = vmax.f32 %v935, 0.0
      %v1035 = vld [vmem:[%s215] sm:$0xff]
      %v1036 = vld [vmem:[%s215 + $0x8] sm:$0xff]
      %v1037 = vld [vmem:[%s215 + $0x10] sm:$0xff]
      %v1038 = vld [vmem:[%s215 + $0x18] sm:$0xff]
      %v1039 = vld [vmem:[%s215 + $0x20] sm:$0xff]
      %v1040 = vld [vmem:[%s215 + $0x28] sm:$0xff]
      %v1041 = vld [vmem:[%s215 + $0x30] sm:$0xff]
      %v1042 = vld [vmem:[%s215 + $0x38] sm:$0xff]
      %v1043 = vld [vmem:[%s215 + $0x40] sm:$0xff]
      %v1044 = vld [vmem:[%s215 + $0x48] sm:$0xff]
      %v1045 = vld [vmem:[%s215 + $0x50] sm:$0xff]
      %v1046 = vld [vmem:[%s215 + $0x58] sm:$0xff]
      %v1047 = vld [vmem:[%s215 + $0x60] sm:$0xff]
      %v1048 = vld [vmem:[%s215 + $0x68] sm:$0xff]
      %v1049 = vld [vmem:[%s215 + $0x70] sm:$0xff]
      %v1050 = vld [vmem:[%s215 + $0x78] sm:$0xff]
      %v1051 = vld [vmem:[%s215 + $0x80] sm:$0xff]
      %v1052 = vld [vmem:[%s215 + $0x88] sm:$0xff]
      %v1053 = vld [vmem:[%s215 + $0x90] sm:$0xff]
      %v1054 = vld [vmem:[%s215 + $0x98] sm:$0xff]
      %v1055 = vld [vmem:[%s215 + $0xa0] sm:$0xff]
      %v1056 = vld [vmem:[%s215 + $0xa8] sm:$0xff]
      %v1057 = vld [vmem:[%s215 + $0xb0] sm:$0xff]
      %v1058 = vld [vmem:[%s215 + $0xb8] sm:$0xff]
      %v1059 = vld [vmem:[%s215 + $0xc0] sm:$0xff]
      %v1060 = vld [vmem:[%s215 + $0xc8] sm:$0xff]
      %v1061 = vld [vmem:[%s215 + $0xd0] sm:$0xff]
      %v1062 = vld [vmem:[%s215 + $0xd8] sm:$0xff]
      %v1063 = vld [vmem:[%s215 + $0xe0] sm:$0xff]
      %v1064 = vld [vmem:[%s215 + $0xe8] sm:$0xff]
      %v1065 = vld [vmem:[%s215 + $0xf0] sm:$0xff]
      %v1066 = vld [vmem:[%s215 + $0xf8] sm:$0xff]
      %v1067 = vld [vmem:[%s215 + $0x100] sm:$0xff]
      %v1068 = vld [vmem:[%s215 + $0x108] sm:$0xff]
      %v1069 = vld [vmem:[%s215 + $0x110] sm:$0xff]
      %v1070 = vld [vmem:[%s215 + $0x118] sm:$0xff]
      %v1071 = vld [vmem:[%s215 + $0x120] sm:$0xff]
      %v1072 = vld [vmem:[%s215 + $0x128] sm:$0xff]
      %v1073 = vld [vmem:[%s215 + $0x130] sm:$0xff]
      %v1074 = vld [vmem:[%s215 + $0x138] sm:$0xff]
      %v1075 = vld [vmem:[%s215 + $0x140] sm:$0xff]
      %v1076 = vld [vmem:[%s215 + $0x148] sm:$0xff]
      %v1077 = vld [vmem:[%s215 + $0x150] sm:$0xff]
      %v1078 = vld [vmem:[%s215 + $0x158] sm:$0xff]
      %v1079 = vld [vmem:[%s215 + $0x160] sm:$0xff]
      %v1080 = vld [vmem:[%s215 + $0x168] sm:$0xff]
      %v1081 = vld [vmem:[%s215 + $0x170] sm:$0xff]
      %v1082 = vld [vmem:[%s215 + $0x178] sm:$0xff]
      %v1083 = vld [vmem:[%s215 + $0x180] sm:$0xff]
      %v1084 = vld [vmem:[%s215 + $0x188] sm:$0xff]
      %v1085 = vld [vmem:[%s215 + $0x190] sm:$0xff]
      %v1086 = vld [vmem:[%s215 + $0x198] sm:$0xff]
      %v1087 = vld [vmem:[%s215 + $0x1a0] sm:$0xff]
      %v1088 = vld [vmem:[%s215 + $0x1a8] sm:$0xff]
      %v1089 = vld [vmem:[%s215 + $0x1b0] sm:$0xff]
      %v1090 = vld [vmem:[%s215 + $0x1b8] sm:$0xff]
      %v1091 = vld [vmem:[%s215 + $0x1c0] sm:$0xff]
      %v1092 = vld [vmem:[%s215 + $0x1c8] sm:$0xff]
      %v1093 = vld [vmem:[%s215 + $0x1d0] sm:$0xff]
      %v1094 = vld [vmem:[%s215 + $0x1d8] sm:$0xff]
      %v1095 = vld [vmem:[%s215 + $0x1e0] sm:$0xff]
      %v1096 = vld [vmem:[%s215 + $0x1e8] sm:$0xff]
      %v1097 = vld [vmem:[%s215 + $0x1f0] sm:$0xff]
      %v1098 = vld [vmem:[%s215 + $0x1f8] sm:$0xff]
      %v1099 = vld [vmem:[%s215 + $0x200] sm:$0xff]
      %v1100 = vld [vmem:[%s215 + $0x208] sm:$0xff]
      %v1101 = vld [vmem:[%s215 + $0x210] sm:$0xff]
      %v1102 = vld [vmem:[%s215 + $0x218] sm:$0xff]
      %v1103 = vld [vmem:[%s215 + $0x220] sm:$0xff]
      %v1104 = vld [vmem:[%s215 + $0x228] sm:$0xff]
      %v1105 = vld [vmem:[%s215 + $0x230] sm:$0xff]
      %v1106 = vld [vmem:[%s215 + $0x238] sm:$0xff]
      %v1107 = vld [vmem:[%s215 + $0x240] sm:$0xff]
      %v1108 = vld [vmem:[%s215 + $0x248] sm:$0xff]
      %v1109 = vld [vmem:[%s215 + $0x250] sm:$0xff]
      %v1110 = vld [vmem:[%s215 + $0x258] sm:$0xff]
      %v1111 = vld [vmem:[%s215 + $0x260] sm:$0xff]
      %v1112 = vld [vmem:[%s215 + $0x268] sm:$0xff]
      %v1113 = vld [vmem:[%s215 + $0x270] sm:$0xff]
      %v1114 = vld [vmem:[%s215 + $0x278] sm:$0xff]
      %v1115 = vld [vmem:[%s215 + $0x280] sm:$0xff]
      %v1116 = vld [vmem:[%s215 + $0x288] sm:$0xff]
      %v1117 = vld [vmem:[%s215 + $0x290] sm:$0xff]
      %v1118 = vld [vmem:[%s215 + $0x298] sm:$0xff]
      %v1119 = vld [vmem:[%s215 + $0x2a0] sm:$0xff]
      %v1120 = vld [vmem:[%s215 + $0x2a8] sm:$0xff]
      %v1121 = vld [vmem:[%s215 + $0x2b0] sm:$0xff]
      %v1122 = vld [vmem:[%s215 + $0x2b8] sm:$0xff]
      %v1123 = vld [vmem:[%s215 + $0x2c0] sm:$0xff]
      %v1124 = vld [vmem:[%s215 + $0x2c8] sm:$0xff]
      %v1125 = vld [vmem:[%s215 + $0x2d0] sm:$0xff]
      %v1126 = vld [vmem:[%s215 + $0x2d8] sm:$0xff]
      %v1127 = vld [vmem:[%s215 + $0x2e0] sm:$0xff]
      %v1128 = vld [vmem:[%s215 + $0x2e8] sm:$0xff]
      %v1129 = vld [vmem:[%s215 + $0x2f0] sm:$0xff]
      %v1130 = vld [vmem:[%s215 + $0x2f8] sm:$0xff]
      %v1131 = vld [vmem:[%s215 + $0x300] sm:$0xff]
      %v1132 = vld [vmem:[%s215 + $0x308] sm:$0xff]
      %1134 = vset.pattern.permute.xlu0 0
      %1135 = vperm.xlu0 %1134, %v1035
      %v1136 = vpop.permute.xlu0 %1135
      %1139 = vset.pattern.permute.xlu0 0
      %1140 = vperm.xlu0 %1139, %v1036
      %v1141 = vpop.permute.xlu0 %1140
      %1144 = vset.pattern.permute.xlu0 0
      %1145 = vperm.xlu0 %1144, %v1037
      %v1146 = vpop.permute.xlu0 %1145
      %1149 = vset.pattern.permute.xlu0 0
      %1150 = vperm.xlu0 %1149, %v1038
      %v1151 = vpop.permute.xlu0 %1150
      %1154 = vset.pattern.permute.xlu0 0
      %1155 = vperm.xlu0 %1154, %v1039
      %v1156 = vpop.permute.xlu0 %1155
      %1159 = vset.pattern.permute.xlu0 0
      %1160 = vperm.xlu0 %1159, %v1040
      %v1161 = vpop.permute.xlu0 %1160
      %1164 = vset.pattern.permute.xlu0 0
      %1165 = vperm.xlu0 %1164, %v1041
      %v1166 = vpop.permute.xlu0 %1165
      %1169 = vset.pattern.permute.xlu0 0
      %1170 = vperm.xlu0 %1169, %v1042
      %v1171 = vpop.permute.xlu0 %1170
      %1174 = vset.pattern.permute.xlu0 0
      %1175 = vperm.xlu0 %1174, %v1043
      %v1176 = vpop.permute.xlu0 %1175
      %1179 = vset.pattern.permute.xlu0 0
      %1180 = vperm.xlu0 %1179, %v1044
      %v1181 = vpop.permute.xlu0 %1180
      %1184 = vset.pattern.permute.xlu0 0
      %1185 = vperm.xlu0 %1184, %v1045
      %v1186 = vpop.permute.xlu0 %1185
      %1189 = vset.pattern.permute.xlu0 0
      %1190 = vperm.xlu0 %1189, %v1046
      %v1191 = vpop.permute.xlu0 %1190
      %1194 = vset.pattern.permute.xlu0 0
      %1195 = vperm.xlu0 %1194, %v1047
      %v1196 = vpop.permute.xlu0 %1195
      %1199 = vset.pattern.permute.xlu0 0
      %1200 = vperm.xlu0 %1199, %v1048
      %v1201 = vpop.permute.xlu0 %1200
      %1204 = vset.pattern.permute.xlu0 0
      %1205 = vperm.xlu0 %1204, %v1049
      %v1206 = vpop.permute.xlu0 %1205
      %1209 = vset.pattern.permute.xlu0 0
      %1210 = vperm.xlu0 %1209, %v1050
      %v1211 = vpop.permute.xlu0 %1210
      %1214 = vset.pattern.permute.xlu0 0
      %1215 = vperm.xlu0 %1214, %v1051
      %v1216 = vpop.permute.xlu0 %1215
      %1219 = vset.pattern.permute.xlu0 0
      %1220 = vperm.xlu0 %1219, %v1052
      %v1221 = vpop.permute.xlu0 %1220
      %1224 = vset.pattern.permute.xlu0 0
      %1225 = vperm.xlu0 %1224, %v1053
      %v1226 = vpop.permute.xlu0 %1225
      %1229 = vset.pattern.permute.xlu0 0
      %1230 = vperm.xlu0 %1229, %v1054
      %v1231 = vpop.permute.xlu0 %1230
      %1234 = vset.pattern.permute.xlu0 0
      %1235 = vperm.xlu0 %1234, %v1055
      %v1236 = vpop.permute.xlu0 %1235
      %1239 = vset.pattern.permute.xlu0 0
      %1240 = vperm.xlu0 %1239, %v1056
      %v1241 = vpop.permute.xlu0 %1240
      %1244 = vset.pattern.permute.xlu0 0
      %1245 = vperm.xlu0 %1244, %v1057
      %v1246 = vpop.permute.xlu0 %1245
      %1249 = vset.pattern.permute.xlu0 0
      %1250 = vperm.xlu0 %1249, %v1058
      %v1251 = vpop.permute.xlu0 %1250
      %1254 = vset.pattern.permute.xlu0 0
      %1255 = vperm.xlu0 %1254, %v1059
      %v1256 = vpop.permute.xlu0 %1255
      %1259 = vset.pattern.permute.xlu0 0
      %1260 = vperm.xlu0 %1259, %v1060
      %v1261 = vpop.permute.xlu0 %1260
      %1264 = vset.pattern.permute.xlu0 0
      %1265 = vperm.xlu0 %1264, %v1061
      %v1266 = vpop.permute.xlu0 %1265
      %1269 = vset.pattern.permute.xlu0 0
      %1270 = vperm.xlu0 %1269, %v1062
      %v1271 = vpop.permute.xlu0 %1270
      %1274 = vset.pattern.permute.xlu0 0
      %1275 = vperm.xlu0 %1274, %v1063
      %v1276 = vpop.permute.xlu0 %1275
      %1279 = vset.pattern.permute.xlu0 0
      %1280 = vperm.xlu0 %1279, %v1064
      %v1281 = vpop.permute.xlu0 %1280
      %1284 = vset.pattern.permute.xlu0 0
      %1285 = vperm.xlu0 %1284, %v1065
      %v1286 = vpop.permute.xlu0 %1285
      %1289 = vset.pattern.permute.xlu0 0
      %1290 = vperm.xlu0 %1289, %v1066
      %v1291 = vpop.permute.xlu0 %1290
      %1294 = vset.pattern.permute.xlu0 0
      %1295 = vperm.xlu0 %1294, %v1067
      %v1296 = vpop.permute.xlu0 %1295
      %1299 = vset.pattern.permute.xlu0 0
      %1300 = vperm.xlu0 %1299, %v1068
      %v1301 = vpop.permute.xlu0 %1300
      %1304 = vset.pattern.permute.xlu0 0
      %1305 = vperm.xlu0 %1304, %v1069
      %v1306 = vpop.permute.xlu0 %1305
      %1309 = vset.pattern.permute.xlu0 0
      %1310 = vperm.xlu0 %1309, %v1070
      %v1311 = vpop.permute.xlu0 %1310
      %1314 = vset.pattern.permute.xlu0 0
      %1315 = vperm.xlu0 %1314, %v1071
      %v1316 = vpop.permute.xlu0 %1315
      %1319 = vset.pattern.permute.xlu0 0
      %1320 = vperm.xlu0 %1319, %v1072
      %v1321 = vpop.permute.xlu0 %1320
      %1324 = vset.pattern.permute.xlu0 0
      %1325 = vperm.xlu0 %1324, %v1073
      %v1326 = vpop.permute.xlu0 %1325
      %1329 = vset.pattern.permute.xlu0 0
      %1330 = vperm.xlu0 %1329, %v1074
      %v1331 = vpop.permute.xlu0 %1330
      %1334 = vset.pattern.permute.xlu0 0
      %1335 = vperm.xlu0 %1334, %v1075
      %v1336 = vpop.permute.xlu0 %1335
      %1339 = vset.pattern.permute.xlu0 0
      %1340 = vperm.xlu0 %1339, %v1076
      %v1341 = vpop.permute.xlu0 %1340
      %1344 = vset.pattern.permute.xlu0 0
      %1345 = vperm.xlu0 %1344, %v1077
      %v1346 = vpop.permute.xlu0 %1345
      %1349 = vset.pattern.permute.xlu0 0
      %1350 = vperm.xlu0 %1349, %v1078
      %v1351 = vpop.permute.xlu0 %1350
      %1354 = vset.pattern.permute.xlu0 0
      %1355 = vperm.xlu0 %1354, %v1079
      %v1356 = vpop.permute.xlu0 %1355
      %1359 = vset.pattern.permute.xlu0 0
      %1360 = vperm.xlu0 %1359, %v1080
      %v1361 = vpop.permute.xlu0 %1360
      %1364 = vset.pattern.permute.xlu0 0
      %1365 = vperm.xlu0 %1364, %v1081
      %v1366 = vpop.permute.xlu0 %1365
      %1369 = vset.pattern.permute.xlu0 0
      %1370 = vperm.xlu0 %1369, %v1082
      %v1371 = vpop.permute.xlu0 %1370
      %1374 = vset.pattern.permute.xlu0 0
      %1375 = vperm.xlu0 %1374, %v1083
      %v1376 = vpop.permute.xlu0 %1375
      %1379 = vset.pattern.permute.xlu0 0
      %1380 = vperm.xlu0 %1379, %v1084
      %v1381 = vpop.permute.xlu0 %1380
      %1384 = vset.pattern.permute.xlu0 0
      %1385 = vperm.xlu0 %1384, %v1085
      %v1386 = vpop.permute.xlu0 %1385
      %1389 = vset.pattern.permute.xlu0 0
      %1390 = vperm.xlu0 %1389, %v1086
      %v1391 = vpop.permute.xlu0 %1390
      %1394 = vset.pattern.permute.xlu0 0
      %1395 = vperm.xlu0 %1394, %v1087
      %v1396 = vpop.permute.xlu0 %1395
      %1399 = vset.pattern.permute.xlu0 0
      %1400 = vperm.xlu0 %1399, %v1088
      %v1401 = vpop.permute.xlu0 %1400
      %1404 = vset.pattern.permute.xlu0 0
      %1405 = vperm.xlu0 %1404, %v1089
      %v1406 = vpop.permute.xlu0 %1405
      %1409 = vset.pattern.permute.xlu0 0
      %1410 = vperm.xlu0 %1409, %v1090
      %v1411 = vpop.permute.xlu0 %1410
      %1414 = vset.pattern.permute.xlu0 0
      %1415 = vperm.xlu0 %1414, %v1091
      %v1416 = vpop.permute.xlu0 %1415
      %1419 = vset.pattern.permute.xlu0 0
      %1420 = vperm.xlu0 %1419, %v1092
      %v1421 = vpop.permute.xlu0 %1420
      %1424 = vset.pattern.permute.xlu0 0
      %1425 = vperm.xlu0 %1424, %v1093
      %v1426 = vpop.permute.xlu0 %1425
      %1429 = vset.pattern.permute.xlu0 0
      %1430 = vperm.xlu0 %1429, %v1094
      %v1431 = vpop.permute.xlu0 %1430
      %1434 = vset.pattern.permute.xlu0 0
      %1435 = vperm.xlu0 %1434, %v1095
      %v1436 = vpop.permute.xlu0 %1435
      %1439 = vset.pattern.permute.xlu0 0
      %1440 = vperm.xlu0 %1439, %v1096
      %v1441 = vpop.permute.xlu0 %1440
      %1444 = vset.pattern.permute.xlu0 0
      %1445 = vperm.xlu0 %1444, %v1097
      %v1446 = vpop.permute.xlu0 %1445
      %1449 = vset.pattern.permute.xlu0 0
      %1450 = vperm.xlu0 %1449, %v1098
      %v1451 = vpop.permute.xlu0 %1450
      %1454 = vset.pattern.permute.xlu0 0
      %1455 = vperm.xlu0 %1454, %v1099
      %v1456 = vpop.permute.xlu0 %1455
      %1459 = vset.pattern.permute.xlu0 0
      %1460 = vperm.xlu0 %1459, %v1100
      %v1461 = vpop.permute.xlu0 %1460
      %1464 = vset.pattern.permute.xlu0 0
      %1465 = vperm.xlu0 %1464, %v1101
      %v1466 = vpop.permute.xlu0 %1465
      %1469 = vset.pattern.permute.xlu0 0
      %1470 = vperm.xlu0 %1469, %v1102
      %v1471 = vpop.permute.xlu0 %1470
      %1474 = vset.pattern.permute.xlu0 0
      %1475 = vperm.xlu0 %1474, %v1103
      %v1476 = vpop.permute.xlu0 %1475
      %1479 = vset.pattern.permute.xlu0 0
      %1480 = vperm.xlu0 %1479, %v1104
      %v1481 = vpop.permute.xlu0 %1480
      %1484 = vset.pattern.permute.xlu0 0
      %1485 = vperm.xlu0 %1484, %v1105
      %v1486 = vpop.permute.xlu0 %1485
      %1489 = vset.pattern.permute.xlu0 0
      %1490 = vperm.xlu0 %1489, %v1106
      %v1491 = vpop.permute.xlu0 %1490
      %1494 = vset.pattern.permute.xlu0 0
      %1495 = vperm.xlu0 %1494, %v1107
      %v1496 = vpop.permute.xlu0 %1495
      %1499 = vset.pattern.permute.xlu0 0
      %1500 = vperm.xlu0 %1499, %v1108
      %v1501 = vpop.permute.xlu0 %1500
      %1504 = vset.pattern.permute.xlu0 0
      %1505 = vperm.xlu0 %1504, %v1109
      %v1506 = vpop.permute.xlu0 %1505
      %1509 = vset.pattern.permute.xlu0 0
      %1510 = vperm.xlu0 %1509, %v1110
      %v1511 = vpop.permute.xlu0 %1510
      %1514 = vset.pattern.permute.xlu0 0
      %1515 = vperm.xlu0 %1514, %v1111
      %v1516 = vpop.permute.xlu0 %1515
      %1519 = vset.pattern.permute.xlu0 0
      %1520 = vperm.xlu0 %1519, %v1112
      %v1521 = vpop.permute.xlu0 %1520
      %1524 = vset.pattern.permute.xlu0 0
      %1525 = vperm.xlu0 %1524, %v1113
      %v1526 = vpop.permute.xlu0 %1525
      %1529 = vset.pattern.permute.xlu0 0
      %1530 = vperm.xlu0 %1529, %v1114
      %v1531 = vpop.permute.xlu0 %1530
      %1534 = vset.pattern.permute.xlu0 0
      %1535 = vperm.xlu0 %1534, %v1115
      %v1536 = vpop.permute.xlu0 %1535
      %1539 = vset.pattern.permute.xlu0 0
      %1540 = vperm.xlu0 %1539, %v1116
      %v1541 = vpop.permute.xlu0 %1540
      %1544 = vset.pattern.permute.xlu0 0
      %1545 = vperm.xlu0 %1544, %v1117
      %v1546 = vpop.permute.xlu0 %1545
      %1549 = vset.pattern.permute.xlu0 0
      %1550 = vperm.xlu0 %1549, %v1118
      %v1551 = vpop.permute.xlu0 %1550
      %1554 = vset.pattern.permute.xlu0 0
      %1555 = vperm.xlu0 %1554, %v1119
      %v1556 = vpop.permute.xlu0 %1555
      %1559 = vset.pattern.permute.xlu0 0
      %1560 = vperm.xlu0 %1559, %v1120
      %v1561 = vpop.permute.xlu0 %1560
      %1564 = vset.pattern.permute.xlu0 0
      %1565 = vperm.xlu0 %1564, %v1121
      %v1566 = vpop.permute.xlu0 %1565
      %1569 = vset.pattern.permute.xlu0 0
      %1570 = vperm.xlu0 %1569, %v1122
      %v1571 = vpop.permute.xlu0 %1570
      %1574 = vset.pattern.permute.xlu0 0
      %1575 = vperm.xlu0 %1574, %v1123
      %v1576 = vpop.permute.xlu0 %1575
      %1579 = vset.pattern.permute.xlu0 0
      %1580 = vperm.xlu0 %1579, %v1124
      %v1581 = vpop.permute.xlu0 %1580
      %1584 = vset.pattern.permute.xlu0 0
      %1585 = vperm.xlu0 %1584, %v1125
      %v1586 = vpop.permute.xlu0 %1585
      %1589 = vset.pattern.permute.xlu0 0
      %1590 = vperm.xlu0 %1589, %v1126
      %v1591 = vpop.permute.xlu0 %1590
      %1594 = vset.pattern.permute.xlu0 0
      %1595 = vperm.xlu0 %1594, %v1127
      %v1596 = vpop.permute.xlu0 %1595
      %1599 = vset.pattern.permute.xlu0 0
      %1600 = vperm.xlu0 %1599, %v1128
      %v1601 = vpop.permute.xlu0 %1600
      %1604 = vset.pattern.permute.xlu0 0
      %1605 = vperm.xlu0 %1604, %v1129
      %v1606 = vpop.permute.xlu0 %1605
      %1609 = vset.pattern.permute.xlu0 0
      %1610 = vperm.xlu0 %1609, %v1130
      %v1611 = vpop.permute.xlu0 %1610
      %1614 = vset.pattern.permute.xlu0 0
      %1615 = vperm.xlu0 %1614, %v1131
      %v1616 = vpop.permute.xlu0 %1615
      %1619 = vset.pattern.permute.xlu0 0
      %1620 = vperm.xlu0 %1619, %v1132
      %v1621 = vpop.permute.xlu0 %1620
      %v1623 = vmul.f32 %v937, %v1136
      %v1624 = vmul.f32 %v938, %v1141
      %v1625 = vmul.f32 %v939, %v1146
      %v1626 = vmul.f32 %v940, %v1151
      %v1627 = vmul.f32 %v941, %v1156
      %v1628 = vmul.f32 %v942, %v1161
      %v1629 = vmul.f32 %v943, %v1166
      %v1630 = vmul.f32 %v944, %v1171
      %v1631 = vmul.f32 %v945, %v1176
      %v1632 = vmul.f32 %v946, %v1181
      %v1633 = vmul.f32 %v947, %v1186
      %v1634 = vmul.f32 %v948, %v1191
      %v1635 = vmul.f32 %v949, %v1196
      %v1636 = vmul.f32 %v950, %v1201
      %v1637 = vmul.f32 %v951, %v1206
      %v1638 = vmul.f32 %v952, %v1211
      %v1639 = vmul.f32 %v953, %v1216
      %v1640 = vmul.f32 %v954, %v1221
      %v1641 = vmul.f32 %v955, %v1226
      %v1642 = vmul.f32 %v956, %v1231
      %v1643 = vmul.f32 %v957, %v1236
      %v1644 = vmul.f32 %v958, %v1241
      %v1645 = vmul.f32 %v959, %v1246
      %v1646 = vmul.f32 %v960, %v1251
      %v1647 = vmul.f32 %v961, %v1256
      %v1648 = vmul.f32 %v962, %v1261
      %v1649 = vmul.f32 %v963, %v1266
      %v1650 = vmul.f32 %v964, %v1271
      %v1651 = vmul.f32 %v965, %v1276
      %v1652 = vmul.f32 %v966, %v1281
      %v1653 = vmul.f32 %v967, %v1286
      %v1654 = vmul.f32 %v968, %v1291
      %v1655 = vmul.f32 %v969, %v1296
      %v1656 = vmul.f32 %v970, %v1301
      %v1657 = vmul.f32 %v971, %v1306
      %v1658 = vmul.f32 %v972, %v1311
      %v1659 = vmul.f32 %v973, %v1316
      %v1660 = vmul.f32 %v974, %v1321
      %v1661 = vmul.f32 %v975, %v1326
      %v1662 = vmul.f32 %v976, %v1331
      %v1663 = vmul.f32 %v977, %v1336
      %v1664 = vmul.f32 %v978, %v1341
      %v1665 = vmul.f32 %v979, %v1346
      %v1666 = vmul.f32 %v980, %v1351
      %v1667 = vmul.f32 %v981, %v1356
      %v1668 = vmul.f32 %v982, %v1361
      %v1669 = vmul.f32 %v983, %v1366
      %v1670 = vmul.f32 %v984, %v1371
      %v1671 = vmul.f32 %v985, %v1376
      %v1672 = vmul.f32 %v986, %v1381
      %v1673 = vmul.f32 %v987, %v1386
      %v1674 = vmul.f32 %v988, %v1391
      %v1675 = vmul.f32 %v989, %v1396
      %v1676 = vmul.f32 %v990, %v1401
      %v1677 = vmul.f32 %v991, %v1406
      %v1678 = vmul.f32 %v992, %v1411
      %v1679 = vmul.f32 %v993, %v1416
      %v1680 = vmul.f32 %v994, %v1421
      %v1681 = vmul.f32 %v995, %v1426
      %v1682 = vmul.f32 %v996, %v1431
      %v1683 = vmul.f32 %v997, %v1436
      %v1684 = vmul.f32 %v998, %v1441
      %v1685 = vmul.f32 %v999, %v1446
      %v1686 = vmul.f32 %v1000, %v1451
      %v1687 = vmul.f32 %v1001, %v1456
      %v1688 = vmul.f32 %v1002, %v1461
      %v1689 = vmul.f32 %v1003, %v1466
      %v1690 = vmul.f32 %v1004, %v1471
      %v1691 = vmul.f32 %v1005, %v1476
      %v1692 = vmul.f32 %v1006, %v1481
      %v1693 = vmul.f32 %v1007, %v1486
      %v1694 = vmul.f32 %v1008, %v1491
      %v1695 = vmul.f32 %v1009, %v1496
      %v1696 = vmul.f32 %v1010, %v1501
      %v1697 = vmul.f32 %v1011, %v1506
      %v1698 = vmul.f32 %v1012, %v1511
      %v1699 = vmul.f32 %v1013, %v1516
      %v1700 = vmul.f32 %v1014, %v1521
      %v1701 = vmul.f32 %v1015, %v1526
      %v1702 = vmul.f32 %v1016, %v1531
      %v1703 = vmul.f32 %v1017, %v1536
      %v1704 = vmul.f32 %v1018, %v1541
      %v1705 = vmul.f32 %v1019, %v1546
      %v1706 = vmul.f32 %v1020, %v1551
      %v1707 = vmul.f32 %v1021, %v1556
      %v1708 = vmul.f32 %v1022, %v1561
      %v1709 = vmul.f32 %v1023, %v1566
      %v1710 = vmul.f32 %v1024, %v1571
      %v1711 = vmul.f32 %v1025, %v1576
      %v1712 = vmul.f32 %v1026, %v1581
      %v1713 = vmul.f32 %v1027, %v1586
      %v1714 = vmul.f32 %v1028, %v1591
      %v1715 = vmul.f32 %v1029, %v1596
      %v1716 = vmul.f32 %v1030, %v1601
      %v1717 = vmul.f32 %v1031, %v1606
      %v1718 = vmul.f32 %v1032, %v1611
      %v1719 = vmul.f32 %v1033, %v1616
      %v1720 = vmul.f32 %v1034, %v1621
      %vm1721 = vcmask 261120
      %1722 = vst.msk [vmem:[%s221] sm:$0xff] %vm1721, %v1623
      %1723 = vst.msk [vmem:[%s221 + $0x8] sm:$0xff] %vm1721, %v1624
      %1724 = vst.msk [vmem:[%s221 + $0x10] sm:$0xff] %vm1721, %v1625
      %1725 = vst.msk [vmem:[%s221 + $0x18] sm:$0xff] %vm1721, %v1626
      %1726 = vst.msk [vmem:[%s221 + $0x20] sm:$0xff] %vm1721, %v1627
      %1727 = vst.msk [vmem:[%s221 + $0x28] sm:$0xff] %vm1721, %v1628
      %1728 = vst.msk [vmem:[%s221 + $0x30] sm:$0xff] %vm1721, %v1629
      %1729 = vst.msk [vmem:[%s221 + $0x38] sm:$0xff] %vm1721, %v1630
      %1730 = vst.msk [vmem:[%s221 + $0x40] sm:$0xff] %vm1721, %v1631
      %1731 = vst.msk [vmem:[%s221 + $0x48] sm:$0xff] %vm1721, %v1632
      %1732 = vst.msk [vmem:[%s221 + $0x50] sm:$0xff] %vm1721, %v1633
      %1733 = vst.msk [vmem:[%s221 + $0x58] sm:$0xff] %vm1721, %v1634
      %1734 = vst.msk [vmem:[%s221 + $0x60] sm:$0xff] %vm1721, %v1635
      %1735 = vst.msk [vmem:[%s221 + $0x68] sm:$0xff] %vm1721, %v1636
      %1736 = vst.msk [vmem:[%s221 + $0x70] sm:$0xff] %vm1721, %v1637
      %1737 = vst.msk [vmem:[%s221 + $0x78] sm:$0xff] %vm1721, %v1638
      %1738 = vst.msk [vmem:[%s221 + $0x80] sm:$0xff] %vm1721, %v1639
      %1739 = vst.msk [vmem:[%s221 + $0x88] sm:$0xff] %vm1721, %v1640
      %1740 = vst.msk [vmem:[%s221 + $0x90] sm:$0xff] %vm1721, %v1641
      %1741 = vst.msk [vmem:[%s221 + $0x98] sm:$0xff] %vm1721, %v1642
      %1742 = vst.msk [vmem:[%s221 + $0xa0] sm:$0xff] %vm1721, %v1643
      %1743 = vst.msk [vmem:[%s221 + $0xa8] sm:$0xff] %vm1721, %v1644
      %1744 = vst.msk [vmem:[%s221 + $0xb0] sm:$0xff] %vm1721, %v1645
      %1745 = vst.msk [vmem:[%s221 + $0xb8] sm:$0xff] %vm1721, %v1646
      %1746 = vst.msk [vmem:[%s221 + $0xc0] sm:$0xff] %vm1721, %v1647
      %1747 = vst.msk [vmem:[%s221 + $0xc8] sm:$0xff] %vm1721, %v1648
      %1748 = vst.msk [vmem:[%s221 + $0xd0] sm:$0xff] %vm1721, %v1649
      %1749 = vst.msk [vmem:[%s221 + $0xd8] sm:$0xff] %vm1721, %v1650
      %1750 = vst.msk [vmem:[%s221 + $0xe0] sm:$0xff] %vm1721, %v1651
      %1751 = vst.msk [vmem:[%s221 + $0xe8] sm:$0xff] %vm1721, %v1652
      %1752 = vst.msk [vmem:[%s221 + $0xf0] sm:$0xff] %vm1721, %v1653
      %1753 = vst.msk [vmem:[%s221 + $0xf8] sm:$0xff] %vm1721, %v1654
      %1754 = vst.msk [vmem:[%s221 + $0x100] sm:$0xff] %vm1721, %v1655
      %1755 = vst.msk [vmem:[%s221 + $0x108] sm:$0xff] %vm1721, %v1656
      %1756 = vst.msk [vmem:[%s221 + $0x110] sm:$0xff] %vm1721, %v1657
      %1757 = vst.msk [vmem:[%s221 + $0x118] sm:$0xff] %vm1721, %v1658
      %1758 = vst.msk [vmem:[%s221 + $0x120] sm:$0xff] %vm1721, %v1659
      %1759 = vst.msk [vmem:[%s221 + $0x128] sm:$0xff] %vm1721, %v1660
      %1760 = vst.msk [vmem:[%s221 + $0x130] sm:$0xff] %vm1721, %v1661
      %1761 = vst.msk [vmem:[%s221 + $0x138] sm:$0xff] %vm1721, %v1662
      %1762 = vst.msk [vmem:[%s221 + $0x140] sm:$0xff] %vm1721, %v1663
      %1763 = vst.msk [vmem:[%s221 + $0x148] sm:$0xff] %vm1721, %v1664
      %1764 = vst.msk [vmem:[%s221 + $0x150] sm:$0xff] %vm1721, %v1665
      %1765 = vst.msk [vmem:[%s221 + $0x158] sm:$0xff] %vm1721, %v1666
      %1766 = vst.msk [vmem:[%s221 + $0x160] sm:$0xff] %vm1721, %v1667
      %1767 = vst.msk [vmem:[%s221 + $0x168] sm:$0xff] %vm1721, %v1668
      %1768 = vst.msk [vmem:[%s221 + $0x170] sm:$0xff] %vm1721, %v1669
      %1769 = vst.msk [vmem:[%s221 + $0x178] sm:$0xff] %vm1721, %v1670
      %1770 = vst.msk [vmem:[%s221 + $0x180] sm:$0xff] %vm1721, %v1671
      %1771 = vst.msk [vmem:[%s221 + $0x188] sm:$0xff] %vm1721, %v1672
      %1772 = vst.msk [vmem:[%s221 + $0x190] sm:$0xff] %vm1721, %v1673
      %1773 = vst.msk [vmem:[%s221 + $0x198] sm:$0xff] %vm1721, %v1674
      %1774 = vst.msk [vmem:[%s221 + $0x1a0] sm:$0xff] %vm1721, %v1675
      %1775 = vst.msk [vmem:[%s221 + $0x1a8] sm:$0xff] %vm1721, %v1676
      %1776 = vst.msk [vmem:[%s221 + $0x1b0] sm:$0xff] %vm1721, %v1677
      %1777 = vst.msk [vmem:[%s221 + $0x1b8] sm:$0xff] %vm1721, %v1678
      %1778 = vst.msk [vmem:[%s221 + $0x1c0] sm:$0xff] %vm1721, %v1679
      %1779 = vst.msk [vmem:[%s221 + $0x1c8] sm:$0xff] %vm1721, %v1680
      %1780 = vst.msk [vmem:[%s221 + $0x1d0] sm:$0xff] %vm1721, %v1681
      %1781 = vst.msk [vmem:[%s221 + $0x1d8] sm:$0xff] %vm1721, %v1682
      %1782 = vst.msk [vmem:[%s221 + $0x1e0] sm:$0xff] %vm1721, %v1683
      %1783 = vst.msk [vmem:[%s221 + $0x1e8] sm:$0xff] %vm1721, %v1684
      %1784 = vst.msk [vmem:[%s221 + $0x1f0] sm:$0xff] %vm1721, %v1685
      %1785 = vst.msk [vmem:[%s221 + $0x1f8] sm:$0xff] %vm1721, %v1686
      %1786 = vst.msk [vmem:[%s221 + $0x200] sm:$0xff] %vm1721, %v1687
      %1787 = vst.msk [vmem:[%s221 + $0x208] sm:$0xff] %vm1721, %v1688
      %1788 = vst.msk [vmem:[%s221 + $0x210] sm:$0xff] %vm1721, %v1689
      %1789 = vst.msk [vmem:[%s221 + $0x218] sm:$0xff] %vm1721, %v1690
      %1790 = vst.msk [vmem:[%s221 + $0x220] sm:$0xff] %vm1721, %v1691
      %1791 = vst.msk [vmem:[%s221 + $0x228] sm:$0xff] %vm1721, %v1692
      %1792 = vst.msk [vmem:[%s221 + $0x230] sm:$0xff] %vm1721, %v1693
      %1793 = vst.msk [vmem:[%s221 + $0x238] sm:$0xff] %vm1721, %v1694
      %1794 = vst.msk [vmem:[%s221 + $0x240] sm:$0xff] %vm1721, %v1695
      %1795 = vst.msk [vmem:[%s221 + $0x248] sm:$0xff] %vm1721, %v1696
      %1796 = vst.msk [vmem:[%s221 + $0x250] sm:$0xff] %vm1721, %v1697
      %1797 = vst.msk [vmem:[%s221 + $0x258] sm:$0xff] %vm1721, %v1698
      %1798 = vst.msk [vmem:[%s221 + $0x260] sm:$0xff] %vm1721, %v1699
      %1799 = vst.msk [vmem:[%s221 + $0x268] sm:$0xff] %vm1721, %v1700
      %1800 = vst.msk [vmem:[%s221 + $0x270] sm:$0xff] %vm1721, %v1701
      %1801 = vst.msk [vmem:[%s221 + $0x278] sm:$0xff] %vm1721, %v1702
      %1802 = vst.msk [vmem:[%s221 + $0x280] sm:$0xff] %vm1721, %v1703
      %1803 = vst.msk [vmem:[%s221 + $0x288] sm:$0xff] %vm1721, %v1704
      %1804 = vst.msk [vmem:[%s221 + $0x290] sm:$0xff] %vm1721, %v1705
      %1805 = vst.msk [vmem:[%s221 + $0x298] sm:$0xff] %vm1721, %v1706
      %1806 = vst.msk [vmem:[%s221 + $0x2a0] sm:$0xff] %vm1721, %v1707
      %1807 = vst.msk [vmem:[%s221 + $0x2a8] sm:$0xff] %vm1721, %v1708
      %1808 = vst.msk [vmem:[%s221 + $0x2b0] sm:$0xff] %vm1721, %v1709
      %1809 = vst.msk [vmem:[%s221 + $0x2b8] sm:$0xff] %vm1721, %v1710
      %1810 = vst.msk [vmem:[%s221 + $0x2c0] sm:$0xff] %vm1721, %v1711
      %1811 = vst.msk [vmem:[%s221 + $0x2c8] sm:$0xff] %vm1721, %v1712
      %1812 = vst.msk [vmem:[%s221 + $0x2d0] sm:$0xff] %vm1721, %v1713
      %1813 = vst.msk [vmem:[%s221 + $0x2d8] sm:$0xff] %vm1721, %v1714
      %1814 = vst.msk [vmem:[%s221 + $0x2e0] sm:$0xff] %vm1721, %v1715
      %1815 = vst.msk [vmem:[%s221 + $0x2e8] sm:$0xff] %vm1721, %v1716
      %1816 = vst.msk [vmem:[%s221 + $0x2f0] sm:$0xff] %vm1721, %v1717
      %1817 = vst.msk [vmem:[%s221 + $0x2f8] sm:$0xff] %vm1721, %v1718
      %1818 = vst.msk [vmem:[%s221 + $0x300] sm:$0xff] %vm1721, %v1719
      %1819 = vst.msk [vmem:[%s221 + $0x308] sm:$0xff] %vm1721, %v1720
      %s1820 = smul.u32 98, %s15
      %p1821 = scmp.lt.s32.totalorder %s1820, 195
      %s1822 = scalar_select %p1821, %s1820, 195
      %s1823 = smul.addr %s1822, 8
      %s1824 = scalar_lea.vmem %s4, %s1823
      // Predicated region
      $region37: #{residual_net_ptq_forward.8} parent=35 // pred_check
        %p1825 = pneg %p127
      $region38: #{residual_net_ptq_forward.8} parent=35 // pred_check_branch
        %1827 = sbr.rel (%p1825) target = $region40
      $region39: #{residual_net_ptq_forward.8} parent=35 // pred_region
        %s1828 = smul.u32 98, %s15
      $region40: #{residual_net_ptq_forward.8} parent=35 // pred_fallthru
        _
    $region36: #{residual_net_ptq_forward.8} parent=5 // pred_fallthru
      _
    %p1829 = scmp.le.s32.totalorder 2, %s10
    // Predicated region
    $region41: #{residual_net_ptq_forward.8} parent=5 // pred_check
      %p1830 = pneg %p1829
    $region42: #{residual_net_ptq_forward.8} parent=5 // pred_check_branch
      %1832 = sbr.rel (%p1830) target = $region44
    $region43: #{residual_net_ptq_forward.8} parent=5 // pred_region
      %s1833 = ssub.s32 %s10, 2
      // Predicated region
      $region45: #{residual_net_ptq_forward.8} parent=43 // pred_check
        %p1834 = pneg %p133
      $region46: #{residual_net_ptq_forward.8} parent=43 // pred_check_branch
        %1836 = sbr.rel (%p1834) target = $region48
      $region47: #{residual_net_ptq_forward.8} parent=43 // pred_region
        %s1837 = smul.u32 98, %s16
        %p1838 = scmp.lt.s32.totalorder %s1837, 195
        %s1839 = scalar_select %p1838, %s1837, 195
        %s1840 = smul.addr %s1839, 8
        %s1841 = scalar_lea.vmem %s4, %s1840
      $region48: #{residual_net_ptq_forward.8} parent=43 // pred_fallthru
        _
    $region44: #{residual_net_ptq_forward.8} parent=5 // pred_fallthru
      _
  $region6: #{residual_net_ptq_forward.8} parent=0 // loop_footer
    %s14 = sadd.s32 1, %s10
  $region7: #{residual_net_ptq_forward.8} parent=0 // loop_footer_branch
    %9 = sbr.rel target = $region3
  $region8: #{residual_net_ptq_forward.8} parent=0 // loop_exit
    _

// kernel: residual_net_ptq_forward.9
$region0: #{residual_net_ptq_forward.9}
  #allocation0 [shape = 'u32[]', space=smem, size = 0x4, offset = 0x4, fixed_abs, tag = 'smem constant byte address 0x4 - core index']
  #allocation1 [shape = 'u32[72,128]{1,0:T(1,128)}', space=vmem, size = 0x9000, scoped, tag = 'internal scratch']
  %s0 = inlined_call_operand.vmem [shape: f32[1568,288], index: 0, kind: input, shape index: {}]
  %s1 = inlined_call_operand.vmem [shape: f32[288,32], index: 1, kind: input, shape index: {}]
  %s2 = inlined_call_operand.vmem [shape: f32[1,32], index: 2, kind: input, shape index: {}]
  %s3 = inlined_call_operand.vmem [shape: f32[1568,1], index: 3, kind: input, shape index: {}]
  %s4 = inlined_call_operand.vmem [shape: f32[1568,32], index: 4, kind: output, shape index: {}]
  %s5 = sld [smem:[#allocation0]]
  $region49: #{residual_net_ptq_forward.9} parent=0
    _
  %s7 = ssub.s32 1, %s5
  %s8 = scalar_select 0, %s7, %s5
  loop: start=0, step=1, limit=4
  $region2: #{residual_net_ptq_forward.9} parent=0 // loop_pre_header
    _
  $region3: #{residual_net_ptq_forward.9} parent=0 // loop_header
    %s10 = sphi 0, %s14
    %p11 = scmp.ge.s32.totalorder %s10, 4
    %s20 = sphi 0, %s22
    %s23 = sphi 0, %s20
    %s24 = sphi 0, %s23
    %s40 = sphi 0, %s24
    %s44 = sphi 0, %s44
    %s46 = sphi 0, %s44
    %s47 = sphi 0, %s46
    %s61 = sphi 0, %s47
    %s65 = sphi 0, %s65
    %s67 = sphi 0, %s65
    %s68 = sphi 0, %s67
    %s82 = sphi 0, %s68
    %s88 = sphi 0, %s90
    %s91 = sphi 0, %s88
    %s92 = sphi 0, %s91
    %s108 = sphi 0, %s92
    %s114 = sphi 0, %s116
    %s117 = sphi 0, %s114
    %s118 = sphi 0, %s117
    %s134 = sphi 0, %s118
  $region4: #{residual_net_ptq_forward.9} parent=0 // loop_header_branch
    %13 = sbr.rel (%p11) target = $region8
  $region5: #{residual_net_ptq_forward.9} parent=0 // loop_body
    %s15 = ssub.s32 %s10, 1
    %s16 = ssub.s32 %s10, 2
    %s17 = sadd.s32 %s10, 1
    %s18 = ssub.s32 %s10, %s17
    %p19 = scmp.eq.s32.totalorder %s18, 0
    %s21 = sadd.s32 %s20, 1
    %s22 = scalar_select %p19, %s20, %s21
    %p25 = pneg %p19
    %p26 = scmp.eq.s32.totalorder %s10, 1
    %p27 = por %p25, %p26
    %p28 = scmp.ne.s32.totalorder %s20, %s23
    %p29 = scmp.eq.s32.totalorder %s10, 0
    %p30 = por %p28, %p29
    %p31 = scmp.ne.s32.totalorder %s20, %s23
    %p32 = scmp.eq.s32.totalorder %s15, 1
    %p33 = por %p31, %p32
    %p34 = scmp.ne.s32.totalorder %s23, %s24
    %p35 = scmp.eq.s32.totalorder %s15, 0
    %p36 = por %p34, %p35
    %p37 = scmp.ne.s32.totalorder %s23, %s24
    %p38 = scmp.eq.s32.totalorder %s16, 1
    %p39 = por %p37, %p38
    %p41 = scmp.ne.s32.totalorder %s24, %s40
    %p42 = scmp.eq.s32.totalorder %s16, 0
    %p43 = por %p41, %p42
    %s45 = sadd.s32 %s44, 1
    %p48 = scmp.eq.s32.totalorder %s10, 1
    %p49 = scmp.ne.s32.totalorder %s44, %s46
    %p50 = scmp.eq.s32.totalorder %s10, 0
    %p51 = por %p49, %p50
    %p52 = scmp.ne.s32.totalorder %s44, %s46
    %p53 = scmp.eq.s32.totalorder %s15, 1
    %p54 = por %p52, %p53
    %p55 = scmp.ne.s32.totalorder %s46, %s47
    %p56 = scmp.eq.s32.totalorder %s15, 0
    %p57 = por %p55, %p56
    %p58 = scmp.ne.s32.totalorder %s46, %s47
    %p59 = scmp.eq.s32.totalorder %s16, 1
    %p60 = por %p58, %p59
    %p62 = scmp.ne.s32.totalorder %s47, %s61
    %p63 = scmp.eq.s32.totalorder %s16, 0
    %p64 = por %p62, %p63
    %s66 = sadd.s32 %s65, 1
    %p69 = scmp.eq.s32.totalorder %s10, 1
    %p70 = scmp.ne.s32.totalorder %s65, %s67
    %p71 = scmp.eq.s32.totalorder %s10, 0
    %p72 = por %p70, %p71
    %p73 = scmp.ne.s32.totalorder %s65, %s67
    %p74 = scmp.eq.s32.totalorder %s15, 1
    %p75 = por %p73, %p74
    %p76 = scmp.ne.s32.totalorder %s67, %s68
    %p77 = scmp.eq.s32.totalorder %s15, 0
    %p78 = por %p76, %p77
    %p79 = scmp.ne.s32.totalorder %s67, %s68
    %p80 = scmp.eq.s32.totalorder %s16, 1
    %p81 = por %p79, %p80
    %p83 = scmp.ne.s32.totalorder %s68, %s82
    %p84 = scmp.eq.s32.totalorder %s16, 0
    %p85 = por %p83, %p84
    %s86 = ssub.s32 %s10, %s17
    %p87 = scmp.eq.s32.totalorder %s86, 0
    %s89 = sadd.s32 %s88, 1
    %s90 = scalar_select %p87, %s88, %s89
    %p93 = pneg %p87
    %p94 = scmp.eq.s32.totalorder %s10, 1
    %p95 = por %p93, %p94
    %p96 = scmp.ne.s32.totalorder %s88, %s91
    %p97 = scmp.eq.s32.totalorder %s10, 0
    %p98 = por %p96, %p97
    %p99 = scmp.ne.s32.totalorder %s88, %s91
    %p100 = scmp.eq.s32.totalorder %s15, 1
    %p101 = por %p99, %p100
    %p102 = scmp.ne.s32.totalorder %s91, %s92
    %p103 = scmp.eq.s32.totalorder %s15, 0
    %p104 = por %p102, %p103
    %p105 = scmp.ne.s32.totalorder %s91, %s92
    %p106 = scmp.eq.s32.totalorder %s16, 1
    %p107 = por %p105, %p106
    %p109 = scmp.ne.s32.totalorder %s92, %s108
    %p110 = scmp.eq.s32.totalorder %s16, 0
    %p111 = por %p109, %p110
    %s112 = ssub.s32 %s10, %s17
    %p113 = scmp.eq.s32.totalorder %s112, 0
    %s115 = sadd.s32 %s114, 1
    %s116 = scalar_select %p113, %s114, %s115
    %p119 = pneg %p113
    %p120 = scmp.eq.s32.totalorder %s10, 1
    %p121 = por %p119, %p120
    %p122 = scmp.ne.s32.totalorder %s114, %s117
    %p123 = scmp.eq.s32.totalorder %s10, 0
    %p124 = por %p122, %p123
    %p125 = scmp.ne.s32.totalorder %s114, %s117
    %p126 = scmp.eq.s32.totalorder %s15, 1
    %p127 = por %p125, %p126
    %p128 = scmp.ne.s32.totalorder %s117, %s118
    %p129 = scmp.eq.s32.totalorder %s15, 0
    %p130 = por %p128, %p129
    %p131 = scmp.ne.s32.totalorder %s117, %s118
    %p132 = scmp.eq.s32.totalorder %s16, 1
    %p133 = por %p131, %p132
    %p135 = scmp.ne.s32.totalorder %s118, %s134
    %p136 = scmp.eq.s32.totalorder %s16, 0
    %p137 = por %p135, %p136
    %p138 = scmp.le.s32.totalorder 1, %s10
    %p139 = scmp.lt.s32.totalorder %s10, 3
    %p140 = pnand %p138, %p139
    %p141 = pneg %p140
    // Predicated region
    $region9: #{residual_net_ptq_forward.9} parent=5 // pred_check
      _
    $region10: #{residual_net_ptq_forward.9} parent=5 // pred_check_branch
      %143 = sbr.rel (%p140) target = $region12
    $region11: #{residual_net_ptq_forward.9} parent=5 // pred_region
      %s144 = ssub.s32 %s10, 1
      // Predicated region
      $region13: #{residual_net_ptq_forward.9} parent=11 // pred_check
        %p145 = pneg %p57
      $region14: #{residual_net_ptq_forward.9} parent=11 // pred_check_branch
        %147 = sbr.rel (%p145) target = $region16
      $region15: #{residual_net_ptq_forward.9} parent=11 // pred_region
        _
      $region16: #{residual_net_ptq_forward.9} parent=11 // pred_fallthru
        _
      // Predicated region
      $region17: #{residual_net_ptq_forward.9} parent=11 // pred_check
        %p148 = pneg %p78
      $region18: #{residual_net_ptq_forward.9} parent=11 // pred_check_branch
        %150 = sbr.rel (%p148) target = $region20
      $region19: #{residual_net_ptq_forward.9} parent=11 // pred_region
        _
      $region20: #{residual_net_ptq_forward.9} parent=11 // pred_fallthru
        _
    $region12: #{residual_net_ptq_forward.9} parent=5 // pred_fallthru
      _
    %p151 = scmp.lt.s32.totalorder %s10, 2
    // Predicated region
    $region21: #{residual_net_ptq_forward.9} parent=5 // pred_check
      %p152 = pneg %p151
    $region22: #{residual_net_ptq_forward.9} parent=5 // pred_check_branch
      %154 = sbr.rel (%p152) target = $region24
    $region23: #{residual_net_ptq_forward.9} parent=5 // pred_region
      // Predicated region
      $region25: #{residual_net_ptq_forward.9} parent=23 // pred_check
        %p155 = pneg %p30
      $region26: #{residual_net_ptq_forward.9} parent=23 // pred_check_branch
        %157 = sbr.rel (%p155) target = $region28
      $region27: #{residual_net_ptq_forward.9} parent=23 // pred_region
        %s158 = smul.u32 98, %s10
        %p159 = scmp.lt.s32.totalorder %s158, 195
        %s160 = scalar_select %p159, %s158, 195
        %s161 = smul.addr %s160, 3
        %s162 = smul.addr %s161, 8
        %s163 = scalar_lea.vmem %s0, %s162
        %s164 = smul.u32 98, %s10
      $region28: #{residual_net_ptq_forward.9} parent=23 // pred_fallthru
        _
      // Predicated region
      $region29: #{residual_net_ptq_forward.9} parent=23 // pred_check
        %p165 = pneg %p98
      $region30: #{residual_net_ptq_forward.9} parent=23 // pred_check_branch
        %167 = sbr.rel (%p165) target = $region32
      $region31: #{residual_net_ptq_forward.9} parent=23 // pred_region
        %s168 = smul.u32 98, %s10
        %p169 = scmp.lt.s32.totalorder %s168, 195
        %s170 = scalar_select %p169, %s168, 195
        %s171 = smul.addr %s170, 8
        %s172 = scalar_lea.vmem %s3, %s171
        %s173 = smul.u32 98, %s10
      $region32: #{residual_net_ptq_forward.9} parent=23 // pred_fallthru
        _
    $region24: #{residual_net_ptq_forward.9} parent=5 // pred_fallthru
      _
    %p174 = scmp.le.s32.totalorder 1, %s10
    %p175 = scmp.lt.s32.totalorder %s10, 3
    %p176 = pnand %p174, %p175
    %p177 = pneg %p176
    // Predicated region
    $region33: #{residual_net_ptq_forward.9} parent=5 // pred_check
      _
    $region34: #{residual_net_ptq_forward.9} parent=5 // pred_check_branch
      %179 = sbr.rel (%p176) target = $region36
    $region35: #{residual_net_ptq_forward.9} parent=5 // pred_region
      %s180 = ssub.s32 %s10, 1
      %s181 = smul.u32 98, %s15
      %p182 = scmp.lt.s32.totalorder %s181, 195
      %s183 = scalar_select %p182, %s181, 195
      %s184 = smul.addr %s183, 3
      %s185 = smul.addr %s184, 8
      %s186 = scalar_lea.vmem %s0, %s185
      %p187 = pneg %p36
      %p188 = pneg %p33
      %p189 = pneg %p57
      %p190 = pneg %p54
      %p191 = pneg %p78
      %p192 = pneg %p75
      %s193 = smul.u32 98, %s15
      %p194 = scmp.lt.s32.totalorder %s193, 195
      %s195 = scalar_select %p194, %s193, 195
      %s196 = smul.addr %s195, 8
      %s197 = scalar_lea.vmem %s3, %s196
      %p198 = pneg %p104
      %p199 = pneg %p101
      %p200 = pneg %p130
      %p201 = pneg %p127
      %s202 = smul.u32 98, %s15
      %p203 = scmp.lt.s32.totalorder %s202, 195
      %s204 = scalar_select %p203, %s202, 195
      %s205 = smul.addr %s204, 8
      %s206 = scalar_lea.vmem %s4, %s205
      %s207 = smul.u32 98, %s15
      %p208 = scmp.lt.s32.totalorder %s207, 195
      %s209 = scalar_select %p208, %s207, 195
      %s210 = smul.addr %s209, 3
      %s211 = smul.addr %s210, 8
      %s212 = scalar_lea.vmem %s0, %s211
      %s213 = smul.u32 98, %s15
      %s214 = smul.u32 98, %s15
      %p215 = scmp.lt.s32.totalorder %s214, 195
      %s216 = scalar_select %p215, %s214, 195
      %s217 = smul.addr %s216, 8
      %s218 = scalar_lea.vmem %s3, %s217
      %s219 = smul.u32 98, %s15
      %s220 = smul.u32 98, %s15
      %p221 = scmp.lt.s32.totalorder %s220, 195
      %s222 = scalar_select %p221, %s220, 195
      %s223 = smul.addr %s222, 8
      %s224 = scalar_lea.vmem %s4, %s223
      %s225 = smul.u32 98, %s15
      %v226 = vld [vmem:[%s212] sm:$0xff]
      %v227 = vld [vmem:[%s212 + $0x8] sm:$0xff]
      %v228 = vld [vmem:[%s212 + $0x10] sm:$0xff]
      %v229 = vld [vmem:[%s212 + $0x18] sm:$0xff]
      %v230 = vld [vmem:[%s212 + $0x20] sm:$0xff]
      %v231 = vld [vmem:[%s212 + $0x28] sm:$0xff]
      %v232 = vld [vmem:[%s212 + $0x30] sm:$0xff]
      %v233 = vld [vmem:[%s212 + $0x38] sm:$0xff]
      %v234 = vld [vmem:[%s212 + $0x40] sm:$0xff]
      %v235 = vld [vmem:[%s212 + $0x48] sm:$0xff]
      %v236 = vld [vmem:[%s212 + $0x50] sm:$0xff]
      %v237 = vld [vmem:[%s212 + $0x58] sm:$0xff]
      %v238 = vld [vmem:[%s212 + $0x60] sm:$0xff]
      %v239 = vld [vmem:[%s212 + $0x68] sm:$0xff]
      %v240 = vld [vmem:[%s212 + $0x70] sm:$0xff]
      %v241 = vld [vmem:[%s212 + $0x78] sm:$0xff]
      %v242 = vld [vmem:[%s212 + $0x80] sm:$0xff]
      %v243 = vld [vmem:[%s212 + $0x88] sm:$0xff]
      %v244 = vld [vmem:[%s212 + $0x90] sm:$0xff]
      %v245 = vld [vmem:[%s212 + $0x98] sm:$0xff]
      %v246 = vld [vmem:[%s212 + $0xa0] sm:$0xff]
      %v247 = vld [vmem:[%s212 + $0xa8] sm:$0xff]
      %v248 = vld [vmem:[%s212 + $0xb0] sm:$0xff]
      %v249 = vld [vmem:[%s212 + $0xb8] sm:$0xff]
      %v250 = vld [vmem:[%s212 + $0xc0] sm:$0xff]
      %v251 = vld [vmem:[%s212 + $0xc8] sm:$0xff]
      %v252 = vld [vmem:[%s212 + $0xd0] sm:$0xff]
      %v253 = vld [vmem:[%s212 + $0xd8] sm:$0xff]
      %v254 = vld [vmem:[%s212 + $0xe0] sm:$0xff]
      %v255 = vld [vmem:[%s212 + $0xe8] sm:$0xff]
      %v256 = vld [vmem:[%s212 + $0xf0] sm:$0xff]
      %v257 = vld [vmem:[%s212 + $0xf8] sm:$0xff]
      %v258 = vld [vmem:[%s212 + $0x100] sm:$0xff]
      %v259 = vld [vmem:[%s212 + $0x108] sm:$0xff]
      %v260 = vld [vmem:[%s212 + $0x110] sm:$0xff]
      %v261 = vld [vmem:[%s212 + $0x118] sm:$0xff]
      %v262 = vld [vmem:[%s212 + $0x120] sm:$0xff]
      %v263 = vld [vmem:[%s212 + $0x128] sm:$0xff]
      %v264 = vld [vmem:[%s212 + $0x130] sm:$0xff]
      %v265 = vld [vmem:[%s212 + $0x138] sm:$0xff]
      %v266 = vld [vmem:[%s212 + $0x140] sm:$0xff]
      %v267 = vld [vmem:[%s212 + $0x148] sm:$0xff]
      %v268 = vld [vmem:[%s212 + $0x150] sm:$0xff]
      %v269 = vld [vmem:[%s212 + $0x158] sm:$0xff]
      %v270 = vld [vmem:[%s212 + $0x160] sm:$0xff]
      %v271 = vld [vmem:[%s212 + $0x168] sm:$0xff]
      %v272 = vld [vmem:[%s212 + $0x170] sm:$0xff]
      %v273 = vld [vmem:[%s212 + $0x178] sm:$0xff]
      %v274 = vld [vmem:[%s212 + $0x180] sm:$0xff]
      %v275 = vld [vmem:[%s212 + $0x188] sm:$0xff]
      %v276 = vld [vmem:[%s212 + $0x190] sm:$0xff]
      %v277 = vld [vmem:[%s212 + $0x198] sm:$0xff]
      %v278 = vld [vmem:[%s212 + $0x1a0] sm:$0xff]
      %v279 = vld [vmem:[%s212 + $0x1a8] sm:$0xff]
      %v280 = vld [vmem:[%s212 + $0x1b0] sm:$0xff]
      %v281 = vld [vmem:[%s212 + $0x1b8] sm:$0xff]
      %v282 = vld [vmem:[%s212 + $0x1c0] sm:$0xff]
      %v283 = vld [vmem:[%s212 + $0x1c8] sm:$0xff]
      %v284 = vld [vmem:[%s212 + $0x1d0] sm:$0xff]
      %v285 = vld [vmem:[%s212 + $0x1d8] sm:$0xff]
      %v286 = vld [vmem:[%s212 + $0x1e0] sm:$0xff]
      %v287 = vld [vmem:[%s212 + $0x1e8] sm:$0xff]
      %v288 = vld [vmem:[%s212 + $0x1f0] sm:$0xff]
      %v289 = vld [vmem:[%s212 + $0x1f8] sm:$0xff]
      %v290 = vld [vmem:[%s212 + $0x200] sm:$0xff]
      %v291 = vld [vmem:[%s212 + $0x208] sm:$0xff]
      %v292 = vld [vmem:[%s212 + $0x210] sm:$0xff]
      %v293 = vld [vmem:[%s212 + $0x218] sm:$0xff]
      %v294 = vld [vmem:[%s212 + $0x220] sm:$0xff]
      %v295 = vld [vmem:[%s212 + $0x228] sm:$0xff]
      %v296 = vld [vmem:[%s212 + $0x230] sm:$0xff]
      %v297 = vld [vmem:[%s212 + $0x238] sm:$0xff]
      %v298 = vld [vmem:[%s212 + $0x240] sm:$0xff]
      %v299 = vld [vmem:[%s212 + $0x248] sm:$0xff]
      %v300 = vld [vmem:[%s212 + $0x250] sm:$0xff]
      %v301 = vld [vmem:[%s212 + $0x258] sm:$0xff]
      %v302 = vld [vmem:[%s212 + $0x260] sm:$0xff]
      %v303 = vld [vmem:[%s212 + $0x268] sm:$0xff]
      %v304 = vld [vmem:[%s212 + $0x270] sm:$0xff]
      %v305 = vld [vmem:[%s212 + $0x278] sm:$0xff]
      %v306 = vld [vmem:[%s212 + $0x280] sm:$0xff]
      %v307 = vld [vmem:[%s212 + $0x288] sm:$0xff]
      %v308 = vld [vmem:[%s212 + $0x290] sm:$0xff]
      %v309 = vld [vmem:[%s212 + $0x298] sm:$0xff]
      %v310 = vld [vmem:[%s212 + $0x2a0] sm:$0xff]
      %v311 = vld [vmem:[%s212 + $0x2a8] sm:$0xff]
      %v312 = vld [vmem:[%s212 + $0x2b0] sm:$0xff]
      %v313 = vld [vmem:[%s212 + $0x2b8] sm:$0xff]
      %v314 = vld [vmem:[%s212 + $0x2c0] sm:$0xff]
      %v315 = vld [vmem:[%s212 + $0x2c8] sm:$0xff]
      %v316 = vld [vmem:[%s212 + $0x2d0] sm:$0xff]
      %v317 = vld [vmem:[%s212 + $0x2d8] sm:$0xff]
      %v318 = vld [vmem:[%s212 + $0x2e0] sm:$0xff]
      %v319 = vld [vmem:[%s212 + $0x2e8] sm:$0xff]
      %v320 = vld [vmem:[%s212 + $0x2f0] sm:$0xff]
      %v321 = vld [vmem:[%s212 + $0x2f8] sm:$0xff]
      %v322 = vld [vmem:[%s212 + $0x300] sm:$0xff]
      %v323 = vld [vmem:[%s212 + $0x308] sm:$0xff]
      %v324 = vld [vmem:[%s212 + $0x310] sm:$0xff]
      %v325 = vld [vmem:[%s212 + $0x318] sm:$0xff]
      %v326 = vld [vmem:[%s212 + $0x320] sm:$0xff]
      %v327 = vld [vmem:[%s212 + $0x328] sm:$0xff]
      %v328 = vld [vmem:[%s212 + $0x330] sm:$0xff]
      %v329 = vld [vmem:[%s212 + $0x338] sm:$0xff]
      %v330 = vld [vmem:[%s212 + $0x340] sm:$0xff]
      %v331 = vld [vmem:[%s212 + $0x348] sm:$0xff]
      %v332 = vld [vmem:[%s212 + $0x350] sm:$0xff]
      %v333 = vld [vmem:[%s212 + $0x358] sm:$0xff]
      %v334 = vld [vmem:[%s212 + $0x360] sm:$0xff]
      %v335 = vld [vmem:[%s212 + $0x368] sm:$0xff]
      %v336 = vld [vmem:[%s212 + $0x370] sm:$0xff]
      %v337 = vld [vmem:[%s212 + $0x378] sm:$0xff]
      %v338 = vld [vmem:[%s212 + $0x380] sm:$0xff]
      %v339 = vld [vmem:[%s212 + $0x388] sm:$0xff]
      %v340 = vld [vmem:[%s212 + $0x390] sm:$0xff]
      %v341 = vld [vmem:[%s212 + $0x398] sm:$0xff]
      %v342 = vld [vmem:[%s212 + $0x3a0] sm:$0xff]
      %v343 = vld [vmem:[%s212 + $0x3a8] sm:$0xff]
      %v344 = vld [vmem:[%s212 + $0x3b0] sm:$0xff]
      %v345 = vld [vmem:[%s212 + $0x3b8] sm:$0xff]
      %v346 = vld [vmem:[%s212 + $0x3c0] sm:$0xff]
      %v347 = vld [vmem:[%s212 + $0x3c8] sm:$0xff]
      %v348 = vld [vmem:[%s212 + $0x3d0] sm:$0xff]
      %v349 = vld [vmem:[%s212 + $0x3d8] sm:$0xff]
      %v350 = vld [vmem:[%s212 + $0x3e0] sm:$0xff]
      %v351 = vld [vmem:[%s212 + $0x3e8] sm:$0xff]
      %v352 = vld [vmem:[%s212 + $0x3f0] sm:$0xff]
      %v353 = vld [vmem:[%s212 + $0x3f8] sm:$0xff]
      %v354 = vld [vmem:[%s212 + $0x400] sm:$0xff]
      %v355 = vld [vmem:[%s212 + $0x408] sm:$0xff]
      %v356 = vld [vmem:[%s212 + $0x410] sm:$0xff]
      %v357 = vld [vmem:[%s212 + $0x418] sm:$0xff]
      %v358 = vld [vmem:[%s212 + $0x420] sm:$0xff]
      %v359 = vld [vmem:[%s212 + $0x428] sm:$0xff]
      %v360 = vld [vmem:[%s212 + $0x430] sm:$0xff]
      %v361 = vld [vmem:[%s212 + $0x438] sm:$0xff]
      %v362 = vld [vmem:[%s212 + $0x440] sm:$0xff]
      %v363 = vld [vmem:[%s212 + $0x448] sm:$0xff]
      %v364 = vld [vmem:[%s212 + $0x450] sm:$0xff]
      %v365 = vld [vmem:[%s212 + $0x458] sm:$0xff]
      %v366 = vld [vmem:[%s212 + $0x460] sm:$0xff]
      %v367 = vld [vmem:[%s212 + $0x468] sm:$0xff]
      %v368 = vld [vmem:[%s212 + $0x470] sm:$0xff]
      %v369 = vld [vmem:[%s212 + $0x478] sm:$0xff]
      %v370 = vld [vmem:[%s212 + $0x480] sm:$0xff]
      %v371 = vld [vmem:[%s212 + $0x488] sm:$0xff]
      %v372 = vld [vmem:[%s212 + $0x490] sm:$0xff]
      %v373 = vld [vmem:[%s212 + $0x498] sm:$0xff]
      %v374 = vld [vmem:[%s212 + $0x4a0] sm:$0xff]
      %v375 = vld [vmem:[%s212 + $0x4a8] sm:$0xff]
      %v376 = vld [vmem:[%s212 + $0x4b0] sm:$0xff]
      %v377 = vld [vmem:[%s212 + $0x4b8] sm:$0xff]
      %v378 = vld [vmem:[%s212 + $0x4c0] sm:$0xff]
      %v379 = vld [vmem:[%s212 + $0x4c8] sm:$0xff]
      %v380 = vld [vmem:[%s212 + $0x4d0] sm:$0xff]
      %v381 = vld [vmem:[%s212 + $0x4d8] sm:$0xff]
      %v382 = vld [vmem:[%s212 + $0x4e0] sm:$0xff]
      %v383 = vld [vmem:[%s212 + $0x4e8] sm:$0xff]
      %v384 = vld [vmem:[%s212 + $0x4f0] sm:$0xff]
      %v385 = vld [vmem:[%s212 + $0x4f8] sm:$0xff]
      %v386 = vld [vmem:[%s212 + $0x500] sm:$0xff]
      %v387 = vld [vmem:[%s212 + $0x508] sm:$0xff]
      %v388 = vld [vmem:[%s212 + $0x510] sm:$0xff]
      %v389 = vld [vmem:[%s212 + $0x518] sm:$0xff]
      %v390 = vld [vmem:[%s212 + $0x520] sm:$0xff]
      %v391 = vld [vmem:[%s212 + $0x528] sm:$0xff]
      %v392 = vld [vmem:[%s212 + $0x530] sm:$0xff]
      %v393 = vld [vmem:[%s212 + $0x538] sm:$0xff]
      %v394 = vld [vmem:[%s212 + $0x540] sm:$0xff]
      %v395 = vld [vmem:[%s212 + $0x548] sm:$0xff]
      %v396 = vld [vmem:[%s212 + $0x550] sm:$0xff]
      %v397 = vld [vmem:[%s212 + $0x558] sm:$0xff]
      %v398 = vld [vmem:[%s212 + $0x560] sm:$0xff]
      %v399 = vld [vmem:[%s212 + $0x568] sm:$0xff]
      %v400 = vld [vmem:[%s212 + $0x570] sm:$0xff]
      %v401 = vld [vmem:[%s212 + $0x578] sm:$0xff]
      %v402 = vld [vmem:[%s212 + $0x580] sm:$0xff]
      %v403 = vld [vmem:[%s212 + $0x588] sm:$0xff]
      %v404 = vld [vmem:[%s212 + $0x590] sm:$0xff]
      %v405 = vld [vmem:[%s212 + $0x598] sm:$0xff]
      %v406 = vld [vmem:[%s212 + $0x5a0] sm:$0xff]
      %v407 = vld [vmem:[%s212 + $0x5a8] sm:$0xff]
      %v408 = vld [vmem:[%s212 + $0x5b0] sm:$0xff]
      %v409 = vld [vmem:[%s212 + $0x5b8] sm:$0xff]
      %v410 = vld [vmem:[%s212 + $0x5c0] sm:$0xff]
      %v411 = vld [vmem:[%s212 + $0x5c8] sm:$0xff]
      %v412 = vld [vmem:[%s212 + $0x5d0] sm:$0xff]
      %v413 = vld [vmem:[%s212 + $0x5d8] sm:$0xff]
      %v414 = vld [vmem:[%s212 + $0x5e0] sm:$0xff]
      %v415 = vld [vmem:[%s212 + $0x5e8] sm:$0xff]
      %v416 = vld [vmem:[%s212 + $0x5f0] sm:$0xff]
      %v417 = vld [vmem:[%s212 + $0x5f8] sm:$0xff]
      %v418 = vld [vmem:[%s212 + $0x600] sm:$0xff]
      %v419 = vld [vmem:[%s212 + $0x608] sm:$0xff]
      %v420 = vld [vmem:[%s212 + $0x610] sm:$0xff]
      %v421 = vld [vmem:[%s212 + $0x618] sm:$0xff]
      %v422 = vld [vmem:[%s212 + $0x620] sm:$0xff]
      %v423 = vld [vmem:[%s212 + $0x628] sm:$0xff]
      %v424 = vld [vmem:[%s212 + $0x630] sm:$0xff]
      %v425 = vld [vmem:[%s212 + $0x638] sm:$0xff]
      %v426 = vld [vmem:[%s212 + $0x640] sm:$0xff]
      %v427 = vld [vmem:[%s212 + $0x648] sm:$0xff]
      %v428 = vld [vmem:[%s212 + $0x650] sm:$0xff]
      %v429 = vld [vmem:[%s212 + $0x658] sm:$0xff]
      %v430 = vld [vmem:[%s212 + $0x660] sm:$0xff]
      %v431 = vld [vmem:[%s212 + $0x668] sm:$0xff]
      %v432 = vld [vmem:[%s212 + $0x670] sm:$0xff]
      %v433 = vld [vmem:[%s212 + $0x678] sm:$0xff]
      %v434 = vld [vmem:[%s212 + $0x680] sm:$0xff]
      %v435 = vld [vmem:[%s212 + $0x688] sm:$0xff]
      %v436 = vld [vmem:[%s212 + $0x690] sm:$0xff]
      %v437 = vld [vmem:[%s212 + $0x698] sm:$0xff]
      %v438 = vld [vmem:[%s212 + $0x6a0] sm:$0xff]
      %v439 = vld [vmem:[%s212 + $0x6a8] sm:$0xff]
      %v440 = vld [vmem:[%s212 + $0x6b0] sm:$0xff]
      %v441 = vld [vmem:[%s212 + $0x6b8] sm:$0xff]
      %v442 = vld [vmem:[%s212 + $0x6c0] sm:$0xff]
      %v443 = vld [vmem:[%s212 + $0x6c8] sm:$0xff]
      %v444 = vld [vmem:[%s212 + $0x6d0] sm:$0xff]
      %v445 = vld [vmem:[%s212 + $0x6d8] sm:$0xff]
      %v446 = vld [vmem:[%s212 + $0x6e0] sm:$0xff]
      %v447 = vld [vmem:[%s212 + $0x6e8] sm:$0xff]
      %v448 = vld [vmem:[%s212 + $0x6f0] sm:$0xff]
      %v449 = vld [vmem:[%s212 + $0x6f8] sm:$0xff]
      %v450 = vld [vmem:[%s212 + $0x700] sm:$0xff]
      %v451 = vld [vmem:[%s212 + $0x708] sm:$0xff]
      %v452 = vld [vmem:[%s212 + $0x710] sm:$0xff]
      %v453 = vld [vmem:[%s212 + $0x718] sm:$0xff]
      %v454 = vld [vmem:[%s212 + $0x720] sm:$0xff]
      %v455 = vld [vmem:[%s212 + $0x728] sm:$0xff]
      %v456 = vld [vmem:[%s212 + $0x730] sm:$0xff]
      %v457 = vld [vmem:[%s212 + $0x738] sm:$0xff]
      %v458 = vld [vmem:[%s212 + $0x740] sm:$0xff]
      %v459 = vld [vmem:[%s212 + $0x748] sm:$0xff]
      %v460 = vld [vmem:[%s212 + $0x750] sm:$0xff]
      %v461 = vld [vmem:[%s212 + $0x758] sm:$0xff]
      %v462 = vld [vmem:[%s212 + $0x760] sm:$0xff]
      %v463 = vld [vmem:[%s212 + $0x768] sm:$0xff]
      %v464 = vld [vmem:[%s212 + $0x770] sm:$0xff]
      %v465 = vld [vmem:[%s212 + $0x778] sm:$0xff]
      %v466 = vld [vmem:[%s212 + $0x780] sm:$0xff]
      %v467 = vld [vmem:[%s212 + $0x788] sm:$0xff]
      %v468 = vld [vmem:[%s212 + $0x790] sm:$0xff]
      %v469 = vld [vmem:[%s212 + $0x798] sm:$0xff]
      %v470 = vld [vmem:[%s212 + $0x7a0] sm:$0xff]
      %v471 = vld [vmem:[%s212 + $0x7a8] sm:$0xff]
      %v472 = vld [vmem:[%s212 + $0x7b0] sm:$0xff]
      %v473 = vld [vmem:[%s212 + $0x7b8] sm:$0xff]
      %v474 = vld [vmem:[%s212 + $0x7c0] sm:$0xff]
      %v475 = vld [vmem:[%s212 + $0x7c8] sm:$0xff]
      %v476 = vld [vmem:[%s212 + $0x7d0] sm:$0xff]
      %v477 = vld [vmem:[%s212 + $0x7d8] sm:$0xff]
      %v478 = vld [vmem:[%s212 + $0x7e0] sm:$0xff]
      %v479 = vld [vmem:[%s212 + $0x7e8] sm:$0xff]
      %v480 = vld [vmem:[%s212 + $0x7f0] sm:$0xff]
      %v481 = vld [vmem:[%s212 + $0x7f8] sm:$0xff]
      %v482 = vld [vmem:[%s212 + $0x800] sm:$0xff]
      %v483 = vld [vmem:[%s212 + $0x808] sm:$0xff]
      %v484 = vld [vmem:[%s212 + $0x810] sm:$0xff]
      %v485 = vld [vmem:[%s212 + $0x818] sm:$0xff]
      %v486 = vld [vmem:[%s212 + $0x820] sm:$0xff]
      %v487 = vld [vmem:[%s212 + $0x828] sm:$0xff]
      %v488 = vld [vmem:[%s212 + $0x830] sm:$0xff]
      %v489 = vld [vmem:[%s212 + $0x838] sm:$0xff]
      %v490 = vld [vmem:[%s212 + $0x840] sm:$0xff]
      %v491 = vld [vmem:[%s212 + $0x848] sm:$0xff]
      %v492 = vld [vmem:[%s212 + $0x850] sm:$0xff]
      %v493 = vld [vmem:[%s212 + $0x858] sm:$0xff]
      %v494 = vld [vmem:[%s212 + $0x860] sm:$0xff]
      %v495 = vld [vmem:[%s212 + $0x868] sm:$0xff]
      %v496 = vld [vmem:[%s212 + $0x870] sm:$0xff]
      %v497 = vld [vmem:[%s212 + $0x878] sm:$0xff]
      %v498 = vld [vmem:[%s212 + $0x880] sm:$0xff]
      %v499 = vld [vmem:[%s212 + $0x888] sm:$0xff]
      %v500 = vld [vmem:[%s212 + $0x890] sm:$0xff]
      %v501 = vld [vmem:[%s212 + $0x898] sm:$0xff]
      %v502 = vld [vmem:[%s212 + $0x8a0] sm:$0xff]
      %v503 = vld [vmem:[%s212 + $0x8a8] sm:$0xff]
      %v504 = vld [vmem:[%s212 + $0x8b0] sm:$0xff]
      %v505 = vld [vmem:[%s212 + $0x8b8] sm:$0xff]
      %v506 = vld [vmem:[%s212 + $0x8c0] sm:$0xff]
      %v507 = vld [vmem:[%s212 + $0x8c8] sm:$0xff]
      %v508 = vld [vmem:[%s212 + $0x8d0] sm:$0xff]
      %v509 = vld [vmem:[%s212 + $0x8d8] sm:$0xff]
      %v510 = vld [vmem:[%s212 + $0x8e0] sm:$0xff]
      %v511 = vld [vmem:[%s212 + $0x8e8] sm:$0xff]
      %v512 = vld [vmem:[%s212 + $0x8f0] sm:$0xff]
      %v513 = vld [vmem:[%s212 + $0x8f8] sm:$0xff]
      %v514 = vld [vmem:[%s212 + $0x900] sm:$0xff]
      %v515 = vld [vmem:[%s212 + $0x908] sm:$0xff]
      %v516 = vld [vmem:[%s212 + $0x910] sm:$0xff]
      %v517 = vld [vmem:[%s212 + $0x918] sm:$0xff]
      %v518 = vld [vmem:[%s212 + $0x920] sm:$0xff]
      %v519 = vld [vmem:[%s212 + $0x928] sm:$0xff]
      %v520 = vld [vmem:[%s1] sm:$0xff]
      %v521 = vld [vmem:[%s1 + $0x8] sm:$0xff]
      %v522 = vld [vmem:[%s1 + $0x10] sm:$0xff]
      %v523 = vld [vmem:[%s1 + $0x18] sm:$0xff]
      %v524 = vld [vmem:[%s1 + $0x20] sm:$0xff]
      %v525 = vld [vmem:[%s1 + $0x28] sm:$0xff]
      %v526 = vld [vmem:[%s1 + $0x30] sm:$0xff]
      %v527 = vld [vmem:[%s1 + $0x38] sm:$0xff]
      %v528 = vld [vmem:[%s1 + $0x40] sm:$0xff]
      %v529 = vld [vmem:[%s1 + $0x48] sm:$0xff]
      %v530 = vld [vmem:[%s1 + $0x50] sm:$0xff]
      %v531 = vld [vmem:[%s1 + $0x58] sm:$0xff]
      %v532 = vld [vmem:[%s1 + $0x60] sm:$0xff]
      %v533 = vld [vmem:[%s1 + $0x68] sm:$0xff]
      %v534 = vld [vmem:[%s1 + $0x70] sm:$0xff]
      %v535 = vld [vmem:[%s1 + $0x78] sm:$0xff]
      %v536 = vld [vmem:[%s1 + $0x80] sm:$0xff]
      %v537 = vld [vmem:[%s1 + $0x88] sm:$0xff]
      %v538 = vld [vmem:[%s1 + $0x90] sm:$0xff]
      %v539 = vld [vmem:[%s1 + $0x98] sm:$0xff]
      %v540 = vld [vmem:[%s1 + $0xa0] sm:$0xff]
      %v541 = vld [vmem:[%s1 + $0xa8] sm:$0xff]
      %v542 = vld [vmem:[%s1 + $0xb0] sm:$0xff]
      %v543 = vld [vmem:[%s1 + $0xb8] sm:$0xff]
      %v544 = vld [vmem:[%s1 + $0xc0] sm:$0xff]
      %v545 = vld [vmem:[%s1 + $0xc8] sm:$0xff]
      %v546 = vld [vmem:[%s1 + $0xd0] sm:$0xff]
      %v547 = vld [vmem:[%s1 + $0xd8] sm:$0xff]
      %v548 = vld [vmem:[%s1 + $0xe0] sm:$0xff]
      %v549 = vld [vmem:[%s1 + $0xe8] sm:$0xff]
      %v550 = vld [vmem:[%s1 + $0xf0] sm:$0xff]
      %v551 = vld [vmem:[%s1 + $0xf8] sm:$0xff]
      %v552 = vld [vmem:[%s1 + $0x100] sm:$0xff]
      %v553 = vld [vmem:[%s1 + $0x108] sm:$0xff]
      %v554 = vld [vmem:[%s1 + $0x110] sm:$0xff]
      %v555 = vld [vmem:[%s1 + $0x118] sm:$0xff]
      %v556 = vld [vmem:[%s2] sm:$0x1]
      %v558 = vperm.slane %v556, 0
      %vm560 = vcmask 261120
      %v562 = vsel %vm560, %v228, 0
      %v565 = vsel %vm560, %v231, 0
      %v568 = vsel %vm560, %v234, 0
      %v571 = vsel %vm560, %v237, 0
      %v574 = vsel %vm560, %v240, 0
      %v577 = vsel %vm560, %v243, 0
      %v580 = vsel %vm560, %v246, 0
      %v583 = vsel %vm560, %v249, 0
      %v586 = vsel %vm560, %v252, 0
      %v589 = vsel %vm560, %v255, 0
      %v592 = vsel %vm560, %v258, 0
      %v595 = vsel %vm560, %v261, 0
      %v598 = vsel %vm560, %v264, 0
      %v601 = vsel %vm560, %v267, 0
      %v604 = vsel %vm560, %v270, 0
      %v607 = vsel %vm560, %v273, 0
      %v610 = vsel %vm560, %v276, 0
      %v613 = vsel %vm560, %v279, 0
      %v616 = vsel %vm560, %v282, 0
      %v619 = vsel %vm560, %v285, 0
      %v622 = vsel %vm560, %v288, 0
      %v625 = vsel %vm560, %v291, 0
      %v628 = vsel %vm560, %v294, 0
      %v631 = vsel %vm560, %v297, 0
      %v634 = vsel %vm560, %v300, 0
      %v637 = vsel %vm560, %v303, 0
      %v640 = vsel %vm560, %v306, 0
      %v643 = vsel %vm560, %v309, 0
      %v646 = vsel %vm560, %v312, 0
      %v649 = vsel %vm560, %v315, 0
      %v652 = vsel %vm560, %v318, 0
      %v655 = vsel %vm560, %v321, 0
      %v658 = vsel %vm560, %v324, 0
      %v661 = vsel %vm560, %v327, 0
      %v664 = vsel %vm560, %v330, 0
      %v667 = vsel %vm560, %v333, 0
      %v670 = vsel %vm560, %v336, 0
      %v673 = vsel %vm560, %v339, 0
      %v676 = vsel %vm560, %v342, 0
      %v679 = vsel %vm560, %v345, 0
      %v682 = vsel %vm560, %v348, 0
      %v685 = vsel %vm560, %v351, 0
      %v688 = vsel %vm560, %v354, 0
      %v691 = vsel %vm560, %v357, 0
      %v694 = vsel %vm560, %v360, 0
      %v697 = vsel %vm560, %v363, 0
      %v700 = vsel %vm560, %v366, 0
      %v703 = vsel %vm560, %v369, 0
      %v706 = vsel %vm560, %v372, 0
      %v709 = vsel %vm560, %v375, 0
      %v712 = vsel %vm560, %v378, 0
      %v715 = vsel %vm560, %v381, 0
      %v718 = vsel %vm560, %v384, 0
      %v721 = vsel %vm560, %v387, 0
      %v724 = vsel %vm560, %v390, 0
      %v727 = vsel %vm560, %v393, 0
      %v730 = vsel %vm560, %v396, 0
      %v733 = vsel %vm560, %v399, 0
      %v736 = vsel %vm560, %v402, 0
      %v739 = vsel %vm560, %v405, 0
      %v742 = vsel %vm560, %v408, 0
      %v745 = vsel %vm560, %v411, 0
      %v748 = vsel %vm560, %v414, 0
      %v751 = vsel %vm560, %v417, 0
      %v754 = vsel %vm560, %v420, 0
      %v757 = vsel %vm560, %v423, 0
      %v760 = vsel %vm560, %v426, 0
      %v763 = vsel %vm560, %v429, 0
      %v766 = vsel %vm560, %v432, 0
      %v769 = vsel %vm560, %v435, 0
      %v772 = vsel %vm560, %v438, 0
      %v775 = vsel %vm560, %v441, 0
      %v778 = vsel %vm560, %v444, 0
      %v781 = vsel %vm560, %v447, 0
      %v784 = vsel %vm560, %v450, 0
      %v787 = vsel %vm560, %v453, 0
      %v790 = vsel %vm560, %v456, 0
      %v793 = vsel %vm560, %v459, 0
      %v796 = vsel %vm560, %v462, 0
      %v799 = vsel %vm560, %v465, 0
      %v802 = vsel %vm560, %v468, 0
      %v805 = vsel %vm560, %v471, 0
      %v808 = vsel %vm560, %v474, 0
      %v811 = vsel %vm560, %v477, 0
      %v814 = vsel %vm560, %v480, 0
      %v817 = vsel %vm560, %v483, 0
      %v820 = vsel %vm560, %v486, 0
      %v823 = vsel %vm560, %v489, 0
      %v826 = vsel %vm560, %v492, 0
      %v829 = vsel %vm560, %v495, 0
      %v832 = vsel %vm560, %v498, 0
      %v835 = vsel %vm560, %v501, 0
      %v838 = vsel %vm560, %v504, 0
      %v841 = vsel %vm560, %v507, 0
      %v844 = vsel %vm560, %v510, 0
      %v847 = vsel %vm560, %v513, 0
      %v850 = vsel %vm560, %v516, 0
      %v853 = vsel %vm560, %v519, 0
      %855 = vmatpush.msra.mxu0 %v535
      %856 = vmatpush.msra.mxu0 %v534
      %857 = vmatpush.msra.mxu0 %v533
      %858 = vmatpush.msra.mxu0 %v532
      %859 = vmatpush.msra.mxu0 %v531
      %860 = vmatpush.msra.mxu0 %v530
      %861 = vmatpush.msra.mxu0 %v529
      %862 = vmatpush.msra.mxu0 %v528
      %863 = vmatpush.msra.mxu0 %v527
      %864 = vmatpush.msra.mxu0 %v526
      %865 = vmatpush.msra.mxu0 %v525
      %866 = vmatpush.msra.mxu0 %v524
      %867 = vmatpush.msra.mxu0 %v523
      %868 = vmatpush.msra.mxu0 %v522
      %869 = vmatpush.msra.mxu0 %v521
      %870 = vmatpush.msra.mxu0 %v520
      %871 = vmatmul.f32.gmra.mxu0 %v226
      %v872 = vpop.f32.mrf.mxu0
      %v873 = vadd.f32 %v558, %v872
      %874 = vmatmul.f32.gmra.mxu0 %v229
      %v875 = vpop.f32.mrf.mxu0
      %v876 = vadd.f32 %v558, %v875
      %877 = vmatmul.f32.gmra.mxu0 %v232
      %v878 = vpop.f32.mrf.mxu0
      %v879 = vadd.f32 %v558, %v878
      %880 = vmatmul.f32.gmra.mxu0 %v235
      %v881 = vpop.f32.mrf.mxu0
      %v882 = vadd.f32 %v558, %v881
      %883 = vmatmul.f32.gmra.mxu0 %v238
      %v884 = vpop.f32.mrf.mxu0
      %v885 = vadd.f32 %v558, %v884
      %886 = vmatmul.f32.gmra.mxu0 %v241
      %v887 = vpop.f32.mrf.mxu0
      %v888 = vadd.f32 %v558, %v887
      %889 = vmatmul.f32.gmra.mxu0 %v244
      %v890 = vpop.f32.mrf.mxu0
      %v891 = vadd.f32 %v558, %v890
      %892 = vmatmul.f32.gmra.mxu0 %v247
      %v893 = vpop.f32.mrf.mxu0
      %v894 = vadd.f32 %v558, %v893
      %895 = vmatmul.f32.gmra.mxu0 %v250
      %v896 = vpop.f32.mrf.mxu0
      %v897 = vadd.f32 %v558, %v896
      %898 = vmatmul.f32.gmra.mxu0 %v253
      %v899 = vpop.f32.mrf.mxu0
      %v900 = vadd.f32 %v558, %v899
      %901 = vmatmul.f32.gmra.mxu0 %v256
      %v902 = vpop.f32.mrf.mxu0
      %v903 = vadd.f32 %v558, %v902
      %904 = vmatmul.f32.gmra.mxu0 %v259
      %v905 = vpop.f32.mrf.mxu0
      %v906 = vadd.f32 %v558, %v905
      %907 = vmatmul.f32.gmra.mxu0 %v262
      %v908 = vpop.f32.mrf.mxu0
      %v909 = vadd.f32 %v558, %v908
      %910 = vmatmul.f32.gmra.mxu0 %v265
      %v911 = vpop.f32.mrf.mxu0
      %v912 = vadd.f32 %v558, %v911
      %913 = vmatmul.f32.gmra.mxu0 %v268
      %v914 = vpop.f32.mrf.mxu0
      %v915 = vadd.f32 %v558, %v914
      %916 = vmatmul.f32.gmra.mxu0 %v271
      %v917 = vpop.f32.mrf.mxu0
      %v918 = vadd.f32 %v558, %v917
      %919 = vmatmul.f32.gmra.mxu0 %v274
      %v920 = vpop.f32.mrf.mxu0
      %v921 = vadd.f32 %v558, %v920
      %922 = vmatmul.f32.gmra.mxu0 %v277
      %v923 = vpop.f32.mrf.mxu0
      %v924 = vadd.f32 %v558, %v923
      %925 = vmatmul.f32.gmra.mxu0 %v280
      %v926 = vpop.f32.mrf.mxu0
      %v927 = vadd.f32 %v558, %v926
      %928 = vmatmul.f32.gmra.mxu0 %v283
      %v929 = vpop.f32.mrf.mxu0
      %v930 = vadd.f32 %v558, %v929
      %931 = vmatmul.f32.gmra.mxu0 %v286
      %v932 = vpop.f32.mrf.mxu0
      %v933 = vadd.f32 %v558, %v932
      %934 = vmatmul.f32.gmra.mxu0 %v289
      %v935 = vpop.f32.mrf.mxu0
      %v936 = vadd.f32 %v558, %v935
      %937 = vmatmul.f32.gmra.mxu0 %v292
      %v938 = vpop.f32.mrf.mxu0
      %v939 = vadd.f32 %v558, %v938
      %940 = vmatmul.f32.gmra.mxu0 %v295
      %v941 = vpop.f32.mrf.mxu0
      %v942 = vadd.f32 %v558, %v941
      %943 = vmatmul.f32.gmra.mxu0 %v298
      %v944 = vpop.f32.mrf.mxu0
      %v945 = vadd.f32 %v558, %v944
      %946 = vmatmul.f32.gmra.mxu0 %v301
      %v947 = vpop.f32.mrf.mxu0
      %v948 = vadd.f32 %v558, %v947
      %949 = vmatmul.f32.gmra.mxu0 %v304
      %v950 = vpop.f32.mrf.mxu0
      %v951 = vadd.f32 %v558, %v950
      %952 = vmatmul.f32.gmra.mxu0 %v307
      %v953 = vpop.f32.mrf.mxu0
      %v954 = vadd.f32 %v558, %v953
      %955 = vmatmul.f32.gmra.mxu0 %v310
      %v956 = vpop.f32.mrf.mxu0
      %v957 = vadd.f32 %v558, %v956
      %958 = vmatmul.f32.gmra.mxu0 %v313
      %v959 = vpop.f32.mrf.mxu0
      %v960 = vadd.f32 %v558, %v959
      %961 = vmatmul.f32.gmra.mxu0 %v316
      %v962 = vpop.f32.mrf.mxu0
      %v963 = vadd.f32 %v558, %v962
      %964 = vmatmul.f32.gmra.mxu0 %v319
      %v965 = vpop.f32.mrf.mxu0
      %v966 = vadd.f32 %v558, %v965
      %967 = vmatmul.f32.gmra.mxu0 %v322
      %v968 = vpop.f32.mrf.mxu0
      %v969 = vadd.f32 %v558, %v968
      %970 = vmatmul.f32.gmra.mxu0 %v325
      %v971 = vpop.f32.mrf.mxu0
      %v972 = vadd.f32 %v558, %v971
      %973 = vmatmul.f32.gmra.mxu0 %v328
      %v974 = vpop.f32.mrf.mxu0
      %v975 = vadd.f32 %v558, %v974
      %976 = vmatmul.f32.gmra.mxu0 %v331
      %v977 = vpop.f32.mrf.mxu0
      %v978 = vadd.f32 %v558, %v977
      %979 = vmatmul.f32.gmra.mxu0 %v334
      %v980 = vpop.f32.mrf.mxu0
      %v981 = vadd.f32 %v558, %v980
      %982 = vmatmul.f32.gmra.mxu0 %v337
      %v983 = vpop.f32.mrf.mxu0
      %v984 = vadd.f32 %v558, %v983
      %985 = vmatmul.f32.gmra.mxu0 %v340
      %v986 = vpop.f32.mrf.mxu0
      %v987 = vadd.f32 %v558, %v986
      %988 = vmatmul.f32.gmra.mxu0 %v343
      %v989 = vpop.f32.mrf.mxu0
      %v990 = vadd.f32 %v558, %v989
      %991 = vmatmul.f32.gmra.mxu0 %v346
      %v992 = vpop.f32.mrf.mxu0
      %v993 = vadd.f32 %v558, %v992
      %994 = vmatmul.f32.gmra.mxu0 %v349
      %v995 = vpop.f32.mrf.mxu0
      %v996 = vadd.f32 %v558, %v995
      %997 = vmatmul.f32.gmra.mxu0 %v352
      %v998 = vpop.f32.mrf.mxu0
      %v999 = vadd.f32 %v558, %v998
      %1000 = vmatmul.f32.gmra.mxu0 %v355
      %v1001 = vpop.f32.mrf.mxu0
      %v1002 = vadd.f32 %v558, %v1001
      %1003 = vmatmul.f32.gmra.mxu0 %v358
      %v1004 = vpop.f32.mrf.mxu0
      %v1005 = vadd.f32 %v558, %v1004
      %1006 = vmatmul.f32.gmra.mxu0 %v361
      %v1007 = vpop.f32.mrf.mxu0
      %v1008 = vadd.f32 %v558, %v1007
      %1009 = vmatmul.f32.gmra.mxu0 %v364
      %v1010 = vpop.f32.mrf.mxu0
      %v1011 = vadd.f32 %v558, %v1010
      %1012 = vmatmul.f32.gmra.mxu0 %v367
      %v1013 = vpop.f32.mrf.mxu0
      %v1014 = vadd.f32 %v558, %v1013
      %1015 = vmatmul.f32.gmra.mxu0 %v370
      %v1016 = vpop.f32.mrf.mxu0
      %v1017 = vadd.f32 %v558, %v1016
      %1018 = vmatmul.f32.gmra.mxu0 %v373
      %v1019 = vpop.f32.mrf.mxu0
      %v1020 = vadd.f32 %v558, %v1019
      %1021 = vmatmul.f32.gmra.mxu0 %v376
      %v1022 = vpop.f32.mrf.mxu0
      %v1023 = vadd.f32 %v558, %v1022
      %1024 = vmatmul.f32.gmra.mxu0 %v379
      %v1025 = vpop.f32.mrf.mxu0
      %v1026 = vadd.f32 %v558, %v1025
      %1027 = vmatmul.f32.gmra.mxu0 %v382
      %v1028 = vpop.f32.mrf.mxu0
      %v1029 = vadd.f32 %v558, %v1028
      %1030 = vmatmul.f32.gmra.mxu0 %v385
      %v1031 = vpop.f32.mrf.mxu0
      %v1032 = vadd.f32 %v558, %v1031
      %1033 = vmatmul.f32.gmra.mxu0 %v388
      %v1034 = vpop.f32.mrf.mxu0
      %v1035 = vadd.f32 %v558, %v1034
      %1036 = vmatmul.f32.gmra.mxu0 %v391
      %v1037 = vpop.f32.mrf.mxu0
      %v1038 = vadd.f32 %v558, %v1037
      %1039 = vmatmul.f32.gmra.mxu0 %v394
      %v1040 = vpop.f32.mrf.mxu0
      %v1041 = vadd.f32 %v558, %v1040
      %1042 = vmatmul.f32.gmra.mxu0 %v397
      %v1043 = vpop.f32.mrf.mxu0
      %v1044 = vadd.f32 %v558, %v1043
      %1045 = vmatmul.f32.gmra.mxu0 %v400
      %v1046 = vpop.f32.mrf.mxu0
      %v1047 = vadd.f32 %v558, %v1046
      %1048 = vmatmul.f32.gmra.mxu0 %v403
      %v1049 = vpop.f32.mrf.mxu0
      %v1050 = vadd.f32 %v558, %v1049
      %1051 = vmatmul.f32.gmra.mxu0 %v406
      %v1052 = vpop.f32.mrf.mxu0
      %v1053 = vadd.f32 %v558, %v1052
      %1054 = vmatmul.f32.gmra.mxu0 %v409
      %v1055 = vpop.f32.mrf.mxu0
      %v1056 = vadd.f32 %v558, %v1055
      %1057 = vmatmul.f32.gmra.mxu0 %v412
      %v1058 = vpop.f32.mrf.mxu0
      %v1059 = vadd.f32 %v558, %v1058
      %1060 = vmatmul.f32.gmra.mxu0 %v415
      %v1061 = vpop.f32.mrf.mxu0
      %v1062 = vadd.f32 %v558, %v1061
      %1063 = vmatmul.f32.gmra.mxu0 %v418
      %v1064 = vpop.f32.mrf.mxu0
      %v1065 = vadd.f32 %v558, %v1064
      %1066 = vmatmul.f32.gmra.mxu0 %v421
      %v1067 = vpop.f32.mrf.mxu0
      %v1068 = vadd.f32 %v558, %v1067
      %1069 = vmatmul.f32.gmra.mxu0 %v424
      %v1070 = vpop.f32.mrf.mxu0
      %v1071 = vadd.f32 %v558, %v1070
      %1072 = vmatmul.f32.gmra.mxu0 %v427
      %v1073 = vpop.f32.mrf.mxu0
      %v1074 = vadd.f32 %v558, %v1073
      %1075 = vmatmul.f32.gmra.mxu0 %v430
      %v1076 = vpop.f32.mrf.mxu0
      %v1077 = vadd.f32 %v558, %v1076
      %1078 = vmatmul.f32.gmra.mxu0 %v433
      %v1079 = vpop.f32.mrf.mxu0
      %v1080 = vadd.f32 %v558, %v1079
      %1081 = vmatmul.f32.gmra.mxu0 %v436
      %v1082 = vpop.f32.mrf.mxu0
      %v1083 = vadd.f32 %v558, %v1082
      %1084 = vmatmul.f32.gmra.mxu0 %v439
      %v1085 = vpop.f32.mrf.mxu0
      %v1086 = vadd.f32 %v558, %v1085
      %1087 = vmatmul.f32.gmra.mxu0 %v442
      %v1088 = vpop.f32.mrf.mxu0
      %v1089 = vadd.f32 %v558, %v1088
      %1090 = vmatmul.f32.gmra.mxu0 %v445
      %v1091 = vpop.f32.mrf.mxu0
      %v1092 = vadd.f32 %v558, %v1091
      %1093 = vmatmul.f32.gmra.mxu0 %v448
      %v1094 = vpop.f32.mrf.mxu0
      %v1095 = vadd.f32 %v558, %v1094
      %1096 = vmatmul.f32.gmra.mxu0 %v451
      %v1097 = vpop.f32.mrf.mxu0
      %v1098 = vadd.f32 %v558, %v1097
      %1099 = vmatmul.f32.gmra.mxu0 %v454
      %v1100 = vpop.f32.mrf.mxu0
      %v1101 = vadd.f32 %v558, %v1100
      %1102 = vmatmul.f32.gmra.mxu0 %v457
      %v1103 = vpop.f32.mrf.mxu0
      %v1104 = vadd.f32 %v558, %v1103
      %1105 = vmatmul.f32.gmra.mxu0 %v460
      %v1106 = vpop.f32.mrf.mxu0
      %v1107 = vadd.f32 %v558, %v1106
      %1108 = vmatmul.f32.gmra.mxu0 %v463
      %v1109 = vpop.f32.mrf.mxu0
      %v1110 = vadd.f32 %v558, %v1109
      %1111 = vmatmul.f32.gmra.mxu0 %v466
      %v1112 = vpop.f32.mrf.mxu0
      %v1113 = vadd.f32 %v558, %v1112
      %1114 = vmatmul.f32.gmra.mxu0 %v469
      %v1115 = vpop.f32.mrf.mxu0
      %v1116 = vadd.f32 %v558, %v1115
      %1117 = vmatmul.f32.gmra.mxu0 %v472
      %v1118 = vpop.f32.mrf.mxu0
      %v1119 = vadd.f32 %v558, %v1118
      %1120 = vmatmul.f32.gmra.mxu0 %v475
      %v1121 = vpop.f32.mrf.mxu0
      %v1122 = vadd.f32 %v558, %v1121
      %1123 = vmatmul.f32.gmra.mxu0 %v478
      %v1124 = vpop.f32.mrf.mxu0
      %v1125 = vadd.f32 %v558, %v1124
      %1126 = vmatmul.f32.gmra.mxu0 %v481
      %v1127 = vpop.f32.mrf.mxu0
      %v1128 = vadd.f32 %v558, %v1127
      %1129 = vmatmul.f32.gmra.mxu0 %v484
      %v1130 = vpop.f32.mrf.mxu0
      %v1131 = vadd.f32 %v558, %v1130
      %1132 = vmatmul.f32.gmra.mxu0 %v487
      %v1133 = vpop.f32.mrf.mxu0
      %v1134 = vadd.f32 %v558, %v1133
      %1135 = vmatmul.f32.gmra.mxu0 %v490
      %v1136 = vpop.f32.mrf.mxu0
      %v1137 = vadd.f32 %v558, %v1136
      %1138 = vmatmul.f32.gmra.mxu0 %v493
      %v1139 = vpop.f32.mrf.mxu0
      %v1140 = vadd.f32 %v558, %v1139
      %1141 = vmatmul.f32.gmra.mxu0 %v496
      %v1142 = vpop.f32.mrf.mxu0
      %v1143 = vadd.f32 %v558, %v1142
      %1144 = vmatmul.f32.gmra.mxu0 %v499
      %v1145 = vpop.f32.mrf.mxu0
      %v1146 = vadd.f32 %v558, %v1145
      %1147 = vmatmul.f32.gmra.mxu0 %v502
      %v1148 = vpop.f32.mrf.mxu0
      %v1149 = vadd.f32 %v558, %v1148
      %1150 = vmatmul.f32.gmra.mxu0 %v505
      %v1151 = vpop.f32.mrf.mxu0
      %v1152 = vadd.f32 %v558, %v1151
      %1153 = vmatmul.f32.gmra.mxu0 %v508
      %v1154 = vpop.f32.mrf.mxu0
      %v1155 = vadd.f32 %v558, %v1154
      %1156 = vmatmul.f32.gmra.mxu0 %v511
      %v1157 = vpop.f32.mrf.mxu0
      %v1158 = vadd.f32 %v558, %v1157
      %1159 = vmatmul.f32.gmra.mxu0 %v514
      %v1160 = vpop.f32.mrf.mxu0
      %v1161 = vadd.f32 %v558, %v1160
      %1162 = vmatmul.f32.gmra.mxu0 %v517
      %v1163 = vpop.f32.mrf.mxu0
      %v1164 = vadd.f32 %v558, %v1163
      %1165 = vdwg.mxu0
      %1166 = vmatpush.msra.mxu0 %v551
      %1167 = vmatpush.msra.mxu0 %v550
      %1168 = vmatpush.msra.mxu0 %v549
      %1169 = vmatpush.msra.mxu0 %v548
      %1170 = vmatpush.msra.mxu0 %v547
      %1171 = vmatpush.msra.mxu0 %v546
      %1172 = vmatpush.msra.mxu0 %v545
      %1173 = vmatpush.msra.mxu0 %v544
      %1174 = vmatpush.msra.mxu0 %v543
      %1175 = vmatpush.msra.mxu0 %v542
      %1176 = vmatpush.msra.mxu0 %v541
      %1177 = vmatpush.msra.mxu0 %v540
      %1178 = vmatpush.msra.mxu0 %v539
      %1179 = vmatpush.msra.mxu0 %v538
      %1180 = vmatpush.msra.mxu0 %v537
      %1181 = vmatpush.msra.mxu0 %v536
      %1182 = vmatmul.f32.gmra.mxu0 %v227
      %v1183 = vpop.f32.mrf.mxu0
      %v1184 = vadd.f32 %v873, %v1183
      %1185 = vmatmul.f32.gmra.mxu0 %v230
      %v1186 = vpop.f32.mrf.mxu0
      %v1187 = vadd.f32 %v876, %v1186
      %1188 = vmatmul.f32.gmra.mxu0 %v233
      %v1189 = vpop.f32.mrf.mxu0
      %v1190 = vadd.f32 %v879, %v1189
      %1191 = vmatmul.f32.gmra.mxu0 %v236
      %v1192 = vpop.f32.mrf.mxu0
      %v1193 = vadd.f32 %v882, %v1192
      %1194 = vmatmul.f32.gmra.mxu0 %v239
      %v1195 = vpop.f32.mrf.mxu0
      %v1196 = vadd.f32 %v885, %v1195
      %1197 = vmatmul.f32.gmra.mxu0 %v242
      %v1198 = vpop.f32.mrf.mxu0
      %v1199 = vadd.f32 %v888, %v1198
      %1200 = vmatmul.f32.gmra.mxu0 %v245
      %v1201 = vpop.f32.mrf.mxu0
      %v1202 = vadd.f32 %v891, %v1201
      %1203 = vmatmul.f32.gmra.mxu0 %v248
      %v1204 = vpop.f32.mrf.mxu0
      %v1205 = vadd.f32 %v894, %v1204
      %1206 = vmatmul.f32.gmra.mxu0 %v251
      %v1207 = vpop.f32.mrf.mxu0
      %v1208 = vadd.f32 %v897, %v1207
      %1209 = vmatmul.f32.gmra.mxu0 %v254
      %v1210 = vpop.f32.mrf.mxu0
      %v1211 = vadd.f32 %v900, %v1210
      %1212 = vmatmul.f32.gmra.mxu0 %v257
      %v1213 = vpop.f32.mrf.mxu0
      %v1214 = vadd.f32 %v903, %v1213
      %1215 = vmatmul.f32.gmra.mxu0 %v260
      %v1216 = vpop.f32.mrf.mxu0
      %v1217 = vadd.f32 %v906, %v1216
      %1218 = vmatmul.f32.gmra.mxu0 %v263
      %v1219 = vpop.f32.mrf.mxu0
      %v1220 = vadd.f32 %v909, %v1219
      %1221 = vmatmul.f32.gmra.mxu0 %v266
      %v1222 = vpop.f32.mrf.mxu0
      %v1223 = vadd.f32 %v912, %v1222
      %1224 = vmatmul.f32.gmra.mxu0 %v269
      %v1225 = vpop.f32.mrf.mxu0
      %v1226 = vadd.f32 %v915, %v1225
      %1227 = vmatmul.f32.gmra.mxu0 %v272
      %v1228 = vpop.f32.mrf.mxu0
      %v1229 = vadd.f32 %v918, %v1228
      %1230 = vmatmul.f32.gmra.mxu0 %v275
      %v1231 = vpop.f32.mrf.mxu0
      %v1232 = vadd.f32 %v921, %v1231
      %1233 = vmatmul.f32.gmra.mxu0 %v278
      %v1234 = vpop.f32.mrf.mxu0
      %v1235 = vadd.f32 %v924, %v1234
      %1236 = vmatmul.f32.gmra.mxu0 %v281
      %v1237 = vpop.f32.mrf.mxu0
      %v1238 = vadd.f32 %v927, %v1237
      %1239 = vmatmul.f32.gmra.mxu0 %v284
      %v1240 = vpop.f32.mrf.mxu0
      %v1241 = vadd.f32 %v930, %v1240
      %1242 = vmatmul.f32.gmra.mxu0 %v287
      %v1243 = vpop.f32.mrf.mxu0
      %v1244 = vadd.f32 %v933, %v1243
      %1245 = vmatmul.f32.gmra.mxu0 %v290
      %v1246 = vpop.f32.mrf.mxu0
      %v1247 = vadd.f32 %v936, %v1246
      %1248 = vmatmul.f32.gmra.mxu0 %v293
      %v1249 = vpop.f32.mrf.mxu0
      %v1250 = vadd.f32 %v939, %v1249
      %1251 = vmatmul.f32.gmra.mxu0 %v296
      %v1252 = vpop.f32.mrf.mxu0
      %v1253 = vadd.f32 %v942, %v1252
      %1254 = vmatmul.f32.gmra.mxu0 %v299
      %v1255 = vpop.f32.mrf.mxu0
      %v1256 = vadd.f32 %v945, %v1255
      %1257 = vmatmul.f32.gmra.mxu0 %v302
      %v1258 = vpop.f32.mrf.mxu0
      %v1259 = vadd.f32 %v948, %v1258
      %1260 = vmatmul.f32.gmra.mxu0 %v305
      %v1261 = vpop.f32.mrf.mxu0
      %v1262 = vadd.f32 %v951, %v1261
      %1263 = vmatmul.f32.gmra.mxu0 %v308
      %v1264 = vpop.f32.mrf.mxu0
      %v1265 = vadd.f32 %v954, %v1264
      %1266 = vmatmul.f32.gmra.mxu0 %v311
      %v1267 = vpop.f32.mrf.mxu0
      %v1268 = vadd.f32 %v957, %v1267
      %1269 = vmatmul.f32.gmra.mxu0 %v314
      %v1270 = vpop.f32.mrf.mxu0
      %v1271 = vadd.f32 %v960, %v1270
      %1272 = vmatmul.f32.gmra.mxu0 %v317
      %v1273 = vpop.f32.mrf.mxu0
      %v1274 = vadd.f32 %v963, %v1273
      %1275 = vmatmul.f32.gmra.mxu0 %v320
      %v1276 = vpop.f32.mrf.mxu0
      %v1277 = vadd.f32 %v966, %v1276
      %1278 = vmatmul.f32.gmra.mxu0 %v323
      %v1279 = vpop.f32.mrf.mxu0
      %v1280 = vadd.f32 %v969, %v1279
      %1281 = vmatmul.f32.gmra.mxu0 %v326
      %v1282 = vpop.f32.mrf.mxu0
      %v1283 = vadd.f32 %v972, %v1282
      %1284 = vmatmul.f32.gmra.mxu0 %v329
      %v1285 = vpop.f32.mrf.mxu0
      %v1286 = vadd.f32 %v975, %v1285
      %1287 = vmatmul.f32.gmra.mxu0 %v332
      %v1288 = vpop.f32.mrf.mxu0
      %v1289 = vadd.f32 %v978, %v1288
      %1290 = vmatmul.f32.gmra.mxu0 %v335
      %v1291 = vpop.f32.mrf.mxu0
      %v1292 = vadd.f32 %v981, %v1291
      %1293 = vmatmul.f32.gmra.mxu0 %v338
      %v1294 = vpop.f32.mrf.mxu0
      %v1295 = vadd.f32 %v984, %v1294
      %1296 = vmatmul.f32.gmra.mxu0 %v341
      %v1297 = vpop.f32.mrf.mxu0
      %v1298 = vadd.f32 %v987, %v1297
      %1299 = vmatmul.f32.gmra.mxu0 %v344
      %v1300 = vpop.f32.mrf.mxu0
      %v1301 = vadd.f32 %v990, %v1300
      %1302 = vmatmul.f32.gmra.mxu0 %v347
      %v1303 = vpop.f32.mrf.mxu0
      %v1304 = vadd.f32 %v993, %v1303
      %1305 = vmatmul.f32.gmra.mxu0 %v350
      %v1306 = vpop.f32.mrf.mxu0
      %v1307 = vadd.f32 %v996, %v1306
      %1308 = vmatmul.f32.gmra.mxu0 %v353
      %v1309 = vpop.f32.mrf.mxu0
      %v1310 = vadd.f32 %v999, %v1309
      %1311 = vmatmul.f32.gmra.mxu0 %v356
      %v1312 = vpop.f32.mrf.mxu0
      %v1313 = vadd.f32 %v1002, %v1312
      %1314 = vmatmul.f32.gmra.mxu0 %v359
      %v1315 = vpop.f32.mrf.mxu0
      %v1316 = vadd.f32 %v1005, %v1315
      %1317 = vmatmul.f32.gmra.mxu0 %v362
      %v1318 = vpop.f32.mrf.mxu0
      %v1319 = vadd.f32 %v1008, %v1318
      %1320 = vmatmul.f32.gmra.mxu0 %v365
      %v1321 = vpop.f32.mrf.mxu0
      %v1322 = vadd.f32 %v1011, %v1321
      %1323 = vmatmul.f32.gmra.mxu0 %v368
      %v1324 = vpop.f32.mrf.mxu0
      %v1325 = vadd.f32 %v1014, %v1324
      %1326 = vmatmul.f32.gmra.mxu0 %v371
      %v1327 = vpop.f32.mrf.mxu0
      %v1328 = vadd.f32 %v1017, %v1327
      %1329 = vmatmul.f32.gmra.mxu0 %v374
      %v1330 = vpop.f32.mrf.mxu0
      %v1331 = vadd.f32 %v1020, %v1330
      %1332 = vmatmul.f32.gmra.mxu0 %v377
      %v1333 = vpop.f32.mrf.mxu0
      %v1334 = vadd.f32 %v1023, %v1333
      %1335 = vmatmul.f32.gmra.mxu0 %v380
      %v1336 = vpop.f32.mrf.mxu0
      %v1337 = vadd.f32 %v1026, %v1336
      %1338 = vmatmul.f32.gmra.mxu0 %v383
      %v1339 = vpop.f32.mrf.mxu0
      %v1340 = vadd.f32 %v1029, %v1339
      %1341 = vmatmul.f32.gmra.mxu0 %v386
      %v1342 = vpop.f32.mrf.mxu0
      %v1343 = vadd.f32 %v1032, %v1342
      %1344 = vmatmul.f32.gmra.mxu0 %v389
      %v1345 = vpop.f32.mrf.mxu0
      %v1346 = vadd.f32 %v1035, %v1345
      %1347 = vmatmul.f32.gmra.mxu0 %v392
      %v1348 = vpop.f32.mrf.mxu0
      %v1349 = vadd.f32 %v1038, %v1348
      %1350 = vmatmul.f32.gmra.mxu0 %v395
      %v1351 = vpop.f32.mrf.mxu0
      %v1352 = vadd.f32 %v1041, %v1351
      %1353 = vmatmul.f32.gmra.mxu0 %v398
      %v1354 = vpop.f32.mrf.mxu0
      %v1355 = vadd.f32 %v1044, %v1354
      %1356 = vmatmul.f32.gmra.mxu0 %v401
      %v1357 = vpop.f32.mrf.mxu0
      %v1358 = vadd.f32 %v1047, %v1357
      %1359 = vmatmul.f32.gmra.mxu0 %v404
      %v1360 = vpop.f32.mrf.mxu0
      %v1361 = vadd.f32 %v1050, %v1360
      %1362 = vmatmul.f32.gmra.mxu0 %v407
      %v1363 = vpop.f32.mrf.mxu0
      %v1364 = vadd.f32 %v1053, %v1363
      %1365 = vmatmul.f32.gmra.mxu0 %v410
      %v1366 = vpop.f32.mrf.mxu0
      %v1367 = vadd.f32 %v1056, %v1366
      %1368 = vmatmul.f32.gmra.mxu0 %v413
      %v1369 = vpop.f32.mrf.mxu0
      %v1370 = vadd.f32 %v1059, %v1369
      %1371 = vmatmul.f32.gmra.mxu0 %v416
      %v1372 = vpop.f32.mrf.mxu0
      %v1373 = vadd.f32 %v1062, %v1372
      %1374 = vmatmul.f32.gmra.mxu0 %v419
      %v1375 = vpop.f32.mrf.mxu0
      %v1376 = vadd.f32 %v1065, %v1375
      %1377 = vmatmul.f32.gmra.mxu0 %v422
      %v1378 = vpop.f32.mrf.mxu0
      %v1379 = vadd.f32 %v1068, %v1378
      %1380 = vmatmul.f32.gmra.mxu0 %v425
      %v1381 = vpop.f32.mrf.mxu0
      %v1382 = vadd.f32 %v1071, %v1381
      %1383 = vmatmul.f32.gmra.mxu0 %v428
      %v1384 = vpop.f32.mrf.mxu0
      %v1385 = vadd.f32 %v1074, %v1384
      %1386 = vmatmul.f32.gmra.mxu0 %v431
      %v1387 = vpop.f32.mrf.mxu0
      %v1388 = vadd.f32 %v1077, %v1387
      %1389 = vmatmul.f32.gmra.mxu0 %v434
      %v1390 = vpop.f32.mrf.mxu0
      %v1391 = vadd.f32 %v1080, %v1390
      %1392 = vmatmul.f32.gmra.mxu0 %v437
      %v1393 = vpop.f32.mrf.mxu0
      %v1394 = vadd.f32 %v1083, %v1393
      %1395 = vmatmul.f32.gmra.mxu0 %v440
      %v1396 = vpop.f32.mrf.mxu0
      %v1397 = vadd.f32 %v1086, %v1396
      %1398 = vmatmul.f32.gmra.mxu0 %v443
      %v1399 = vpop.f32.mrf.mxu0
      %v1400 = vadd.f32 %v1089, %v1399
      %1401 = vmatmul.f32.gmra.mxu0 %v446
      %v1402 = vpop.f32.mrf.mxu0
      %v1403 = vadd.f32 %v1092, %v1402
      %1404 = vmatmul.f32.gmra.mxu0 %v449
      %v1405 = vpop.f32.mrf.mxu0
      %v1406 = vadd.f32 %v1095, %v1405
      %1407 = vmatmul.f32.gmra.mxu0 %v452
      %v1408 = vpop.f32.mrf.mxu0
      %v1409 = vadd.f32 %v1098, %v1408
      %1410 = vmatmul.f32.gmra.mxu0 %v455
      %v1411 = vpop.f32.mrf.mxu0
      %v1412 = vadd.f32 %v1101, %v1411
      %1413 = vmatmul.f32.gmra.mxu0 %v458
      %v1414 = vpop.f32.mrf.mxu0
      %v1415 = vadd.f32 %v1104, %v1414
      %1416 = vmatmul.f32.gmra.mxu0 %v461
      %v1417 = vpop.f32.mrf.mxu0
      %v1418 = vadd.f32 %v1107, %v1417
      %1419 = vmatmul.f32.gmra.mxu0 %v464
      %v1420 = vpop.f32.mrf.mxu0
      %v1421 = vadd.f32 %v1110, %v1420
      %1422 = vmatmul.f32.gmra.mxu0 %v467
      %v1423 = vpop.f32.mrf.mxu0
      %v1424 = vadd.f32 %v1113, %v1423
      %1425 = vmatmul.f32.gmra.mxu0 %v470
      %v1426 = vpop.f32.mrf.mxu0
      %v1427 = vadd.f32 %v1116, %v1426
      %1428 = vmatmul.f32.gmra.mxu0 %v473
      %v1429 = vpop.f32.mrf.mxu0
      %v1430 = vadd.f32 %v1119, %v1429
      %1431 = vmatmul.f32.gmra.mxu0 %v476
      %v1432 = vpop.f32.mrf.mxu0
      %v1433 = vadd.f32 %v1122, %v1432
      %1434 = vmatmul.f32.gmra.mxu0 %v479
      %v1435 = vpop.f32.mrf.mxu0
      %v1436 = vadd.f32 %v1125, %v1435
      %1437 = vmatmul.f32.gmra.mxu0 %v482
      %v1438 = vpop.f32.mrf.mxu0
      %v1439 = vadd.f32 %v1128, %v1438
      %1440 = vmatmul.f32.gmra.mxu0 %v485
      %v1441 = vpop.f32.mrf.mxu0
      %v1442 = vadd.f32 %v1131, %v1441
      %1443 = vmatmul.f32.gmra.mxu0 %v488
      %v1444 = vpop.f32.mrf.mxu0
      %v1445 = vadd.f32 %v1134, %v1444
      %1446 = vmatmul.f32.gmra.mxu0 %v491
      %v1447 = vpop.f32.mrf.mxu0
      %v1448 = vadd.f32 %v1137, %v1447
      %1449 = vmatmul.f32.gmra.mxu0 %v494
      %v1450 = vpop.f32.mrf.mxu0
      %v1451 = vadd.f32 %v1140, %v1450
      %1452 = vmatmul.f32.gmra.mxu0 %v497
      %v1453 = vpop.f32.mrf.mxu0
      %v1454 = vadd.f32 %v1143, %v1453
      %1455 = vmatmul.f32.gmra.mxu0 %v500
      %v1456 = vpop.f32.mrf.mxu0
      %v1457 = vadd.f32 %v1146, %v1456
      %1458 = vmatmul.f32.gmra.mxu0 %v503
      %v1459 = vpop.f32.mrf.mxu0
      %v1460 = vadd.f32 %v1149, %v1459
      %1461 = vmatmul.f32.gmra.mxu0 %v506
      %v1462 = vpop.f32.mrf.mxu0
      %v1463 = vadd.f32 %v1152, %v1462
      %1464 = vmatmul.f32.gmra.mxu0 %v509
      %v1465 = vpop.f32.mrf.mxu0
      %v1466 = vadd.f32 %v1155, %v1465
      %1467 = vmatmul.f32.gmra.mxu0 %v512
      %v1468 = vpop.f32.mrf.mxu0
      %v1469 = vadd.f32 %v1158, %v1468
      %1470 = vmatmul.f32.gmra.mxu0 %v515
      %v1471 = vpop.f32.mrf.mxu0
      %v1472 = vadd.f32 %v1161, %v1471
      %1473 = vmatmul.f32.gmra.mxu0 %v518
      %v1474 = vpop.f32.mrf.mxu0
      %v1475 = vadd.f32 %v1164, %v1474
      %1476 = vdwg.mxu0
      %1477 = vmatpush.msra.mxu0 0.0
      %1478 = vmatpush.msra.mxu0 0.0
      %1479 = vmatpush.msra.mxu0 0.0
      %1480 = vmatpush.msra.mxu0 0.0
      %1481 = vmatpush.msra.mxu0 0.0
      %1482 = vmatpush.msra.mxu0 0.0
      %1483 = vmatpush.msra.mxu0 0.0
      %1484 = vmatpush.msra.mxu0 0.0
      %1485 = vmatpush.msra.mxu0 0.0
      %1486 = vmatpush.msra.mxu0 0.0
      %1487 = vmatpush.msra.mxu0 0.0
      %1488 = vmatpush.msra.mxu0 0.0
      %1489 = vmatpush.msra.mxu0 %v555
      %1490 = vmatpush.msra.mxu0 %v554
      %1491 = vmatpush.msra.mxu0 %v553
      %1492 = vmatpush.msra.mxu0 %v552
      %1493 = vmatmul.f32.gmra.mxu0 %v562
      %v1494 = vpop.f32.mrf.mxu0
      %v1495 = vadd.f32 %v1184, %v1494
      %1496 = vmatmul.f32.gmra.mxu0 %v565
      %v1497 = vpop.f32.mrf.mxu0
      %v1498 = vadd.f32 %v1187, %v1497
      %1499 = vmatmul.f32.gmra.mxu0 %v568
      %v1500 = vpop.f32.mrf.mxu0
      %v1501 = vadd.f32 %v1190, %v1500
      %1502 = vmatmul.f32.gmra.mxu0 %v571
      %v1503 = vpop.f32.mrf.mxu0
      %v1504 = vadd.f32 %v1193, %v1503
      %1505 = vmatmul.f32.gmra.mxu0 %v574
      %v1506 = vpop.f32.mrf.mxu0
      %v1507 = vadd.f32 %v1196, %v1506
      %1508 = vmatmul.f32.gmra.mxu0 %v577
      %v1509 = vpop.f32.mrf.mxu0
      %v1510 = vadd.f32 %v1199, %v1509
      %1511 = vmatmul.f32.gmra.mxu0 %v580
      %v1512 = vpop.f32.mrf.mxu0
      %v1513 = vadd.f32 %v1202, %v1512
      %1514 = vmatmul.f32.gmra.mxu0 %v583
      %v1515 = vpop.f32.mrf.mxu0
      %v1516 = vadd.f32 %v1205, %v1515
      %1517 = vmatmul.f32.gmra.mxu0 %v586
      %v1518 = vpop.f32.mrf.mxu0
      %v1519 = vadd.f32 %v1208, %v1518
      %1520 = vmatmul.f32.gmra.mxu0 %v589
      %v1521 = vpop.f32.mrf.mxu0
      %v1522 = vadd.f32 %v1211, %v1521
      %1523 = vmatmul.f32.gmra.mxu0 %v592
      %v1524 = vpop.f32.mrf.mxu0
      %v1525 = vadd.f32 %v1214, %v1524
      %1526 = vmatmul.f32.gmra.mxu0 %v595
      %v1527 = vpop.f32.mrf.mxu0
      %v1528 = vadd.f32 %v1217, %v1527
      %1529 = vmatmul.f32.gmra.mxu0 %v598
      %v1530 = vpop.f32.mrf.mxu0
      %v1531 = vadd.f32 %v1220, %v1530
      %1532 = vmatmul.f32.gmra.mxu0 %v601
      %v1533 = vpop.f32.mrf.mxu0
      %v1534 = vadd.f32 %v1223, %v1533
      %1535 = vmatmul.f32.gmra.mxu0 %v604
      %v1536 = vpop.f32.mrf.mxu0
      %v1537 = vadd.f32 %v1226, %v1536
      %1538 = vmatmul.f32.gmra.mxu0 %v607
      %v1539 = vpop.f32.mrf.mxu0
      %v1540 = vadd.f32 %v1229, %v1539
      %1541 = vmatmul.f32.gmra.mxu0 %v610
      %v1542 = vpop.f32.mrf.mxu0
      %v1543 = vadd.f32 %v1232, %v1542
      %1544 = vmatmul.f32.gmra.mxu0 %v613
      %v1545 = vpop.f32.mrf.mxu0
      %v1546 = vadd.f32 %v1235, %v1545
      %1547 = vmatmul.f32.gmra.mxu0 %v616
      %v1548 = vpop.f32.mrf.mxu0
      %v1549 = vadd.f32 %v1238, %v1548
      %1550 = vmatmul.f32.gmra.mxu0 %v619
      %v1551 = vpop.f32.mrf.mxu0
      %v1552 = vadd.f32 %v1241, %v1551
      %1553 = vmatmul.f32.gmra.mxu0 %v622
      %v1554 = vpop.f32.mrf.mxu0
      %v1555 = vadd.f32 %v1244, %v1554
      %1556 = vmatmul.f32.gmra.mxu0 %v625
      %v1557 = vpop.f32.mrf.mxu0
      %v1558 = vadd.f32 %v1247, %v1557
      %1559 = vmatmul.f32.gmra.mxu0 %v628
      %v1560 = vpop.f32.mrf.mxu0
      %v1561 = vadd.f32 %v1250, %v1560
      %1562 = vmatmul.f32.gmra.mxu0 %v631
      %v1563 = vpop.f32.mrf.mxu0
      %v1564 = vadd.f32 %v1253, %v1563
      %1565 = vmatmul.f32.gmra.mxu0 %v634
      %v1566 = vpop.f32.mrf.mxu0
      %v1567 = vadd.f32 %v1256, %v1566
      %1568 = vmatmul.f32.gmra.mxu0 %v637
      %v1569 = vpop.f32.mrf.mxu0
      %v1570 = vadd.f32 %v1259, %v1569
      %1571 = vmatmul.f32.gmra.mxu0 %v640
      %v1572 = vpop.f32.mrf.mxu0
      %v1573 = vadd.f32 %v1262, %v1572
      %1574 = vmatmul.f32.gmra.mxu0 %v643
      %v1575 = vpop.f32.mrf.mxu0
      %v1576 = vadd.f32 %v1265, %v1575
      %1577 = vmatmul.f32.gmra.mxu0 %v646
      %v1578 = vpop.f32.mrf.mxu0
      %v1579 = vadd.f32 %v1268, %v1578
      %1580 = vmatmul.f32.gmra.mxu0 %v649
      %v1581 = vpop.f32.mrf.mxu0
      %v1582 = vadd.f32 %v1271, %v1581
      %1583 = vmatmul.f32.gmra.mxu0 %v652
      %v1584 = vpop.f32.mrf.mxu0
      %v1585 = vadd.f32 %v1274, %v1584
      %1586 = vmatmul.f32.gmra.mxu0 %v655
      %v1587 = vpop.f32.mrf.mxu0
      %v1588 = vadd.f32 %v1277, %v1587
      %1589 = vmatmul.f32.gmra.mxu0 %v658
      %v1590 = vpop.f32.mrf.mxu0
      %v1591 = vadd.f32 %v1280, %v1590
      %1592 = vmatmul.f32.gmra.mxu0 %v661
      %v1593 = vpop.f32.mrf.mxu0
      %v1594 = vadd.f32 %v1283, %v1593
      %1595 = vmatmul.f32.gmra.mxu0 %v664
      %v1596 = vpop.f32.mrf.mxu0
      %v1597 = vadd.f32 %v1286, %v1596
      %1598 = vmatmul.f32.gmra.mxu0 %v667
      %v1599 = vpop.f32.mrf.mxu0
      %v1600 = vadd.f32 %v1289, %v1599
      %1601 = vmatmul.f32.gmra.mxu0 %v670
      %v1602 = vpop.f32.mrf.mxu0
      %v1603 = vadd.f32 %v1292, %v1602
      %1604 = vmatmul.f32.gmra.mxu0 %v673
      %v1605 = vpop.f32.mrf.mxu0
      %v1606 = vadd.f32 %v1295, %v1605
      %1607 = vmatmul.f32.gmra.mxu0 %v676
      %v1608 = vpop.f32.mrf.mxu0
      %v1609 = vadd.f32 %v1298, %v1608
      %1610 = vmatmul.f32.gmra.mxu0 %v679
      %v1611 = vpop.f32.mrf.mxu0
      %v1612 = vadd.f32 %v1301, %v1611
      %1613 = vmatmul.f32.gmra.mxu0 %v682
      %v1614 = vpop.f32.mrf.mxu0
      %v1615 = vadd.f32 %v1304, %v1614
      %1616 = vmatmul.f32.gmra.mxu0 %v685
      %v1617 = vpop.f32.mrf.mxu0
      %v1618 = vadd.f32 %v1307, %v1617
      %1619 = vmatmul.f32.gmra.mxu0 %v688
      %v1620 = vpop.f32.mrf.mxu0
      %v1621 = vadd.f32 %v1310, %v1620
      %1622 = vmatmul.f32.gmra.mxu0 %v691
      %v1623 = vpop.f32.mrf.mxu0
      %v1624 = vadd.f32 %v1313, %v1623
      %1625 = vmatmul.f32.gmra.mxu0 %v694
      %v1626 = vpop.f32.mrf.mxu0
      %v1627 = vadd.f32 %v1316, %v1626
      %1628 = vmatmul.f32.gmra.mxu0 %v697
      %v1629 = vpop.f32.mrf.mxu0
      %v1630 = vadd.f32 %v1319, %v1629
      %1631 = vmatmul.f32.gmra.mxu0 %v700
      %v1632 = vpop.f32.mrf.mxu0
      %v1633 = vadd.f32 %v1322, %v1632
      %1634 = vmatmul.f32.gmra.mxu0 %v703
      %v1635 = vpop.f32.mrf.mxu0
      %v1636 = vadd.f32 %v1325, %v1635
      %1637 = vmatmul.f32.gmra.mxu0 %v706
      %v1638 = vpop.f32.mrf.mxu0
      %v1639 = vadd.f32 %v1328, %v1638
      %1640 = vmatmul.f32.gmra.mxu0 %v709
      %v1641 = vpop.f32.mrf.mxu0
      %v1642 = vadd.f32 %v1331, %v1641
      %1643 = vmatmul.f32.gmra.mxu0 %v712
      %v1644 = vpop.f32.mrf.mxu0
      %v1645 = vadd.f32 %v1334, %v1644
      %1646 = vmatmul.f32.gmra.mxu0 %v715
      %v1647 = vpop.f32.mrf.mxu0
      %v1648 = vadd.f32 %v1337, %v1647
      %1649 = vmatmul.f32.gmra.mxu0 %v718
      %v1650 = vpop.f32.mrf.mxu0
      %v1651 = vadd.f32 %v1340, %v1650
      %1652 = vmatmul.f32.gmra.mxu0 %v721
      %v1653 = vpop.f32.mrf.mxu0
      %v1654 = vadd.f32 %v1343, %v1653
      %1655 = vmatmul.f32.gmra.mxu0 %v724
      %v1656 = vpop.f32.mrf.mxu0
      %v1657 = vadd.f32 %v1346, %v1656
      %1658 = vmatmul.f32.gmra.mxu0 %v727
      %v1659 = vpop.f32.mrf.mxu0
      %v1660 = vadd.f32 %v1349, %v1659
      %1661 = vmatmul.f32.gmra.mxu0 %v730
      %v1662 = vpop.f32.mrf.mxu0
      %v1663 = vadd.f32 %v1352, %v1662
      %1664 = vmatmul.f32.gmra.mxu0 %v733
      %v1665 = vpop.f32.mrf.mxu0
      %v1666 = vadd.f32 %v1355, %v1665
      %1667 = vmatmul.f32.gmra.mxu0 %v736
      %v1668 = vpop.f32.mrf.mxu0
      %v1669 = vadd.f32 %v1358, %v1668
      %1670 = vmatmul.f32.gmra.mxu0 %v739
      %v1671 = vpop.f32.mrf.mxu0
      %v1672 = vadd.f32 %v1361, %v1671
      %1673 = vmatmul.f32.gmra.mxu0 %v742
      %v1674 = vpop.f32.mrf.mxu0
      %v1675 = vadd.f32 %v1364, %v1674
      %1676 = vmatmul.f32.gmra.mxu0 %v745
      %v1677 = vpop.f32.mrf.mxu0
      %v1678 = vadd.f32 %v1367, %v1677
      %1679 = vmatmul.f32.gmra.mxu0 %v748
      %v1680 = vpop.f32.mrf.mxu0
      %v1681 = vadd.f32 %v1370, %v1680
      %1682 = vmatmul.f32.gmra.mxu0 %v751
      %v1683 = vpop.f32.mrf.mxu0
      %v1684 = vadd.f32 %v1373, %v1683
      %1685 = vmatmul.f32.gmra.mxu0 %v754
      %v1686 = vpop.f32.mrf.mxu0
      %v1687 = vadd.f32 %v1376, %v1686
      %1688 = vmatmul.f32.gmra.mxu0 %v757
      %v1689 = vpop.f32.mrf.mxu0
      %v1690 = vadd.f32 %v1379, %v1689
      %1691 = vmatmul.f32.gmra.mxu0 %v760
      %v1692 = vpop.f32.mrf.mxu0
      %v1693 = vadd.f32 %v1382, %v1692
      %1694 = vmatmul.f32.gmra.mxu0 %v763
      %v1695 = vpop.f32.mrf.mxu0
      %v1696 = vadd.f32 %v1385, %v1695
      %1697 = vmatmul.f32.gmra.mxu0 %v766
      %v1698 = vpop.f32.mrf.mxu0
      %v1699 = vadd.f32 %v1388, %v1698
      %1700 = vmatmul.f32.gmra.mxu0 %v769
      %v1701 = vpop.f32.mrf.mxu0
      %v1702 = vadd.f32 %v1391, %v1701
      %1703 = vmatmul.f32.gmra.mxu0 %v772
      %v1704 = vpop.f32.mrf.mxu0
      %v1705 = vadd.f32 %v1394, %v1704
      %1706 = vmatmul.f32.gmra.mxu0 %v775
      %v1707 = vpop.f32.mrf.mxu0
      %v1708 = vadd.f32 %v1397, %v1707
      %1709 = vmatmul.f32.gmra.mxu0 %v778
      %v1710 = vpop.f32.mrf.mxu0
      %v1711 = vadd.f32 %v1400, %v1710
      %1712 = vmatmul.f32.gmra.mxu0 %v781
      %v1713 = vpop.f32.mrf.mxu0
      %v1714 = vadd.f32 %v1403, %v1713
      %1715 = vmatmul.f32.gmra.mxu0 %v784
      %v1716 = vpop.f32.mrf.mxu0
      %v1717 = vadd.f32 %v1406, %v1716
      %1718 = vmatmul.f32.gmra.mxu0 %v787
      %v1719 = vpop.f32.mrf.mxu0
      %v1720 = vadd.f32 %v1409, %v1719
      %1721 = vmatmul.f32.gmra.mxu0 %v790
      %v1722 = vpop.f32.mrf.mxu0
      %v1723 = vadd.f32 %v1412, %v1722
      %1724 = vmatmul.f32.gmra.mxu0 %v793
      %v1725 = vpop.f32.mrf.mxu0
      %v1726 = vadd.f32 %v1415, %v1725
      %1727 = vmatmul.f32.gmra.mxu0 %v796
      %v1728 = vpop.f32.mrf.mxu0
      %v1729 = vadd.f32 %v1418, %v1728
      %1730 = vmatmul.f32.gmra.mxu0 %v799
      %v1731 = vpop.f32.mrf.mxu0
      %v1732 = vadd.f32 %v1421, %v1731
      %1733 = vmatmul.f32.gmra.mxu0 %v802
      %v1734 = vpop.f32.mrf.mxu0
      %v1735 = vadd.f32 %v1424, %v1734
      %1736 = vmatmul.f32.gmra.mxu0 %v805
      %v1737 = vpop.f32.mrf.mxu0
      %v1738 = vadd.f32 %v1427, %v1737
      %1739 = vmatmul.f32.gmra.mxu0 %v808
      %v1740 = vpop.f32.mrf.mxu0
      %v1741 = vadd.f32 %v1430, %v1740
      %1742 = vmatmul.f32.gmra.mxu0 %v811
      %v1743 = vpop.f32.mrf.mxu0
      %v1744 = vadd.f32 %v1433, %v1743
      %1745 = vmatmul.f32.gmra.mxu0 %v814
      %v1746 = vpop.f32.mrf.mxu0
      %v1747 = vadd.f32 %v1436, %v1746
      %1748 = vmatmul.f32.gmra.mxu0 %v817
      %v1749 = vpop.f32.mrf.mxu0
      %v1750 = vadd.f32 %v1439, %v1749
      %1751 = vmatmul.f32.gmra.mxu0 %v820
      %v1752 = vpop.f32.mrf.mxu0
      %v1753 = vadd.f32 %v1442, %v1752
      %1754 = vmatmul.f32.gmra.mxu0 %v823
      %v1755 = vpop.f32.mrf.mxu0
      %v1756 = vadd.f32 %v1445, %v1755
      %1757 = vmatmul.f32.gmra.mxu0 %v826
      %v1758 = vpop.f32.mrf.mxu0
      %v1759 = vadd.f32 %v1448, %v1758
      %1760 = vmatmul.f32.gmra.mxu0 %v829
      %v1761 = vpop.f32.mrf.mxu0
      %v1762 = vadd.f32 %v1451, %v1761
      %1763 = vmatmul.f32.gmra.mxu0 %v832
      %v1764 = vpop.f32.mrf.mxu0
      %v1765 = vadd.f32 %v1454, %v1764
      %1766 = vmatmul.f32.gmra.mxu0 %v835
      %v1767 = vpop.f32.mrf.mxu0
      %v1768 = vadd.f32 %v1457, %v1767
      %1769 = vmatmul.f32.gmra.mxu0 %v838
      %v1770 = vpop.f32.mrf.mxu0
      %v1771 = vadd.f32 %v1460, %v1770
      %1772 = vmatmul.f32.gmra.mxu0 %v841
      %v1773 = vpop.f32.mrf.mxu0
      %v1774 = vadd.f32 %v1463, %v1773
      %1775 = vmatmul.f32.gmra.mxu0 %v844
      %v1776 = vpop.f32.mrf.mxu0
      %v1777 = vadd.f32 %v1466, %v1776
      %1778 = vmatmul.f32.gmra.mxu0 %v847
      %v1779 = vpop.f32.mrf.mxu0
      %v1780 = vadd.f32 %v1469, %v1779
      %1781 = vmatmul.f32.gmra.mxu0 %v850
      %v1782 = vpop.f32.mrf.mxu0
      %v1783 = vadd.f32 %v1472, %v1782
      %1784 = vmatmul.f32.gmra.mxu0 %v853
      %v1785 = vpop.f32.mrf.mxu0
      %v1786 = vadd.f32 %v1475, %v1785
      %1787 = vdwg.mxu0
      %v1788 = vmax.f32 %v1495, 0.0
      %v1789 = vmax.f32 %v1498, 0.0
      %v1790 = vmax.f32 %v1501, 0.0
      %v1791 = vmax.f32 %v1504, 0.0
      %v1792 = vmax.f32 %v1507, 0.0
      %v1793 = vmax.f32 %v1510, 0.0
      %v1794 = vmax.f32 %v1513, 0.0
      %v1795 = vmax.f32 %v1516, 0.0
      %v1796 = vmax.f32 %v1519, 0.0
      %v1797 = vmax.f32 %v1522, 0.0
      %v1798 = vmax.f32 %v1525, 0.0
      %v1799 = vmax.f32 %v1528, 0.0
      %v1800 = vmax.f32 %v1531, 0.0
      %v1801 = vmax.f32 %v1534, 0.0
      %v1802 = vmax.f32 %v1537, 0.0
      %v1803 = vmax.f32 %v1540, 0.0
      %v1804 = vmax.f32 %v1543, 0.0
      %v1805 = vmax.f32 %v1546, 0.0
      %v1806 = vmax.f32 %v1549, 0.0
      %v1807 = vmax.f32 %v1552, 0.0
      %v1808 = vmax.f32 %v1555, 0.0
      %v1809 = vmax.f32 %v1558, 0.0
      %v1810 = vmax.f32 %v1561, 0.0
      %v1811 = vmax.f32 %v1564, 0.0
      %v1812 = vmax.f32 %v1567, 0.0
      %v1813 = vmax.f32 %v1570, 0.0
      %v1814 = vmax.f32 %v1573, 0.0
      %v1815 = vmax.f32 %v1576, 0.0
      %v1816 = vmax.f32 %v1579, 0.0
      %v1817 = vmax.f32 %v1582, 0.0
      %v1818 = vmax.f32 %v1585, 0.0
      %v1819 = vmax.f32 %v1588, 0.0
      %v1820 = vmax.f32 %v1591, 0.0
      %v1821 = vmax.f32 %v1594, 0.0
      %v1822 = vmax.f32 %v1597, 0.0
      %v1823 = vmax.f32 %v1600, 0.0
      %v1824 = vmax.f32 %v1603, 0.0
      %v1825 = vmax.f32 %v1606, 0.0
      %v1826 = vmax.f32 %v1609, 0.0
      %v1827 = vmax.f32 %v1612, 0.0
      %v1828 = vmax.f32 %v1615, 0.0
      %v1829 = vmax.f32 %v1618, 0.0
      %v1830 = vmax.f32 %v1621, 0.0
      %v1831 = vmax.f32 %v1624, 0.0
      %v1832 = vmax.f32 %v1627, 0.0
      %v1833 = vmax.f32 %v1630, 0.0
      %v1834 = vmax.f32 %v1633, 0.0
      %v1835 = vmax.f32 %v1636, 0.0
      %v1836 = vmax.f32 %v1639, 0.0
      %v1837 = vmax.f32 %v1642, 0.0
      %v1838 = vmax.f32 %v1645, 0.0
      %v1839 = vmax.f32 %v1648, 0.0
      %v1840 = vmax.f32 %v1651, 0.0
      %v1841 = vmax.f32 %v1654, 0.0
      %v1842 = vmax.f32 %v1657, 0.0
      %v1843 = vmax.f32 %v1660, 0.0
      %v1844 = vmax.f32 %v1663, 0.0
      %v1845 = vmax.f32 %v1666, 0.0
      %v1846 = vmax.f32 %v1669, 0.0
      %v1847 = vmax.f32 %v1672, 0.0
      %v1848 = vmax.f32 %v1675, 0.0
      %v1849 = vmax.f32 %v1678, 0.0
      %v1850 = vmax.f32 %v1681, 0.0
      %v1851 = vmax.f32 %v1684, 0.0
      %v1852 = vmax.f32 %v1687, 0.0
      %v1853 = vmax.f32 %v1690, 0.0
      %v1854 = vmax.f32 %v1693, 0.0
      %v1855 = vmax.f32 %v1696, 0.0
      %v1856 = vmax.f32 %v1699, 0.0
      %v1857 = vmax.f32 %v1702, 0.0
      %v1858 = vmax.f32 %v1705, 0.0
      %v1859 = vmax.f32 %v1708, 0.0
      %v1860 = vmax.f32 %v1711, 0.0
      %v1861 = vmax.f32 %v1714, 0.0
      %v1862 = vmax.f32 %v1717, 0.0
      %v1863 = vmax.f32 %v1720, 0.0
      %v1864 = vmax.f32 %v1723, 0.0
      %v1865 = vmax.f32 %v1726, 0.0
      %v1866 = vmax.f32 %v1729, 0.0
      %v1867 = vmax.f32 %v1732, 0.0
      %v1868 = vmax.f32 %v1735, 0.0
      %v1869 = vmax.f32 %v1738, 0.0
      %v1870 = vmax.f32 %v1741, 0.0
      %v1871 = vmax.f32 %v1744, 0.0
      %v1872 = vmax.f32 %v1747, 0.0
      %v1873 = vmax.f32 %v1750, 0.0
      %v1874 = vmax.f32 %v1753, 0.0
      %v1875 = vmax.f32 %v1756, 0.0
      %v1876 = vmax.f32 %v1759, 0.0
      %v1877 = vmax.f32 %v1762, 0.0
      %v1878 = vmax.f32 %v1765, 0.0
      %v1879 = vmax.f32 %v1768, 0.0
      %v1880 = vmax.f32 %v1771, 0.0
      %v1881 = vmax.f32 %v1774, 0.0
      %v1882 = vmax.f32 %v1777, 0.0
      %v1883 = vmax.f32 %v1780, 0.0
      %v1884 = vmax.f32 %v1783, 0.0
      %v1885 = vmax.f32 %v1786, 0.0
      %v1886 = vld [vmem:[%s218] sm:$0xff]
      %v1887 = vld [vmem:[%s218 + $0x8] sm:$0xff]
      %v1888 = vld [vmem:[%s218 + $0x10] sm:$0xff]
      %v1889 = vld [vmem:[%s218 + $0x18] sm:$0xff]
      %v1890 = vld [vmem:[%s218 + $0x20] sm:$0xff]
      %v1891 = vld [vmem:[%s218 + $0x28] sm:$0xff]
      %v1892 = vld [vmem:[%s218 + $0x30] sm:$0xff]
      %v1893 = vld [vmem:[%s218 + $0x38] sm:$0xff]
      %v1894 = vld [vmem:[%s218 + $0x40] sm:$0xff]
      %v1895 = vld [vmem:[%s218 + $0x48] sm:$0xff]
      %v1896 = vld [vmem:[%s218 + $0x50] sm:$0xff]
      %v1897 = vld [vmem:[%s218 + $0x58] sm:$0xff]
      %v1898 = vld [vmem:[%s218 + $0x60] sm:$0xff]
      %v1899 = vld [vmem:[%s218 + $0x68] sm:$0xff]
      %v1900 = vld [vmem:[%s218 + $0x70] sm:$0xff]
      %v1901 = vld [vmem:[%s218 + $0x78] sm:$0xff]
      %v1902 = vld [vmem:[%s218 + $0x80] sm:$0xff]
      %v1903 = vld [vmem:[%s218 + $0x88] sm:$0xff]
      %v1904 = vld [vmem:[%s218 + $0x90] sm:$0xff]
      %v1905 = vld [vmem:[%s218 + $0x98] sm:$0xff]
      %v1906 = vld [vmem:[%s218 + $0xa0] sm:$0xff]
      %v1907 = vld [vmem:[%s218 + $0xa8] sm:$0xff]
      %v1908 = vld [vmem:[%s218 + $0xb0] sm:$0xff]
      %v1909 = vld [vmem:[%s218 + $0xb8] sm:$0xff]
      %v1910 = vld [vmem:[%s218 + $0xc0] sm:$0xff]
      %v1911 = vld [vmem:[%s218 + $0xc8] sm:$0xff]
      %v1912 = vld [vmem:[%s218 + $0xd0] sm:$0xff]
      %v1913 = vld [vmem:[%s218 + $0xd8] sm:$0xff]
      %v1914 = vld [vmem:[%s218 + $0xe0] sm:$0xff]
      %v1915 = vld [vmem:[%s218 + $0xe8] sm:$0xff]
      %v1916 = vld [vmem:[%s218 + $0xf0] sm:$0xff]
      %v1917 = vld [vmem:[%s218 + $0xf8] sm:$0xff]
      %v1918 = vld [vmem:[%s218 + $0x100] sm:$0xff]
      %v1919 = vld [vmem:[%s218 + $0x108] sm:$0xff]
      %v1920 = vld [vmem:[%s218 + $0x110] sm:$0xff]
      %v1921 = vld [vmem:[%s218 + $0x118] sm:$0xff]
      %v1922 = vld [vmem:[%s218 + $0x120] sm:$0xff]
      %v1923 = vld [vmem:[%s218 + $0x128] sm:$0xff]
      %v1924 = vld [vmem:[%s218 + $0x130] sm:$0xff]
      %v1925 = vld [vmem:[%s218 + $0x138] sm:$0xff]
      %v1926 = vld [vmem:[%s218 + $0x140] sm:$0xff]
      %v1927 = vld [vmem:[%s218 + $0x148] sm:$0xff]
      %v1928 = vld [vmem:[%s218 + $0x150] sm:$0xff]
      %v1929 = vld [vmem:[%s218 + $0x158] sm:$0xff]
      %v1930 = vld [vmem:[%s218 + $0x160] sm:$0xff]
      %v1931 = vld [vmem:[%s218 + $0x168] sm:$0xff]
      %v1932 = vld [vmem:[%s218 + $0x170] sm:$0xff]
      %v1933 = vld [vmem:[%s218 + $0x178] sm:$0xff]
      %v1934 = vld [vmem:[%s218 + $0x180] sm:$0xff]
      %v1935 = vld [vmem:[%s218 + $0x188] sm:$0xff]
      %v1936 = vld [vmem:[%s218 + $0x190] sm:$0xff]
      %v1937 = vld [vmem:[%s218 + $0x198] sm:$0xff]
      %v1938 = vld [vmem:[%s218 + $0x1a0] sm:$0xff]
      %v1939 = vld [vmem:[%s218 + $0x1a8] sm:$0xff]
      %v1940 = vld [vmem:[%s218 + $0x1b0] sm:$0xff]
      %v1941 = vld [vmem:[%s218 + $0x1b8] sm:$0xff]
      %v1942 = vld [vmem:[%s218 + $0x1c0] sm:$0xff]
      %v1943 = vld [vmem:[%s218 + $0x1c8] sm:$0xff]
      %v1944 = vld [vmem:[%s218 + $0x1d0] sm:$0xff]
      %v1945 = vld [vmem:[%s218 + $0x1d8] sm:$0xff]
      %v1946 = vld [vmem:[%s218 + $0x1e0] sm:$0xff]
      %v1947 = vld [vmem:[%s218 + $0x1e8] sm:$0xff]
      %v1948 = vld [vmem:[%s218 + $0x1f0] sm:$0xff]
      %v1949 = vld [vmem:[%s218 + $0x1f8] sm:$0xff]
      %v1950 = vld [vmem:[%s218 + $0x200] sm:$0xff]
      %v1951 = vld [vmem:[%s218 + $0x208] sm:$0xff]
      %v1952 = vld [vmem:[%s218 + $0x210] sm:$0xff]
      %v1953 = vld [vmem:[%s218 + $0x218] sm:$0xff]
      %v1954 = vld [vmem:[%s218 + $0x220] sm:$0xff]
      %v1955 = vld [vmem:[%s218 + $0x228] sm:$0xff]
      %v1956 = vld [vmem:[%s218 + $0x230] sm:$0xff]
      %v1957 = vld [vmem:[%s218 + $0x238] sm:$0xff]
      %v1958 = vld [vmem:[%s218 + $0x240] sm:$0xff]
      %v1959 = vld [vmem:[%s218 + $0x248] sm:$0xff]
      %v1960 = vld [vmem:[%s218 + $0x250] sm:$0xff]
      %v1961 = vld [vmem:[%s218 + $0x258] sm:$0xff]
      %v1962 = vld [vmem:[%s218 + $0x260] sm:$0xff]
      %v1963 = vld [vmem:[%s218 + $0x268] sm:$0xff]
      %v1964 = vld [vmem:[%s218 + $0x270] sm:$0xff]
      %v1965 = vld [vmem:[%s218 + $0x278] sm:$0xff]
      %v1966 = vld [vmem:[%s218 + $0x280] sm:$0xff]
      %v1967 = vld [vmem:[%s218 + $0x288] sm:$0xff]
      %v1968 = vld [vmem:[%s218 + $0x290] sm:$0xff]
      %v1969 = vld [vmem:[%s218 + $0x298] sm:$0xff]
      %v1970 = vld [vmem:[%s218 + $0x2a0] sm:$0xff]
      %v1971 = vld [vmem:[%s218 + $0x2a8] sm:$0xff]
      %v1972 = vld [vmem:[%s218 + $0x2b0] sm:$0xff]
      %v1973 = vld [vmem:[%s218 + $0x2b8] sm:$0xff]
      %v1974 = vld [vmem:[%s218 + $0x2c0] sm:$0xff]
      %v1975 = vld [vmem:[%s218 + $0x2c8] sm:$0xff]
      %v1976 = vld [vmem:[%s218 + $0x2d0] sm:$0xff]
      %v1977 = vld [vmem:[%s218 + $0x2d8] sm:$0xff]
      %v1978 = vld [vmem:[%s218 + $0x2e0] sm:$0xff]
      %v1979 = vld [vmem:[%s218 + $0x2e8] sm:$0xff]
      %v1980 = vld [vmem:[%s218 + $0x2f0] sm:$0xff]
      %v1981 = vld [vmem:[%s218 + $0x2f8] sm:$0xff]
      %v1982 = vld [vmem:[%s218 + $0x300] sm:$0xff]
      %v1983 = vld [vmem:[%s218 + $0x308] sm:$0xff]
      %1985 = vset.pattern.permute.xlu0 0
      %1986 = vperm.xlu0 %1985, %v1886
      %v1987 = vpop.permute.xlu0 %1986
      %1990 = vset.pattern.permute.xlu0 0
      %1991 = vperm.xlu0 %1990, %v1887
      %v1992 = vpop.permute.xlu0 %1991
      %1995 = vset.pattern.permute.xlu0 0
      %1996 = vperm.xlu0 %1995, %v1888
      %v1997 = vpop.permute.xlu0 %1996
      %2000 = vset.pattern.permute.xlu0 0
      %2001 = vperm.xlu0 %2000, %v1889
      %v2002 = vpop.permute.xlu0 %2001
      %2005 = vset.pattern.permute.xlu0 0
      %2006 = vperm.xlu0 %2005, %v1890
      %v2007 = vpop.permute.xlu0 %2006
      %2010 = vset.pattern.permute.xlu0 0
      %2011 = vperm.xlu0 %2010, %v1891
      %v2012 = vpop.permute.xlu0 %2011
      %2015 = vset.pattern.permute.xlu0 0
      %2016 = vperm.xlu0 %2015, %v1892
      %v2017 = vpop.permute.xlu0 %2016
      %2020 = vset.pattern.permute.xlu0 0
      %2021 = vperm.xlu0 %2020, %v1893
      %v2022 = vpop.permute.xlu0 %2021
      %2025 = vset.pattern.permute.xlu0 0
      %2026 = vperm.xlu0 %2025, %v1894
      %v2027 = vpop.permute.xlu0 %2026
      %2030 = vset.pattern.permute.xlu0 0
      %2031 = vperm.xlu0 %2030, %v1895
      %v2032 = vpop.permute.xlu0 %2031
      %2035 = vset.pattern.permute.xlu0 0
      %2036 = vperm.xlu0 %2035, %v1896
      %v2037 = vpop.permute.xlu0 %2036
      %2040 = vset.pattern.permute.xlu0 0
      %2041 = vperm.xlu0 %2040, %v1897
      %v2042 = vpop.permute.xlu0 %2041
      %2045 = vset.pattern.permute.xlu0 0
      %2046 = vperm.xlu0 %2045, %v1898
      %v2047 = vpop.permute.xlu0 %2046
      %2050 = vset.pattern.permute.xlu0 0
      %2051 = vperm.xlu0 %2050, %v1899
      %v2052 = vpop.permute.xlu0 %2051
      %2055 = vset.pattern.permute.xlu0 0
      %2056 = vperm.xlu0 %2055, %v1900
      %v2057 = vpop.permute.xlu0 %2056
      %2060 = vset.pattern.permute.xlu0 0
      %2061 = vperm.xlu0 %2060, %v1901
      %v2062 = vpop.permute.xlu0 %2061
      %2065 = vset.pattern.permute.xlu0 0
      %2066 = vperm.xlu0 %2065, %v1902
      %v2067 = vpop.permute.xlu0 %2066
      %2070 = vset.pattern.permute.xlu0 0
      %2071 = vperm.xlu0 %2070, %v1903
      %v2072 = vpop.permute.xlu0 %2071
      %2075 = vset.pattern.permute.xlu0 0
      %2076 = vperm.xlu0 %2075, %v1904
      %v2077 = vpop.permute.xlu0 %2076
      %2080 = vset.pattern.permute.xlu0 0
      %2081 = vperm.xlu0 %2080, %v1905
      %v2082 = vpop.permute.xlu0 %2081
      %2085 = vset.pattern.permute.xlu0 0
      %2086 = vperm.xlu0 %2085, %v1906
      %v2087 = vpop.permute.xlu0 %2086
      %2090 = vset.pattern.permute.xlu0 0
      %2091 = vperm.xlu0 %2090, %v1907
      %v2092 = vpop.permute.xlu0 %2091
      %2095 = vset.pattern.permute.xlu0 0
      %2096 = vperm.xlu0 %2095, %v1908
      %v2097 = vpop.permute.xlu0 %2096
      %2100 = vset.pattern.permute.xlu0 0
      %2101 = vperm.xlu0 %2100, %v1909
      %v2102 = vpop.permute.xlu0 %2101
      %2105 = vset.pattern.permute.xlu0 0
      %2106 = vperm.xlu0 %2105, %v1910
      %v2107 = vpop.permute.xlu0 %2106
      %2110 = vset.pattern.permute.xlu0 0
      %2111 = vperm.xlu0 %2110, %v1911
      %v2112 = vpop.permute.xlu0 %2111
      %2115 = vset.pattern.permute.xlu0 0
      %2116 = vperm.xlu0 %2115, %v1912
      %v2117 = vpop.permute.xlu0 %2116
      %2120 = vset.pattern.permute.xlu0 0
      %2121 = vperm.xlu0 %2120, %v1913
      %v2122 = vpop.permute.xlu0 %2121
      %2125 = vset.pattern.permute.xlu0 0
      %2126 = vperm.xlu0 %2125, %v1914
      %v2127 = vpop.permute.xlu0 %2126
      %2130 = vset.pattern.permute.xlu0 0
      %2131 = vperm.xlu0 %2130, %v1915
      %v2132 = vpop.permute.xlu0 %2131
      %2135 = vset.pattern.permute.xlu0 0
      %2136 = vperm.xlu0 %2135, %v1916
      %v2137 = vpop.permute.xlu0 %2136
      %2140 = vset.pattern.permute.xlu0 0
      %2141 = vperm.xlu0 %2140, %v1917
      %v2142 = vpop.permute.xlu0 %2141
      %2145 = vset.pattern.permute.xlu0 0
      %2146 = vperm.xlu0 %2145, %v1918
      %v2147 = vpop.permute.xlu0 %2146
      %2150 = vset.pattern.permute.xlu0 0
      %2151 = vperm.xlu0 %2150, %v1919
      %v2152 = vpop.permute.xlu0 %2151
      %2155 = vset.pattern.permute.xlu0 0
      %2156 = vperm.xlu0 %2155, %v1920
      %v2157 = vpop.permute.xlu0 %2156
      %2160 = vset.pattern.permute.xlu0 0
      %2161 = vperm.xlu0 %2160, %v1921
      %v2162 = vpop.permute.xlu0 %2161
      %2165 = vset.pattern.permute.xlu0 0
      %2166 = vperm.xlu0 %2165, %v1922
      %v2167 = vpop.permute.xlu0 %2166
      %2170 = vset.pattern.permute.xlu0 0
      %2171 = vperm.xlu0 %2170, %v1923
      %v2172 = vpop.permute.xlu0 %2171
      %2175 = vset.pattern.permute.xlu0 0
      %2176 = vperm.xlu0 %2175, %v1924
      %v2177 = vpop.permute.xlu0 %2176
      %2180 = vset.pattern.permute.xlu0 0
      %2181 = vperm.xlu0 %2180, %v1925
      %v2182 = vpop.permute.xlu0 %2181
      %2185 = vset.pattern.permute.xlu0 0
      %2186 = vperm.xlu0 %2185, %v1926
      %v2187 = vpop.permute.xlu0 %2186
      %2190 = vset.pattern.permute.xlu0 0
      %2191 = vperm.xlu0 %2190, %v1927
      %v2192 = vpop.permute.xlu0 %2191
      %2195 = vset.pattern.permute.xlu0 0
      %2196 = vperm.xlu0 %2195, %v1928
      %v2197 = vpop.permute.xlu0 %2196
      %2200 = vset.pattern.permute.xlu0 0
      %2201 = vperm.xlu0 %2200, %v1929
      %v2202 = vpop.permute.xlu0 %2201
      %2205 = vset.pattern.permute.xlu0 0
      %2206 = vperm.xlu0 %2205, %v1930
      %v2207 = vpop.permute.xlu0 %2206
      %2210 = vset.pattern.permute.xlu0 0
      %2211 = vperm.xlu0 %2210, %v1931
      %v2212 = vpop.permute.xlu0 %2211
      %2215 = vset.pattern.permute.xlu0 0
      %2216 = vperm.xlu0 %2215, %v1932
      %v2217 = vpop.permute.xlu0 %2216
      %2220 = vset.pattern.permute.xlu0 0
      %2221 = vperm.xlu0 %2220, %v1933
      %v2222 = vpop.permute.xlu0 %2221
      %2225 = vset.pattern.permute.xlu0 0
      %2226 = vperm.xlu0 %2225, %v1934
      %v2227 = vpop.permute.xlu0 %2226
      %2230 = vset.pattern.permute.xlu0 0
      %2231 = vperm.xlu0 %2230, %v1935
      %v2232 = vpop.permute.xlu0 %2231
      %2235 = vset.pattern.permute.xlu0 0
      %2236 = vperm.xlu0 %2235, %v1936
      %v2237 = vpop.permute.xlu0 %2236
      %2240 = vset.pattern.permute.xlu0 0
      %2241 = vperm.xlu0 %2240, %v1937
      %v2242 = vpop.permute.xlu0 %2241
      %2245 = vset.pattern.permute.xlu0 0
      %2246 = vperm.xlu0 %2245, %v1938
      %v2247 = vpop.permute.xlu0 %2246
      %2250 = vset.pattern.permute.xlu0 0
      %2251 = vperm.xlu0 %2250, %v1939
      %v2252 = vpop.permute.xlu0 %2251
      %2255 = vset.pattern.permute.xlu0 0
      %2256 = vperm.xlu0 %2255, %v1940
      %v2257 = vpop.permute.xlu0 %2256
      %2260 = vset.pattern.permute.xlu0 0
      %2261 = vperm.xlu0 %2260, %v1941
      %v2262 = vpop.permute.xlu0 %2261
      %2265 = vset.pattern.permute.xlu0 0
      %2266 = vperm.xlu0 %2265, %v1942
      %v2267 = vpop.permute.xlu0 %2266
      %2270 = vset.pattern.permute.xlu0 0
      %2271 = vperm.xlu0 %2270, %v1943
      %v2272 = vpop.permute.xlu0 %2271
      %2275 = vset.pattern.permute.xlu0 0
      %2276 = vperm.xlu0 %2275, %v1944
      %v2277 = vpop.permute.xlu0 %2276
      %2280 = vset.pattern.permute.xlu0 0
      %2281 = vperm.xlu0 %2280, %v1945
      %v2282 = vpop.permute.xlu0 %2281
      %2285 = vset.pattern.permute.xlu0 0
      %2286 = vperm.xlu0 %2285, %v1946
      %v2287 = vpop.permute.xlu0 %2286
      %2290 = vset.pattern.permute.xlu0 0
      %2291 = vperm.xlu0 %2290, %v1947
      %v2292 = vpop.permute.xlu0 %2291
      %2295 = vset.pattern.permute.xlu0 0
      %2296 = vperm.xlu0 %2295, %v1948
      %v2297 = vpop.permute.xlu0 %2296
      %2300 = vset.pattern.permute.xlu0 0
      %2301 = vperm.xlu0 %2300, %v1949
      %v2302 = vpop.permute.xlu0 %2301
      %2305 = vset.pattern.permute.xlu0 0
      %2306 = vperm.xlu0 %2305, %v1950
      %v2307 = vpop.permute.xlu0 %2306
      %2310 = vset.pattern.permute.xlu0 0
      %2311 = vperm.xlu0 %2310, %v1951
      %v2312 = vpop.permute.xlu0 %2311
      %2315 = vset.pattern.permute.xlu0 0
      %2316 = vperm.xlu0 %2315, %v1952
      %v2317 = vpop.permute.xlu0 %2316
      %2320 = vset.pattern.permute.xlu0 0
      %2321 = vperm.xlu0 %2320, %v1953
      %v2322 = vpop.permute.xlu0 %2321
      %2325 = vset.pattern.permute.xlu0 0
      %2326 = vperm.xlu0 %2325, %v1954
      %v2327 = vpop.permute.xlu0 %2326
      %2330 = vset.pattern.permute.xlu0 0
      %2331 = vperm.xlu0 %2330, %v1955
      %v2332 = vpop.permute.xlu0 %2331
      %2335 = vset.pattern.permute.xlu0 0
      %2336 = vperm.xlu0 %2335, %v1956
      %v2337 = vpop.permute.xlu0 %2336
      %2340 = vset.pattern.permute.xlu0 0
      %2341 = vperm.xlu0 %2340, %v1957
      %v2342 = vpop.permute.xlu0 %2341
      %2345 = vset.pattern.permute.xlu0 0
      %2346 = vperm.xlu0 %2345, %v1958
      %v2347 = vpop.permute.xlu0 %2346
      %2350 = vset.pattern.permute.xlu0 0
      %2351 = vperm.xlu0 %2350, %v1959
      %v2352 = vpop.permute.xlu0 %2351
      %2355 = vset.pattern.permute.xlu0 0
      %2356 = vperm.xlu0 %2355, %v1960
      %v2357 = vpop.permute.xlu0 %2356
      %2360 = vset.pattern.permute.xlu0 0
      %2361 = vperm.xlu0 %2360, %v1961
      %v2362 = vpop.permute.xlu0 %2361
      %2365 = vset.pattern.permute.xlu0 0
      %2366 = vperm.xlu0 %2365, %v1962
      %v2367 = vpop.permute.xlu0 %2366
      %2370 = vset.pattern.permute.xlu0 0
      %2371 = vperm.xlu0 %2370, %v1963
      %v2372 = vpop.permute.xlu0 %2371
      %2375 = vset.pattern.permute.xlu0 0
      %2376 = vperm.xlu0 %2375, %v1964
      %v2377 = vpop.permute.xlu0 %2376
      %2380 = vset.pattern.permute.xlu0 0
      %2381 = vperm.xlu0 %2380, %v1965
      %v2382 = vpop.permute.xlu0 %2381
      %2385 = vset.pattern.permute.xlu0 0
      %2386 = vperm.xlu0 %2385, %v1966
      %v2387 = vpop.permute.xlu0 %2386
      %2390 = vset.pattern.permute.xlu0 0
      %2391 = vperm.xlu0 %2390, %v1967
      %v2392 = vpop.permute.xlu0 %2391
      %2395 = vset.pattern.permute.xlu0 0
      %2396 = vperm.xlu0 %2395, %v1968
      %v2397 = vpop.permute.xlu0 %2396
      %2400 = vset.pattern.permute.xlu0 0
      %2401 = vperm.xlu0 %2400, %v1969
      %v2402 = vpop.permute.xlu0 %2401
      %2405 = vset.pattern.permute.xlu0 0
      %2406 = vperm.xlu0 %2405, %v1970
      %v2407 = vpop.permute.xlu0 %2406
      %2410 = vset.pattern.permute.xlu0 0
      %2411 = vperm.xlu0 %2410, %v1971
      %v2412 = vpop.permute.xlu0 %2411
      %2415 = vset.pattern.permute.xlu0 0
      %2416 = vperm.xlu0 %2415, %v1972
      %v2417 = vpop.permute.xlu0 %2416
      %2420 = vset.pattern.permute.xlu0 0
      %2421 = vperm.xlu0 %2420, %v1973
      %v2422 = vpop.permute.xlu0 %2421
      %2425 = vset.pattern.permute.xlu0 0
      %2426 = vperm.xlu0 %2425, %v1974
      %v2427 = vpop.permute.xlu0 %2426
      %2430 = vset.pattern.permute.xlu0 0
      %2431 = vperm.xlu0 %2430, %v1975
      %v2432 = vpop.permute.xlu0 %2431
      %2435 = vset.pattern.permute.xlu0 0
      %2436 = vperm.xlu0 %2435, %v1976
      %v2437 = vpop.permute.xlu0 %2436
      %2440 = vset.pattern.permute.xlu0 0
      %2441 = vperm.xlu0 %2440, %v1977
      %v2442 = vpop.permute.xlu0 %2441
      %2445 = vset.pattern.permute.xlu0 0
      %2446 = vperm.xlu0 %2445, %v1978
      %v2447 = vpop.permute.xlu0 %2446
      %2450 = vset.pattern.permute.xlu0 0
      %2451 = vperm.xlu0 %2450, %v1979
      %v2452 = vpop.permute.xlu0 %2451
      %2455 = vset.pattern.permute.xlu0 0
      %2456 = vperm.xlu0 %2455, %v1980
      %v2457 = vpop.permute.xlu0 %2456
      %2460 = vset.pattern.permute.xlu0 0
      %2461 = vperm.xlu0 %2460, %v1981
      %v2462 = vpop.permute.xlu0 %2461
      %2465 = vset.pattern.permute.xlu0 0
      %2466 = vperm.xlu0 %2465, %v1982
      %v2467 = vpop.permute.xlu0 %2466
      %2470 = vset.pattern.permute.xlu0 0
      %2471 = vperm.xlu0 %2470, %v1983
      %v2472 = vpop.permute.xlu0 %2471
      %v2474 = vmul.f32 %v1788, %v1987
      %v2475 = vmul.f32 %v1789, %v1992
      %v2476 = vmul.f32 %v1790, %v1997
      %v2477 = vmul.f32 %v1791, %v2002
      %v2478 = vmul.f32 %v1792, %v2007
      %v2479 = vmul.f32 %v1793, %v2012
      %v2480 = vmul.f32 %v1794, %v2017
      %v2481 = vmul.f32 %v1795, %v2022
      %v2482 = vmul.f32 %v1796, %v2027
      %v2483 = vmul.f32 %v1797, %v2032
      %v2484 = vmul.f32 %v1798, %v2037
      %v2485 = vmul.f32 %v1799, %v2042
      %v2486 = vmul.f32 %v1800, %v2047
      %v2487 = vmul.f32 %v1801, %v2052
      %v2488 = vmul.f32 %v1802, %v2057
      %v2489 = vmul.f32 %v1803, %v2062
      %v2490 = vmul.f32 %v1804, %v2067
      %v2491 = vmul.f32 %v1805, %v2072
      %v2492 = vmul.f32 %v1806, %v2077
      %v2493 = vmul.f32 %v1807, %v2082
      %v2494 = vmul.f32 %v1808, %v2087
      %v2495 = vmul.f32 %v1809, %v2092
      %v2496 = vmul.f32 %v1810, %v2097
      %v2497 = vmul.f32 %v1811, %v2102
      %v2498 = vmul.f32 %v1812, %v2107
      %v2499 = vmul.f32 %v1813, %v2112
      %v2500 = vmul.f32 %v1814, %v2117
      %v2501 = vmul.f32 %v1815, %v2122
      %v2502 = vmul.f32 %v1816, %v2127
      %v2503 = vmul.f32 %v1817, %v2132
      %v2504 = vmul.f32 %v1818, %v2137
      %v2505 = vmul.f32 %v1819, %v2142
      %v2506 = vmul.f32 %v1820, %v2147
      %v2507 = vmul.f32 %v1821, %v2152
      %v2508 = vmul.f32 %v1822, %v2157
      %v2509 = vmul.f32 %v1823, %v2162
      %v2510 = vmul.f32 %v1824, %v2167
      %v2511 = vmul.f32 %v1825, %v2172
      %v2512 = vmul.f32 %v1826, %v2177
      %v2513 = vmul.f32 %v1827, %v2182
      %v2514 = vmul.f32 %v1828, %v2187
      %v2515 = vmul.f32 %v1829, %v2192
      %v2516 = vmul.f32 %v1830, %v2197
      %v2517 = vmul.f32 %v1831, %v2202
      %v2518 = vmul.f32 %v1832, %v2207
      %v2519 = vmul.f32 %v1833, %v2212
      %v2520 = vmul.f32 %v1834, %v2217
      %v2521 = vmul.f32 %v1835, %v2222
      %v2522 = vmul.f32 %v1836, %v2227
      %v2523 = vmul.f32 %v1837, %v2232
      %v2524 = vmul.f32 %v1838, %v2237
      %v2525 = vmul.f32 %v1839, %v2242
      %v2526 = vmul.f32 %v1840, %v2247
      %v2527 = vmul.f32 %v1841, %v2252
      %v2528 = vmul.f32 %v1842, %v2257
      %v2529 = vmul.f32 %v1843, %v2262
      %v2530 = vmul.f32 %v1844, %v2267
      %v2531 = vmul.f32 %v1845, %v2272
      %v2532 = vmul.f32 %v1846, %v2277
      %v2533 = vmul.f32 %v1847, %v2282
      %v2534 = vmul.f32 %v1848, %v2287
      %v2535 = vmul.f32 %v1849, %v2292
      %v2536 = vmul.f32 %v1850, %v2297
      %v2537 = vmul.f32 %v1851, %v2302
      %v2538 = vmul.f32 %v1852, %v2307
      %v2539 = vmul.f32 %v1853, %v2312
      %v2540 = vmul.f32 %v1854, %v2317
      %v2541 = vmul.f32 %v1855, %v2322
      %v2542 = vmul.f32 %v1856, %v2327
      %v2543 = vmul.f32 %v1857, %v2332
      %v2544 = vmul.f32 %v1858, %v2337
      %v2545 = vmul.f32 %v1859, %v2342
      %v2546 = vmul.f32 %v1860, %v2347
      %v2547 = vmul.f32 %v1861, %v2352
      %v2548 = vmul.f32 %v1862, %v2357
      %v2549 = vmul.f32 %v1863, %v2362
      %v2550 = vmul.f32 %v1864, %v2367
      %v2551 = vmul.f32 %v1865, %v2372
      %v2552 = vmul.f32 %v1866, %v2377
      %v2553 = vmul.f32 %v1867, %v2382
      %v2554 = vmul.f32 %v1868, %v2387
      %v2555 = vmul.f32 %v1869, %v2392
      %v2556 = vmul.f32 %v1870, %v2397
      %v2557 = vmul.f32 %v1871, %v2402
      %v2558 = vmul.f32 %v1872, %v2407
      %v2559 = vmul.f32 %v1873, %v2412
      %v2560 = vmul.f32 %v1874, %v2417
      %v2561 = vmul.f32 %v1875, %v2422
      %v2562 = vmul.f32 %v1876, %v2427
      %v2563 = vmul.f32 %v1877, %v2432
      %v2564 = vmul.f32 %v1878, %v2437
      %v2565 = vmul.f32 %v1879, %v2442
      %v2566 = vmul.f32 %v1880, %v2447
      %v2567 = vmul.f32 %v1881, %v2452
      %v2568 = vmul.f32 %v1882, %v2457
      %v2569 = vmul.f32 %v1883, %v2462
      %v2570 = vmul.f32 %v1884, %v2467
      %v2571 = vmul.f32 %v1885, %v2472
      %2572 = vst.msk [vmem:[%s224] sm:$0xff] %vm560, %v2474
      %2573 = vst.msk [vmem:[%s224 + $0x8] sm:$0xff] %vm560, %v2475
      %2574 = vst.msk [vmem:[%s224 + $0x10] sm:$0xff] %vm560, %v2476
      %2575 = vst.msk [vmem:[%s224 + $0x18] sm:$0xff] %vm560, %v2477
      %2576 = vst.msk [vmem:[%s224 + $0x20] sm:$0xff] %vm560, %v2478
      %2577 = vst.msk [vmem:[%s224 + $0x28] sm:$0xff] %vm560, %v2479
      %2578 = vst.msk [vmem:[%s224 + $0x30] sm:$0xff] %vm560, %v2480
      %2579 = vst.msk [vmem:[%s224 + $0x38] sm:$0xff] %vm560, %v2481
      %2580 = vst.msk [vmem:[%s224 + $0x40] sm:$0xff] %vm560, %v2482
      %2581 = vst.msk [vmem:[%s224 + $0x48] sm:$0xff] %vm560, %v2483
      %2582 = vst.msk [vmem:[%s224 + $0x50] sm:$0xff] %vm560, %v2484
      %2583 = vst.msk [vmem:[%s224 + $0x58] sm:$0xff] %vm560, %v2485
      %2584 = vst.msk [vmem:[%s224 + $0x60] sm:$0xff] %vm560, %v2486
      %2585 = vst.msk [vmem:[%s224 + $0x68] sm:$0xff] %vm560, %v2487
      %2586 = vst.msk [vmem:[%s224 + $0x70] sm:$0xff] %vm560, %v2488
      %2587 = vst.msk [vmem:[%s224 + $0x78] sm:$0xff] %vm560, %v2489
      %2588 = vst.msk [vmem:[%s224 + $0x80] sm:$0xff] %vm560, %v2490
      %2589 = vst.msk [vmem:[%s224 + $0x88] sm:$0xff] %vm560, %v2491
      %2590 = vst.msk [vmem:[%s224 + $0x90] sm:$0xff] %vm560, %v2492
      %2591 = vst.msk [vmem:[%s224 + $0x98] sm:$0xff] %vm560, %v2493
      %2592 = vst.msk [vmem:[%s224 + $0xa0] sm:$0xff] %vm560, %v2494
      %2593 = vst.msk [vmem:[%s224 + $0xa8] sm:$0xff] %vm560, %v2495
      %2594 = vst.msk [vmem:[%s224 + $0xb0] sm:$0xff] %vm560, %v2496
      %2595 = vst.msk [vmem:[%s224 + $0xb8] sm:$0xff] %vm560, %v2497
      %2596 = vst.msk [vmem:[%s224 + $0xc0] sm:$0xff] %vm560, %v2498
      %2597 = vst.msk [vmem:[%s224 + $0xc8] sm:$0xff] %vm560, %v2499
      %2598 = vst.msk [vmem:[%s224 + $0xd0] sm:$0xff] %vm560, %v2500
      %2599 = vst.msk [vmem:[%s224 + $0xd8] sm:$0xff] %vm560, %v2501
      %2600 = vst.msk [vmem:[%s224 + $0xe0] sm:$0xff] %vm560, %v2502
      %2601 = vst.msk [vmem:[%s224 + $0xe8] sm:$0xff] %vm560, %v2503
      %2602 = vst.msk [vmem:[%s224 + $0xf0] sm:$0xff] %vm560, %v2504
      %2603 = vst.msk [vmem:[%s224 + $0xf8] sm:$0xff] %vm560, %v2505
      %2604 = vst.msk [vmem:[%s224 + $0x100] sm:$0xff] %vm560, %v2506
      %2605 = vst.msk [vmem:[%s224 + $0x108] sm:$0xff] %vm560, %v2507
      %2606 = vst.msk [vmem:[%s224 + $0x110] sm:$0xff] %vm560, %v2508
      %2607 = vst.msk [vmem:[%s224 + $0x118] sm:$0xff] %vm560, %v2509
      %2608 = vst.msk [vmem:[%s224 + $0x120] sm:$0xff] %vm560, %v2510
      %2609 = vst.msk [vmem:[%s224 + $0x128] sm:$0xff] %vm560, %v2511
      %2610 = vst.msk [vmem:[%s224 + $0x130] sm:$0xff] %vm560, %v2512
      %2611 = vst.msk [vmem:[%s224 + $0x138] sm:$0xff] %vm560, %v2513
      %2612 = vst.msk [vmem:[%s224 + $0x140] sm:$0xff] %vm560, %v2514
      %2613 = vst.msk [vmem:[%s224 + $0x148] sm:$0xff] %vm560, %v2515
      %2614 = vst.msk [vmem:[%s224 + $0x150] sm:$0xff] %vm560, %v2516
      %2615 = vst.msk [vmem:[%s224 + $0x158] sm:$0xff] %vm560, %v2517
      %2616 = vst.msk [vmem:[%s224 + $0x160] sm:$0xff] %vm560, %v2518
      %2617 = vst.msk [vmem:[%s224 + $0x168] sm:$0xff] %vm560, %v2519
      %2618 = vst.msk [vmem:[%s224 + $0x170] sm:$0xff] %vm560, %v2520
      %2619 = vst.msk [vmem:[%s224 + $0x178] sm:$0xff] %vm560, %v2521
      %2620 = vst.msk [vmem:[%s224 + $0x180] sm:$0xff] %vm560, %v2522
      %2621 = vst.msk [vmem:[%s224 + $0x188] sm:$0xff] %vm560, %v2523
      %2622 = vst.msk [vmem:[%s224 + $0x190] sm:$0xff] %vm560, %v2524
      %2623 = vst.msk [vmem:[%s224 + $0x198] sm:$0xff] %vm560, %v2525
      %2624 = vst.msk [vmem:[%s224 + $0x1a0] sm:$0xff] %vm560, %v2526
      %2625 = vst.msk [vmem:[%s224 + $0x1a8] sm:$0xff] %vm560, %v2527
      %2626 = vst.msk [vmem:[%s224 + $0x1b0] sm:$0xff] %vm560, %v2528
      %2627 = vst.msk [vmem:[%s224 + $0x1b8] sm:$0xff] %vm560, %v2529
      %2628 = vst.msk [vmem:[%s224 + $0x1c0] sm:$0xff] %vm560, %v2530
      %2629 = vst.msk [vmem:[%s224 + $0x1c8] sm:$0xff] %vm560, %v2531
      %2630 = vst.msk [vmem:[%s224 + $0x1d0] sm:$0xff] %vm560, %v2532
      %2631 = vst.msk [vmem:[%s224 + $0x1d8] sm:$0xff] %vm560, %v2533
      %2632 = vst.msk [vmem:[%s224 + $0x1e0] sm:$0xff] %vm560, %v2534
      %2633 = vst.msk [vmem:[%s224 + $0x1e8] sm:$0xff] %vm560, %v2535
      %2634 = vst.msk [vmem:[%s224 + $0x1f0] sm:$0xff] %vm560, %v2536
      %2635 = vst.msk [vmem:[%s224 + $0x1f8] sm:$0xff] %vm560, %v2537
      %2636 = vst.msk [vmem:[%s224 + $0x200] sm:$0xff] %vm560, %v2538
      %2637 = vst.msk [vmem:[%s224 + $0x208] sm:$0xff] %vm560, %v2539
      %2638 = vst.msk [vmem:[%s224 + $0x210] sm:$0xff] %vm560, %v2540
      %2639 = vst.msk [vmem:[%s224 + $0x218] sm:$0xff] %vm560, %v2541
      %2640 = vst.msk [vmem:[%s224 + $0x220] sm:$0xff] %vm560, %v2542
      %2641 = vst.msk [vmem:[%s224 + $0x228] sm:$0xff] %vm560, %v2543
      %2642 = vst.msk [vmem:[%s224 + $0x230] sm:$0xff] %vm560, %v2544
      %2643 = vst.msk [vmem:[%s224 + $0x238] sm:$0xff] %vm560, %v2545
      %2644 = vst.msk [vmem:[%s224 + $0x240] sm:$0xff] %vm560, %v2546
      %2645 = vst.msk [vmem:[%s224 + $0x248] sm:$0xff] %vm560, %v2547
      %2646 = vst.msk [vmem:[%s224 + $0x250] sm:$0xff] %vm560, %v2548
      %2647 = vst.msk [vmem:[%s224 + $0x258] sm:$0xff] %vm560, %v2549
      %2648 = vst.msk [vmem:[%s224 + $0x260] sm:$0xff] %vm560, %v2550
      %2649 = vst.msk [vmem:[%s224 + $0x268] sm:$0xff] %vm560, %v2551
      %2650 = vst.msk [vmem:[%s224 + $0x270] sm:$0xff] %vm560, %v2552
      %2651 = vst.msk [vmem:[%s224 + $0x278] sm:$0xff] %vm560, %v2553
      %2652 = vst.msk [vmem:[%s224 + $0x280] sm:$0xff] %vm560, %v2554
      %2653 = vst.msk [vmem:[%s224 + $0x288] sm:$0xff] %vm560, %v2555
      %2654 = vst.msk [vmem:[%s224 + $0x290] sm:$0xff] %vm560, %v2556
      %2655 = vst.msk [vmem:[%s224 + $0x298] sm:$0xff] %vm560, %v2557
      %2656 = vst.msk [vmem:[%s224 + $0x2a0] sm:$0xff] %vm560, %v2558
      %2657 = vst.msk [vmem:[%s224 + $0x2a8] sm:$0xff] %vm560, %v2559
      %2658 = vst.msk [vmem:[%s224 + $0x2b0] sm:$0xff] %vm560, %v2560
      %2659 = vst.msk [vmem:[%s224 + $0x2b8] sm:$0xff] %vm560, %v2561
      %2660 = vst.msk [vmem:[%s224 + $0x2c0] sm:$0xff] %vm560, %v2562
      %2661 = vst.msk [vmem:[%s224 + $0x2c8] sm:$0xff] %vm560, %v2563
      %2662 = vst.msk [vmem:[%s224 + $0x2d0] sm:$0xff] %vm560, %v2564
      %2663 = vst.msk [vmem:[%s224 + $0x2d8] sm:$0xff] %vm560, %v2565
      %2664 = vst.msk [vmem:[%s224 + $0x2e0] sm:$0xff] %vm560, %v2566
      %2665 = vst.msk [vmem:[%s224 + $0x2e8] sm:$0xff] %vm560, %v2567
      %2666 = vst.msk [vmem:[%s224 + $0x2f0] sm:$0xff] %vm560, %v2568
      %2667 = vst.msk [vmem:[%s224 + $0x2f8] sm:$0xff] %vm560, %v2569
      %2668 = vst.msk [vmem:[%s224 + $0x300] sm:$0xff] %vm560, %v2570
      %2669 = vst.msk [vmem:[%s224 + $0x308] sm:$0xff] %vm560, %v2571
      %s2670 = smul.u32 98, %s15
      %p2671 = scmp.lt.s32.totalorder %s2670, 195
      %s2672 = scalar_select %p2671, %s2670, 195
      %s2673 = smul.addr %s2672, 8
      %s2674 = scalar_lea.vmem %s4, %s2673
      // Predicated region
      $region37: #{residual_net_ptq_forward.9} parent=35 // pred_check
        %p2675 = pneg %p127
      $region38: #{residual_net_ptq_forward.9} parent=35 // pred_check_branch
        %2677 = sbr.rel (%p2675) target = $region40
      $region39: #{residual_net_ptq_forward.9} parent=35 // pred_region
        %s2678 = smul.u32 98, %s15
      $region40: #{residual_net_ptq_forward.9} parent=35 // pred_fallthru
        _
    $region36: #{residual_net_ptq_forward.9} parent=5 // pred_fallthru
      _
    %p2679 = scmp.le.s32.totalorder 2, %s10
    // Predicated region
    $region41: #{residual_net_ptq_forward.9} parent=5 // pred_check
      %p2680 = pneg %p2679
    $region42: #{residual_net_ptq_forward.9} parent=5 // pred_check_branch
      %2682 = sbr.rel (%p2680) target = $region44
    $region43: #{residual_net_ptq_forward.9} parent=5 // pred_region
      %s2683 = ssub.s32 %s10, 2
      // Predicated region
      $region45: #{residual_net_ptq_forward.9} parent=43 // pred_check
        %p2684 = pneg %p133
      $region46: #{residual_net_ptq_forward.9} parent=43 // pred_check_branch
        %2686 = sbr.rel (%p2684) target = $region48
      $region47: #{residual_net_ptq_forward.9} parent=43 // pred_region
        %s2687 = smul.u32 98, %s16
        %p2688 = scmp.lt.s32.totalorder %s2687, 195
        %s2689 = scalar_select %p2688, %s2687, 195
        %s2690 = smul.addr %s2689, 8
        %s2691 = scalar_lea.vmem %s4, %s2690
      $region48: #{residual_net_ptq_forward.9} parent=43 // pred_fallthru
        _
    $region44: #{residual_net_ptq_forward.9} parent=5 // pred_fallthru
      _
  $region6: #{residual_net_ptq_forward.9} parent=0 // loop_footer
    %s14 = sadd.s32 1, %s10
  $region7: #{residual_net_ptq_forward.9} parent=0 // loop_footer_branch
    %9 = sbr.rel target = $region3
  $region8: #{residual_net_ptq_forward.9} parent=0 // loop_exit
    _

// kernel: residual_net_ptq_forward.10
$region0: #{residual_net_ptq_forward.10}
  #allocation0 [shape = 'u32[]', space=smem, size = 0x4, offset = 0x4, fixed_abs, tag = 'smem constant byte address 0x4 - core index']
  #allocation1 [shape = 'u32[72,128]{1,0:T(1,128)}', space=vmem, size = 0x9000, scoped, tag = 'internal scratch']
  %s0 = inlined_call_operand.vmem [shape: f32[1568,288], index: 0, kind: input, shape index: {}]
  %s1 = inlined_call_operand.vmem [shape: f32[288,32], index: 1, kind: input, shape index: {}]
  %s2 = inlined_call_operand.vmem [shape: f32[1,32], index: 2, kind: input, shape index: {}]
  %s3 = inlined_call_operand.vmem [shape: f32[1568,32], index: 3, kind: input, shape index: {}]
  %s4 = inlined_call_operand.vmem [shape: f32[1568,1], index: 4, kind: input, shape index: {}]
  %s5 = inlined_call_operand.vmem [shape: f32[1568,32], index: 5, kind: output, shape index: {}]
  %s6 = sld [smem:[#allocation0]]
  $region53: #{residual_net_ptq_forward.10} parent=0
    _
  %s8 = ssub.s32 1, %s6
  %s9 = scalar_select 0, %s8, %s6
  loop: start=0, step=1, limit=4
  $region2: #{residual_net_ptq_forward.10} parent=0 // loop_pre_header
    _
  $region3: #{residual_net_ptq_forward.10} parent=0 // loop_header
    %s11 = sphi 0, %s15
    %p12 = scmp.ge.s32.totalorder %s11, 4
    %s21 = sphi 0, %s23
    %s24 = sphi 0, %s21
    %s25 = sphi 0, %s24
    %s41 = sphi 0, %s25
    %s45 = sphi 0, %s45
    %s47 = sphi 0, %s45
    %s48 = sphi 0, %s47
    %s62 = sphi 0, %s48
    %s66 = sphi 0, %s66
    %s68 = sphi 0, %s66
    %s69 = sphi 0, %s68
    %s83 = sphi 0, %s69
    %s89 = sphi 0, %s91
    %s92 = sphi 0, %s89
    %s93 = sphi 0, %s92
    %s109 = sphi 0, %s93
    %s115 = sphi 0, %s117
    %s118 = sphi 0, %s115
    %s119 = sphi 0, %s118
    %s135 = sphi 0, %s119
    %s141 = sphi 0, %s143
    %s144 = sphi 0, %s141
    %s145 = sphi 0, %s144
    %s161 = sphi 0, %s145
  $region4: #{residual_net_ptq_forward.10} parent=0 // loop_header_branch
    %14 = sbr.rel (%p12) target = $region8
  $region5: #{residual_net_ptq_forward.10} parent=0 // loop_body
    %s16 = ssub.s32 %s11, 1
    %s17 = ssub.s32 %s11, 2
    %s18 = sadd.s32 %s11, 1
    %s19 = ssub.s32 %s11, %s18
    %p20 = scmp.eq.s32.totalorder %s19, 0
    %s22 = sadd.s32 %s21, 1
    %s23 = scalar_select %p20, %s21, %s22
    %p26 = pneg %p20
    %p27 = scmp.eq.s32.totalorder %s11, 1
    %p28 = por %p26, %p27
    %p29 = scmp.ne.s32.totalorder %s21, %s24
    %p30 = scmp.eq.s32.totalorder %s11, 0
    %p31 = por %p29, %p30
    %p32 = scmp.ne.s32.totalorder %s21, %s24
    %p33 = scmp.eq.s32.totalorder %s16, 1
    %p34 = por %p32, %p33
    %p35 = scmp.ne.s32.totalorder %s24, %s25
    %p36 = scmp.eq.s32.totalorder %s16, 0
    %p37 = por %p35, %p36
    %p38 = scmp.ne.s32.totalorder %s24, %s25
    %p39 = scmp.eq.s32.totalorder %s17, 1
    %p40 = por %p38, %p39
    %p42 = scmp.ne.s32.totalorder %s25, %s41
    %p43 = scmp.eq.s32.totalorder %s17, 0
    %p44 = por %p42, %p43
    %s46 = sadd.s32 %s45, 1
    %p49 = scmp.eq.s32.totalorder %s11, 1
    %p50 = scmp.ne.s32.totalorder %s45, %s47
    %p51 = scmp.eq.s32.totalorder %s11, 0
    %p52 = por %p50, %p51
    %p53 = scmp.ne.s32.totalorder %s45, %s47
    %p54 = scmp.eq.s32.totalorder %s16, 1
    %p55 = por %p53, %p54
    %p56 = scmp.ne.s32.totalorder %s47, %s48
    %p57 = scmp.eq.s32.totalorder %s16, 0
    %p58 = por %p56, %p57
    %p59 = scmp.ne.s32.totalorder %s47, %s48
    %p60 = scmp.eq.s32.totalorder %s17, 1
    %p61 = por %p59, %p60
    %p63 = scmp.ne.s32.totalorder %s48, %s62
    %p64 = scmp.eq.s32.totalorder %s17, 0
    %p65 = por %p63, %p64
    %s67 = sadd.s32 %s66, 1
    %p70 = scmp.eq.s32.totalorder %s11, 1
    %p71 = scmp.ne.s32.totalorder %s66, %s68
    %p72 = scmp.eq.s32.totalorder %s11, 0
    %p73 = por %p71, %p72
    %p74 = scmp.ne.s32.totalorder %s66, %s68
    %p75 = scmp.eq.s32.totalorder %s16, 1
    %p76 = por %p74, %p75
    %p77 = scmp.ne.s32.totalorder %s68, %s69
    %p78 = scmp.eq.s32.totalorder %s16, 0
    %p79 = por %p77, %p78
    %p80 = scmp.ne.s32.totalorder %s68, %s69
    %p81 = scmp.eq.s32.totalorder %s17, 1
    %p82 = por %p80, %p81
    %p84 = scmp.ne.s32.totalorder %s69, %s83
    %p85 = scmp.eq.s32.totalorder %s17, 0
    %p86 = por %p84, %p85
    %s87 = ssub.s32 %s11, %s18
    %p88 = scmp.eq.s32.totalorder %s87, 0
    %s90 = sadd.s32 %s89, 1
    %s91 = scalar_select %p88, %s89, %s90
    %p94 = pneg %p88
    %p95 = scmp.eq.s32.totalorder %s11, 1
    %p96 = por %p94, %p95
    %p97 = scmp.ne.s32.totalorder %s89, %s92
    %p98 = scmp.eq.s32.totalorder %s11, 0
    %p99 = por %p97, %p98
    %p100 = scmp.ne.s32.totalorder %s89, %s92
    %p101 = scmp.eq.s32.totalorder %s16, 1
    %p102 = por %p100, %p101
    %p103 = scmp.ne.s32.totalorder %s92, %s93
    %p104 = scmp.eq.s32.totalorder %s16, 0
    %p105 = por %p103, %p104
    %p106 = scmp.ne.s32.totalorder %s92, %s93
    %p107 = scmp.eq.s32.totalorder %s17, 1
    %p108 = por %p106, %p107
    %p110 = scmp.ne.s32.totalorder %s93, %s109
    %p111 = scmp.eq.s32.totalorder %s17, 0
    %p112 = por %p110, %p111
    %s113 = ssub.s32 %s11, %s18
    %p114 = scmp.eq.s32.totalorder %s113, 0
    %s116 = sadd.s32 %s115, 1
    %s117 = scalar_select %p114, %s115, %s116
    %p120 = pneg %p114
    %p121 = scmp.eq.s32.totalorder %s11, 1
    %p122 = por %p120, %p121
    %p123 = scmp.ne.s32.totalorder %s115, %s118
    %p124 = scmp.eq.s32.totalorder %s11, 0
    %p125 = por %p123, %p124
    %p126 = scmp.ne.s32.totalorder %s115, %s118
    %p127 = scmp.eq.s32.totalorder %s16, 1
    %p128 = por %p126, %p127
    %p129 = scmp.ne.s32.totalorder %s118, %s119
    %p130 = scmp.eq.s32.totalorder %s16, 0
    %p131 = por %p129, %p130
    %p132 = scmp.ne.s32.totalorder %s118, %s119
    %p133 = scmp.eq.s32.totalorder %s17, 1
    %p134 = por %p132, %p133
    %p136 = scmp.ne.s32.totalorder %s119, %s135
    %p137 = scmp.eq.s32.totalorder %s17, 0
    %p138 = por %p136, %p137
    %s139 = ssub.s32 %s11, %s18
    %p140 = scmp.eq.s32.totalorder %s139, 0
    %s142 = sadd.s32 %s141, 1
    %s143 = scalar_select %p140, %s141, %s142
    %p146 = pneg %p140
    %p147 = scmp.eq.s32.totalorder %s11, 1
    %p148 = por %p146, %p147
    %p149 = scmp.ne.s32.totalorder %s141, %s144
    %p150 = scmp.eq.s32.totalorder %s11, 0
    %p151 = por %p149, %p150
    %p152 = scmp.ne.s32.totalorder %s141, %s144
    %p153 = scmp.eq.s32.totalorder %s16, 1
    %p154 = por %p152, %p153
    %p155 = scmp.ne.s32.totalorder %s144, %s145
    %p156 = scmp.eq.s32.totalorder %s16, 0
    %p157 = por %p155, %p156
    %p158 = scmp.ne.s32.totalorder %s144, %s145
    %p159 = scmp.eq.s32.totalorder %s17, 1
    %p160 = por %p158, %p159
    %p162 = scmp.ne.s32.totalorder %s145, %s161
    %p163 = scmp.eq.s32.totalorder %s17, 0
    %p164 = por %p162, %p163
    %p165 = scmp.le.s32.totalorder 1, %s11
    %p166 = scmp.lt.s32.totalorder %s11, 3
    %p167 = pnand %p165, %p166
    %p168 = pneg %p167
    // Predicated region
    $region9: #{residual_net_ptq_forward.10} parent=5 // pred_check
      _
    $region10: #{residual_net_ptq_forward.10} parent=5 // pred_check_branch
      %170 = sbr.rel (%p167) target = $region12
    $region11: #{residual_net_ptq_forward.10} parent=5 // pred_region
      %s171 = ssub.s32 %s11, 1
      // Predicated region
      $region13: #{residual_net_ptq_forward.10} parent=11 // pred_check
        %p172 = pneg %p58
      $region14: #{residual_net_ptq_forward.10} parent=11 // pred_check_branch
        %174 = sbr.rel (%p172) target = $region16
      $region15: #{residual_net_ptq_forward.10} parent=11 // pred_region
        _
      $region16: #{residual_net_ptq_forward.10} parent=11 // pred_fallthru
        _
      // Predicated region
      $region17: #{residual_net_ptq_forward.10} parent=11 // pred_check
        %p175 = pneg %p79
      $region18: #{residual_net_ptq_forward.10} parent=11 // pred_check_branch
        %177 = sbr.rel (%p175) target = $region20
      $region19: #{residual_net_ptq_forward.10} parent=11 // pred_region
        _
      $region20: #{residual_net_ptq_forward.10} parent=11 // pred_fallthru
        _
    $region12: #{residual_net_ptq_forward.10} parent=5 // pred_fallthru
      _
    %p178 = scmp.lt.s32.totalorder %s11, 2
    // Predicated region
    $region21: #{residual_net_ptq_forward.10} parent=5 // pred_check
      %p179 = pneg %p178
    $region22: #{residual_net_ptq_forward.10} parent=5 // pred_check_branch
      %181 = sbr.rel (%p179) target = $region24
    $region23: #{residual_net_ptq_forward.10} parent=5 // pred_region
      // Predicated region
      $region25: #{residual_net_ptq_forward.10} parent=23 // pred_check
        %p182 = pneg %p31
      $region26: #{residual_net_ptq_forward.10} parent=23 // pred_check_branch
        %184 = sbr.rel (%p182) target = $region28
      $region27: #{residual_net_ptq_forward.10} parent=23 // pred_region
        %s185 = smul.u32 98, %s11
        %p186 = scmp.lt.s32.totalorder %s185, 195
        %s187 = scalar_select %p186, %s185, 195
        %s188 = smul.addr %s187, 3
        %s189 = smul.addr %s188, 8
        %s190 = scalar_lea.vmem %s0, %s189
        %s191 = smul.u32 98, %s11
      $region28: #{residual_net_ptq_forward.10} parent=23 // pred_fallthru
        _
      // Predicated region
      $region29: #{residual_net_ptq_forward.10} parent=23 // pred_check
        %p192 = pneg %p99
      $region30: #{residual_net_ptq_forward.10} parent=23 // pred_check_branch
        %194 = sbr.rel (%p192) target = $region32
      $region31: #{residual_net_ptq_forward.10} parent=23 // pred_region
        %s195 = smul.u32 98, %s11
        %p196 = scmp.lt.s32.totalorder %s195, 195
        %s197 = scalar_select %p196, %s195, 195
        %s198 = smul.addr %s197, 8
        %s199 = scalar_lea.vmem %s3, %s198
        %s200 = smul.u32 98, %s11
      $region32: #{residual_net_ptq_forward.10} parent=23 // pred_fallthru
        _
      // Predicated region
      $region33: #{residual_net_ptq_forward.10} parent=23 // pred_check
        %p201 = pneg %p125
      $region34: #{residual_net_ptq_forward.10} parent=23 // pred_check_branch
        %203 = sbr.rel (%p201) target = $region36
      $region35: #{residual_net_ptq_forward.10} parent=23 // pred_region
        %s204 = smul.u32 98, %s11
        %p205 = scmp.lt.s32.totalorder %s204, 195
        %s206 = scalar_select %p205, %s204, 195
        %s207 = smul.addr %s206, 8
        %s208 = scalar_lea.vmem %s4, %s207
        %s209 = smul.u32 98, %s11
      $region36: #{residual_net_ptq_forward.10} parent=23 // pred_fallthru
        _
    $region24: #{residual_net_ptq_forward.10} parent=5 // pred_fallthru
      _
    %p210 = scmp.le.s32.totalorder 1, %s11
    %p211 = scmp.lt.s32.totalorder %s11, 3
    %p212 = pnand %p210, %p211
    %p213 = pneg %p212
    // Predicated region
    $region37: #{residual_net_ptq_forward.10} parent=5 // pred_check
      _
    $region38: #{residual_net_ptq_forward.10} parent=5 // pred_check_branch
      %215 = sbr.rel (%p212) target = $region40
    $region39: #{residual_net_ptq_forward.10} parent=5 // pred_region
      %s216 = ssub.s32 %s11, 1
      %s217 = smul.u32 98, %s16
      %p218 = scmp.lt.s32.totalorder %s217, 195
      %s219 = scalar_select %p218, %s217, 195
      %s220 = smul.addr %s219, 3
      %s221 = smul.addr %s220, 8
      %s222 = scalar_lea.vmem %s0, %s221
      %p223 = pneg %p37
      %p224 = pneg %p34
      %p225 = pneg %p58
      %p226 = pneg %p55
      %p227 = pneg %p79
      %p228 = pneg %p76
      %s229 = smul.u32 98, %s16
      %p230 = scmp.lt.s32.totalorder %s229, 195
      %s231 = scalar_select %p230, %s229, 195
      %s232 = smul.addr %s231, 8
      %s233 = scalar_lea.vmem %s3, %s232
      %p234 = pneg %p105
      %p235 = pneg %p102
      %s236 = smul.u32 98, %s16
      %p237 = scmp.lt.s32.totalorder %s236, 195
      %s238 = scalar_select %p237, %s236, 195
      %s239 = smul.addr %s238, 8
      %s240 = scalar_lea.vmem %s4, %s239
      %p241 = pneg %p131
      %p242 = pneg %p128
      %p243 = pneg %p157
      %p244 = pneg %p154
      %s245 = smul.u32 98, %s16
      %p246 = scmp.lt.s32.totalorder %s245, 195
      %s247 = scalar_select %p246, %s245, 195
      %s248 = smul.addr %s247, 8
      %s249 = scalar_lea.vmem %s5, %s248
      %s250 = smul.u32 98, %s16
      %p251 = scmp.lt.s32.totalorder %s250, 195
      %s252 = scalar_select %p251, %s250, 195
      %s253 = smul.addr %s252, 3
      %s254 = smul.addr %s253, 8
      %s255 = scalar_lea.vmem %s0, %s254
      %s256 = smul.u32 98, %s16
      %s257 = smul.u32 98, %s16
      %p258 = scmp.lt.s32.totalorder %s257, 195
      %s259 = scalar_select %p258, %s257, 195
      %s260 = smul.addr %s259, 8
      %s261 = scalar_lea.vmem %s3, %s260
      %s262 = smul.u32 98, %s16
      %s263 = smul.u32 98, %s16
      %p264 = scmp.lt.s32.totalorder %s263, 195
      %s265 = scalar_select %p264, %s263, 195
      %s266 = smul.addr %s265, 8
      %s267 = scalar_lea.vmem %s4, %s266
      %s268 = smul.u32 98, %s16
      %s269 = smul.u32 98, %s16
      %p270 = scmp.lt.s32.totalorder %s269, 195
      %s271 = scalar_select %p270, %s269, 195
      %s272 = smul.addr %s271, 8
      %s273 = scalar_lea.vmem %s5, %s272
      %s274 = smul.u32 98, %s16
      %v275 = vld [vmem:[%s255] sm:$0xff]
      %v276 = vld [vmem:[%s255 + $0x8] sm:$0xff]
      %v277 = vld [vmem:[%s255 + $0x10] sm:$0xff]
      %v278 = vld [vmem:[%s255 + $0x18] sm:$0xff]
      %v279 = vld [vmem:[%s255 + $0x20] sm:$0xff]
      %v280 = vld [vmem:[%s255 + $0x28] sm:$0xff]
      %v281 = vld [vmem:[%s255 + $0x30] sm:$0xff]
      %v282 = vld [vmem:[%s255 + $0x38] sm:$0xff]
      %v283 = vld [vmem:[%s255 + $0x40] sm:$0xff]
      %v284 = vld [vmem:[%s255 + $0x48] sm:$0xff]
      %v285 = vld [vmem:[%s255 + $0x50] sm:$0xff]
      %v286 = vld [vmem:[%s255 + $0x58] sm:$0xff]
      %v287 = vld [vmem:[%s255 + $0x60] sm:$0xff]
      %v288 = vld [vmem:[%s255 + $0x68] sm:$0xff]
      %v289 = vld [vmem:[%s255 + $0x70] sm:$0xff]
      %v290 = vld [vmem:[%s255 + $0x78] sm:$0xff]
      %v291 = vld [vmem:[%s255 + $0x80] sm:$0xff]
      %v292 = vld [vmem:[%s255 + $0x88] sm:$0xff]
      %v293 = vld [vmem:[%s255 + $0x90] sm:$0xff]
      %v294 = vld [vmem:[%s255 + $0x98] sm:$0xff]
      %v295 = vld [vmem:[%s255 + $0xa0] sm:$0xff]
      %v296 = vld [vmem:[%s255 + $0xa8] sm:$0xff]
      %v297 = vld [vmem:[%s255 + $0xb0] sm:$0xff]
      %v298 = vld [vmem:[%s255 + $0xb8] sm:$0xff]
      %v299 = vld [vmem:[%s255 + $0xc0] sm:$0xff]
      %v300 = vld [vmem:[%s255 + $0xc8] sm:$0xff]
      %v301 = vld [vmem:[%s255 + $0xd0] sm:$0xff]
      %v302 = vld [vmem:[%s255 + $0xd8] sm:$0xff]
      %v303 = vld [vmem:[%s255 + $0xe0] sm:$0xff]
      %v304 = vld [vmem:[%s255 + $0xe8] sm:$0xff]
      %v305 = vld [vmem:[%s255 + $0xf0] sm:$0xff]
      %v306 = vld [vmem:[%s255 + $0xf8] sm:$0xff]
      %v307 = vld [vmem:[%s255 + $0x100] sm:$0xff]
      %v308 = vld [vmem:[%s255 + $0x108] sm:$0xff]
      %v309 = vld [vmem:[%s255 + $0x110] sm:$0xff]
      %v310 = vld [vmem:[%s255 + $0x118] sm:$0xff]
      %v311 = vld [vmem:[%s255 + $0x120] sm:$0xff]
      %v312 = vld [vmem:[%s255 + $0x128] sm:$0xff]
      %v313 = vld [vmem:[%s255 + $0x130] sm:$0xff]
      %v314 = vld [vmem:[%s255 + $0x138] sm:$0xff]
      %v315 = vld [vmem:[%s255 + $0x140] sm:$0xff]
      %v316 = vld [vmem:[%s255 + $0x148] sm:$0xff]
      %v317 = vld [vmem:[%s255 + $0x150] sm:$0xff]
      %v318 = vld [vmem:[%s255 + $0x158] sm:$0xff]
      %v319 = vld [vmem:[%s255 + $0x160] sm:$0xff]
      %v320 = vld [vmem:[%s255 + $0x168] sm:$0xff]
      %v321 = vld [vmem:[%s255 + $0x170] sm:$0xff]
      %v322 = vld [vmem:[%s255 + $0x178] sm:$0xff]
      %v323 = vld [vmem:[%s255 + $0x180] sm:$0xff]
      %v324 = vld [vmem:[%s255 + $0x188] sm:$0xff]
      %v325 = vld [vmem:[%s255 + $0x190] sm:$0xff]
      %v326 = vld [vmem:[%s255 + $0x198] sm:$0xff]
      %v327 = vld [vmem:[%s255 + $0x1a0] sm:$0xff]
      %v328 = vld [vmem:[%s255 + $0x1a8] sm:$0xff]
      %v329 = vld [vmem:[%s255 + $0x1b0] sm:$0xff]
      %v330 = vld [vmem:[%s255 + $0x1b8] sm:$0xff]
      %v331 = vld [vmem:[%s255 + $0x1c0] sm:$0xff]
      %v332 = vld [vmem:[%s255 + $0x1c8] sm:$0xff]
      %v333 = vld [vmem:[%s255 + $0x1d0] sm:$0xff]
      %v334 = vld [vmem:[%s255 + $0x1d8] sm:$0xff]
      %v335 = vld [vmem:[%s255 + $0x1e0] sm:$0xff]
      %v336 = vld [vmem:[%s255 + $0x1e8] sm:$0xff]
      %v337 = vld [vmem:[%s255 + $0x1f0] sm:$0xff]
      %v338 = vld [vmem:[%s255 + $0x1f8] sm:$0xff]
      %v339 = vld [vmem:[%s255 + $0x200] sm:$0xff]
      %v340 = vld [vmem:[%s255 + $0x208] sm:$0xff]
      %v341 = vld [vmem:[%s255 + $0x210] sm:$0xff]
      %v342 = vld [vmem:[%s255 + $0x218] sm:$0xff]
      %v343 = vld [vmem:[%s255 + $0x220] sm:$0xff]
      %v344 = vld [vmem:[%s255 + $0x228] sm:$0xff]
      %v345 = vld [vmem:[%s255 + $0x230] sm:$0xff]
      %v346 = vld [vmem:[%s255 + $0x238] sm:$0xff]
      %v347 = vld [vmem:[%s255 + $0x240] sm:$0xff]
      %v348 = vld [vmem:[%s255 + $0x248] sm:$0xff]
      %v349 = vld [vmem:[%s255 + $0x250] sm:$0xff]
      %v350 = vld [vmem:[%s255 + $0x258] sm:$0xff]
      %v351 = vld [vmem:[%s255 + $0x260] sm:$0xff]
      %v352 = vld [vmem:[%s255 + $0x268] sm:$0xff]
      %v353 = vld [vmem:[%s255 + $0x270] sm:$0xff]
      %v354 = vld [vmem:[%s255 + $0x278] sm:$0xff]
      %v355 = vld [vmem:[%s255 + $0x280] sm:$0xff]
      %v356 = vld [vmem:[%s255 + $0x288] sm:$0xff]
      %v357 = vld [vmem:[%s255 + $0x290] sm:$0xff]
      %v358 = vld [vmem:[%s255 + $0x298] sm:$0xff]
      %v359 = vld [vmem:[%s255 + $0x2a0] sm:$0xff]
      %v360 = vld [vmem:[%s255 + $0x2a8] sm:$0xff]
      %v361 = vld [vmem:[%s255 + $0x2b0] sm:$0xff]
      %v362 = vld [vmem:[%s255 + $0x2b8] sm:$0xff]
      %v363 = vld [vmem:[%s255 + $0x2c0] sm:$0xff]
      %v364 = vld [vmem:[%s255 + $0x2c8] sm:$0xff]
      %v365 = vld [vmem:[%s255 + $0x2d0] sm:$0xff]
      %v366 = vld [vmem:[%s255 + $0x2d8] sm:$0xff]
      %v367 = vld [vmem:[%s255 + $0x2e0] sm:$0xff]
      %v368 = vld [vmem:[%s255 + $0x2e8] sm:$0xff]
      %v369 = vld [vmem:[%s255 + $0x2f0] sm:$0xff]
      %v370 = vld [vmem:[%s255 + $0x2f8] sm:$0xff]
      %v371 = vld [vmem:[%s255 + $0x300] sm:$0xff]
      %v372 = vld [vmem:[%s255 + $0x308] sm:$0xff]
      %v373 = vld [vmem:[%s255 + $0x310] sm:$0xff]
      %v374 = vld [vmem:[%s255 + $0x318] sm:$0xff]
      %v375 = vld [vmem:[%s255 + $0x320] sm:$0xff]
      %v376 = vld [vmem:[%s255 + $0x328] sm:$0xff]
      %v377 = vld [vmem:[%s255 + $0x330] sm:$0xff]
      %v378 = vld [vmem:[%s255 + $0x338] sm:$0xff]
      %v379 = vld [vmem:[%s255 + $0x340] sm:$0xff]
      %v380 = vld [vmem:[%s255 + $0x348] sm:$0xff]
      %v381 = vld [vmem:[%s255 + $0x350] sm:$0xff]
      %v382 = vld [vmem:[%s255 + $0x358] sm:$0xff]
      %v383 = vld [vmem:[%s255 + $0x360] sm:$0xff]
      %v384 = vld [vmem:[%s255 + $0x368] sm:$0xff]
      %v385 = vld [vmem:[%s255 + $0x370] sm:$0xff]
      %v386 = vld [vmem:[%s255 + $0x378] sm:$0xff]
      %v387 = vld [vmem:[%s255 + $0x380] sm:$0xff]
      %v388 = vld [vmem:[%s255 + $0x388] sm:$0xff]
      %v389 = vld [vmem:[%s255 + $0x390] sm:$0xff]
      %v390 = vld [vmem:[%s255 + $0x398] sm:$0xff]
      %v391 = vld [vmem:[%s255 + $0x3a0] sm:$0xff]
      %v392 = vld [vmem:[%s255 + $0x3a8] sm:$0xff]
      %v393 = vld [vmem:[%s255 + $0x3b0] sm:$0xff]
      %v394 = vld [vmem:[%s255 + $0x3b8] sm:$0xff]
      %v395 = vld [vmem:[%s255 + $0x3c0] sm:$0xff]
      %v396 = vld [vmem:[%s255 + $0x3c8] sm:$0xff]
      %v397 = vld [vmem:[%s255 + $0x3d0] sm:$0xff]
      %v398 = vld [vmem:[%s255 + $0x3d8] sm:$0xff]
      %v399 = vld [vmem:[%s255 + $0x3e0] sm:$0xff]
      %v400 = vld [vmem:[%s255 + $0x3e8] sm:$0xff]
      %v401 = vld [vmem:[%s255 + $0x3f0] sm:$0xff]
      %v402 = vld [vmem:[%s255 + $0x3f8] sm:$0xff]
      %v403 = vld [vmem:[%s255 + $0x400] sm:$0xff]
      %v404 = vld [vmem:[%s255 + $0x408] sm:$0xff]
      %v405 = vld [vmem:[%s255 + $0x410] sm:$0xff]
      %v406 = vld [vmem:[%s255 + $0x418] sm:$0xff]
      %v407 = vld [vmem:[%s255 + $0x420] sm:$0xff]
      %v408 = vld [vmem:[%s255 + $0x428] sm:$0xff]
      %v409 = vld [vmem:[%s255 + $0x430] sm:$0xff]
      %v410 = vld [vmem:[%s255 + $0x438] sm:$0xff]
      %v411 = vld [vmem:[%s255 + $0x440] sm:$0xff]
      %v412 = vld [vmem:[%s255 + $0x448] sm:$0xff]
      %v413 = vld [vmem:[%s255 + $0x450] sm:$0xff]
      %v414 = vld [vmem:[%s255 + $0x458] sm:$0xff]
      %v415 = vld [vmem:[%s255 + $0x460] sm:$0xff]
      %v416 = vld [vmem:[%s255 + $0x468] sm:$0xff]
      %v417 = vld [vmem:[%s255 + $0x470] sm:$0xff]
      %v418 = vld [vmem:[%s255 + $0x478] sm:$0xff]
      %v419 = vld [vmem:[%s255 + $0x480] sm:$0xff]
      %v420 = vld [vmem:[%s255 + $0x488] sm:$0xff]
      %v421 = vld [vmem:[%s255 + $0x490] sm:$0xff]
      %v422 = vld [vmem:[%s255 + $0x498] sm:$0xff]
      %v423 = vld [vmem:[%s255 + $0x4a0] sm:$0xff]
      %v424 = vld [vmem:[%s255 + $0x4a8] sm:$0xff]
      %v425 = vld [vmem:[%s255 + $0x4b0] sm:$0xff]
      %v426 = vld [vmem:[%s255 + $0x4b8] sm:$0xff]
      %v427 = vld [vmem:[%s255 + $0x4c0] sm:$0xff]
      %v428 = vld [vmem:[%s255 + $0x4c8] sm:$0xff]
      %v429 = vld [vmem:[%s255 + $0x4d0] sm:$0xff]
      %v430 = vld [vmem:[%s255 + $0x4d8] sm:$0xff]
      %v431 = vld [vmem:[%s255 + $0x4e0] sm:$0xff]
      %v432 = vld [vmem:[%s255 + $0x4e8] sm:$0xff]
      %v433 = vld [vmem:[%s255 + $0x4f0] sm:$0xff]
      %v434 = vld [vmem:[%s255 + $0x4f8] sm:$0xff]
      %v435 = vld [vmem:[%s255 + $0x500] sm:$0xff]
      %v436 = vld [vmem:[%s255 + $0x508] sm:$0xff]
      %v437 = vld [vmem:[%s255 + $0x510] sm:$0xff]
      %v438 = vld [vmem:[%s255 + $0x518] sm:$0xff]
      %v439 = vld [vmem:[%s255 + $0x520] sm:$0xff]
      %v440 = vld [vmem:[%s255 + $0x528] sm:$0xff]
      %v441 = vld [vmem:[%s255 + $0x530] sm:$0xff]
      %v442 = vld [vmem:[%s255 + $0x538] sm:$0xff]
      %v443 = vld [vmem:[%s255 + $0x540] sm:$0xff]
      %v444 = vld [vmem:[%s255 + $0x548] sm:$0xff]
      %v445 = vld [vmem:[%s255 + $0x550] sm:$0xff]
      %v446 = vld [vmem:[%s255 + $0x558] sm:$0xff]
      %v447 = vld [vmem:[%s255 + $0x560] sm:$0xff]
      %v448 = vld [vmem:[%s255 + $0x568] sm:$0xff]
      %v449 = vld [vmem:[%s255 + $0x570] sm:$0xff]
      %v450 = vld [vmem:[%s255 + $0x578] sm:$0xff]
      %v451 = vld [vmem:[%s255 + $0x580] sm:$0xff]
      %v452 = vld [vmem:[%s255 + $0x588] sm:$0xff]
      %v453 = vld [vmem:[%s255 + $0x590] sm:$0xff]
      %v454 = vld [vmem:[%s255 + $0x598] sm:$0xff]
      %v455 = vld [vmem:[%s255 + $0x5a0] sm:$0xff]
      %v456 = vld [vmem:[%s255 + $0x5a8] sm:$0xff]
      %v457 = vld [vmem:[%s255 + $0x5b0] sm:$0xff]
      %v458 = vld [vmem:[%s255 + $0x5b8] sm:$0xff]
      %v459 = vld [vmem:[%s255 + $0x5c0] sm:$0xff]
      %v460 = vld [vmem:[%s255 + $0x5c8] sm:$0xff]
      %v461 = vld [vmem:[%s255 + $0x5d0] sm:$0xff]
      %v462 = vld [vmem:[%s255 + $0x5d8] sm:$0xff]
      %v463 = vld [vmem:[%s255 + $0x5e0] sm:$0xff]
      %v464 = vld [vmem:[%s255 + $0x5e8] sm:$0xff]
      %v465 = vld [vmem:[%s255 + $0x5f0] sm:$0xff]
      %v466 = vld [vmem:[%s255 + $0x5f8] sm:$0xff]
      %v467 = vld [vmem:[%s255 + $0x600] sm:$0xff]
      %v468 = vld [vmem:[%s255 + $0x608] sm:$0xff]
      %v469 = vld [vmem:[%s255 + $0x610] sm:$0xff]
      %v470 = vld [vmem:[%s255 + $0x618] sm:$0xff]
      %v471 = vld [vmem:[%s255 + $0x620] sm:$0xff]
      %v472 = vld [vmem:[%s255 + $0x628] sm:$0xff]
      %v473 = vld [vmem:[%s255 + $0x630] sm:$0xff]
      %v474 = vld [vmem:[%s255 + $0x638] sm:$0xff]
      %v475 = vld [vmem:[%s255 + $0x640] sm:$0xff]
      %v476 = vld [vmem:[%s255 + $0x648] sm:$0xff]
      %v477 = vld [vmem:[%s255 + $0x650] sm:$0xff]
      %v478 = vld [vmem:[%s255 + $0x658] sm:$0xff]
      %v479 = vld [vmem:[%s255 + $0x660] sm:$0xff]
      %v480 = vld [vmem:[%s255 + $0x668] sm:$0xff]
      %v481 = vld [vmem:[%s255 + $0x670] sm:$0xff]
      %v482 = vld [vmem:[%s255 + $0x678] sm:$0xff]
      %v483 = vld [vmem:[%s255 + $0x680] sm:$0xff]
      %v484 = vld [vmem:[%s255 + $0x688] sm:$0xff]
      %v485 = vld [vmem:[%s255 + $0x690] sm:$0xff]
      %v486 = vld [vmem:[%s255 + $0x698] sm:$0xff]
      %v487 = vld [vmem:[%s255 + $0x6a0] sm:$0xff]
      %v488 = vld [vmem:[%s255 + $0x6a8] sm:$0xff]
      %v489 = vld [vmem:[%s255 + $0x6b0] sm:$0xff]
      %v490 = vld [vmem:[%s255 + $0x6b8] sm:$0xff]
      %v491 = vld [vmem:[%s255 + $0x6c0] sm:$0xff]
      %v492 = vld [vmem:[%s255 + $0x6c8] sm:$0xff]
      %v493 = vld [vmem:[%s255 + $0x6d0] sm:$0xff]
      %v494 = vld [vmem:[%s255 + $0x6d8] sm:$0xff]
      %v495 = vld [vmem:[%s255 + $0x6e0] sm:$0xff]
      %v496 = vld [vmem:[%s255 + $0x6e8] sm:$0xff]
      %v497 = vld [vmem:[%s255 + $0x6f0] sm:$0xff]
      %v498 = vld [vmem:[%s255 + $0x6f8] sm:$0xff]
      %v499 = vld [vmem:[%s255 + $0x700] sm:$0xff]
      %v500 = vld [vmem:[%s255 + $0x708] sm:$0xff]
      %v501 = vld [vmem:[%s255 + $0x710] sm:$0xff]
      %v502 = vld [vmem:[%s255 + $0x718] sm:$0xff]
      %v503 = vld [vmem:[%s255 + $0x720] sm:$0xff]
      %v504 = vld [vmem:[%s255 + $0x728] sm:$0xff]
      %v505 = vld [vmem:[%s255 + $0x730] sm:$0xff]
      %v506 = vld [vmem:[%s255 + $0x738] sm:$0xff]
      %v507 = vld [vmem:[%s255 + $0x740] sm:$0xff]
      %v508 = vld [vmem:[%s255 + $0x748] sm:$0xff]
      %v509 = vld [vmem:[%s255 + $0x750] sm:$0xff]
      %v510 = vld [vmem:[%s255 + $0x758] sm:$0xff]
      %v511 = vld [vmem:[%s255 + $0x760] sm:$0xff]
      %v512 = vld [vmem:[%s255 + $0x768] sm:$0xff]
      %v513 = vld [vmem:[%s255 + $0x770] sm:$0xff]
      %v514 = vld [vmem:[%s255 + $0x778] sm:$0xff]
      %v515 = vld [vmem:[%s255 + $0x780] sm:$0xff]
      %v516 = vld [vmem:[%s255 + $0x788] sm:$0xff]
      %v517 = vld [vmem:[%s255 + $0x790] sm:$0xff]
      %v518 = vld [vmem:[%s255 + $0x798] sm:$0xff]
      %v519 = vld [vmem:[%s255 + $0x7a0] sm:$0xff]
      %v520 = vld [vmem:[%s255 + $0x7a8] sm:$0xff]
      %v521 = vld [vmem:[%s255 + $0x7b0] sm:$0xff]
      %v522 = vld [vmem:[%s255 + $0x7b8] sm:$0xff]
      %v523 = vld [vmem:[%s255 + $0x7c0] sm:$0xff]
      %v524 = vld [vmem:[%s255 + $0x7c8] sm:$0xff]
      %v525 = vld [vmem:[%s255 + $0x7d0] sm:$0xff]
      %v526 = vld [vmem:[%s255 + $0x7d8] sm:$0xff]
      %v527 = vld [vmem:[%s255 + $0x7e0] sm:$0xff]
      %v528 = vld [vmem:[%s255 + $0x7e8] sm:$0xff]
      %v529 = vld [vmem:[%s255 + $0x7f0] sm:$0xff]
      %v530 = vld [vmem:[%s255 + $0x7f8] sm:$0xff]
      %v531 = vld [vmem:[%s255 + $0x800] sm:$0xff]
      %v532 = vld [vmem:[%s255 + $0x808] sm:$0xff]
      %v533 = vld [vmem:[%s255 + $0x810] sm:$0xff]
      %v534 = vld [vmem:[%s255 + $0x818] sm:$0xff]
      %v535 = vld [vmem:[%s255 + $0x820] sm:$0xff]
      %v536 = vld [vmem:[%s255 + $0x828] sm:$0xff]
      %v537 = vld [vmem:[%s255 + $0x830] sm:$0xff]
      %v538 = vld [vmem:[%s255 + $0x838] sm:$0xff]
      %v539 = vld [vmem:[%s255 + $0x840] sm:$0xff]
      %v540 = vld [vmem:[%s255 + $0x848] sm:$0xff]
      %v541 = vld [vmem:[%s255 + $0x850] sm:$0xff]
      %v542 = vld [vmem:[%s255 + $0x858] sm:$0xff]
      %v543 = vld [vmem:[%s255 + $0x860] sm:$0xff]
      %v544 = vld [vmem:[%s255 + $0x868] sm:$0xff]
      %v545 = vld [vmem:[%s255 + $0x870] sm:$0xff]
      %v546 = vld [vmem:[%s255 + $0x878] sm:$0xff]
      %v547 = vld [vmem:[%s255 + $0x880] sm:$0xff]
      %v548 = vld [vmem:[%s255 + $0x888] sm:$0xff]
      %v549 = vld [vmem:[%s255 + $0x890] sm:$0xff]
      %v550 = vld [vmem:[%s255 + $0x898] sm:$0xff]
      %v551 = vld [vmem:[%s255 + $0x8a0] sm:$0xff]
      %v552 = vld [vmem:[%s255 + $0x8a8] sm:$0xff]
      %v553 = vld [vmem:[%s255 + $0x8b0] sm:$0xff]
      %v554 = vld [vmem:[%s255 + $0x8b8] sm:$0xff]
      %v555 = vld [vmem:[%s255 + $0x8c0] sm:$0xff]
      %v556 = vld [vmem:[%s255 + $0x8c8] sm:$0xff]
      %v557 = vld [vmem:[%s255 + $0x8d0] sm:$0xff]
      %v558 = vld [vmem:[%s255 + $0x8d8] sm:$0xff]
      %v559 = vld [vmem:[%s255 + $0x8e0] sm:$0xff]
      %v560 = vld [vmem:[%s255 + $0x8e8] sm:$0xff]
      %v561 = vld [vmem:[%s255 + $0x8f0] sm:$0xff]
      %v562 = vld [vmem:[%s255 + $0x8f8] sm:$0xff]
      %v563 = vld [vmem:[%s255 + $0x900] sm:$0xff]
      %v564 = vld [vmem:[%s255 + $0x908] sm:$0xff]
      %v565 = vld [vmem:[%s255 + $0x910] sm:$0xff]
      %v566 = vld [vmem:[%s255 + $0x918] sm:$0xff]
      %v567 = vld [vmem:[%s255 + $0x920] sm:$0xff]
      %v568 = vld [vmem:[%s255 + $0x928] sm:$0xff]
      %v569 = vld [vmem:[%s1] sm:$0xff]
      %v570 = vld [vmem:[%s1 + $0x8] sm:$0xff]
      %v571 = vld [vmem:[%s1 + $0x10] sm:$0xff]
      %v572 = vld [vmem:[%s1 + $0x18] sm:$0xff]
      %v573 = vld [vmem:[%s1 + $0x20] sm:$0xff]
      %v574 = vld [vmem:[%s1 + $0x28] sm:$0xff]
      %v575 = vld [vmem:[%s1 + $0x30] sm:$0xff]
      %v576 = vld [vmem:[%s1 + $0x38] sm:$0xff]
      %v577 = vld [vmem:[%s1 + $0x40] sm:$0xff]
      %v578 = vld [vmem:[%s1 + $0x48] sm:$0xff]
      %v579 = vld [vmem:[%s1 + $0x50] sm:$0xff]
      %v580 = vld [vmem:[%s1 + $0x58] sm:$0xff]
      %v581 = vld [vmem:[%s1 + $0x60] sm:$0xff]
      %v582 = vld [vmem:[%s1 + $0x68] sm:$0xff]
      %v583 = vld [vmem:[%s1 + $0x70] sm:$0xff]
      %v584 = vld [vmem:[%s1 + $0x78] sm:$0xff]
      %v585 = vld [vmem:[%s1 + $0x80] sm:$0xff]
      %v586 = vld [vmem:[%s1 + $0x88] sm:$0xff]
      %v587 = vld [vmem:[%s1 + $0x90] sm:$0xff]
      %v588 = vld [vmem:[%s1 + $0x98] sm:$0xff]
      %v589 = vld [vmem:[%s1 + $0xa0] sm:$0xff]
      %v590 = vld [vmem:[%s1 + $0xa8] sm:$0xff]
      %v591 = vld [vmem:[%s1 + $0xb0] sm:$0xff]
      %v592 = vld [vmem:[%s1 + $0xb8] sm:$0xff]
      %v593 = vld [vmem:[%s1 + $0xc0] sm:$0xff]
      %v594 = vld [vmem:[%s1 + $0xc8] sm:$0xff]
      %v595 = vld [vmem:[%s1 + $0xd0] sm:$0xff]
      %v596 = vld [vmem:[%s1 + $0xd8] sm:$0xff]
      %v597 = vld [vmem:[%s1 + $0xe0] sm:$0xff]
      %v598 = vld [vmem:[%s1 + $0xe8] sm:$0xff]
      %v599 = vld [vmem:[%s1 + $0xf0] sm:$0xff]
      %v600 = vld [vmem:[%s1 + $0xf8] sm:$0xff]
      %v601 = vld [vmem:[%s1 + $0x100] sm:$0xff]
      %v602 = vld [vmem:[%s1 + $0x108] sm:$0xff]
      %v603 = vld [vmem:[%s1 + $0x110] sm:$0xff]
      %v604 = vld [vmem:[%s1 + $0x118] sm:$0xff]
      %v605 = vld [vmem:[%s2] sm:$0x1]
      %v607 = vperm.slane %v605, 0
      %vm609 = vcmask 261120
      %v611 = vsel %vm609, %v277, 0
      %v614 = vsel %vm609, %v280, 0
      %v617 = vsel %vm609, %v283, 0
      %v620 = vsel %vm609, %v286, 0
      %v623 = vsel %vm609, %v289, 0
      %v626 = vsel %vm609, %v292, 0
      %v629 = vsel %vm609, %v295, 0
      %v632 = vsel %vm609, %v298, 0
      %v635 = vsel %vm609, %v301, 0
      %v638 = vsel %vm609, %v304, 0
      %v641 = vsel %vm609, %v307, 0
      %v644 = vsel %vm609, %v310, 0
      %v647 = vsel %vm609, %v313, 0
      %v650 = vsel %vm609, %v316, 0
      %v653 = vsel %vm609, %v319, 0
      %v656 = vsel %vm609, %v322, 0
      %v659 = vsel %vm609, %v325, 0
      %v662 = vsel %vm609, %v328, 0
      %v665 = vsel %vm609, %v331, 0
      %v668 = vsel %vm609, %v334, 0
      %v671 = vsel %vm609, %v337, 0
      %v674 = vsel %vm609, %v340, 0
      %v677 = vsel %vm609, %v343, 0
      %v680 = vsel %vm609, %v346, 0
      %v683 = vsel %vm609, %v349, 0
      %v686 = vsel %vm609, %v352, 0
      %v689 = vsel %vm609, %v355, 0
      %v692 = vsel %vm609, %v358, 0
      %v695 = vsel %vm609, %v361, 0
      %v698 = vsel %vm609, %v364, 0
      %v701 = vsel %vm609, %v367, 0
      %v704 = vsel %vm609, %v370, 0
      %v707 = vsel %vm609, %v373, 0
      %v710 = vsel %vm609, %v376, 0
      %v713 = vsel %vm609, %v379, 0
      %v716 = vsel %vm609, %v382, 0
      %v719 = vsel %vm609, %v385, 0
      %v722 = vsel %vm609, %v388, 0
      %v725 = vsel %vm609, %v391, 0
      %v728 = vsel %vm609, %v394, 0
      %v731 = vsel %vm609, %v397, 0
      %v734 = vsel %vm609, %v400, 0
      %v737 = vsel %vm609, %v403, 0
      %v740 = vsel %vm609, %v406, 0
      %v743 = vsel %vm609, %v409, 0
      %v746 = vsel %vm609, %v412, 0
      %v749 = vsel %vm609, %v415, 0
      %v752 = vsel %vm609, %v418, 0
      %v755 = vsel %vm609, %v421, 0
      %v758 = vsel %vm609, %v424, 0
      %v761 = vsel %vm609, %v427, 0
      %v764 = vsel %vm609, %v430, 0
      %v767 = vsel %vm609, %v433, 0
      %v770 = vsel %vm609, %v436, 0
      %v773 = vsel %vm609, %v439, 0
      %v776 = vsel %vm609, %v442, 0
      %v779 = vsel %vm609, %v445, 0
      %v782 = vsel %vm609, %v448, 0
      %v785 = vsel %vm609, %v451, 0
      %v788 = vsel %vm609, %v454, 0
      %v791 = vsel %vm609, %v457, 0
      %v794 = vsel %vm609, %v460, 0
      %v797 = vsel %vm609, %v463, 0
      %v800 = vsel %vm609, %v466, 0
      %v803 = vsel %vm609, %v469, 0
      %v806 = vsel %vm609, %v472, 0
      %v809 = vsel %vm609, %v475, 0
      %v812 = vsel %vm609, %v478, 0
      %v815 = vsel %vm609, %v481, 0
      %v818 = vsel %vm609, %v484, 0
      %v821 = vsel %vm609, %v487, 0
      %v824 = vsel %vm609, %v490, 0
      %v827 = vsel %vm609, %v493, 0
      %v830 = vsel %vm609, %v496, 0
      %v833 = vsel %vm609, %v499, 0
      %v836 = vsel %vm609, %v502, 0
      %v839 = vsel %vm609, %v505, 0
      %v842 = vsel %vm609, %v508, 0
      %v845 = vsel %vm609, %v511, 0
      %v848 = vsel %vm609, %v514, 0
      %v851 = vsel %vm609, %v517, 0
      %v854 = vsel %vm609, %v520, 0
      %v857 = vsel %vm609, %v523, 0
      %v860 = vsel %vm609, %v526, 0
      %v863 = vsel %vm609, %v529, 0
      %v866 = vsel %vm609, %v532, 0
      %v869 = vsel %vm609, %v535, 0
      %v872 = vsel %vm609, %v538, 0
      %v875 = vsel %vm609, %v541, 0
      %v878 = vsel %vm609, %v544, 0
      %v881 = vsel %vm609, %v547, 0
      %v884 = vsel %vm609, %v550, 0
      %v887 = vsel %vm609, %v553, 0
      %v890 = vsel %vm609, %v556, 0
      %v893 = vsel %vm609, %v559, 0
      %v896 = vsel %vm609, %v562, 0
      %v899 = vsel %vm609, %v565, 0
      %v902 = vsel %vm609, %v568, 0
      %904 = vmatpush.msra.mxu0 %v584
      %905 = vmatpush.msra.mxu0 %v583
      %906 = vmatpush.msra.mxu0 %v582
      %907 = vmatpush.msra.mxu0 %v581
      %908 = vmatpush.msra.mxu0 %v580
      %909 = vmatpush.msra.mxu0 %v579
      %910 = vmatpush.msra.mxu0 %v578
      %911 = vmatpush.msra.mxu0 %v577
      %912 = vmatpush.msra.mxu0 %v576
      %913 = vmatpush.msra.mxu0 %v575
      %914 = vmatpush.msra.mxu0 %v574
      %915 = vmatpush.msra.mxu0 %v573
      %916 = vmatpush.msra.mxu0 %v572
      %917 = vmatpush.msra.mxu0 %v571
      %918 = vmatpush.msra.mxu0 %v570
      %919 = vmatpush.msra.mxu0 %v569
      %920 = vmatmul.f32.gmra.mxu0 %v275
      %v921 = vpop.f32.mrf.mxu0
      %v922 = vadd.f32 %v607, %v921
      %923 = vmatmul.f32.gmra.mxu0 %v278
      %v924 = vpop.f32.mrf.mxu0
      %v925 = vadd.f32 %v607, %v924
      %926 = vmatmul.f32.gmra.mxu0 %v281
      %v927 = vpop.f32.mrf.mxu0
      %v928 = vadd.f32 %v607, %v927
      %929 = vmatmul.f32.gmra.mxu0 %v284
      %v930 = vpop.f32.mrf.mxu0
      %v931 = vadd.f32 %v607, %v930
      %932 = vmatmul.f32.gmra.mxu0 %v287
      %v933 = vpop.f32.mrf.mxu0
      %v934 = vadd.f32 %v607, %v933
      %935 = vmatmul.f32.gmra.mxu0 %v290
      %v936 = vpop.f32.mrf.mxu0
      %v937 = vadd.f32 %v607, %v936
      %938 = vmatmul.f32.gmra.mxu0 %v293
      %v939 = vpop.f32.mrf.mxu0
      %v940 = vadd.f32 %v607, %v939
      %941 = vmatmul.f32.gmra.mxu0 %v296
      %v942 = vpop.f32.mrf.mxu0
      %v943 = vadd.f32 %v607, %v942
      %944 = vmatmul.f32.gmra.mxu0 %v299
      %v945 = vpop.f32.mrf.mxu0
      %v946 = vadd.f32 %v607, %v945
      %947 = vmatmul.f32.gmra.mxu0 %v302
      %v948 = vpop.f32.mrf.mxu0
      %v949 = vadd.f32 %v607, %v948
      %950 = vmatmul.f32.gmra.mxu0 %v305
      %v951 = vpop.f32.mrf.mxu0
      %v952 = vadd.f32 %v607, %v951
      %953 = vmatmul.f32.gmra.mxu0 %v308
      %v954 = vpop.f32.mrf.mxu0
      %v955 = vadd.f32 %v607, %v954
      %956 = vmatmul.f32.gmra.mxu0 %v311
      %v957 = vpop.f32.mrf.mxu0
      %v958 = vadd.f32 %v607, %v957
      %959 = vmatmul.f32.gmra.mxu0 %v314
      %v960 = vpop.f32.mrf.mxu0
      %v961 = vadd.f32 %v607, %v960
      %962 = vmatmul.f32.gmra.mxu0 %v317
      %v963 = vpop.f32.mrf.mxu0
      %v964 = vadd.f32 %v607, %v963
      %965 = vmatmul.f32.gmra.mxu0 %v320
      %v966 = vpop.f32.mrf.mxu0
      %v967 = vadd.f32 %v607, %v966
      %968 = vmatmul.f32.gmra.mxu0 %v323
      %v969 = vpop.f32.mrf.mxu0
      %v970 = vadd.f32 %v607, %v969
      %971 = vmatmul.f32.gmra.mxu0 %v326
      %v972 = vpop.f32.mrf.mxu0
      %v973 = vadd.f32 %v607, %v972
      %974 = vmatmul.f32.gmra.mxu0 %v329
      %v975 = vpop.f32.mrf.mxu0
      %v976 = vadd.f32 %v607, %v975
      %977 = vmatmul.f32.gmra.mxu0 %v332
      %v978 = vpop.f32.mrf.mxu0
      %v979 = vadd.f32 %v607, %v978
      %980 = vmatmul.f32.gmra.mxu0 %v335
      %v981 = vpop.f32.mrf.mxu0
      %v982 = vadd.f32 %v607, %v981
      %983 = vmatmul.f32.gmra.mxu0 %v338
      %v984 = vpop.f32.mrf.mxu0
      %v985 = vadd.f32 %v607, %v984
      %986 = vmatmul.f32.gmra.mxu0 %v341
      %v987 = vpop.f32.mrf.mxu0
      %v988 = vadd.f32 %v607, %v987
      %989 = vmatmul.f32.gmra.mxu0 %v344
      %v990 = vpop.f32.mrf.mxu0
      %v991 = vadd.f32 %v607, %v990
      %992 = vmatmul.f32.gmra.mxu0 %v347
      %v993 = vpop.f32.mrf.mxu0
      %v994 = vadd.f32 %v607, %v993
      %995 = vmatmul.f32.gmra.mxu0 %v350
      %v996 = vpop.f32.mrf.mxu0
      %v997 = vadd.f32 %v607, %v996
      %998 = vmatmul.f32.gmra.mxu0 %v353
      %v999 = vpop.f32.mrf.mxu0
      %v1000 = vadd.f32 %v607, %v999
      %1001 = vmatmul.f32.gmra.mxu0 %v356
      %v1002 = vpop.f32.mrf.mxu0
      %v1003 = vadd.f32 %v607, %v1002
      %1004 = vmatmul.f32.gmra.mxu0 %v359
      %v1005 = vpop.f32.mrf.mxu0
      %v1006 = vadd.f32 %v607, %v1005
      %1007 = vmatmul.f32.gmra.mxu0 %v362
      %v1008 = vpop.f32.mrf.mxu0
      %v1009 = vadd.f32 %v607, %v1008
      %1010 = vmatmul.f32.gmra.mxu0 %v365
      %v1011 = vpop.f32.mrf.mxu0
      %v1012 = vadd.f32 %v607, %v1011
      %1013 = vmatmul.f32.gmra.mxu0 %v368
      %v1014 = vpop.f32.mrf.mxu0
      %v1015 = vadd.f32 %v607, %v1014
      %1016 = vmatmul.f32.gmra.mxu0 %v371
      %v1017 = vpop.f32.mrf.mxu0
      %v1018 = vadd.f32 %v607, %v1017
      %1019 = vmatmul.f32.gmra.mxu0 %v374
      %v1020 = vpop.f32.mrf.mxu0
      %v1021 = vadd.f32 %v607, %v1020
      %1022 = vmatmul.f32.gmra.mxu0 %v377
      %v1023 = vpop.f32.mrf.mxu0
      %v1024 = vadd.f32 %v607, %v1023
      %1025 = vmatmul.f32.gmra.mxu0 %v380
      %v1026 = vpop.f32.mrf.mxu0
      %v1027 = vadd.f32 %v607, %v1026
      %1028 = vmatmul.f32.gmra.mxu0 %v383
      %v1029 = vpop.f32.mrf.mxu0
      %v1030 = vadd.f32 %v607, %v1029
      %1031 = vmatmul.f32.gmra.mxu0 %v386
      %v1032 = vpop.f32.mrf.mxu0
      %v1033 = vadd.f32 %v607, %v1032
      %1034 = vmatmul.f32.gmra.mxu0 %v389
      %v1035 = vpop.f32.mrf.mxu0
      %v1036 = vadd.f32 %v607, %v1035
      %1037 = vmatmul.f32.gmra.mxu0 %v392
      %v1038 = vpop.f32.mrf.mxu0
      %v1039 = vadd.f32 %v607, %v1038
      %1040 = vmatmul.f32.gmra.mxu0 %v395
      %v1041 = vpop.f32.mrf.mxu0
      %v1042 = vadd.f32 %v607, %v1041
      %1043 = vmatmul.f32.gmra.mxu0 %v398
      %v1044 = vpop.f32.mrf.mxu0
      %v1045 = vadd.f32 %v607, %v1044
      %1046 = vmatmul.f32.gmra.mxu0 %v401
      %v1047 = vpop.f32.mrf.mxu0
      %v1048 = vadd.f32 %v607, %v1047
      %1049 = vmatmul.f32.gmra.mxu0 %v404
      %v1050 = vpop.f32.mrf.mxu0
      %v1051 = vadd.f32 %v607, %v1050
      %1052 = vmatmul.f32.gmra.mxu0 %v407
      %v1053 = vpop.f32.mrf.mxu0
      %v1054 = vadd.f32 %v607, %v1053
      %1055 = vmatmul.f32.gmra.mxu0 %v410
      %v1056 = vpop.f32.mrf.mxu0
      %v1057 = vadd.f32 %v607, %v1056
      %1058 = vmatmul.f32.gmra.mxu0 %v413
      %v1059 = vpop.f32.mrf.mxu0
      %v1060 = vadd.f32 %v607, %v1059
      %1061 = vmatmul.f32.gmra.mxu0 %v416
      %v1062 = vpop.f32.mrf.mxu0
      %v1063 = vadd.f32 %v607, %v1062
      %1064 = vmatmul.f32.gmra.mxu0 %v419
      %v1065 = vpop.f32.mrf.mxu0
      %v1066 = vadd.f32 %v607, %v1065
      %1067 = vmatmul.f32.gmra.mxu0 %v422
      %v1068 = vpop.f32.mrf.mxu0
      %v1069 = vadd.f32 %v607, %v1068
      %1070 = vmatmul.f32.gmra.mxu0 %v425
      %v1071 = vpop.f32.mrf.mxu0
      %v1072 = vadd.f32 %v607, %v1071
      %1073 = vmatmul.f32.gmra.mxu0 %v428
      %v1074 = vpop.f32.mrf.mxu0
      %v1075 = vadd.f32 %v607, %v1074
      %1076 = vmatmul.f32.gmra.mxu0 %v431
      %v1077 = vpop.f32.mrf.mxu0
      %v1078 = vadd.f32 %v607, %v1077
      %1079 = vmatmul.f32.gmra.mxu0 %v434
      %v1080 = vpop.f32.mrf.mxu0
      %v1081 = vadd.f32 %v607, %v1080
      %1082 = vmatmul.f32.gmra.mxu0 %v437
      %v1083 = vpop.f32.mrf.mxu0
      %v1084 = vadd.f32 %v607, %v1083
      %1085 = vmatmul.f32.gmra.mxu0 %v440
      %v1086 = vpop.f32.mrf.mxu0
      %v1087 = vadd.f32 %v607, %v1086
      %1088 = vmatmul.f32.gmra.mxu0 %v443
      %v1089 = vpop.f32.mrf.mxu0
      %v1090 = vadd.f32 %v607, %v1089
      %1091 = vmatmul.f32.gmra.mxu0 %v446
      %v1092 = vpop.f32.mrf.mxu0
      %v1093 = vadd.f32 %v607, %v1092
      %1094 = vmatmul.f32.gmra.mxu0 %v449
      %v1095 = vpop.f32.mrf.mxu0
      %v1096 = vadd.f32 %v607, %v1095
      %1097 = vmatmul.f32.gmra.mxu0 %v452
      %v1098 = vpop.f32.mrf.mxu0
      %v1099 = vadd.f32 %v607, %v1098
      %1100 = vmatmul.f32.gmra.mxu0 %v455
      %v1101 = vpop.f32.mrf.mxu0
      %v1102 = vadd.f32 %v607, %v1101
      %1103 = vmatmul.f32.gmra.mxu0 %v458
      %v1104 = vpop.f32.mrf.mxu0
      %v1105 = vadd.f32 %v607, %v1104
      %1106 = vmatmul.f32.gmra.mxu0 %v461
      %v1107 = vpop.f32.mrf.mxu0
      %v1108 = vadd.f32 %v607, %v1107
      %1109 = vmatmul.f32.gmra.mxu0 %v464
      %v1110 = vpop.f32.mrf.mxu0
      %v1111 = vadd.f32 %v607, %v1110
      %1112 = vmatmul.f32.gmra.mxu0 %v467
      %v1113 = vpop.f32.mrf.mxu0
      %v1114 = vadd.f32 %v607, %v1113
      %1115 = vmatmul.f32.gmra.mxu0 %v470
      %v1116 = vpop.f32.mrf.mxu0
      %v1117 = vadd.f32 %v607, %v1116
      %1118 = vmatmul.f32.gmra.mxu0 %v473
      %v1119 = vpop.f32.mrf.mxu0
      %v1120 = vadd.f32 %v607, %v1119
      %1121 = vmatmul.f32.gmra.mxu0 %v476
      %v1122 = vpop.f32.mrf.mxu0
      %v1123 = vadd.f32 %v607, %v1122
      %1124 = vmatmul.f32.gmra.mxu0 %v479
      %v1125 = vpop.f32.mrf.mxu0
      %v1126 = vadd.f32 %v607, %v1125
      %1127 = vmatmul.f32.gmra.mxu0 %v482
      %v1128 = vpop.f32.mrf.mxu0
      %v1129 = vadd.f32 %v607, %v1128
      %1130 = vmatmul.f32.gmra.mxu0 %v485
      %v1131 = vpop.f32.mrf.mxu0
      %v1132 = vadd.f32 %v607, %v1131
      %1133 = vmatmul.f32.gmra.mxu0 %v488
      %v1134 = vpop.f32.mrf.mxu0
      %v1135 = vadd.f32 %v607, %v1134
      %1136 = vmatmul.f32.gmra.mxu0 %v491
      %v1137 = vpop.f32.mrf.mxu0
      %v1138 = vadd.f32 %v607, %v1137
      %1139 = vmatmul.f32.gmra.mxu0 %v494
      %v1140 = vpop.f32.mrf.mxu0
      %v1141 = vadd.f32 %v607, %v1140
      %1142 = vmatmul.f32.gmra.mxu0 %v497
      %v1143 = vpop.f32.mrf.mxu0
      %v1144 = vadd.f32 %v607, %v1143
      %1145 = vmatmul.f32.gmra.mxu0 %v500
      %v1146 = vpop.f32.mrf.mxu0
      %v1147 = vadd.f32 %v607, %v1146
      %1148 = vmatmul.f32.gmra.mxu0 %v503
      %v1149 = vpop.f32.mrf.mxu0
      %v1150 = vadd.f32 %v607, %v1149
      %1151 = vmatmul.f32.gmra.mxu0 %v506
      %v1152 = vpop.f32.mrf.mxu0
      %v1153 = vadd.f32 %v607, %v1152
      %1154 = vmatmul.f32.gmra.mxu0 %v509
      %v1155 = vpop.f32.mrf.mxu0
      %v1156 = vadd.f32 %v607, %v1155
      %1157 = vmatmul.f32.gmra.mxu0 %v512
      %v1158 = vpop.f32.mrf.mxu0
      %v1159 = vadd.f32 %v607, %v1158
      %1160 = vmatmul.f32.gmra.mxu0 %v515
      %v1161 = vpop.f32.mrf.mxu0
      %v1162 = vadd.f32 %v607, %v1161
      %1163 = vmatmul.f32.gmra.mxu0 %v518
      %v1164 = vpop.f32.mrf.mxu0
      %v1165 = vadd.f32 %v607, %v1164
      %1166 = vmatmul.f32.gmra.mxu0 %v521
      %v1167 = vpop.f32.mrf.mxu0
      %v1168 = vadd.f32 %v607, %v1167
      %1169 = vmatmul.f32.gmra.mxu0 %v524
      %v1170 = vpop.f32.mrf.mxu0
      %v1171 = vadd.f32 %v607, %v1170
      %1172 = vmatmul.f32.gmra.mxu0 %v527
      %v1173 = vpop.f32.mrf.mxu0
      %v1174 = vadd.f32 %v607, %v1173
      %1175 = vmatmul.f32.gmra.mxu0 %v530
      %v1176 = vpop.f32.mrf.mxu0
      %v1177 = vadd.f32 %v607, %v1176
      %1178 = vmatmul.f32.gmra.mxu0 %v533
      %v1179 = vpop.f32.mrf.mxu0
      %v1180 = vadd.f32 %v607, %v1179
      %1181 = vmatmul.f32.gmra.mxu0 %v536
      %v1182 = vpop.f32.mrf.mxu0
      %v1183 = vadd.f32 %v607, %v1182
      %1184 = vmatmul.f32.gmra.mxu0 %v539
      %v1185 = vpop.f32.mrf.mxu0
      %v1186 = vadd.f32 %v607, %v1185
      %1187 = vmatmul.f32.gmra.mxu0 %v542
      %v1188 = vpop.f32.mrf.mxu0
      %v1189 = vadd.f32 %v607, %v1188
      %1190 = vmatmul.f32.gmra.mxu0 %v545
      %v1191 = vpop.f32.mrf.mxu0
      %v1192 = vadd.f32 %v607, %v1191
      %1193 = vmatmul.f32.gmra.mxu0 %v548
      %v1194 = vpop.f32.mrf.mxu0
      %v1195 = vadd.f32 %v607, %v1194
      %1196 = vmatmul.f32.gmra.mxu0 %v551
      %v1197 = vpop.f32.mrf.mxu0
      %v1198 = vadd.f32 %v607, %v1197
      %1199 = vmatmul.f32.gmra.mxu0 %v554
      %v1200 = vpop.f32.mrf.mxu0
      %v1201 = vadd.f32 %v607, %v1200
      %1202 = vmatmul.f32.gmra.mxu0 %v557
      %v1203 = vpop.f32.mrf.mxu0
      %v1204 = vadd.f32 %v607, %v1203
      %1205 = vmatmul.f32.gmra.mxu0 %v560
      %v1206 = vpop.f32.mrf.mxu0
      %v1207 = vadd.f32 %v607, %v1206
      %1208 = vmatmul.f32.gmra.mxu0 %v563
      %v1209 = vpop.f32.mrf.mxu0
      %v1210 = vadd.f32 %v607, %v1209
      %1211 = vmatmul.f32.gmra.mxu0 %v566
      %v1212 = vpop.f32.mrf.mxu0
      %v1213 = vadd.f32 %v607, %v1212
      %1214 = vdwg.mxu0
      %1215 = vmatpush.msra.mxu0 %v600
      %1216 = vmatpush.msra.mxu0 %v599
      %1217 = vmatpush.msra.mxu0 %v598
      %1218 = vmatpush.msra.mxu0 %v597
      %1219 = vmatpush.msra.mxu0 %v596
      %1220 = vmatpush.msra.mxu0 %v595
      %1221 = vmatpush.msra.mxu0 %v594
      %1222 = vmatpush.msra.mxu0 %v593
      %1223 = vmatpush.msra.mxu0 %v592
      %1224 = vmatpush.msra.mxu0 %v591
      %1225 = vmatpush.msra.mxu0 %v590
      %1226 = vmatpush.msra.mxu0 %v589
      %1227 = vmatpush.msra.mxu0 %v588
      %1228 = vmatpush.msra.mxu0 %v587
      %1229 = vmatpush.msra.mxu0 %v586
      %1230 = vmatpush.msra.mxu0 %v585
      %1231 = vmatmul.f32.gmra.mxu0 %v276
      %v1232 = vpop.f32.mrf.mxu0
      %v1233 = vadd.f32 %v922, %v1232
      %1234 = vmatmul.f32.gmra.mxu0 %v279
      %v1235 = vpop.f32.mrf.mxu0
      %v1236 = vadd.f32 %v925, %v1235
      %1237 = vmatmul.f32.gmra.mxu0 %v282
      %v1238 = vpop.f32.mrf.mxu0
      %v1239 = vadd.f32 %v928, %v1238
      %1240 = vmatmul.f32.gmra.mxu0 %v285
      %v1241 = vpop.f32.mrf.mxu0
      %v1242 = vadd.f32 %v931, %v1241
      %1243 = vmatmul.f32.gmra.mxu0 %v288
      %v1244 = vpop.f32.mrf.mxu0
      %v1245 = vadd.f32 %v934, %v1244
      %1246 = vmatmul.f32.gmra.mxu0 %v291
      %v1247 = vpop.f32.mrf.mxu0
      %v1248 = vadd.f32 %v937, %v1247
      %1249 = vmatmul.f32.gmra.mxu0 %v294
      %v1250 = vpop.f32.mrf.mxu0
      %v1251 = vadd.f32 %v940, %v1250
      %1252 = vmatmul.f32.gmra.mxu0 %v297
      %v1253 = vpop.f32.mrf.mxu0
      %v1254 = vadd.f32 %v943, %v1253
      %1255 = vmatmul.f32.gmra.mxu0 %v300
      %v1256 = vpop.f32.mrf.mxu0
      %v1257 = vadd.f32 %v946, %v1256
      %1258 = vmatmul.f32.gmra.mxu0 %v303
      %v1259 = vpop.f32.mrf.mxu0
      %v1260 = vadd.f32 %v949, %v1259
      %1261 = vmatmul.f32.gmra.mxu0 %v306
      %v1262 = vpop.f32.mrf.mxu0
      %v1263 = vadd.f32 %v952, %v1262
      %1264 = vmatmul.f32.gmra.mxu0 %v309
      %v1265 = vpop.f32.mrf.mxu0
      %v1266 = vadd.f32 %v955, %v1265
      %1267 = vmatmul.f32.gmra.mxu0 %v312
      %v1268 = vpop.f32.mrf.mxu0
      %v1269 = vadd.f32 %v958, %v1268
      %1270 = vmatmul.f32.gmra.mxu0 %v315
      %v1271 = vpop.f32.mrf.mxu0
      %v1272 = vadd.f32 %v961, %v1271
      %1273 = vmatmul.f32.gmra.mxu0 %v318
      %v1274 = vpop.f32.mrf.mxu0
      %v1275 = vadd.f32 %v964, %v1274
      %1276 = vmatmul.f32.gmra.mxu0 %v321
      %v1277 = vpop.f32.mrf.mxu0
      %v1278 = vadd.f32 %v967, %v1277
      %1279 = vmatmul.f32.gmra.mxu0 %v324
      %v1280 = vpop.f32.mrf.mxu0
      %v1281 = vadd.f32 %v970, %v1280
      %1282 = vmatmul.f32.gmra.mxu0 %v327
      %v1283 = vpop.f32.mrf.mxu0
      %v1284 = vadd.f32 %v973, %v1283
      %1285 = vmatmul.f32.gmra.mxu0 %v330
      %v1286 = vpop.f32.mrf.mxu0
      %v1287 = vadd.f32 %v976, %v1286
      %1288 = vmatmul.f32.gmra.mxu0 %v333
      %v1289 = vpop.f32.mrf.mxu0
      %v1290 = vadd.f32 %v979, %v1289
      %1291 = vmatmul.f32.gmra.mxu0 %v336
      %v1292 = vpop.f32.mrf.mxu0
      %v1293 = vadd.f32 %v982, %v1292
      %1294 = vmatmul.f32.gmra.mxu0 %v339
      %v1295 = vpop.f32.mrf.mxu0
      %v1296 = vadd.f32 %v985, %v1295
      %1297 = vmatmul.f32.gmra.mxu0 %v342
      %v1298 = vpop.f32.mrf.mxu0
      %v1299 = vadd.f32 %v988, %v1298
      %1300 = vmatmul.f32.gmra.mxu0 %v345
      %v1301 = vpop.f32.mrf.mxu0
      %v1302 = vadd.f32 %v991, %v1301
      %1303 = vmatmul.f32.gmra.mxu0 %v348
      %v1304 = vpop.f32.mrf.mxu0
      %v1305 = vadd.f32 %v994, %v1304
      %1306 = vmatmul.f32.gmra.mxu0 %v351
      %v1307 = vpop.f32.mrf.mxu0
      %v1308 = vadd.f32 %v997, %v1307
      %1309 = vmatmul.f32.gmra.mxu0 %v354
      %v1310 = vpop.f32.mrf.mxu0
      %v1311 = vadd.f32 %v1000, %v1310
      %1312 = vmatmul.f32.gmra.mxu0 %v357
      %v1313 = vpop.f32.mrf.mxu0
      %v1314 = vadd.f32 %v1003, %v1313
      %1315 = vmatmul.f32.gmra.mxu0 %v360
      %v1316 = vpop.f32.mrf.mxu0
      %v1317 = vadd.f32 %v1006, %v1316
      %1318 = vmatmul.f32.gmra.mxu0 %v363
      %v1319 = vpop.f32.mrf.mxu0
      %v1320 = vadd.f32 %v1009, %v1319
      %1321 = vmatmul.f32.gmra.mxu0 %v366
      %v1322 = vpop.f32.mrf.mxu0
      %v1323 = vadd.f32 %v1012, %v1322
      %1324 = vmatmul.f32.gmra.mxu0 %v369
      %v1325 = vpop.f32.mrf.mxu0
      %v1326 = vadd.f32 %v1015, %v1325
      %1327 = vmatmul.f32.gmra.mxu0 %v372
      %v1328 = vpop.f32.mrf.mxu0
      %v1329 = vadd.f32 %v1018, %v1328
      %1330 = vmatmul.f32.gmra.mxu0 %v375
      %v1331 = vpop.f32.mrf.mxu0
      %v1332 = vadd.f32 %v1021, %v1331
      %1333 = vmatmul.f32.gmra.mxu0 %v378
      %v1334 = vpop.f32.mrf.mxu0
      %v1335 = vadd.f32 %v1024, %v1334
      %1336 = vmatmul.f32.gmra.mxu0 %v381
      %v1337 = vpop.f32.mrf.mxu0
      %v1338 = vadd.f32 %v1027, %v1337
      %1339 = vmatmul.f32.gmra.mxu0 %v384
      %v1340 = vpop.f32.mrf.mxu0
      %v1341 = vadd.f32 %v1030, %v1340
      %1342 = vmatmul.f32.gmra.mxu0 %v387
      %v1343 = vpop.f32.mrf.mxu0
      %v1344 = vadd.f32 %v1033, %v1343
      %1345 = vmatmul.f32.gmra.mxu0 %v390
      %v1346 = vpop.f32.mrf.mxu0
      %v1347 = vadd.f32 %v1036, %v1346
      %1348 = vmatmul.f32.gmra.mxu0 %v393
      %v1349 = vpop.f32.mrf.mxu0
      %v1350 = vadd.f32 %v1039, %v1349
      %1351 = vmatmul.f32.gmra.mxu0 %v396
      %v1352 = vpop.f32.mrf.mxu0
      %v1353 = vadd.f32 %v1042, %v1352
      %1354 = vmatmul.f32.gmra.mxu0 %v399
      %v1355 = vpop.f32.mrf.mxu0
      %v1356 = vadd.f32 %v1045, %v1355
      %1357 = vmatmul.f32.gmra.mxu0 %v402
      %v1358 = vpop.f32.mrf.mxu0
      %v1359 = vadd.f32 %v1048, %v1358
      %1360 = vmatmul.f32.gmra.mxu0 %v405
      %v1361 = vpop.f32.mrf.mxu0
      %v1362 = vadd.f32 %v1051, %v1361
      %1363 = vmatmul.f32.gmra.mxu0 %v408
      %v1364 = vpop.f32.mrf.mxu0
      %v1365 = vadd.f32 %v1054, %v1364
      %1366 = vmatmul.f32.gmra.mxu0 %v411
      %v1367 = vpop.f32.mrf.mxu0
      %v1368 = vadd.f32 %v1057, %v1367
      %1369 = vmatmul.f32.gmra.mxu0 %v414
      %v1370 = vpop.f32.mrf.mxu0
      %v1371 = vadd.f32 %v1060, %v1370
      %1372 = vmatmul.f32.gmra.mxu0 %v417
      %v1373 = vpop.f32.mrf.mxu0
      %v1374 = vadd.f32 %v1063, %v1373
      %1375 = vmatmul.f32.gmra.mxu0 %v420
      %v1376 = vpop.f32.mrf.mxu0
      %v1377 = vadd.f32 %v1066, %v1376
      %1378 = vmatmul.f32.gmra.mxu0 %v423
      %v1379 = vpop.f32.mrf.mxu0
      %v1380 = vadd.f32 %v1069, %v1379
      %1381 = vmatmul.f32.gmra.mxu0 %v426
      %v1382 = vpop.f32.mrf.mxu0
      %v1383 = vadd.f32 %v1072, %v1382
      %1384 = vmatmul.f32.gmra.mxu0 %v429
      %v1385 = vpop.f32.mrf.mxu0
      %v1386 = vadd.f32 %v1075, %v1385
      %1387 = vmatmul.f32.gmra.mxu0 %v432
      %v1388 = vpop.f32.mrf.mxu0
      %v1389 = vadd.f32 %v1078, %v1388
      %1390 = vmatmul.f32.gmra.mxu0 %v435
      %v1391 = vpop.f32.mrf.mxu0
      %v1392 = vadd.f32 %v1081, %v1391
      %1393 = vmatmul.f32.gmra.mxu0 %v438
      %v1394 = vpop.f32.mrf.mxu0
      %v1395 = vadd.f32 %v1084, %v1394
      %1396 = vmatmul.f32.gmra.mxu0 %v441
      %v1397 = vpop.f32.mrf.mxu0
      %v1398 = vadd.f32 %v1087, %v1397
      %1399 = vmatmul.f32.gmra.mxu0 %v444
      %v1400 = vpop.f32.mrf.mxu0
      %v1401 = vadd.f32 %v1090, %v1400
      %1402 = vmatmul.f32.gmra.mxu0 %v447
      %v1403 = vpop.f32.mrf.mxu0
      %v1404 = vadd.f32 %v1093, %v1403
      %1405 = vmatmul.f32.gmra.mxu0 %v450
      %v1406 = vpop.f32.mrf.mxu0
      %v1407 = vadd.f32 %v1096, %v1406
      %1408 = vmatmul.f32.gmra.mxu0 %v453
      %v1409 = vpop.f32.mrf.mxu0
      %v1410 = vadd.f32 %v1099, %v1409
      %1411 = vmatmul.f32.gmra.mxu0 %v456
      %v1412 = vpop.f32.mrf.mxu0
      %v1413 = vadd.f32 %v1102, %v1412
      %1414 = vmatmul.f32.gmra.mxu0 %v459
      %v1415 = vpop.f32.mrf.mxu0
      %v1416 = vadd.f32 %v1105, %v1415
      %1417 = vmatmul.f32.gmra.mxu0 %v462
      %v1418 = vpop.f32.mrf.mxu0
      %v1419 = vadd.f32 %v1108, %v1418
      %1420 = vmatmul.f32.gmra.mxu0 %v465
      %v1421 = vpop.f32.mrf.mxu0
      %v1422 = vadd.f32 %v1111, %v1421
      %1423 = vmatmul.f32.gmra.mxu0 %v468
      %v1424 = vpop.f32.mrf.mxu0
      %v1425 = vadd.f32 %v1114, %v1424
      %1426 = vmatmul.f32.gmra.mxu0 %v471
      %v1427 = vpop.f32.mrf.mxu0
      %v1428 = vadd.f32 %v1117, %v1427
      %1429 = vmatmul.f32.gmra.mxu0 %v474
      %v1430 = vpop.f32.mrf.mxu0
      %v1431 = vadd.f32 %v1120, %v1430
      %1432 = vmatmul.f32.gmra.mxu0 %v477
      %v1433 = vpop.f32.mrf.mxu0
      %v1434 = vadd.f32 %v1123, %v1433
      %1435 = vmatmul.f32.gmra.mxu0 %v480
      %v1436 = vpop.f32.mrf.mxu0
      %v1437 = vadd.f32 %v1126, %v1436
      %1438 = vmatmul.f32.gmra.mxu0 %v483
      %v1439 = vpop.f32.mrf.mxu0
      %v1440 = vadd.f32 %v1129, %v1439
      %1441 = vmatmul.f32.gmra.mxu0 %v486
      %v1442 = vpop.f32.mrf.mxu0
      %v1443 = vadd.f32 %v1132, %v1442
      %1444 = vmatmul.f32.gmra.mxu0 %v489
      %v1445 = vpop.f32.mrf.mxu0
      %v1446 = vadd.f32 %v1135, %v1445
      %1447 = vmatmul.f32.gmra.mxu0 %v492
      %v1448 = vpop.f32.mrf.mxu0
      %v1449 = vadd.f32 %v1138, %v1448
      %1450 = vmatmul.f32.gmra.mxu0 %v495
      %v1451 = vpop.f32.mrf.mxu0
      %v1452 = vadd.f32 %v1141, %v1451
      %1453 = vmatmul.f32.gmra.mxu0 %v498
      %v1454 = vpop.f32.mrf.mxu0
      %v1455 = vadd.f32 %v1144, %v1454
      %1456 = vmatmul.f32.gmra.mxu0 %v501
      %v1457 = vpop.f32.mrf.mxu0
      %v1458 = vadd.f32 %v1147, %v1457
      %1459 = vmatmul.f32.gmra.mxu0 %v504
      %v1460 = vpop.f32.mrf.mxu0
      %v1461 = vadd.f32 %v1150, %v1460
      %1462 = vmatmul.f32.gmra.mxu0 %v507
      %v1463 = vpop.f32.mrf.mxu0
      %v1464 = vadd.f32 %v1153, %v1463
      %1465 = vmatmul.f32.gmra.mxu0 %v510
      %v1466 = vpop.f32.mrf.mxu0
      %v1467 = vadd.f32 %v1156, %v1466
      %1468 = vmatmul.f32.gmra.mxu0 %v513
      %v1469 = vpop.f32.mrf.mxu0
      %v1470 = vadd.f32 %v1159, %v1469
      %1471 = vmatmul.f32.gmra.mxu0 %v516
      %v1472 = vpop.f32.mrf.mxu0
      %v1473 = vadd.f32 %v1162, %v1472
      %1474 = vmatmul.f32.gmra.mxu0 %v519
      %v1475 = vpop.f32.mrf.mxu0
      %v1476 = vadd.f32 %v1165, %v1475
      %1477 = vmatmul.f32.gmra.mxu0 %v522
      %v1478 = vpop.f32.mrf.mxu0
      %v1479 = vadd.f32 %v1168, %v1478
      %1480 = vmatmul.f32.gmra.mxu0 %v525
      %v1481 = vpop.f32.mrf.mxu0
      %v1482 = vadd.f32 %v1171, %v1481
      %1483 = vmatmul.f32.gmra.mxu0 %v528
      %v1484 = vpop.f32.mrf.mxu0
      %v1485 = vadd.f32 %v1174, %v1484
      %1486 = vmatmul.f32.gmra.mxu0 %v531
      %v1487 = vpop.f32.mrf.mxu0
      %v1488 = vadd.f32 %v1177, %v1487
      %1489 = vmatmul.f32.gmra.mxu0 %v534
      %v1490 = vpop.f32.mrf.mxu0
      %v1491 = vadd.f32 %v1180, %v1490
      %1492 = vmatmul.f32.gmra.mxu0 %v537
      %v1493 = vpop.f32.mrf.mxu0
      %v1494 = vadd.f32 %v1183, %v1493
      %1495 = vmatmul.f32.gmra.mxu0 %v540
      %v1496 = vpop.f32.mrf.mxu0
      %v1497 = vadd.f32 %v1186, %v1496
      %1498 = vmatmul.f32.gmra.mxu0 %v543
      %v1499 = vpop.f32.mrf.mxu0
      %v1500 = vadd.f32 %v1189, %v1499
      %1501 = vmatmul.f32.gmra.mxu0 %v546
      %v1502 = vpop.f32.mrf.mxu0
      %v1503 = vadd.f32 %v1192, %v1502
      %1504 = vmatmul.f32.gmra.mxu0 %v549
      %v1505 = vpop.f32.mrf.mxu0
      %v1506 = vadd.f32 %v1195, %v1505
      %1507 = vmatmul.f32.gmra.mxu0 %v552
      %v1508 = vpop.f32.mrf.mxu0
      %v1509 = vadd.f32 %v1198, %v1508
      %1510 = vmatmul.f32.gmra.mxu0 %v555
      %v1511 = vpop.f32.mrf.mxu0
      %v1512 = vadd.f32 %v1201, %v1511
      %1513 = vmatmul.f32.gmra.mxu0 %v558
      %v1514 = vpop.f32.mrf.mxu0
      %v1515 = vadd.f32 %v1204, %v1514
      %1516 = vmatmul.f32.gmra.mxu0 %v561
      %v1517 = vpop.f32.mrf.mxu0
      %v1518 = vadd.f32 %v1207, %v1517
      %1519 = vmatmul.f32.gmra.mxu0 %v564
      %v1520 = vpop.f32.mrf.mxu0
      %v1521 = vadd.f32 %v1210, %v1520
      %1522 = vmatmul.f32.gmra.mxu0 %v567
      %v1523 = vpop.f32.mrf.mxu0
      %v1524 = vadd.f32 %v1213, %v1523
      %1525 = vdwg.mxu0
      %1526 = vmatpush.msra.mxu0 0.0
      %1527 = vmatpush.msra.mxu0 0.0
      %1528 = vmatpush.msra.mxu0 0.0
      %1529 = vmatpush.msra.mxu0 0.0
      %1530 = vmatpush.msra.mxu0 0.0
      %1531 = vmatpush.msra.mxu0 0.0
      %1532 = vmatpush.msra.mxu0 0.0
      %1533 = vmatpush.msra.mxu0 0.0
      %1534 = vmatpush.msra.mxu0 0.0
      %1535 = vmatpush.msra.mxu0 0.0
      %1536 = vmatpush.msra.mxu0 0.0
      %1537 = vmatpush.msra.mxu0 0.0
      %1538 = vmatpush.msra.mxu0 %v604
      %1539 = vmatpush.msra.mxu0 %v603
      %1540 = vmatpush.msra.mxu0 %v602
      %1541 = vmatpush.msra.mxu0 %v601
      %1542 = vmatmul.f32.gmra.mxu0 %v611
      %v1543 = vpop.f32.mrf.mxu0
      %v1544 = vadd.f32 %v1233, %v1543
      %1545 = vmatmul.f32.gmra.mxu0 %v614
      %v1546 = vpop.f32.mrf.mxu0
      %v1547 = vadd.f32 %v1236, %v1546
      %1548 = vmatmul.f32.gmra.mxu0 %v617
      %v1549 = vpop.f32.mrf.mxu0
      %v1550 = vadd.f32 %v1239, %v1549
      %1551 = vmatmul.f32.gmra.mxu0 %v620
      %v1552 = vpop.f32.mrf.mxu0
      %v1553 = vadd.f32 %v1242, %v1552
      %1554 = vmatmul.f32.gmra.mxu0 %v623
      %v1555 = vpop.f32.mrf.mxu0
      %v1556 = vadd.f32 %v1245, %v1555
      %1557 = vmatmul.f32.gmra.mxu0 %v626
      %v1558 = vpop.f32.mrf.mxu0
      %v1559 = vadd.f32 %v1248, %v1558
      %1560 = vmatmul.f32.gmra.mxu0 %v629
      %v1561 = vpop.f32.mrf.mxu0
      %v1562 = vadd.f32 %v1251, %v1561
      %1563 = vmatmul.f32.gmra.mxu0 %v632
      %v1564 = vpop.f32.mrf.mxu0
      %v1565 = vadd.f32 %v1254, %v1564
      %1566 = vmatmul.f32.gmra.mxu0 %v635
      %v1567 = vpop.f32.mrf.mxu0
      %v1568 = vadd.f32 %v1257, %v1567
      %1569 = vmatmul.f32.gmra.mxu0 %v638
      %v1570 = vpop.f32.mrf.mxu0
      %v1571 = vadd.f32 %v1260, %v1570
      %1572 = vmatmul.f32.gmra.mxu0 %v641
      %v1573 = vpop.f32.mrf.mxu0
      %v1574 = vadd.f32 %v1263, %v1573
      %1575 = vmatmul.f32.gmra.mxu0 %v644
      %v1576 = vpop.f32.mrf.mxu0
      %v1577 = vadd.f32 %v1266, %v1576
      %1578 = vmatmul.f32.gmra.mxu0 %v647
      %v1579 = vpop.f32.mrf.mxu0
      %v1580 = vadd.f32 %v1269, %v1579
      %1581 = vmatmul.f32.gmra.mxu0 %v650
      %v1582 = vpop.f32.mrf.mxu0
      %v1583 = vadd.f32 %v1272, %v1582
      %1584 = vmatmul.f32.gmra.mxu0 %v653
      %v1585 = vpop.f32.mrf.mxu0
      %v1586 = vadd.f32 %v1275, %v1585
      %1587 = vmatmul.f32.gmra.mxu0 %v656
      %v1588 = vpop.f32.mrf.mxu0
      %v1589 = vadd.f32 %v1278, %v1588
      %1590 = vmatmul.f32.gmra.mxu0 %v659
      %v1591 = vpop.f32.mrf.mxu0
      %v1592 = vadd.f32 %v1281, %v1591
      %1593 = vmatmul.f32.gmra.mxu0 %v662
      %v1594 = vpop.f32.mrf.mxu0
      %v1595 = vadd.f32 %v1284, %v1594
      %1596 = vmatmul.f32.gmra.mxu0 %v665
      %v1597 = vpop.f32.mrf.mxu0
      %v1598 = vadd.f32 %v1287, %v1597
      %1599 = vmatmul.f32.gmra.mxu0 %v668
      %v1600 = vpop.f32.mrf.mxu0
      %v1601 = vadd.f32 %v1290, %v1600
      %1602 = vmatmul.f32.gmra.mxu0 %v671
      %v1603 = vpop.f32.mrf.mxu0
      %v1604 = vadd.f32 %v1293, %v1603
      %1605 = vmatmul.f32.gmra.mxu0 %v674
      %v1606 = vpop.f32.mrf.mxu0
      %v1607 = vadd.f32 %v1296, %v1606
      %1608 = vmatmul.f32.gmra.mxu0 %v677
      %v1609 = vpop.f32.mrf.mxu0
      %v1610 = vadd.f32 %v1299, %v1609
      %1611 = vmatmul.f32.gmra.mxu0 %v680
      %v1612 = vpop.f32.mrf.mxu0
      %v1613 = vadd.f32 %v1302, %v1612
      %1614 = vmatmul.f32.gmra.mxu0 %v683
      %v1615 = vpop.f32.mrf.mxu0
      %v1616 = vadd.f32 %v1305, %v1615
      %1617 = vmatmul.f32.gmra.mxu0 %v686
      %v1618 = vpop.f32.mrf.mxu0
      %v1619 = vadd.f32 %v1308, %v1618
      %1620 = vmatmul.f32.gmra.mxu0 %v689
      %v1621 = vpop.f32.mrf.mxu0
      %v1622 = vadd.f32 %v1311, %v1621
      %1623 = vmatmul.f32.gmra.mxu0 %v692
      %v1624 = vpop.f32.mrf.mxu0
      %v1625 = vadd.f32 %v1314, %v1624
      %1626 = vmatmul.f32.gmra.mxu0 %v695
      %v1627 = vpop.f32.mrf.mxu0
      %v1628 = vadd.f32 %v1317, %v1627
      %1629 = vmatmul.f32.gmra.mxu0 %v698
      %v1630 = vpop.f32.mrf.mxu0
      %v1631 = vadd.f32 %v1320, %v1630
      %1632 = vmatmul.f32.gmra.mxu0 %v701
      %v1633 = vpop.f32.mrf.mxu0
      %v1634 = vadd.f32 %v1323, %v1633
      %1635 = vmatmul.f32.gmra.mxu0 %v704
      %v1636 = vpop.f32.mrf.mxu0
      %v1637 = vadd.f32 %v1326, %v1636
      %1638 = vmatmul.f32.gmra.mxu0 %v707
      %v1639 = vpop.f32.mrf.mxu0
      %v1640 = vadd.f32 %v1329, %v1639
      %1641 = vmatmul.f32.gmra.mxu0 %v710
      %v1642 = vpop.f32.mrf.mxu0
      %v1643 = vadd.f32 %v1332, %v1642
      %1644 = vmatmul.f32.gmra.mxu0 %v713
      %v1645 = vpop.f32.mrf.mxu0
      %v1646 = vadd.f32 %v1335, %v1645
      %1647 = vmatmul.f32.gmra.mxu0 %v716
      %v1648 = vpop.f32.mrf.mxu0
      %v1649 = vadd.f32 %v1338, %v1648
      %1650 = vmatmul.f32.gmra.mxu0 %v719
      %v1651 = vpop.f32.mrf.mxu0
      %v1652 = vadd.f32 %v1341, %v1651
      %1653 = vmatmul.f32.gmra.mxu0 %v722
      %v1654 = vpop.f32.mrf.mxu0
      %v1655 = vadd.f32 %v1344, %v1654
      %1656 = vmatmul.f32.gmra.mxu0 %v725
      %v1657 = vpop.f32.mrf.mxu0
      %v1658 = vadd.f32 %v1347, %v1657
      %1659 = vmatmul.f32.gmra.mxu0 %v728
      %v1660 = vpop.f32.mrf.mxu0
      %v1661 = vadd.f32 %v1350, %v1660
      %1662 = vmatmul.f32.gmra.mxu0 %v731
      %v1663 = vpop.f32.mrf.mxu0
      %v1664 = vadd.f32 %v1353, %v1663
      %1665 = vmatmul.f32.gmra.mxu0 %v734
      %v1666 = vpop.f32.mrf.mxu0
      %v1667 = vadd.f32 %v1356, %v1666
      %1668 = vmatmul.f32.gmra.mxu0 %v737
      %v1669 = vpop.f32.mrf.mxu0
      %v1670 = vadd.f32 %v1359, %v1669
      %1671 = vmatmul.f32.gmra.mxu0 %v740
      %v1672 = vpop.f32.mrf.mxu0
      %v1673 = vadd.f32 %v1362, %v1672
      %1674 = vmatmul.f32.gmra.mxu0 %v743
      %v1675 = vpop.f32.mrf.mxu0
      %v1676 = vadd.f32 %v1365, %v1675
      %1677 = vmatmul.f32.gmra.mxu0 %v746
      %v1678 = vpop.f32.mrf.mxu0
      %v1679 = vadd.f32 %v1368, %v1678
      %1680 = vmatmul.f32.gmra.mxu0 %v749
      %v1681 = vpop.f32.mrf.mxu0
      %v1682 = vadd.f32 %v1371, %v1681
      %1683 = vmatmul.f32.gmra.mxu0 %v752
      %v1684 = vpop.f32.mrf.mxu0
      %v1685 = vadd.f32 %v1374, %v1684
      %1686 = vmatmul.f32.gmra.mxu0 %v755
      %v1687 = vpop.f32.mrf.mxu0
      %v1688 = vadd.f32 %v1377, %v1687
      %1689 = vmatmul.f32.gmra.mxu0 %v758
      %v1690 = vpop.f32.mrf.mxu0
      %v1691 = vadd.f32 %v1380, %v1690
      %1692 = vmatmul.f32.gmra.mxu0 %v761
      %v1693 = vpop.f32.mrf.mxu0
      %v1694 = vadd.f32 %v1383, %v1693
      %1695 = vmatmul.f32.gmra.mxu0 %v764
      %v1696 = vpop.f32.mrf.mxu0
      %v1697 = vadd.f32 %v1386, %v1696
      %1698 = vmatmul.f32.gmra.mxu0 %v767
      %v1699 = vpop.f32.mrf.mxu0
      %v1700 = vadd.f32 %v1389, %v1699
      %1701 = vmatmul.f32.gmra.mxu0 %v770
      %v1702 = vpop.f32.mrf.mxu0
      %v1703 = vadd.f32 %v1392, %v1702
      %1704 = vmatmul.f32.gmra.mxu0 %v773
      %v1705 = vpop.f32.mrf.mxu0
      %v1706 = vadd.f32 %v1395, %v1705
      %1707 = vmatmul.f32.gmra.mxu0 %v776
      %v1708 = vpop.f32.mrf.mxu0
      %v1709 = vadd.f32 %v1398, %v1708
      %1710 = vmatmul.f32.gmra.mxu0 %v779
      %v1711 = vpop.f32.mrf.mxu0
      %v1712 = vadd.f32 %v1401, %v1711
      %1713 = vmatmul.f32.gmra.mxu0 %v782
      %v1714 = vpop.f32.mrf.mxu0
      %v1715 = vadd.f32 %v1404, %v1714
      %1716 = vmatmul.f32.gmra.mxu0 %v785
      %v1717 = vpop.f32.mrf.mxu0
      %v1718 = vadd.f32 %v1407, %v1717
      %1719 = vmatmul.f32.gmra.mxu0 %v788
      %v1720 = vpop.f32.mrf.mxu0
      %v1721 = vadd.f32 %v1410, %v1720
      %1722 = vmatmul.f32.gmra.mxu0 %v791
      %v1723 = vpop.f32.mrf.mxu0
      %v1724 = vadd.f32 %v1413, %v1723
      %1725 = vmatmul.f32.gmra.mxu0 %v794
      %v1726 = vpop.f32.mrf.mxu0
      %v1727 = vadd.f32 %v1416, %v1726
      %1728 = vmatmul.f32.gmra.mxu0 %v797
      %v1729 = vpop.f32.mrf.mxu0
      %v1730 = vadd.f32 %v1419, %v1729
      %1731 = vmatmul.f32.gmra.mxu0 %v800
      %v1732 = vpop.f32.mrf.mxu0
      %v1733 = vadd.f32 %v1422, %v1732
      %1734 = vmatmul.f32.gmra.mxu0 %v803
      %v1735 = vpop.f32.mrf.mxu0
      %v1736 = vadd.f32 %v1425, %v1735
      %1737 = vmatmul.f32.gmra.mxu0 %v806
      %v1738 = vpop.f32.mrf.mxu0
      %v1739 = vadd.f32 %v1428, %v1738
      %1740 = vmatmul.f32.gmra.mxu0 %v809
      %v1741 = vpop.f32.mrf.mxu0
      %v1742 = vadd.f32 %v1431, %v1741
      %1743 = vmatmul.f32.gmra.mxu0 %v812
      %v1744 = vpop.f32.mrf.mxu0
      %v1745 = vadd.f32 %v1434, %v1744
      %1746 = vmatmul.f32.gmra.mxu0 %v815
      %v1747 = vpop.f32.mrf.mxu0
      %v1748 = vadd.f32 %v1437, %v1747
      %1749 = vmatmul.f32.gmra.mxu0 %v818
      %v1750 = vpop.f32.mrf.mxu0
      %v1751 = vadd.f32 %v1440, %v1750
      %1752 = vmatmul.f32.gmra.mxu0 %v821
      %v1753 = vpop.f32.mrf.mxu0
      %v1754 = vadd.f32 %v1443, %v1753
      %1755 = vmatmul.f32.gmra.mxu0 %v824
      %v1756 = vpop.f32.mrf.mxu0
      %v1757 = vadd.f32 %v1446, %v1756
      %1758 = vmatmul.f32.gmra.mxu0 %v827
      %v1759 = vpop.f32.mrf.mxu0
      %v1760 = vadd.f32 %v1449, %v1759
      %1761 = vmatmul.f32.gmra.mxu0 %v830
      %v1762 = vpop.f32.mrf.mxu0
      %v1763 = vadd.f32 %v1452, %v1762
      %1764 = vmatmul.f32.gmra.mxu0 %v833
      %v1765 = vpop.f32.mrf.mxu0
      %v1766 = vadd.f32 %v1455, %v1765
      %1767 = vmatmul.f32.gmra.mxu0 %v836
      %v1768 = vpop.f32.mrf.mxu0
      %v1769 = vadd.f32 %v1458, %v1768
      %1770 = vmatmul.f32.gmra.mxu0 %v839
      %v1771 = vpop.f32.mrf.mxu0
      %v1772 = vadd.f32 %v1461, %v1771
      %1773 = vmatmul.f32.gmra.mxu0 %v842
      %v1774 = vpop.f32.mrf.mxu0
      %v1775 = vadd.f32 %v1464, %v1774
      %1776 = vmatmul.f32.gmra.mxu0 %v845
      %v1777 = vpop.f32.mrf.mxu0
      %v1778 = vadd.f32 %v1467, %v1777
      %1779 = vmatmul.f32.gmra.mxu0 %v848
      %v1780 = vpop.f32.mrf.mxu0
      %v1781 = vadd.f32 %v1470, %v1780
      %1782 = vmatmul.f32.gmra.mxu0 %v851
      %v1783 = vpop.f32.mrf.mxu0
      %v1784 = vadd.f32 %v1473, %v1783
      %1785 = vmatmul.f32.gmra.mxu0 %v854
      %v1786 = vpop.f32.mrf.mxu0
      %v1787 = vadd.f32 %v1476, %v1786
      %1788 = vmatmul.f32.gmra.mxu0 %v857
      %v1789 = vpop.f32.mrf.mxu0
      %v1790 = vadd.f32 %v1479, %v1789
      %1791 = vmatmul.f32.gmra.mxu0 %v860
      %v1792 = vpop.f32.mrf.mxu0
      %v1793 = vadd.f32 %v1482, %v1792
      %1794 = vmatmul.f32.gmra.mxu0 %v863
      %v1795 = vpop.f32.mrf.mxu0
      %v1796 = vadd.f32 %v1485, %v1795
      %1797 = vmatmul.f32.gmra.mxu0 %v866
      %v1798 = vpop.f32.mrf.mxu0
      %v1799 = vadd.f32 %v1488, %v1798
      %1800 = vmatmul.f32.gmra.mxu0 %v869
      %v1801 = vpop.f32.mrf.mxu0
      %v1802 = vadd.f32 %v1491, %v1801
      %1803 = vmatmul.f32.gmra.mxu0 %v872
      %v1804 = vpop.f32.mrf.mxu0
      %v1805 = vadd.f32 %v1494, %v1804
      %1806 = vmatmul.f32.gmra.mxu0 %v875
      %v1807 = vpop.f32.mrf.mxu0
      %v1808 = vadd.f32 %v1497, %v1807
      %1809 = vmatmul.f32.gmra.mxu0 %v878
      %v1810 = vpop.f32.mrf.mxu0
      %v1811 = vadd.f32 %v1500, %v1810
      %1812 = vmatmul.f32.gmra.mxu0 %v881
      %v1813 = vpop.f32.mrf.mxu0
      %v1814 = vadd.f32 %v1503, %v1813
      %1815 = vmatmul.f32.gmra.mxu0 %v884
      %v1816 = vpop.f32.mrf.mxu0
      %v1817 = vadd.f32 %v1506, %v1816
      %1818 = vmatmul.f32.gmra.mxu0 %v887
      %v1819 = vpop.f32.mrf.mxu0
      %v1820 = vadd.f32 %v1509, %v1819
      %1821 = vmatmul.f32.gmra.mxu0 %v890
      %v1822 = vpop.f32.mrf.mxu0
      %v1823 = vadd.f32 %v1512, %v1822
      %1824 = vmatmul.f32.gmra.mxu0 %v893
      %v1825 = vpop.f32.mrf.mxu0
      %v1826 = vadd.f32 %v1515, %v1825
      %1827 = vmatmul.f32.gmra.mxu0 %v896
      %v1828 = vpop.f32.mrf.mxu0
      %v1829 = vadd.f32 %v1518, %v1828
      %1830 = vmatmul.f32.gmra.mxu0 %v899
      %v1831 = vpop.f32.mrf.mxu0
      %v1832 = vadd.f32 %v1521, %v1831
      %1833 = vmatmul.f32.gmra.mxu0 %v902
      %v1834 = vpop.f32.mrf.mxu0
      %v1835 = vadd.f32 %v1524, %v1834
      %1836 = vdwg.mxu0
      %v1837 = vld [vmem:[%s261] sm:$0xff]
      %v1838 = vld [vmem:[%s261 + $0x8] sm:$0xff]
      %v1839 = vld [vmem:[%s261 + $0x10] sm:$0xff]
      %v1840 = vld [vmem:[%s261 + $0x18] sm:$0xff]
      %v1841 = vld [vmem:[%s261 + $0x20] sm:$0xff]
      %v1842 = vld [vmem:[%s261 + $0x28] sm:$0xff]
      %v1843 = vld [vmem:[%s261 + $0x30] sm:$0xff]
      %v1844 = vld [vmem:[%s261 + $0x38] sm:$0xff]
      %v1845 = vld [vmem:[%s261 + $0x40] sm:$0xff]
      %v1846 = vld [vmem:[%s261 + $0x48] sm:$0xff]
      %v1847 = vld [vmem:[%s261 + $0x50] sm:$0xff]
      %v1848 = vld [vmem:[%s261 + $0x58] sm:$0xff]
      %v1849 = vld [vmem:[%s261 + $0x60] sm:$0xff]
      %v1850 = vld [vmem:[%s261 + $0x68] sm:$0xff]
      %v1851 = vld [vmem:[%s261 + $0x70] sm:$0xff]
      %v1852 = vld [vmem:[%s261 + $0x78] sm:$0xff]
      %v1853 = vld [vmem:[%s261 + $0x80] sm:$0xff]
      %v1854 = vld [vmem:[%s261 + $0x88] sm:$0xff]
      %v1855 = vld [vmem:[%s261 + $0x90] sm:$0xff]
      %v1856 = vld [vmem:[%s261 + $0x98] sm:$0xff]
      %v1857 = vld [vmem:[%s261 + $0xa0] sm:$0xff]
      %v1858 = vld [vmem:[%s261 + $0xa8] sm:$0xff]
      %v1859 = vld [vmem:[%s261 + $0xb0] sm:$0xff]
      %v1860 = vld [vmem:[%s261 + $0xb8] sm:$0xff]
      %v1861 = vld [vmem:[%s261 + $0xc0] sm:$0xff]
      %v1862 = vld [vmem:[%s261 + $0xc8] sm:$0xff]
      %v1863 = vld [vmem:[%s261 + $0xd0] sm:$0xff]
      %v1864 = vld [vmem:[%s261 + $0xd8] sm:$0xff]
      %v1865 = vld [vmem:[%s261 + $0xe0] sm:$0xff]
      %v1866 = vld [vmem:[%s261 + $0xe8] sm:$0xff]
      %v1867 = vld [vmem:[%s261 + $0xf0] sm:$0xff]
      %v1868 = vld [vmem:[%s261 + $0xf8] sm:$0xff]
      %v1869 = vld [vmem:[%s261 + $0x100] sm:$0xff]
      %v1870 = vld [vmem:[%s261 + $0x108] sm:$0xff]
      %v1871 = vld [vmem:[%s261 + $0x110] sm:$0xff]
      %v1872 = vld [vmem:[%s261 + $0x118] sm:$0xff]
      %v1873 = vld [vmem:[%s261 + $0x120] sm:$0xff]
      %v1874 = vld [vmem:[%s261 + $0x128] sm:$0xff]
      %v1875 = vld [vmem:[%s261 + $0x130] sm:$0xff]
      %v1876 = vld [vmem:[%s261 + $0x138] sm:$0xff]
      %v1877 = vld [vmem:[%s261 + $0x140] sm:$0xff]
      %v1878 = vld [vmem:[%s261 + $0x148] sm:$0xff]
      %v1879 = vld [vmem:[%s261 + $0x150] sm:$0xff]
      %v1880 = vld [vmem:[%s261 + $0x158] sm:$0xff]
      %v1881 = vld [vmem:[%s261 + $0x160] sm:$0xff]
      %v1882 = vld [vmem:[%s261 + $0x168] sm:$0xff]
      %v1883 = vld [vmem:[%s261 + $0x170] sm:$0xff]
      %v1884 = vld [vmem:[%s261 + $0x178] sm:$0xff]
      %v1885 = vld [vmem:[%s261 + $0x180] sm:$0xff]
      %v1886 = vld [vmem:[%s261 + $0x188] sm:$0xff]
      %v1887 = vld [vmem:[%s261 + $0x190] sm:$0xff]
      %v1888 = vld [vmem:[%s261 + $0x198] sm:$0xff]
      %v1889 = vld [vmem:[%s261 + $0x1a0] sm:$0xff]
      %v1890 = vld [vmem:[%s261 + $0x1a8] sm:$0xff]
      %v1891 = vld [vmem:[%s261 + $0x1b0] sm:$0xff]
      %v1892 = vld [vmem:[%s261 + $0x1b8] sm:$0xff]
      %v1893 = vld [vmem:[%s261 + $0x1c0] sm:$0xff]
      %v1894 = vld [vmem:[%s261 + $0x1c8] sm:$0xff]
      %v1895 = vld [vmem:[%s261 + $0x1d0] sm:$0xff]
      %v1896 = vld [vmem:[%s261 + $0x1d8] sm:$0xff]
      %v1897 = vld [vmem:[%s261 + $0x1e0] sm:$0xff]
      %v1898 = vld [vmem:[%s261 + $0x1e8] sm:$0xff]
      %v1899 = vld [vmem:[%s261 + $0x1f0] sm:$0xff]
      %v1900 = vld [vmem:[%s261 + $0x1f8] sm:$0xff]
      %v1901 = vld [vmem:[%s261 + $0x200] sm:$0xff]
      %v1902 = vld [vmem:[%s261 + $0x208] sm:$0xff]
      %v1903 = vld [vmem:[%s261 + $0x210] sm:$0xff]
      %v1904 = vld [vmem:[%s261 + $0x218] sm:$0xff]
      %v1905 = vld [vmem:[%s261 + $0x220] sm:$0xff]
      %v1906 = vld [vmem:[%s261 + $0x228] sm:$0xff]
      %v1907 = vld [vmem:[%s261 + $0x230] sm:$0xff]
      %v1908 = vld [vmem:[%s261 + $0x238] sm:$0xff]
      %v1909 = vld [vmem:[%s261 + $0x240] sm:$0xff]
      %v1910 = vld [vmem:[%s261 + $0x248] sm:$0xff]
      %v1911 = vld [vmem:[%s261 + $0x250] sm:$0xff]
      %v1912 = vld [vmem:[%s261 + $0x258] sm:$0xff]
      %v1913 = vld [vmem:[%s261 + $0x260] sm:$0xff]
      %v1914 = vld [vmem:[%s261 + $0x268] sm:$0xff]
      %v1915 = vld [vmem:[%s261 + $0x270] sm:$0xff]
      %v1916 = vld [vmem:[%s261 + $0x278] sm:$0xff]
      %v1917 = vld [vmem:[%s261 + $0x280] sm:$0xff]
      %v1918 = vld [vmem:[%s261 + $0x288] sm:$0xff]
      %v1919 = vld [vmem:[%s261 + $0x290] sm:$0xff]
      %v1920 = vld [vmem:[%s261 + $0x298] sm:$0xff]
      %v1921 = vld [vmem:[%s261 + $0x2a0] sm:$0xff]
      %v1922 = vld [vmem:[%s261 + $0x2a8] sm:$0xff]
      %v1923 = vld [vmem:[%s261 + $0x2b0] sm:$0xff]
      %v1924 = vld [vmem:[%s261 + $0x2b8] sm:$0xff]
      %v1925 = vld [vmem:[%s261 + $0x2c0] sm:$0xff]
      %v1926 = vld [vmem:[%s261 + $0x2c8] sm:$0xff]
      %v1927 = vld [vmem:[%s261 + $0x2d0] sm:$0xff]
      %v1928 = vld [vmem:[%s261 + $0x2d8] sm:$0xff]
      %v1929 = vld [vmem:[%s261 + $0x2e0] sm:$0xff]
      %v1930 = vld [vmem:[%s261 + $0x2e8] sm:$0xff]
      %v1931 = vld [vmem:[%s261 + $0x2f0] sm:$0xff]
      %v1932 = vld [vmem:[%s261 + $0x2f8] sm:$0xff]
      %v1933 = vld [vmem:[%s261 + $0x300] sm:$0xff]
      %v1934 = vld [vmem:[%s261 + $0x308] sm:$0xff]
      %v1935 = vadd.f32 %v1544, %v1837
      %v1936 = vadd.f32 %v1547, %v1838
      %v1937 = vadd.f32 %v1550, %v1839
      %v1938 = vadd.f32 %v1553, %v1840
      %v1939 = vadd.f32 %v1556, %v1841
      %v1940 = vadd.f32 %v1559, %v1842
      %v1941 = vadd.f32 %v1562, %v1843
      %v1942 = vadd.f32 %v1565, %v1844
      %v1943 = vadd.f32 %v1568, %v1845
      %v1944 = vadd.f32 %v1571, %v1846
      %v1945 = vadd.f32 %v1574, %v1847
      %v1946 = vadd.f32 %v1577, %v1848
      %v1947 = vadd.f32 %v1580, %v1849
      %v1948 = vadd.f32 %v1583, %v1850
      %v1949 = vadd.f32 %v1586, %v1851
      %v1950 = vadd.f32 %v1589, %v1852
      %v1951 = vadd.f32 %v1592, %v1853
      %v1952 = vadd.f32 %v1595, %v1854
      %v1953 = vadd.f32 %v1598, %v1855
      %v1954 = vadd.f32 %v1601, %v1856
      %v1955 = vadd.f32 %v1604, %v1857
      %v1956 = vadd.f32 %v1607, %v1858
      %v1957 = vadd.f32 %v1610, %v1859
      %v1958 = vadd.f32 %v1613, %v1860
      %v1959 = vadd.f32 %v1616, %v1861
      %v1960 = vadd.f32 %v1619, %v1862
      %v1961 = vadd.f32 %v1622, %v1863
      %v1962 = vadd.f32 %v1625, %v1864
      %v1963 = vadd.f32 %v1628, %v1865
      %v1964 = vadd.f32 %v1631, %v1866
      %v1965 = vadd.f32 %v1634, %v1867
      %v1966 = vadd.f32 %v1637, %v1868
      %v1967 = vadd.f32 %v1640, %v1869
      %v1968 = vadd.f32 %v1643, %v1870
      %v1969 = vadd.f32 %v1646, %v1871
      %v1970 = vadd.f32 %v1649, %v1872
      %v1971 = vadd.f32 %v1652, %v1873
      %v1972 = vadd.f32 %v1655, %v1874
      %v1973 = vadd.f32 %v1658, %v1875
      %v1974 = vadd.f32 %v1661, %v1876
      %v1975 = vadd.f32 %v1664, %v1877
      %v1976 = vadd.f32 %v1667, %v1878
      %v1977 = vadd.f32 %v1670, %v1879
      %v1978 = vadd.f32 %v1673, %v1880
      %v1979 = vadd.f32 %v1676, %v1881
      %v1980 = vadd.f32 %v1679, %v1882
      %v1981 = vadd.f32 %v1682, %v1883
      %v1982 = vadd.f32 %v1685, %v1884
      %v1983 = vadd.f32 %v1688, %v1885
      %v1984 = vadd.f32 %v1691, %v1886
      %v1985 = vadd.f32 %v1694, %v1887
      %v1986 = vadd.f32 %v1697, %v1888
      %v1987 = vadd.f32 %v1700, %v1889
      %v1988 = vadd.f32 %v1703, %v1890
      %v1989 = vadd.f32 %v1706, %v1891
      %v1990 = vadd.f32 %v1709, %v1892
      %v1991 = vadd.f32 %v1712, %v1893
      %v1992 = vadd.f32 %v1715, %v1894
      %v1993 = vadd.f32 %v1718, %v1895
      %v1994 = vadd.f32 %v1721, %v1896
      %v1995 = vadd.f32 %v1724, %v1897
      %v1996 = vadd.f32 %v1727, %v1898
      %v1997 = vadd.f32 %v1730, %v1899
      %v1998 = vadd.f32 %v1733, %v1900
      %v1999 = vadd.f32 %v1736, %v1901
      %v2000 = vadd.f32 %v1739, %v1902
      %v2001 = vadd.f32 %v1742, %v1903
      %v2002 = vadd.f32 %v1745, %v1904
      %v2003 = vadd.f32 %v1748, %v1905
      %v2004 = vadd.f32 %v1751, %v1906
      %v2005 = vadd.f32 %v1754, %v1907
      %v2006 = vadd.f32 %v1757, %v1908
      %v2007 = vadd.f32 %v1760, %v1909
      %v2008 = vadd.f32 %v1763, %v1910
      %v2009 = vadd.f32 %v1766, %v1911
      %v2010 = vadd.f32 %v1769, %v1912
      %v2011 = vadd.f32 %v1772, %v1913
      %v2012 = vadd.f32 %v1775, %v1914
      %v2013 = vadd.f32 %v1778, %v1915
      %v2014 = vadd.f32 %v1781, %v1916
      %v2015 = vadd.f32 %v1784, %v1917
      %v2016 = vadd.f32 %v1787, %v1918
      %v2017 = vadd.f32 %v1790, %v1919
      %v2018 = vadd.f32 %v1793, %v1920
      %v2019 = vadd.f32 %v1796, %v1921
      %v2020 = vadd.f32 %v1799, %v1922
      %v2021 = vadd.f32 %v1802, %v1923
      %v2022 = vadd.f32 %v1805, %v1924
      %v2023 = vadd.f32 %v1808, %v1925
      %v2024 = vadd.f32 %v1811, %v1926
      %v2025 = vadd.f32 %v1814, %v1927
      %v2026 = vadd.f32 %v1817, %v1928
      %v2027 = vadd.f32 %v1820, %v1929
      %v2028 = vadd.f32 %v1823, %v1930
      %v2029 = vadd.f32 %v1826, %v1931
      %v2030 = vadd.f32 %v1829, %v1932
      %v2031 = vadd.f32 %v1832, %v1933
      %v2032 = vadd.f32 %v1835, %v1934
      %v2033 = vmax.f32 %v1935, 0.0
      %v2034 = vmax.f32 %v1936, 0.0
      %v2035 = vmax.f32 %v1937, 0.0
      %v2036 = vmax.f32 %v1938, 0.0
      %v2037 = vmax.f32 %v1939, 0.0
      %v2038 = vmax.f32 %v1940, 0.0
      %v2039 = vmax.f32 %v1941, 0.0
      %v2040 = vmax.f32 %v1942, 0.0
      %v2041 = vmax.f32 %v1943, 0.0
      %v2042 = vmax.f32 %v1944, 0.0
      %v2043 = vmax.f32 %v1945, 0.0
      %v2044 = vmax.f32 %v1946, 0.0
      %v2045 = vmax.f32 %v1947, 0.0
      %v2046 = vmax.f32 %v1948, 0.0
      %v2047 = vmax.f32 %v1949, 0.0
      %v2048 = vmax.f32 %v1950, 0.0
      %v2049 = vmax.f32 %v1951, 0.0
      %v2050 = vmax.f32 %v1952, 0.0
      %v2051 = vmax.f32 %v1953, 0.0
      %v2052 = vmax.f32 %v1954, 0.0
      %v2053 = vmax.f32 %v1955, 0.0
      %v2054 = vmax.f32 %v1956, 0.0
      %v2055 = vmax.f32 %v1957, 0.0
      %v2056 = vmax.f32 %v1958, 0.0
      %v2057 = vmax.f32 %v1959, 0.0
      %v2058 = vmax.f32 %v1960, 0.0
      %v2059 = vmax.f32 %v1961, 0.0
      %v2060 = vmax.f32 %v1962, 0.0
      %v2061 = vmax.f32 %v1963, 0.0
      %v2062 = vmax.f32 %v1964, 0.0
      %v2063 = vmax.f32 %v1965, 0.0
      %v2064 = vmax.f32 %v1966, 0.0
      %v2065 = vmax.f32 %v1967, 0.0
      %v2066 = vmax.f32 %v1968, 0.0
      %v2067 = vmax.f32 %v1969, 0.0
      %v2068 = vmax.f32 %v1970, 0.0
      %v2069 = vmax.f32 %v1971, 0.0
      %v2070 = vmax.f32 %v1972, 0.0
      %v2071 = vmax.f32 %v1973, 0.0
      %v2072 = vmax.f32 %v1974, 0.0
      %v2073 = vmax.f32 %v1975, 0.0
      %v2074 = vmax.f32 %v1976, 0.0
      %v2075 = vmax.f32 %v1977, 0.0
      %v2076 = vmax.f32 %v1978, 0.0
      %v2077 = vmax.f32 %v1979, 0.0
      %v2078 = vmax.f32 %v1980, 0.0
      %v2079 = vmax.f32 %v1981, 0.0
      %v2080 = vmax.f32 %v1982, 0.0
      %v2081 = vmax.f32 %v1983, 0.0
      %v2082 = vmax.f32 %v1984, 0.0
      %v2083 = vmax.f32 %v1985, 0.0
      %v2084 = vmax.f32 %v1986, 0.0
      %v2085 = vmax.f32 %v1987, 0.0
      %v2086 = vmax.f32 %v1988, 0.0
      %v2087 = vmax.f32 %v1989, 0.0
      %v2088 = vmax.f32 %v1990, 0.0
      %v2089 = vmax.f32 %v1991, 0.0
      %v2090 = vmax.f32 %v1992, 0.0
      %v2091 = vmax.f32 %v1993, 0.0
      %v2092 = vmax.f32 %v1994, 0.0
      %v2093 = vmax.f32 %v1995, 0.0
      %v2094 = vmax.f32 %v1996, 0.0
      %v2095 = vmax.f32 %v1997, 0.0
      %v2096 = vmax.f32 %v1998, 0.0
      %v2097 = vmax.f32 %v1999, 0.0
      %v2098 = vmax.f32 %v2000, 0.0
      %v2099 = vmax.f32 %v2001, 0.0
      %v2100 = vmax.f32 %v2002, 0.0
      %v2101 = vmax.f32 %v2003, 0.0
      %v2102 = vmax.f32 %v2004, 0.0
      %v2103 = vmax.f32 %v2005, 0.0
      %v2104 = vmax.f32 %v2006, 0.0
      %v2105 = vmax.f32 %v2007, 0.0
      %v2106 = vmax.f32 %v2008, 0.0
      %v2107 = vmax.f32 %v2009, 0.0
      %v2108 = vmax.f32 %v2010, 0.0
      %v2109 = vmax.f32 %v2011, 0.0
      %v2110 = vmax.f32 %v2012, 0.0
      %v2111 = vmax.f32 %v2013, 0.0
      %v2112 = vmax.f32 %v2014, 0.0
      %v2113 = vmax.f32 %v2015, 0.0
      %v2114 = vmax.f32 %v2016, 0.0
      %v2115 = vmax.f32 %v2017, 0.0
      %v2116 = vmax.f32 %v2018, 0.0
      %v2117 = vmax.f32 %v2019, 0.0
      %v2118 = vmax.f32 %v2020, 0.0
      %v2119 = vmax.f32 %v2021, 0.0
      %v2120 = vmax.f32 %v2022, 0.0
      %v2121 = vmax.f32 %v2023, 0.0
      %v2122 = vmax.f32 %v2024, 0.0
      %v2123 = vmax.f32 %v2025, 0.0
      %v2124 = vmax.f32 %v2026, 0.0
      %v2125 = vmax.f32 %v2027, 0.0
      %v2126 = vmax.f32 %v2028, 0.0
      %v2127 = vmax.f32 %v2029, 0.0
      %v2128 = vmax.f32 %v2030, 0.0
      %v2129 = vmax.f32 %v2031, 0.0
      %v2130 = vmax.f32 %v2032, 0.0
      %v2131 = vld [vmem:[%s267] sm:$0xff]
      %v2132 = vld [vmem:[%s267 + $0x8] sm:$0xff]
      %v2133 = vld [vmem:[%s267 + $0x10] sm:$0xff]
      %v2134 = vld [vmem:[%s267 + $0x18] sm:$0xff]
      %v2135 = vld [vmem:[%s267 + $0x20] sm:$0xff]
      %v2136 = vld [vmem:[%s267 + $0x28] sm:$0xff]
      %v2137 = vld [vmem:[%s267 + $0x30] sm:$0xff]
      %v2138 = vld [vmem:[%s267 + $0x38] sm:$0xff]
      %v2139 = vld [vmem:[%s267 + $0x40] sm:$0xff]
      %v2140 = vld [vmem:[%s267 + $0x48] sm:$0xff]
      %v2141 = vld [vmem:[%s267 + $0x50] sm:$0xff]
      %v2142 = vld [vmem:[%s267 + $0x58] sm:$0xff]
      %v2143 = vld [vmem:[%s267 + $0x60] sm:$0xff]
      %v2144 = vld [vmem:[%s267 + $0x68] sm:$0xff]
      %v2145 = vld [vmem:[%s267 + $0x70] sm:$0xff]
      %v2146 = vld [vmem:[%s267 + $0x78] sm:$0xff]
      %v2147 = vld [vmem:[%s267 + $0x80] sm:$0xff]
      %v2148 = vld [vmem:[%s267 + $0x88] sm:$0xff]
      %v2149 = vld [vmem:[%s267 + $0x90] sm:$0xff]
      %v2150 = vld [vmem:[%s267 + $0x98] sm:$0xff]
      %v2151 = vld [vmem:[%s267 + $0xa0] sm:$0xff]
      %v2152 = vld [vmem:[%s267 + $0xa8] sm:$0xff]
      %v2153 = vld [vmem:[%s267 + $0xb0] sm:$0xff]
      %v2154 = vld [vmem:[%s267 + $0xb8] sm:$0xff]
      %v2155 = vld [vmem:[%s267 + $0xc0] sm:$0xff]
      %v2156 = vld [vmem:[%s267 + $0xc8] sm:$0xff]
      %v2157 = vld [vmem:[%s267 + $0xd0] sm:$0xff]
      %v2158 = vld [vmem:[%s267 + $0xd8] sm:$0xff]
      %v2159 = vld [vmem:[%s267 + $0xe0] sm:$0xff]
      %v2160 = vld [vmem:[%s267 + $0xe8] sm:$0xff]
      %v2161 = vld [vmem:[%s267 + $0xf0] sm:$0xff]
      %v2162 = vld [vmem:[%s267 + $0xf8] sm:$0xff]
      %v2163 = vld [vmem:[%s267 + $0x100] sm:$0xff]
      %v2164 = vld [vmem:[%s267 + $0x108] sm:$0xff]
      %v2165 = vld [vmem:[%s267 + $0x110] sm:$0xff]
      %v2166 = vld [vmem:[%s267 + $0x118] sm:$0xff]
      %v2167 = vld [vmem:[%s267 + $0x120] sm:$0xff]
      %v2168 = vld [vmem:[%s267 + $0x128] sm:$0xff]
      %v2169 = vld [vmem:[%s267 + $0x130] sm:$0xff]
      %v2170 = vld [vmem:[%s267 + $0x138] sm:$0xff]
      %v2171 = vld [vmem:[%s267 + $0x140] sm:$0xff]
      %v2172 = vld [vmem:[%s267 + $0x148] sm:$0xff]
      %v2173 = vld [vmem:[%s267 + $0x150] sm:$0xff]
      %v2174 = vld [vmem:[%s267 + $0x158] sm:$0xff]
      %v2175 = vld [vmem:[%s267 + $0x160] sm:$0xff]
      %v2176 = vld [vmem:[%s267 + $0x168] sm:$0xff]
      %v2177 = vld [vmem:[%s267 + $0x170] sm:$0xff]
      %v2178 = vld [vmem:[%s267 + $0x178] sm:$0xff]
      %v2179 = vld [vmem:[%s267 + $0x180] sm:$0xff]
      %v2180 = vld [vmem:[%s267 + $0x188] sm:$0xff]
      %v2181 = vld [vmem:[%s267 + $0x190] sm:$0xff]
      %v2182 = vld [vmem:[%s267 + $0x198] sm:$0xff]
      %v2183 = vld [vmem:[%s267 + $0x1a0] sm:$0xff]
      %v2184 = vld [vmem:[%s267 + $0x1a8] sm:$0xff]
      %v2185 = vld [vmem:[%s267 + $0x1b0] sm:$0xff]
      %v2186 = vld [vmem:[%s267 + $0x1b8] sm:$0xff]
      %v2187 = vld [vmem:[%s267 + $0x1c0] sm:$0xff]
      %v2188 = vld [vmem:[%s267 + $0x1c8] sm:$0xff]
      %v2189 = vld [vmem:[%s267 + $0x1d0] sm:$0xff]
      %v2190 = vld [vmem:[%s267 + $0x1d8] sm:$0xff]
      %v2191 = vld [vmem:[%s267 + $0x1e0] sm:$0xff]
      %v2192 = vld [vmem:[%s267 + $0x1e8] sm:$0xff]
      %v2193 = vld [vmem:[%s267 + $0x1f0] sm:$0xff]
      %v2194 = vld [vmem:[%s267 + $0x1f8] sm:$0xff]
      %v2195 = vld [vmem:[%s267 + $0x200] sm:$0xff]
      %v2196 = vld [vmem:[%s267 + $0x208] sm:$0xff]
      %v2197 = vld [vmem:[%s267 + $0x210] sm:$0xff]
      %v2198 = vld [vmem:[%s267 + $0x218] sm:$0xff]
      %v2199 = vld [vmem:[%s267 + $0x220] sm:$0xff]
      %v2200 = vld [vmem:[%s267 + $0x228] sm:$0xff]
      %v2201 = vld [vmem:[%s267 + $0x230] sm:$0xff]
      %v2202 = vld [vmem:[%s267 + $0x238] sm:$0xff]
      %v2203 = vld [vmem:[%s267 + $0x240] sm:$0xff]
      %v2204 = vld [vmem:[%s267 + $0x248] sm:$0xff]
      %v2205 = vld [vmem:[%s267 + $0x250] sm:$0xff]
      %v2206 = vld [vmem:[%s267 + $0x258] sm:$0xff]
      %v2207 = vld [vmem:[%s267 + $0x260] sm:$0xff]
      %v2208 = vld [vmem:[%s267 + $0x268] sm:$0xff]
      %v2209 = vld [vmem:[%s267 + $0x270] sm:$0xff]
      %v2210 = vld [vmem:[%s267 + $0x278] sm:$0xff]
      %v2211 = vld [vmem:[%s267 + $0x280] sm:$0xff]
      %v2212 = vld [vmem:[%s267 + $0x288] sm:$0xff]
      %v2213 = vld [vmem:[%s267 + $0x290] sm:$0xff]
      %v2214 = vld [vmem:[%s267 + $0x298] sm:$0xff]
      %v2215 = vld [vmem:[%s267 + $0x2a0] sm:$0xff]
      %v2216 = vld [vmem:[%s267 + $0x2a8] sm:$0xff]
      %v2217 = vld [vmem:[%s267 + $0x2b0] sm:$0xff]
      %v2218 = vld [vmem:[%s267 + $0x2b8] sm:$0xff]
      %v2219 = vld [vmem:[%s267 + $0x2c0] sm:$0xff]
      %v2220 = vld [vmem:[%s267 + $0x2c8] sm:$0xff]
      %v2221 = vld [vmem:[%s267 + $0x2d0] sm:$0xff]
      %v2222 = vld [vmem:[%s267 + $0x2d8] sm:$0xff]
      %v2223 = vld [vmem:[%s267 + $0x2e0] sm:$0xff]
      %v2224 = vld [vmem:[%s267 + $0x2e8] sm:$0xff]
      %v2225 = vld [vmem:[%s267 + $0x2f0] sm:$0xff]
      %v2226 = vld [vmem:[%s267 + $0x2f8] sm:$0xff]
      %v2227 = vld [vmem:[%s267 + $0x300] sm:$0xff]
      %v2228 = vld [vmem:[%s267 + $0x308] sm:$0xff]
      %2230 = vset.pattern.permute.xlu0 0
      %2231 = vperm.xlu0 %2230, %v2131
      %v2232 = vpop.permute.xlu0 %2231
      %2235 = vset.pattern.permute.xlu0 0
      %2236 = vperm.xlu0 %2235, %v2132
      %v2237 = vpop.permute.xlu0 %2236
      %2240 = vset.pattern.permute.xlu0 0
      %2241 = vperm.xlu0 %2240, %v2133
      %v2242 = vpop.permute.xlu0 %2241
      %2245 = vset.pattern.permute.xlu0 0
      %2246 = vperm.xlu0 %2245, %v2134
      %v2247 = vpop.permute.xlu0 %2246
      %2250 = vset.pattern.permute.xlu0 0
      %2251 = vperm.xlu0 %2250, %v2135
      %v2252 = vpop.permute.xlu0 %2251
      %2255 = vset.pattern.permute.xlu0 0
      %2256 = vperm.xlu0 %2255, %v2136
      %v2257 = vpop.permute.xlu0 %2256
      %2260 = vset.pattern.permute.xlu0 0
      %2261 = vperm.xlu0 %2260, %v2137
      %v2262 = vpop.permute.xlu0 %2261
      %2265 = vset.pattern.permute.xlu0 0
      %2266 = vperm.xlu0 %2265, %v2138
      %v2267 = vpop.permute.xlu0 %2266
      %2270 = vset.pattern.permute.xlu0 0
      %2271 = vperm.xlu0 %2270, %v2139
      %v2272 = vpop.permute.xlu0 %2271
      %2275 = vset.pattern.permute.xlu0 0
      %2276 = vperm.xlu0 %2275, %v2140
      %v2277 = vpop.permute.xlu0 %2276
      %2280 = vset.pattern.permute.xlu0 0
      %2281 = vperm.xlu0 %2280, %v2141
      %v2282 = vpop.permute.xlu0 %2281
      %2285 = vset.pattern.permute.xlu0 0
      %2286 = vperm.xlu0 %2285, %v2142
      %v2287 = vpop.permute.xlu0 %2286
      %2290 = vset.pattern.permute.xlu0 0
      %2291 = vperm.xlu0 %2290, %v2143
      %v2292 = vpop.permute.xlu0 %2291
      %2295 = vset.pattern.permute.xlu0 0
      %2296 = vperm.xlu0 %2295, %v2144
      %v2297 = vpop.permute.xlu0 %2296
      %2300 = vset.pattern.permute.xlu0 0
      %2301 = vperm.xlu0 %2300, %v2145
      %v2302 = vpop.permute.xlu0 %2301
      %2305 = vset.pattern.permute.xlu0 0
      %2306 = vperm.xlu0 %2305, %v2146
      %v2307 = vpop.permute.xlu0 %2306
      %2310 = vset.pattern.permute.xlu0 0
      %2311 = vperm.xlu0 %2310, %v2147
      %v2312 = vpop.permute.xlu0 %2311
      %2315 = vset.pattern.permute.xlu0 0
      %2316 = vperm.xlu0 %2315, %v2148
      %v2317 = vpop.permute.xlu0 %2316
      %2320 = vset.pattern.permute.xlu0 0
      %2321 = vperm.xlu0 %2320, %v2149
      %v2322 = vpop.permute.xlu0 %2321
      %2325 = vset.pattern.permute.xlu0 0
      %2326 = vperm.xlu0 %2325, %v2150
      %v2327 = vpop.permute.xlu0 %2326
      %2330 = vset.pattern.permute.xlu0 0
      %2331 = vperm.xlu0 %2330, %v2151
      %v2332 = vpop.permute.xlu0 %2331
      %2335 = vset.pattern.permute.xlu0 0
      %2336 = vperm.xlu0 %2335, %v2152
      %v2337 = vpop.permute.xlu0 %2336
      %2340 = vset.pattern.permute.xlu0 0
      %2341 = vperm.xlu0 %2340, %v2153
      %v2342 = vpop.permute.xlu0 %2341
      %2345 = vset.pattern.permute.xlu0 0
      %2346 = vperm.xlu0 %2345, %v2154
      %v2347 = vpop.permute.xlu0 %2346
      %2350 = vset.pattern.permute.xlu0 0
      %2351 = vperm.xlu0 %2350, %v2155
      %v2352 = vpop.permute.xlu0 %2351
      %2355 = vset.pattern.permute.xlu0 0
      %2356 = vperm.xlu0 %2355, %v2156
      %v2357 = vpop.permute.xlu0 %2356
      %2360 = vset.pattern.permute.xlu0 0
      %2361 = vperm.xlu0 %2360, %v2157
      %v2362 = vpop.permute.xlu0 %2361
      %2365 = vset.pattern.permute.xlu0 0
      %2366 = vperm.xlu0 %2365, %v2158
      %v2367 = vpop.permute.xlu0 %2366
      %2370 = vset.pattern.permute.xlu0 0
      %2371 = vperm.xlu0 %2370, %v2159
      %v2372 = vpop.permute.xlu0 %2371
      %2375 = vset.pattern.permute.xlu0 0
      %2376 = vperm.xlu0 %2375, %v2160
      %v2377 = vpop.permute.xlu0 %2376
      %2380 = vset.pattern.permute.xlu0 0
      %2381 = vperm.xlu0 %2380, %v2161
      %v2382 = vpop.permute.xlu0 %2381
      %2385 = vset.pattern.permute.xlu0 0
      %2386 = vperm.xlu0 %2385, %v2162
      %v2387 = vpop.permute.xlu0 %2386
      %2390 = vset.pattern.permute.xlu0 0
      %2391 = vperm.xlu0 %2390, %v2163
      %v2392 = vpop.permute.xlu0 %2391
      %2395 = vset.pattern.permute.xlu0 0
      %2396 = vperm.xlu0 %2395, %v2164
      %v2397 = vpop.permute.xlu0 %2396
      %2400 = vset.pattern.permute.xlu0 0
      %2401 = vperm.xlu0 %2400, %v2165
      %v2402 = vpop.permute.xlu0 %2401
      %2405 = vset.pattern.permute.xlu0 0
      %2406 = vperm.xlu0 %2405, %v2166
      %v2407 = vpop.permute.xlu0 %2406
      %2410 = vset.pattern.permute.xlu0 0
      %2411 = vperm.xlu0 %2410, %v2167
      %v2412 = vpop.permute.xlu0 %2411
      %2415 = vset.pattern.permute.xlu0 0
      %2416 = vperm.xlu0 %2415, %v2168
      %v2417 = vpop.permute.xlu0 %2416
      %2420 = vset.pattern.permute.xlu0 0
      %2421 = vperm.xlu0 %2420, %v2169
      %v2422 = vpop.permute.xlu0 %2421
      %2425 = vset.pattern.permute.xlu0 0
      %2426 = vperm.xlu0 %2425, %v2170
      %v2427 = vpop.permute.xlu0 %2426
      %2430 = vset.pattern.permute.xlu0 0
      %2431 = vperm.xlu0 %2430, %v2171
      %v2432 = vpop.permute.xlu0 %2431
      %2435 = vset.pattern.permute.xlu0 0
      %2436 = vperm.xlu0 %2435, %v2172
      %v2437 = vpop.permute.xlu0 %2436
      %2440 = vset.pattern.permute.xlu0 0
      %2441 = vperm.xlu0 %2440, %v2173
      %v2442 = vpop.permute.xlu0 %2441
      %2445 = vset.pattern.permute.xlu0 0
      %2446 = vperm.xlu0 %2445, %v2174
      %v2447 = vpop.permute.xlu0 %2446
      %2450 = vset.pattern.permute.xlu0 0
      %2451 = vperm.xlu0 %2450, %v2175
      %v2452 = vpop.permute.xlu0 %2451
      %2455 = vset.pattern.permute.xlu0 0
      %2456 = vperm.xlu0 %2455, %v2176
      %v2457 = vpop.permute.xlu0 %2456
      %2460 = vset.pattern.permute.xlu0 0
      %2461 = vperm.xlu0 %2460, %v2177
      %v2462 = vpop.permute.xlu0 %2461
      %2465 = vset.pattern.permute.xlu0 0
      %2466 = vperm.xlu0 %2465, %v2178
      %v2467 = vpop.permute.xlu0 %2466
      %2470 = vset.pattern.permute.xlu0 0
      %2471 = vperm.xlu0 %2470, %v2179
      %v2472 = vpop.permute.xlu0 %2471
      %2475 = vset.pattern.permute.xlu0 0
      %2476 = vperm.xlu0 %2475, %v2180
      %v2477 = vpop.permute.xlu0 %2476
      %2480 = vset.pattern.permute.xlu0 0
      %2481 = vperm.xlu0 %2480, %v2181
      %v2482 = vpop.permute.xlu0 %2481
      %2485 = vset.pattern.permute.xlu0 0
      %2486 = vperm.xlu0 %2485, %v2182
      %v2487 = vpop.permute.xlu0 %2486
      %2490 = vset.pattern.permute.xlu0 0
      %2491 = vperm.xlu0 %2490, %v2183
      %v2492 = vpop.permute.xlu0 %2491
      %2495 = vset.pattern.permute.xlu0 0
      %2496 = vperm.xlu0 %2495, %v2184
      %v2497 = vpop.permute.xlu0 %2496
      %2500 = vset.pattern.permute.xlu0 0
      %2501 = vperm.xlu0 %2500, %v2185
      %v2502 = vpop.permute.xlu0 %2501
      %2505 = vset.pattern.permute.xlu0 0
      %2506 = vperm.xlu0 %2505, %v2186
      %v2507 = vpop.permute.xlu0 %2506
      %2510 = vset.pattern.permute.xlu0 0
      %2511 = vperm.xlu0 %2510, %v2187
      %v2512 = vpop.permute.xlu0 %2511
      %2515 = vset.pattern.permute.xlu0 0
      %2516 = vperm.xlu0 %2515, %v2188
      %v2517 = vpop.permute.xlu0 %2516
      %2520 = vset.pattern.permute.xlu0 0
      %2521 = vperm.xlu0 %2520, %v2189
      %v2522 = vpop.permute.xlu0 %2521
      %2525 = vset.pattern.permute.xlu0 0
      %2526 = vperm.xlu0 %2525, %v2190
      %v2527 = vpop.permute.xlu0 %2526
      %2530 = vset.pattern.permute.xlu0 0
      %2531 = vperm.xlu0 %2530, %v2191
      %v2532 = vpop.permute.xlu0 %2531
      %2535 = vset.pattern.permute.xlu0 0
      %2536 = vperm.xlu0 %2535, %v2192
      %v2537 = vpop.permute.xlu0 %2536
      %2540 = vset.pattern.permute.xlu0 0
      %2541 = vperm.xlu0 %2540, %v2193
      %v2542 = vpop.permute.xlu0 %2541
      %2545 = vset.pattern.permute.xlu0 0
      %2546 = vperm.xlu0 %2545, %v2194
      %v2547 = vpop.permute.xlu0 %2546
      %2550 = vset.pattern.permute.xlu0 0
      %2551 = vperm.xlu0 %2550, %v2195
      %v2552 = vpop.permute.xlu0 %2551
      %2555 = vset.pattern.permute.xlu0 0
      %2556 = vperm.xlu0 %2555, %v2196
      %v2557 = vpop.permute.xlu0 %2556
      %2560 = vset.pattern.permute.xlu0 0
      %2561 = vperm.xlu0 %2560, %v2197
      %v2562 = vpop.permute.xlu0 %2561
      %2565 = vset.pattern.permute.xlu0 0
      %2566 = vperm.xlu0 %2565, %v2198
      %v2567 = vpop.permute.xlu0 %2566
      %2570 = vset.pattern.permute.xlu0 0
      %2571 = vperm.xlu0 %2570, %v2199
      %v2572 = vpop.permute.xlu0 %2571
      %2575 = vset.pattern.permute.xlu0 0
      %2576 = vperm.xlu0 %2575, %v2200
      %v2577 = vpop.permute.xlu0 %2576
      %2580 = vset.pattern.permute.xlu0 0
      %2581 = vperm.xlu0 %2580, %v2201
      %v2582 = vpop.permute.xlu0 %2581
      %2585 = vset.pattern.permute.xlu0 0
      %2586 = vperm.xlu0 %2585, %v2202
      %v2587 = vpop.permute.xlu0 %2586
      %2590 = vset.pattern.permute.xlu0 0
      %2591 = vperm.xlu0 %2590, %v2203
      %v2592 = vpop.permute.xlu0 %2591
      %2595 = vset.pattern.permute.xlu0 0
      %2596 = vperm.xlu0 %2595, %v2204
      %v2597 = vpop.permute.xlu0 %2596
      %2600 = vset.pattern.permute.xlu0 0
      %2601 = vperm.xlu0 %2600, %v2205
      %v2602 = vpop.permute.xlu0 %2601
      %2605 = vset.pattern.permute.xlu0 0
      %2606 = vperm.xlu0 %2605, %v2206
      %v2607 = vpop.permute.xlu0 %2606
      %2610 = vset.pattern.permute.xlu0 0
      %2611 = vperm.xlu0 %2610, %v2207
      %v2612 = vpop.permute.xlu0 %2611
      %2615 = vset.pattern.permute.xlu0 0
      %2616 = vperm.xlu0 %2615, %v2208
      %v2617 = vpop.permute.xlu0 %2616
      %2620 = vset.pattern.permute.xlu0 0
      %2621 = vperm.xlu0 %2620, %v2209
      %v2622 = vpop.permute.xlu0 %2621
      %2625 = vset.pattern.permute.xlu0 0
      %2626 = vperm.xlu0 %2625, %v2210
      %v2627 = vpop.permute.xlu0 %2626
      %2630 = vset.pattern.permute.xlu0 0
      %2631 = vperm.xlu0 %2630, %v2211
      %v2632 = vpop.permute.xlu0 %2631
      %2635 = vset.pattern.permute.xlu0 0
      %2636 = vperm.xlu0 %2635, %v2212
      %v2637 = vpop.permute.xlu0 %2636
      %2640 = vset.pattern.permute.xlu0 0
      %2641 = vperm.xlu0 %2640, %v2213
      %v2642 = vpop.permute.xlu0 %2641
      %2645 = vset.pattern.permute.xlu0 0
      %2646 = vperm.xlu0 %2645, %v2214
      %v2647 = vpop.permute.xlu0 %2646
      %2650 = vset.pattern.permute.xlu0 0
      %2651 = vperm.xlu0 %2650, %v2215
      %v2652 = vpop.permute.xlu0 %2651
      %2655 = vset.pattern.permute.xlu0 0
      %2656 = vperm.xlu0 %2655, %v2216
      %v2657 = vpop.permute.xlu0 %2656
      %2660 = vset.pattern.permute.xlu0 0
      %2661 = vperm.xlu0 %2660, %v2217
      %v2662 = vpop.permute.xlu0 %2661
      %2665 = vset.pattern.permute.xlu0 0
      %2666 = vperm.xlu0 %2665, %v2218
      %v2667 = vpop.permute.xlu0 %2666
      %2670 = vset.pattern.permute.xlu0 0
      %2671 = vperm.xlu0 %2670, %v2219
      %v2672 = vpop.permute.xlu0 %2671
      %2675 = vset.pattern.permute.xlu0 0
      %2676 = vperm.xlu0 %2675, %v2220
      %v2677 = vpop.permute.xlu0 %2676
      %2680 = vset.pattern.permute.xlu0 0
      %2681 = vperm.xlu0 %2680, %v2221
      %v2682 = vpop.permute.xlu0 %2681
      %2685 = vset.pattern.permute.xlu0 0
      %2686 = vperm.xlu0 %2685, %v2222
      %v2687 = vpop.permute.xlu0 %2686
      %2690 = vset.pattern.permute.xlu0 0
      %2691 = vperm.xlu0 %2690, %v2223
      %v2692 = vpop.permute.xlu0 %2691
      %2695 = vset.pattern.permute.xlu0 0
      %2696 = vperm.xlu0 %2695, %v2224
      %v2697 = vpop.permute.xlu0 %2696
      %2700 = vset.pattern.permute.xlu0 0
      %2701 = vperm.xlu0 %2700, %v2225
      %v2702 = vpop.permute.xlu0 %2701
      %2705 = vset.pattern.permute.xlu0 0
      %2706 = vperm.xlu0 %2705, %v2226
      %v2707 = vpop.permute.xlu0 %2706
      %2710 = vset.pattern.permute.xlu0 0
      %2711 = vperm.xlu0 %2710, %v2227
      %v2712 = vpop.permute.xlu0 %2711
      %2715 = vset.pattern.permute.xlu0 0
      %2716 = vperm.xlu0 %2715, %v2228
      %v2717 = vpop.permute.xlu0 %2716
      %v2719 = vmul.f32 %v2033, %v2232
      %v2720 = vmul.f32 %v2034, %v2237
      %v2721 = vmul.f32 %v2035, %v2242
      %v2722 = vmul.f32 %v2036, %v2247
      %v2723 = vmul.f32 %v2037, %v2252
      %v2724 = vmul.f32 %v2038, %v2257
      %v2725 = vmul.f32 %v2039, %v2262
      %v2726 = vmul.f32 %v2040, %v2267
      %v2727 = vmul.f32 %v2041, %v2272
      %v2728 = vmul.f32 %v2042, %v2277
      %v2729 = vmul.f32 %v2043, %v2282
      %v2730 = vmul.f32 %v2044, %v2287
      %v2731 = vmul.f32 %v2045, %v2292
      %v2732 = vmul.f32 %v2046, %v2297
      %v2733 = vmul.f32 %v2047, %v2302
      %v2734 = vmul.f32 %v2048, %v2307
      %v2735 = vmul.f32 %v2049, %v2312
      %v2736 = vmul.f32 %v2050, %v2317
      %v2737 = vmul.f32 %v2051, %v2322
      %v2738 = vmul.f32 %v2052, %v2327
      %v2739 = vmul.f32 %v2053, %v2332
      %v2740 = vmul.f32 %v2054, %v2337
      %v2741 = vmul.f32 %v2055, %v2342
      %v2742 = vmul.f32 %v2056, %v2347
      %v2743 = vmul.f32 %v2057, %v2352
      %v2744 = vmul.f32 %v2058, %v2357
      %v2745 = vmul.f32 %v2059, %v2362
      %v2746 = vmul.f32 %v2060, %v2367
      %v2747 = vmul.f32 %v2061, %v2372
      %v2748 = vmul.f32 %v2062, %v2377
      %v2749 = vmul.f32 %v2063, %v2382
      %v2750 = vmul.f32 %v2064, %v2387
      %v2751 = vmul.f32 %v2065, %v2392
      %v2752 = vmul.f32 %v2066, %v2397
      %v2753 = vmul.f32 %v2067, %v2402
      %v2754 = vmul.f32 %v2068, %v2407
      %v2755 = vmul.f32 %v2069, %v2412
      %v2756 = vmul.f32 %v2070, %v2417
      %v2757 = vmul.f32 %v2071, %v2422
      %v2758 = vmul.f32 %v2072, %v2427
      %v2759 = vmul.f32 %v2073, %v2432
      %v2760 = vmul.f32 %v2074, %v2437
      %v2761 = vmul.f32 %v2075, %v2442
      %v2762 = vmul.f32 %v2076, %v2447
      %v2763 = vmul.f32 %v2077, %v2452
      %v2764 = vmul.f32 %v2078, %v2457
      %v2765 = vmul.f32 %v2079, %v2462
      %v2766 = vmul.f32 %v2080, %v2467
      %v2767 = vmul.f32 %v2081, %v2472
      %v2768 = vmul.f32 %v2082, %v2477
      %v2769 = vmul.f32 %v2083, %v2482
      %v2770 = vmul.f32 %v2084, %v2487
      %v2771 = vmul.f32 %v2085, %v2492
      %v2772 = vmul.f32 %v2086, %v2497
      %v2773 = vmul.f32 %v2087, %v2502
      %v2774 = vmul.f32 %v2088, %v2507
      %v2775 = vmul.f32 %v2089, %v2512
      %v2776 = vmul.f32 %v2090, %v2517
      %v2777 = vmul.f32 %v2091, %v2522
      %v2778 = vmul.f32 %v2092, %v2527
      %v2779 = vmul.f32 %v2093, %v2532
      %v2780 = vmul.f32 %v2094, %v2537
      %v2781 = vmul.f32 %v2095, %v2542
      %v2782 = vmul.f32 %v2096, %v2547
      %v2783 = vmul.f32 %v2097, %v2552
      %v2784 = vmul.f32 %v2098, %v2557
      %v2785 = vmul.f32 %v2099, %v2562
      %v2786 = vmul.f32 %v2100, %v2567
      %v2787 = vmul.f32 %v2101, %v2572
      %v2788 = vmul.f32 %v2102, %v2577
      %v2789 = vmul.f32 %v2103, %v2582
      %v2790 = vmul.f32 %v2104, %v2587
      %v2791 = vmul.f32 %v2105, %v2592
      %v2792 = vmul.f32 %v2106, %v2597
      %v2793 = vmul.f32 %v2107, %v2602
      %v2794 = vmul.f32 %v2108, %v2607
      %v2795 = vmul.f32 %v2109, %v2612
      %v2796 = vmul.f32 %v2110, %v2617
      %v2797 = vmul.f32 %v2111, %v2622
      %v2798 = vmul.f32 %v2112, %v2627
      %v2799 = vmul.f32 %v2113, %v2632
      %v2800 = vmul.f32 %v2114, %v2637
      %v2801 = vmul.f32 %v2115, %v2642
      %v2802 = vmul.f32 %v2116, %v2647
      %v2803 = vmul.f32 %v2117, %v2652
      %v2804 = vmul.f32 %v2118, %v2657
      %v2805 = vmul.f32 %v2119, %v2662
      %v2806 = vmul.f32 %v2120, %v2667
      %v2807 = vmul.f32 %v2121, %v2672
      %v2808 = vmul.f32 %v2122, %v2677
      %v2809 = vmul.f32 %v2123, %v2682
      %v2810 = vmul.f32 %v2124, %v2687
      %v2811 = vmul.f32 %v2125, %v2692
      %v2812 = vmul.f32 %v2126, %v2697
      %v2813 = vmul.f32 %v2127, %v2702
      %v2814 = vmul.f32 %v2128, %v2707
      %v2815 = vmul.f32 %v2129, %v2712
      %v2816 = vmul.f32 %v2130, %v2717
      %2817 = vst.msk [vmem:[%s273] sm:$0xff] %vm609, %v2719
      %2818 = vst.msk [vmem:[%s273 + $0x8] sm:$0xff] %vm609, %v2720
      %2819 = vst.msk [vmem:[%s273 + $0x10] sm:$0xff] %vm609, %v2721
      %2820 = vst.msk [vmem:[%s273 + $0x18] sm:$0xff] %vm609, %v2722
      %2821 = vst.msk [vmem:[%s273 + $0x20] sm:$0xff] %vm609, %v2723
      %2822 = vst.msk [vmem:[%s273 + $0x28] sm:$0xff] %vm609, %v2724
      %2823 = vst.msk [vmem:[%s273 + $0x30] sm:$0xff] %vm609, %v2725
      %2824 = vst.msk [vmem:[%s273 + $0x38] sm:$0xff] %vm609, %v2726
      %2825 = vst.msk [vmem:[%s273 + $0x40] sm:$0xff] %vm609, %v2727
      %2826 = vst.msk [vmem:[%s273 + $0x48] sm:$0xff] %vm609, %v2728
      %2827 = vst.msk [vmem:[%s273 + $0x50] sm:$0xff] %vm609, %v2729
      %2828 = vst.msk [vmem:[%s273 + $0x58] sm:$0xff] %vm609, %v2730
      %2829 = vst.msk [vmem:[%s273 + $0x60] sm:$0xff] %vm609, %v2731
      %2830 = vst.msk [vmem:[%s273 + $0x68] sm:$0xff] %vm609, %v2732
      %2831 = vst.msk [vmem:[%s273 + $0x70] sm:$0xff] %vm609, %v2733
      %2832 = vst.msk [vmem:[%s273 + $0x78] sm:$0xff] %vm609, %v2734
      %2833 = vst.msk [vmem:[%s273 + $0x80] sm:$0xff] %vm609, %v2735
      %2834 = vst.msk [vmem:[%s273 + $0x88] sm:$0xff] %vm609, %v2736
      %2835 = vst.msk [vmem:[%s273 + $0x90] sm:$0xff] %vm609, %v2737
      %2836 = vst.msk [vmem:[%s273 + $0x98] sm:$0xff] %vm609, %v2738
      %2837 = vst.msk [vmem:[%s273 + $0xa0] sm:$0xff] %vm609, %v2739
      %2838 = vst.msk [vmem:[%s273 + $0xa8] sm:$0xff] %vm609, %v2740
      %2839 = vst.msk [vmem:[%s273 + $0xb0] sm:$0xff] %vm609, %v2741
      %2840 = vst.msk [vmem:[%s273 + $0xb8] sm:$0xff] %vm609, %v2742
      %2841 = vst.msk [vmem:[%s273 + $0xc0] sm:$0xff] %vm609, %v2743
      %2842 = vst.msk [vmem:[%s273 + $0xc8] sm:$0xff] %vm609, %v2744
      %2843 = vst.msk [vmem:[%s273 + $0xd0] sm:$0xff] %vm609, %v2745
      %2844 = vst.msk [vmem:[%s273 + $0xd8] sm:$0xff] %vm609, %v2746
      %2845 = vst.msk [vmem:[%s273 + $0xe0] sm:$0xff] %vm609, %v2747
      %2846 = vst.msk [vmem:[%s273 + $0xe8] sm:$0xff] %vm609, %v2748
      %2847 = vst.msk [vmem:[%s273 + $0xf0] sm:$0xff] %vm609, %v2749
      %2848 = vst.msk [vmem:[%s273 + $0xf8] sm:$0xff] %vm609, %v2750
      %2849 = vst.msk [vmem:[%s273 + $0x100] sm:$0xff] %vm609, %v2751
      %2850 = vst.msk [vmem:[%s273 + $0x108] sm:$0xff] %vm609, %v2752
      %2851 = vst.msk [vmem:[%s273 + $0x110] sm:$0xff] %vm609, %v2753
      %2852 = vst.msk [vmem:[%s273 + $0x118] sm:$0xff] %vm609, %v2754
      %2853 = vst.msk [vmem:[%s273 + $0x120] sm:$0xff] %vm609, %v2755
      %2854 = vst.msk [vmem:[%s273 + $0x128] sm:$0xff] %vm609, %v2756
      %2855 = vst.msk [vmem:[%s273 + $0x130] sm:$0xff] %vm609, %v2757
      %2856 = vst.msk [vmem:[%s273 + $0x138] sm:$0xff] %vm609, %v2758
      %2857 = vst.msk [vmem:[%s273 + $0x140] sm:$0xff] %vm609, %v2759
      %2858 = vst.msk [vmem:[%s273 + $0x148] sm:$0xff] %vm609, %v2760
      %2859 = vst.msk [vmem:[%s273 + $0x150] sm:$0xff] %vm609, %v2761
      %2860 = vst.msk [vmem:[%s273 + $0x158] sm:$0xff] %vm609, %v2762
      %2861 = vst.msk [vmem:[%s273 + $0x160] sm:$0xff] %vm609, %v2763
      %2862 = vst.msk [vmem:[%s273 + $0x168] sm:$0xff] %vm609, %v2764
      %2863 = vst.msk [vmem:[%s273 + $0x170] sm:$0xff] %vm609, %v2765
      %2864 = vst.msk [vmem:[%s273 + $0x178] sm:$0xff] %vm609, %v2766
      %2865 = vst.msk [vmem:[%s273 + $0x180] sm:$0xff] %vm609, %v2767
      %2866 = vst.msk [vmem:[%s273 + $0x188] sm:$0xff] %vm609, %v2768
      %2867 = vst.msk [vmem:[%s273 + $0x190] sm:$0xff] %vm609, %v2769
      %2868 = vst.msk [vmem:[%s273 + $0x198] sm:$0xff] %vm609, %v2770
      %2869 = vst.msk [vmem:[%s273 + $0x1a0] sm:$0xff] %vm609, %v2771
      %2870 = vst.msk [vmem:[%s273 + $0x1a8] sm:$0xff] %vm609, %v2772
      %2871 = vst.msk [vmem:[%s273 + $0x1b0] sm:$0xff] %vm609, %v2773
      %2872 = vst.msk [vmem:[%s273 + $0x1b8] sm:$0xff] %vm609, %v2774
      %2873 = vst.msk [vmem:[%s273 + $0x1c0] sm:$0xff] %vm609, %v2775
      %2874 = vst.msk [vmem:[%s273 + $0x1c8] sm:$0xff] %vm609, %v2776
      %2875 = vst.msk [vmem:[%s273 + $0x1d0] sm:$0xff] %vm609, %v2777
      %2876 = vst.msk [vmem:[%s273 + $0x1d8] sm:$0xff] %vm609, %v2778
      %2877 = vst.msk [vmem:[%s273 + $0x1e0] sm:$0xff] %vm609, %v2779
      %2878 = vst.msk [vmem:[%s273 + $0x1e8] sm:$0xff] %vm609, %v2780
      %2879 = vst.msk [vmem:[%s273 + $0x1f0] sm:$0xff] %vm609, %v2781
      %2880 = vst.msk [vmem:[%s273 + $0x1f8] sm:$0xff] %vm609, %v2782
      %2881 = vst.msk [vmem:[%s273 + $0x200] sm:$0xff] %vm609, %v2783
      %2882 = vst.msk [vmem:[%s273 + $0x208] sm:$0xff] %vm609, %v2784
      %2883 = vst.msk [vmem:[%s273 + $0x210] sm:$0xff] %vm609, %v2785
      %2884 = vst.msk [vmem:[%s273 + $0x218] sm:$0xff] %vm609, %v2786
      %2885 = vst.msk [vmem:[%s273 + $0x220] sm:$0xff] %vm609, %v2787
      %2886 = vst.msk [vmem:[%s273 + $0x228] sm:$0xff] %vm609, %v2788
      %2887 = vst.msk [vmem:[%s273 + $0x230] sm:$0xff] %vm609, %v2789
      %2888 = vst.msk [vmem:[%s273 + $0x238] sm:$0xff] %vm609, %v2790
      %2889 = vst.msk [vmem:[%s273 + $0x240] sm:$0xff] %vm609, %v2791
      %2890 = vst.msk [vmem:[%s273 + $0x248] sm:$0xff] %vm609, %v2792
      %2891 = vst.msk [vmem:[%s273 + $0x250] sm:$0xff] %vm609, %v2793
      %2892 = vst.msk [vmem:[%s273 + $0x258] sm:$0xff] %vm609, %v2794
      %2893 = vst.msk [vmem:[%s273 + $0x260] sm:$0xff] %vm609, %v2795
      %2894 = vst.msk [vmem:[%s273 + $0x268] sm:$0xff] %vm609, %v2796
      %2895 = vst.msk [vmem:[%s273 + $0x270] sm:$0xff] %vm609, %v2797
      %2896 = vst.msk [vmem:[%s273 + $0x278] sm:$0xff] %vm609, %v2798
      %2897 = vst.msk [vmem:[%s273 + $0x280] sm:$0xff] %vm609, %v2799
      %2898 = vst.msk [vmem:[%s273 + $0x288] sm:$0xff] %vm609, %v2800
      %2899 = vst.msk [vmem:[%s273 + $0x290] sm:$0xff] %vm609, %v2801
      %2900 = vst.msk [vmem:[%s273 + $0x298] sm:$0xff] %vm609, %v2802
      %2901 = vst.msk [vmem:[%s273 + $0x2a0] sm:$0xff] %vm609, %v2803
      %2902 = vst.msk [vmem:[%s273 + $0x2a8] sm:$0xff] %vm609, %v2804
      %2903 = vst.msk [vmem:[%s273 + $0x2b0] sm:$0xff] %vm609, %v2805
      %2904 = vst.msk [vmem:[%s273 + $0x2b8] sm:$0xff] %vm609, %v2806
      %2905 = vst.msk [vmem:[%s273 + $0x2c0] sm:$0xff] %vm609, %v2807
      %2906 = vst.msk [vmem:[%s273 + $0x2c8] sm:$0xff] %vm609, %v2808
      %2907 = vst.msk [vmem:[%s273 + $0x2d0] sm:$0xff] %vm609, %v2809
      %2908 = vst.msk [vmem:[%s273 + $0x2d8] sm:$0xff] %vm609, %v2810
      %2909 = vst.msk [vmem:[%s273 + $0x2e0] sm:$0xff] %vm609, %v2811
      %2910 = vst.msk [vmem:[%s273 + $0x2e8] sm:$0xff] %vm609, %v2812
      %2911 = vst.msk [vmem:[%s273 + $0x2f0] sm:$0xff] %vm609, %v2813
      %2912 = vst.msk [vmem:[%s273 + $0x2f8] sm:$0xff] %vm609, %v2814
      %2913 = vst.msk [vmem:[%s273 + $0x300] sm:$0xff] %vm609, %v2815
      %2914 = vst.msk [vmem:[%s273 + $0x308] sm:$0xff] %vm609, %v2816
      %s2915 = smul.u32 98, %s16
      %p2916 = scmp.lt.s32.totalorder %s2915, 195
      %s2917 = scalar_select %p2916, %s2915, 195
      %s2918 = smul.addr %s2917, 8
      %s2919 = scalar_lea.vmem %s5, %s2918
      // Predicated region
      $region41: #{residual_net_ptq_forward.10} parent=39 // pred_check
        %p2920 = pneg %p154
      $region42: #{residual_net_ptq_forward.10} parent=39 // pred_check_branch
        %2922 = sbr.rel (%p2920) target = $region44
      $region43: #{residual_net_ptq_forward.10} parent=39 // pred_region
        %s2923 = smul.u32 98, %s16
      $region44: #{residual_net_ptq_forward.10} parent=39 // pred_fallthru
        _
    $region40: #{residual_net_ptq_forward.10} parent=5 // pred_fallthru
      _
    %p2924 = scmp.le.s32.totalorder 2, %s11
    // Predicated region
    $region45: #{residual_net_ptq_forward.10} parent=5 // pred_check
      %p2925 = pneg %p2924
    $region46: #{residual_net_ptq_forward.10} parent=5 // pred_check_branch
      %2927 = sbr.rel (%p2925) target = $region48
    $region47: #{residual_net_ptq_forward.10} parent=5 // pred_region
      %s2928 = ssub.s32 %s11, 2
      // Predicated region
      $region49: #{residual_net_ptq_forward.10} parent=47 // pred_check
        %p2929 = pneg %p160
      $region50: #{residual_net_ptq_forward.10} parent=47 // pred_check_branch
        %2931 = sbr.rel (%p2929) target = $region52
      $region51: #{residual_net_ptq_forward.10} parent=47 // pred_region
        %s2932 = smul.u32 98, %s17
        %p2933 = scmp.lt.s32.totalorder %s2932, 195
        %s2934 = scalar_select %p2933, %s2932, 195
        %s2935 = smul.addr %s2934, 8
        %s2936 = scalar_lea.vmem %s5, %s2935
      $region52: #{residual_net_ptq_forward.10} parent=47 // pred_fallthru
        _
    $region48: #{residual_net_ptq_forward.10} parent=5 // pred_fallthru
      _
  $region6: #{residual_net_ptq_forward.10} parent=0 // loop_footer
    %s15 = sadd.s32 1, %s11
  $region7: #{residual_net_ptq_forward.10} parent=0 // loop_footer_branch
    %10 = sbr.rel target = $region3
  $region8: #{residual_net_ptq_forward.10} parent=0 // loop_exit
    _

// kernel: residual_net_ptq_forward.11
$region0: #{residual_net_ptq_forward.11}
  #allocation0 [shape = 'u32[]', space=smem, size = 0x4, offset = 0x4, fixed_abs, tag = 'smem constant byte address 0x4 - core index']
  #allocation1 [shape = 'u32[72,128]{1,0:T(1,128)}', space=vmem, size = 0x9000, scoped, tag = 'internal scratch']
  %s0 = inlined_call_operand.vmem [shape: f32[1568,288], index: 0, kind: input, shape index: {}]
  %s1 = inlined_call_operand.vmem [shape: f32[288,64], index: 1, kind: input, shape index: {}]
  %s2 = inlined_call_operand.vmem [shape: f32[1,64], index: 2, kind: input, shape index: {}]
  %s3 = inlined_call_operand.vmem [shape: f32[1568,1], index: 3, kind: input, shape index: {}]
  %s4 = inlined_call_operand.vmem [shape: f32[1568,64], index: 4, kind: output, shape index: {}]
  %s5 = sld [smem:[#allocation0]]
  $region49: #{residual_net_ptq_forward.11} parent=0
    _
  %s7 = ssub.s32 1, %s5
  %s8 = scalar_select 0, %s7, %s5
  loop: start=0, step=1, limit=4
  $region2: #{residual_net_ptq_forward.11} parent=0 // loop_pre_header
    _
  $region3: #{residual_net_ptq_forward.11} parent=0 // loop_header
    %s10 = sphi 0, %s14
    %p11 = scmp.ge.s32.totalorder %s10, 4
    %s20 = sphi 0, %s22
    %s23 = sphi 0, %s20
    %s24 = sphi 0, %s23
    %s40 = sphi 0, %s24
    %s44 = sphi 0, %s44
    %s46 = sphi 0, %s44
    %s47 = sphi 0, %s46
    %s61 = sphi 0, %s47
    %s65 = sphi 0, %s65
    %s67 = sphi 0, %s65
    %s68 = sphi 0, %s67
    %s82 = sphi 0, %s68
    %s88 = sphi 0, %s90
    %s91 = sphi 0, %s88
    %s92 = sphi 0, %s91
    %s108 = sphi 0, %s92
    %s114 = sphi 0, %s116
    %s117 = sphi 0, %s114
    %s118 = sphi 0, %s117
    %s134 = sphi 0, %s118
  $region4: #{residual_net_ptq_forward.11} parent=0 // loop_header_branch
    %13 = sbr.rel (%p11) target = $region8
  $region5: #{residual_net_ptq_forward.11} parent=0 // loop_body
    %s15 = ssub.s32 %s10, 1
    %s16 = ssub.s32 %s10, 2
    %s17 = sadd.s32 %s10, 1
    %s18 = ssub.s32 %s10, %s17
    %p19 = scmp.eq.s32.totalorder %s18, 0
    %s21 = sadd.s32 %s20, 1
    %s22 = scalar_select %p19, %s20, %s21
    %p25 = pneg %p19
    %p26 = scmp.eq.s32.totalorder %s10, 1
    %p27 = por %p25, %p26
    %p28 = scmp.ne.s32.totalorder %s20, %s23
    %p29 = scmp.eq.s32.totalorder %s10, 0
    %p30 = por %p28, %p29
    %p31 = scmp.ne.s32.totalorder %s20, %s23
    %p32 = scmp.eq.s32.totalorder %s15, 1
    %p33 = por %p31, %p32
    %p34 = scmp.ne.s32.totalorder %s23, %s24
    %p35 = scmp.eq.s32.totalorder %s15, 0
    %p36 = por %p34, %p35
    %p37 = scmp.ne.s32.totalorder %s23, %s24
    %p38 = scmp.eq.s32.totalorder %s16, 1
    %p39 = por %p37, %p38
    %p41 = scmp.ne.s32.totalorder %s24, %s40
    %p42 = scmp.eq.s32.totalorder %s16, 0
    %p43 = por %p41, %p42
    %s45 = sadd.s32 %s44, 1
    %p48 = scmp.eq.s32.totalorder %s10, 1
    %p49 = scmp.ne.s32.totalorder %s44, %s46
    %p50 = scmp.eq.s32.totalorder %s10, 0
    %p51 = por %p49, %p50
    %p52 = scmp.ne.s32.totalorder %s44, %s46
    %p53 = scmp.eq.s32.totalorder %s15, 1
    %p54 = por %p52, %p53
    %p55 = scmp.ne.s32.totalorder %s46, %s47
    %p56 = scmp.eq.s32.totalorder %s15, 0
    %p57 = por %p55, %p56
    %p58 = scmp.ne.s32.totalorder %s46, %s47
    %p59 = scmp.eq.s32.totalorder %s16, 1
    %p60 = por %p58, %p59
    %p62 = scmp.ne.s32.totalorder %s47, %s61
    %p63 = scmp.eq.s32.totalorder %s16, 0
    %p64 = por %p62, %p63
    %s66 = sadd.s32 %s65, 1
    %p69 = scmp.eq.s32.totalorder %s10, 1
    %p70 = scmp.ne.s32.totalorder %s65, %s67
    %p71 = scmp.eq.s32.totalorder %s10, 0
    %p72 = por %p70, %p71
    %p73 = scmp.ne.s32.totalorder %s65, %s67
    %p74 = scmp.eq.s32.totalorder %s15, 1
    %p75 = por %p73, %p74
    %p76 = scmp.ne.s32.totalorder %s67, %s68
    %p77 = scmp.eq.s32.totalorder %s15, 0
    %p78 = por %p76, %p77
    %p79 = scmp.ne.s32.totalorder %s67, %s68
    %p80 = scmp.eq.s32.totalorder %s16, 1
    %p81 = por %p79, %p80
    %p83 = scmp.ne.s32.totalorder %s68, %s82
    %p84 = scmp.eq.s32.totalorder %s16, 0
    %p85 = por %p83, %p84
    %s86 = ssub.s32 %s10, %s17
    %p87 = scmp.eq.s32.totalorder %s86, 0
    %s89 = sadd.s32 %s88, 1
    %s90 = scalar_select %p87, %s88, %s89
    %p93 = pneg %p87
    %p94 = scmp.eq.s32.totalorder %s10, 1
    %p95 = por %p93, %p94
    %p96 = scmp.ne.s32.totalorder %s88, %s91
    %p97 = scmp.eq.s32.totalorder %s10, 0
    %p98 = por %p96, %p97
    %p99 = scmp.ne.s32.totalorder %s88, %s91
    %p100 = scmp.eq.s32.totalorder %s15, 1
    %p101 = por %p99, %p100
    %p102 = scmp.ne.s32.totalorder %s91, %s92
    %p103 = scmp.eq.s32.totalorder %s15, 0
    %p104 = por %p102, %p103
    %p105 = scmp.ne.s32.totalorder %s91, %s92
    %p106 = scmp.eq.s32.totalorder %s16, 1
    %p107 = por %p105, %p106
    %p109 = scmp.ne.s32.totalorder %s92, %s108
    %p110 = scmp.eq.s32.totalorder %s16, 0
    %p111 = por %p109, %p110
    %s112 = ssub.s32 %s10, %s17
    %p113 = scmp.eq.s32.totalorder %s112, 0
    %s115 = sadd.s32 %s114, 1
    %s116 = scalar_select %p113, %s114, %s115
    %p119 = pneg %p113
    %p120 = scmp.eq.s32.totalorder %s10, 1
    %p121 = por %p119, %p120
    %p122 = scmp.ne.s32.totalorder %s114, %s117
    %p123 = scmp.eq.s32.totalorder %s10, 0
    %p124 = por %p122, %p123
    %p125 = scmp.ne.s32.totalorder %s114, %s117
    %p126 = scmp.eq.s32.totalorder %s15, 1
    %p127 = por %p125, %p126
    %p128 = scmp.ne.s32.totalorder %s117, %s118
    %p129 = scmp.eq.s32.totalorder %s15, 0
    %p130 = por %p128, %p129
    %p131 = scmp.ne.s32.totalorder %s117, %s118
    %p132 = scmp.eq.s32.totalorder %s16, 1
    %p133 = por %p131, %p132
    %p135 = scmp.ne.s32.totalorder %s118, %s134
    %p136 = scmp.eq.s32.totalorder %s16, 0
    %p137 = por %p135, %p136
    %p138 = scmp.le.s32.totalorder 1, %s10
    %p139 = scmp.lt.s32.totalorder %s10, 3
    %p140 = pnand %p138, %p139
    %p141 = pneg %p140
    // Predicated region
    $region9: #{residual_net_ptq_forward.11} parent=5 // pred_check
      _
    $region10: #{residual_net_ptq_forward.11} parent=5 // pred_check_branch
      %143 = sbr.rel (%p140) target = $region12
    $region11: #{residual_net_ptq_forward.11} parent=5 // pred_region
      %s144 = ssub.s32 %s10, 1
      // Predicated region
      $region13: #{residual_net_ptq_forward.11} parent=11 // pred_check
        %p145 = pneg %p57
      $region14: #{residual_net_ptq_forward.11} parent=11 // pred_check_branch
        %147 = sbr.rel (%p145) target = $region16
      $region15: #{residual_net_ptq_forward.11} parent=11 // pred_region
        _
      $region16: #{residual_net_ptq_forward.11} parent=11 // pred_fallthru
        _
      // Predicated region
      $region17: #{residual_net_ptq_forward.11} parent=11 // pred_check
        %p148 = pneg %p78
      $region18: #{residual_net_ptq_forward.11} parent=11 // pred_check_branch
        %150 = sbr.rel (%p148) target = $region20
      $region19: #{residual_net_ptq_forward.11} parent=11 // pred_region
        _
      $region20: #{residual_net_ptq_forward.11} parent=11 // pred_fallthru
        _
    $region12: #{residual_net_ptq_forward.11} parent=5 // pred_fallthru
      _
    %p151 = scmp.lt.s32.totalorder %s10, 2
    // Predicated region
    $region21: #{residual_net_ptq_forward.11} parent=5 // pred_check
      %p152 = pneg %p151
    $region22: #{residual_net_ptq_forward.11} parent=5 // pred_check_branch
      %154 = sbr.rel (%p152) target = $region24
    $region23: #{residual_net_ptq_forward.11} parent=5 // pred_region
      // Predicated region
      $region25: #{residual_net_ptq_forward.11} parent=23 // pred_check
        %p155 = pneg %p30
      $region26: #{residual_net_ptq_forward.11} parent=23 // pred_check_branch
        %157 = sbr.rel (%p155) target = $region28
      $region27: #{residual_net_ptq_forward.11} parent=23 // pred_region
        %s158 = smul.u32 98, %s10
        %p159 = scmp.lt.s32.totalorder %s158, 195
        %s160 = scalar_select %p159, %s158, 195
        %s161 = smul.addr %s160, 3
        %s162 = smul.addr %s161, 8
        %s163 = scalar_lea.vmem %s0, %s162
        %s164 = smul.u32 98, %s10
      $region28: #{residual_net_ptq_forward.11} parent=23 // pred_fallthru
        _
      // Predicated region
      $region29: #{residual_net_ptq_forward.11} parent=23 // pred_check
        %p165 = pneg %p98
      $region30: #{residual_net_ptq_forward.11} parent=23 // pred_check_branch
        %167 = sbr.rel (%p165) target = $region32
      $region31: #{residual_net_ptq_forward.11} parent=23 // pred_region
        %s168 = smul.u32 98, %s10
        %p169 = scmp.lt.s32.totalorder %s168, 195
        %s170 = scalar_select %p169, %s168, 195
        %s171 = smul.addr %s170, 8
        %s172 = scalar_lea.vmem %s3, %s171
        %s173 = smul.u32 98, %s10
      $region32: #{residual_net_ptq_forward.11} parent=23 // pred_fallthru
        _
    $region24: #{residual_net_ptq_forward.11} parent=5 // pred_fallthru
      _
    %p174 = scmp.le.s32.totalorder 1, %s10
    %p175 = scmp.lt.s32.totalorder %s10, 3
    %p176 = pnand %p174, %p175
    %p177 = pneg %p176
    // Predicated region
    $region33: #{residual_net_ptq_forward.11} parent=5 // pred_check
      _
    $region34: #{residual_net_ptq_forward.11} parent=5 // pred_check_branch
      %179 = sbr.rel (%p176) target = $region36
    $region35: #{residual_net_ptq_forward.11} parent=5 // pred_region
      %s180 = ssub.s32 %s10, 1
      %s181 = smul.u32 98, %s15
      %p182 = scmp.lt.s32.totalorder %s181, 195
      %s183 = scalar_select %p182, %s181, 195
      %s184 = smul.addr %s183, 3
      %s185 = smul.addr %s184, 8
      %s186 = scalar_lea.vmem %s0, %s185
      %p187 = pneg %p36
      %p188 = pneg %p33
      %p189 = pneg %p57
      %p190 = pneg %p54
      %p191 = pneg %p78
      %p192 = pneg %p75
      %s193 = smul.u32 98, %s15
      %p194 = scmp.lt.s32.totalorder %s193, 195
      %s195 = scalar_select %p194, %s193, 195
      %s196 = smul.addr %s195, 8
      %s197 = scalar_lea.vmem %s3, %s196
      %p198 = pneg %p104
      %p199 = pneg %p101
      %p200 = pneg %p130
      %p201 = pneg %p127
      %s202 = smul.u32 98, %s15
      %p203 = scmp.lt.s32.totalorder %s202, 195
      %s204 = scalar_select %p203, %s202, 195
      %s205 = smul.addr %s204, 8
      %s206 = scalar_lea.vmem %s4, %s205
      %s207 = smul.u32 98, %s15
      %p208 = scmp.lt.s32.totalorder %s207, 195
      %s209 = scalar_select %p208, %s207, 195
      %s210 = smul.addr %s209, 3
      %s211 = smul.addr %s210, 8
      %s212 = scalar_lea.vmem %s0, %s211
      %s213 = smul.u32 98, %s15
      %s214 = smul.u32 98, %s15
      %p215 = scmp.lt.s32.totalorder %s214, 195
      %s216 = scalar_select %p215, %s214, 195
      %s217 = smul.addr %s216, 8
      %s218 = scalar_lea.vmem %s3, %s217
      %s219 = smul.u32 98, %s15
      %s220 = smul.u32 98, %s15
      %p221 = scmp.lt.s32.totalorder %s220, 195
      %s222 = scalar_select %p221, %s220, 195
      %s223 = smul.addr %s222, 8
      %s224 = scalar_lea.vmem %s4, %s223
      %s225 = smul.u32 98, %s15
      %v226 = vld [vmem:[%s212] sm:$0xff]
      %v227 = vld [vmem:[%s212 + $0x8] sm:$0xff]
      %v228 = vld [vmem:[%s212 + $0x10] sm:$0xff]
      %v229 = vld [vmem:[%s212 + $0x18] sm:$0xff]
      %v230 = vld [vmem:[%s212 + $0x20] sm:$0xff]
      %v231 = vld [vmem:[%s212 + $0x28] sm:$0xff]
      %v232 = vld [vmem:[%s212 + $0x30] sm:$0xff]
      %v233 = vld [vmem:[%s212 + $0x38] sm:$0xff]
      %v234 = vld [vmem:[%s212 + $0x40] sm:$0xff]
      %v235 = vld [vmem:[%s212 + $0x48] sm:$0xff]
      %v236 = vld [vmem:[%s212 + $0x50] sm:$0xff]
      %v237 = vld [vmem:[%s212 + $0x58] sm:$0xff]
      %v238 = vld [vmem:[%s212 + $0x60] sm:$0xff]
      %v239 = vld [vmem:[%s212 + $0x68] sm:$0xff]
      %v240 = vld [vmem:[%s212 + $0x70] sm:$0xff]
      %v241 = vld [vmem:[%s212 + $0x78] sm:$0xff]
      %v242 = vld [vmem:[%s212 + $0x80] sm:$0xff]
      %v243 = vld [vmem:[%s212 + $0x88] sm:$0xff]
      %v244 = vld [vmem:[%s212 + $0x90] sm:$0xff]
      %v245 = vld [vmem:[%s212 + $0x98] sm:$0xff]
      %v246 = vld [vmem:[%s212 + $0xa0] sm:$0xff]
      %v247 = vld [vmem:[%s212 + $0xa8] sm:$0xff]
      %v248 = vld [vmem:[%s212 + $0xb0] sm:$0xff]
      %v249 = vld [vmem:[%s212 + $0xb8] sm:$0xff]
      %v250 = vld [vmem:[%s212 + $0xc0] sm:$0xff]
      %v251 = vld [vmem:[%s212 + $0xc8] sm:$0xff]
      %v252 = vld [vmem:[%s212 + $0xd0] sm:$0xff]
      %v253 = vld [vmem:[%s212 + $0xd8] sm:$0xff]
      %v254 = vld [vmem:[%s212 + $0xe0] sm:$0xff]
      %v255 = vld [vmem:[%s212 + $0xe8] sm:$0xff]
      %v256 = vld [vmem:[%s212 + $0xf0] sm:$0xff]
      %v257 = vld [vmem:[%s212 + $0xf8] sm:$0xff]
      %v258 = vld [vmem:[%s212 + $0x100] sm:$0xff]
      %v259 = vld [vmem:[%s212 + $0x108] sm:$0xff]
      %v260 = vld [vmem:[%s212 + $0x110] sm:$0xff]
      %v261 = vld [vmem:[%s212 + $0x118] sm:$0xff]
      %v262 = vld [vmem:[%s212 + $0x120] sm:$0xff]
      %v263 = vld [vmem:[%s212 + $0x128] sm:$0xff]
      %v264 = vld [vmem:[%s212 + $0x130] sm:$0xff]
      %v265 = vld [vmem:[%s212 + $0x138] sm:$0xff]
      %v266 = vld [vmem:[%s212 + $0x140] sm:$0xff]
      %v267 = vld [vmem:[%s212 + $0x148] sm:$0xff]
      %v268 = vld [vmem:[%s212 + $0x150] sm:$0xff]
      %v269 = vld [vmem:[%s212 + $0x158] sm:$0xff]
      %v270 = vld [vmem:[%s212 + $0x160] sm:$0xff]
      %v271 = vld [vmem:[%s212 + $0x168] sm:$0xff]
      %v272 = vld [vmem:[%s212 + $0x170] sm:$0xff]
      %v273 = vld [vmem:[%s212 + $0x178] sm:$0xff]
      %v274 = vld [vmem:[%s212 + $0x180] sm:$0xff]
      %v275 = vld [vmem:[%s212 + $0x188] sm:$0xff]
      %v276 = vld [vmem:[%s212 + $0x190] sm:$0xff]
      %v277 = vld [vmem:[%s212 + $0x198] sm:$0xff]
      %v278 = vld [vmem:[%s212 + $0x1a0] sm:$0xff]
      %v279 = vld [vmem:[%s212 + $0x1a8] sm:$0xff]
      %v280 = vld [vmem:[%s212 + $0x1b0] sm:$0xff]
      %v281 = vld [vmem:[%s212 + $0x1b8] sm:$0xff]
      %v282 = vld [vmem:[%s212 + $0x1c0] sm:$0xff]
      %v283 = vld [vmem:[%s212 + $0x1c8] sm:$0xff]
      %v284 = vld [vmem:[%s212 + $0x1d0] sm:$0xff]
      %v285 = vld [vmem:[%s212 + $0x1d8] sm:$0xff]
      %v286 = vld [vmem:[%s212 + $0x1e0] sm:$0xff]
      %v287 = vld [vmem:[%s212 + $0x1e8] sm:$0xff]
      %v288 = vld [vmem:[%s212 + $0x1f0] sm:$0xff]
      %v289 = vld [vmem:[%s212 + $0x1f8] sm:$0xff]
      %v290 = vld [vmem:[%s212 + $0x200] sm:$0xff]
      %v291 = vld [vmem:[%s212 + $0x208] sm:$0xff]
      %v292 = vld [vmem:[%s212 + $0x210] sm:$0xff]
      %v293 = vld [vmem:[%s212 + $0x218] sm:$0xff]
      %v294 = vld [vmem:[%s212 + $0x220] sm:$0xff]
      %v295 = vld [vmem:[%s212 + $0x228] sm:$0xff]
      %v296 = vld [vmem:[%s212 + $0x230] sm:$0xff]
      %v297 = vld [vmem:[%s212 + $0x238] sm:$0xff]
      %v298 = vld [vmem:[%s212 + $0x240] sm:$0xff]
      %v299 = vld [vmem:[%s212 + $0x248] sm:$0xff]
      %v300 = vld [vmem:[%s212 + $0x250] sm:$0xff]
      %v301 = vld [vmem:[%s212 + $0x258] sm:$0xff]
      %v302 = vld [vmem:[%s212 + $0x260] sm:$0xff]
      %v303 = vld [vmem:[%s212 + $0x268] sm:$0xff]
      %v304 = vld [vmem:[%s212 + $0x270] sm:$0xff]
      %v305 = vld [vmem:[%s212 + $0x278] sm:$0xff]
      %v306 = vld [vmem:[%s212 + $0x280] sm:$0xff]
      %v307 = vld [vmem:[%s212 + $0x288] sm:$0xff]
      %v308 = vld [vmem:[%s212 + $0x290] sm:$0xff]
      %v309 = vld [vmem:[%s212 + $0x298] sm:$0xff]
      %v310 = vld [vmem:[%s212 + $0x2a0] sm:$0xff]
      %v311 = vld [vmem:[%s212 + $0x2a8] sm:$0xff]
      %v312 = vld [vmem:[%s212 + $0x2b0] sm:$0xff]
      %v313 = vld [vmem:[%s212 + $0x2b8] sm:$0xff]
      %v314 = vld [vmem:[%s212 + $0x2c0] sm:$0xff]
      %v315 = vld [vmem:[%s212 + $0x2c8] sm:$0xff]
      %v316 = vld [vmem:[%s212 + $0x2d0] sm:$0xff]
      %v317 = vld [vmem:[%s212 + $0x2d8] sm:$0xff]
      %v318 = vld [vmem:[%s212 + $0x2e0] sm:$0xff]
      %v319 = vld [vmem:[%s212 + $0x2e8] sm:$0xff]
      %v320 = vld [vmem:[%s212 + $0x2f0] sm:$0xff]
      %v321 = vld [vmem:[%s212 + $0x2f8] sm:$0xff]
      %v322 = vld [vmem:[%s212 + $0x300] sm:$0xff]
      %v323 = vld [vmem:[%s212 + $0x308] sm:$0xff]
      %v324 = vld [vmem:[%s212 + $0x310] sm:$0xff]
      %v325 = vld [vmem:[%s212 + $0x318] sm:$0xff]
      %v326 = vld [vmem:[%s212 + $0x320] sm:$0xff]
      %v327 = vld [vmem:[%s212 + $0x328] sm:$0xff]
      %v328 = vld [vmem:[%s212 + $0x330] sm:$0xff]
      %v329 = vld [vmem:[%s212 + $0x338] sm:$0xff]
      %v330 = vld [vmem:[%s212 + $0x340] sm:$0xff]
      %v331 = vld [vmem:[%s212 + $0x348] sm:$0xff]
      %v332 = vld [vmem:[%s212 + $0x350] sm:$0xff]
      %v333 = vld [vmem:[%s212 + $0x358] sm:$0xff]
      %v334 = vld [vmem:[%s212 + $0x360] sm:$0xff]
      %v335 = vld [vmem:[%s212 + $0x368] sm:$0xff]
      %v336 = vld [vmem:[%s212 + $0x370] sm:$0xff]
      %v337 = vld [vmem:[%s212 + $0x378] sm:$0xff]
      %v338 = vld [vmem:[%s212 + $0x380] sm:$0xff]
      %v339 = vld [vmem:[%s212 + $0x388] sm:$0xff]
      %v340 = vld [vmem:[%s212 + $0x390] sm:$0xff]
      %v341 = vld [vmem:[%s212 + $0x398] sm:$0xff]
      %v342 = vld [vmem:[%s212 + $0x3a0] sm:$0xff]
      %v343 = vld [vmem:[%s212 + $0x3a8] sm:$0xff]
      %v344 = vld [vmem:[%s212 + $0x3b0] sm:$0xff]
      %v345 = vld [vmem:[%s212 + $0x3b8] sm:$0xff]
      %v346 = vld [vmem:[%s212 + $0x3c0] sm:$0xff]
      %v347 = vld [vmem:[%s212 + $0x3c8] sm:$0xff]
      %v348 = vld [vmem:[%s212 + $0x3d0] sm:$0xff]
      %v349 = vld [vmem:[%s212 + $0x3d8] sm:$0xff]
      %v350 = vld [vmem:[%s212 + $0x3e0] sm:$0xff]
      %v351 = vld [vmem:[%s212 + $0x3e8] sm:$0xff]
      %v352 = vld [vmem:[%s212 + $0x3f0] sm:$0xff]
      %v353 = vld [vmem:[%s212 + $0x3f8] sm:$0xff]
      %v354 = vld [vmem:[%s212 + $0x400] sm:$0xff]
      %v355 = vld [vmem:[%s212 + $0x408] sm:$0xff]
      %v356 = vld [vmem:[%s212 + $0x410] sm:$0xff]
      %v357 = vld [vmem:[%s212 + $0x418] sm:$0xff]
      %v358 = vld [vmem:[%s212 + $0x420] sm:$0xff]
      %v359 = vld [vmem:[%s212 + $0x428] sm:$0xff]
      %v360 = vld [vmem:[%s212 + $0x430] sm:$0xff]
      %v361 = vld [vmem:[%s212 + $0x438] sm:$0xff]
      %v362 = vld [vmem:[%s212 + $0x440] sm:$0xff]
      %v363 = vld [vmem:[%s212 + $0x448] sm:$0xff]
      %v364 = vld [vmem:[%s212 + $0x450] sm:$0xff]
      %v365 = vld [vmem:[%s212 + $0x458] sm:$0xff]
      %v366 = vld [vmem:[%s212 + $0x460] sm:$0xff]
      %v367 = vld [vmem:[%s212 + $0x468] sm:$0xff]
      %v368 = vld [vmem:[%s212 + $0x470] sm:$0xff]
      %v369 = vld [vmem:[%s212 + $0x478] sm:$0xff]
      %v370 = vld [vmem:[%s212 + $0x480] sm:$0xff]
      %v371 = vld [vmem:[%s212 + $0x488] sm:$0xff]
      %v372 = vld [vmem:[%s212 + $0x490] sm:$0xff]
      %v373 = vld [vmem:[%s212 + $0x498] sm:$0xff]
      %v374 = vld [vmem:[%s212 + $0x4a0] sm:$0xff]
      %v375 = vld [vmem:[%s212 + $0x4a8] sm:$0xff]
      %v376 = vld [vmem:[%s212 + $0x4b0] sm:$0xff]
      %v377 = vld [vmem:[%s212 + $0x4b8] sm:$0xff]
      %v378 = vld [vmem:[%s212 + $0x4c0] sm:$0xff]
      %v379 = vld [vmem:[%s212 + $0x4c8] sm:$0xff]
      %v380 = vld [vmem:[%s212 + $0x4d0] sm:$0xff]
      %v381 = vld [vmem:[%s212 + $0x4d8] sm:$0xff]
      %v382 = vld [vmem:[%s212 + $0x4e0] sm:$0xff]
      %v383 = vld [vmem:[%s212 + $0x4e8] sm:$0xff]
      %v384 = vld [vmem:[%s212 + $0x4f0] sm:$0xff]
      %v385 = vld [vmem:[%s212 + $0x4f8] sm:$0xff]
      %v386 = vld [vmem:[%s212 + $0x500] sm:$0xff]
      %v387 = vld [vmem:[%s212 + $0x508] sm:$0xff]
      %v388 = vld [vmem:[%s212 + $0x510] sm:$0xff]
      %v389 = vld [vmem:[%s212 + $0x518] sm:$0xff]
      %v390 = vld [vmem:[%s212 + $0x520] sm:$0xff]
      %v391 = vld [vmem:[%s212 + $0x528] sm:$0xff]
      %v392 = vld [vmem:[%s212 + $0x530] sm:$0xff]
      %v393 = vld [vmem:[%s212 + $0x538] sm:$0xff]
      %v394 = vld [vmem:[%s212 + $0x540] sm:$0xff]
      %v395 = vld [vmem:[%s212 + $0x548] sm:$0xff]
      %v396 = vld [vmem:[%s212 + $0x550] sm:$0xff]
      %v397 = vld [vmem:[%s212 + $0x558] sm:$0xff]
      %v398 = vld [vmem:[%s212 + $0x560] sm:$0xff]
      %v399 = vld [vmem:[%s212 + $0x568] sm:$0xff]
      %v400 = vld [vmem:[%s212 + $0x570] sm:$0xff]
      %v401 = vld [vmem:[%s212 + $0x578] sm:$0xff]
      %v402 = vld [vmem:[%s212 + $0x580] sm:$0xff]
      %v403 = vld [vmem:[%s212 + $0x588] sm:$0xff]
      %v404 = vld [vmem:[%s212 + $0x590] sm:$0xff]
      %v405 = vld [vmem:[%s212 + $0x598] sm:$0xff]
      %v406 = vld [vmem:[%s212 + $0x5a0] sm:$0xff]
      %v407 = vld [vmem:[%s212 + $0x5a8] sm:$0xff]
      %v408 = vld [vmem:[%s212 + $0x5b0] sm:$0xff]
      %v409 = vld [vmem:[%s212 + $0x5b8] sm:$0xff]
      %v410 = vld [vmem:[%s212 + $0x5c0] sm:$0xff]
      %v411 = vld [vmem:[%s212 + $0x5c8] sm:$0xff]
      %v412 = vld [vmem:[%s212 + $0x5d0] sm:$0xff]
      %v413 = vld [vmem:[%s212 + $0x5d8] sm:$0xff]
      %v414 = vld [vmem:[%s212 + $0x5e0] sm:$0xff]
      %v415 = vld [vmem:[%s212 + $0x5e8] sm:$0xff]
      %v416 = vld [vmem:[%s212 + $0x5f0] sm:$0xff]
      %v417 = vld [vmem:[%s212 + $0x5f8] sm:$0xff]
      %v418 = vld [vmem:[%s212 + $0x600] sm:$0xff]
      %v419 = vld [vmem:[%s212 + $0x608] sm:$0xff]
      %v420 = vld [vmem:[%s212 + $0x610] sm:$0xff]
      %v421 = vld [vmem:[%s212 + $0x618] sm:$0xff]
      %v422 = vld [vmem:[%s212 + $0x620] sm:$0xff]
      %v423 = vld [vmem:[%s212 + $0x628] sm:$0xff]
      %v424 = vld [vmem:[%s212 + $0x630] sm:$0xff]
      %v425 = vld [vmem:[%s212 + $0x638] sm:$0xff]
      %v426 = vld [vmem:[%s212 + $0x640] sm:$0xff]
      %v427 = vld [vmem:[%s212 + $0x648] sm:$0xff]
      %v428 = vld [vmem:[%s212 + $0x650] sm:$0xff]
      %v429 = vld [vmem:[%s212 + $0x658] sm:$0xff]
      %v430 = vld [vmem:[%s212 + $0x660] sm:$0xff]
      %v431 = vld [vmem:[%s212 + $0x668] sm:$0xff]
      %v432 = vld [vmem:[%s212 + $0x670] sm:$0xff]
      %v433 = vld [vmem:[%s212 + $0x678] sm:$0xff]
      %v434 = vld [vmem:[%s212 + $0x680] sm:$0xff]
      %v435 = vld [vmem:[%s212 + $0x688] sm:$0xff]
      %v436 = vld [vmem:[%s212 + $0x690] sm:$0xff]
      %v437 = vld [vmem:[%s212 + $0x698] sm:$0xff]
      %v438 = vld [vmem:[%s212 + $0x6a0] sm:$0xff]
      %v439 = vld [vmem:[%s212 + $0x6a8] sm:$0xff]
      %v440 = vld [vmem:[%s212 + $0x6b0] sm:$0xff]
      %v441 = vld [vmem:[%s212 + $0x6b8] sm:$0xff]
      %v442 = vld [vmem:[%s212 + $0x6c0] sm:$0xff]
      %v443 = vld [vmem:[%s212 + $0x6c8] sm:$0xff]
      %v444 = vld [vmem:[%s212 + $0x6d0] sm:$0xff]
      %v445 = vld [vmem:[%s212 + $0x6d8] sm:$0xff]
      %v446 = vld [vmem:[%s212 + $0x6e0] sm:$0xff]
      %v447 = vld [vmem:[%s212 + $0x6e8] sm:$0xff]
      %v448 = vld [vmem:[%s212 + $0x6f0] sm:$0xff]
      %v449 = vld [vmem:[%s212 + $0x6f8] sm:$0xff]
      %v450 = vld [vmem:[%s212 + $0x700] sm:$0xff]
      %v451 = vld [vmem:[%s212 + $0x708] sm:$0xff]
      %v452 = vld [vmem:[%s212 + $0x710] sm:$0xff]
      %v453 = vld [vmem:[%s212 + $0x718] sm:$0xff]
      %v454 = vld [vmem:[%s212 + $0x720] sm:$0xff]
      %v455 = vld [vmem:[%s212 + $0x728] sm:$0xff]
      %v456 = vld [vmem:[%s212 + $0x730] sm:$0xff]
      %v457 = vld [vmem:[%s212 + $0x738] sm:$0xff]
      %v458 = vld [vmem:[%s212 + $0x740] sm:$0xff]
      %v459 = vld [vmem:[%s212 + $0x748] sm:$0xff]
      %v460 = vld [vmem:[%s212 + $0x750] sm:$0xff]
      %v461 = vld [vmem:[%s212 + $0x758] sm:$0xff]
      %v462 = vld [vmem:[%s212 + $0x760] sm:$0xff]
      %v463 = vld [vmem:[%s212 + $0x768] sm:$0xff]
      %v464 = vld [vmem:[%s212 + $0x770] sm:$0xff]
      %v465 = vld [vmem:[%s212 + $0x778] sm:$0xff]
      %v466 = vld [vmem:[%s212 + $0x780] sm:$0xff]
      %v467 = vld [vmem:[%s212 + $0x788] sm:$0xff]
      %v468 = vld [vmem:[%s212 + $0x790] sm:$0xff]
      %v469 = vld [vmem:[%s212 + $0x798] sm:$0xff]
      %v470 = vld [vmem:[%s212 + $0x7a0] sm:$0xff]
      %v471 = vld [vmem:[%s212 + $0x7a8] sm:$0xff]
      %v472 = vld [vmem:[%s212 + $0x7b0] sm:$0xff]
      %v473 = vld [vmem:[%s212 + $0x7b8] sm:$0xff]
      %v474 = vld [vmem:[%s212 + $0x7c0] sm:$0xff]
      %v475 = vld [vmem:[%s212 + $0x7c8] sm:$0xff]
      %v476 = vld [vmem:[%s212 + $0x7d0] sm:$0xff]
      %v477 = vld [vmem:[%s212 + $0x7d8] sm:$0xff]
      %v478 = vld [vmem:[%s212 + $0x7e0] sm:$0xff]
      %v479 = vld [vmem:[%s212 + $0x7e8] sm:$0xff]
      %v480 = vld [vmem:[%s212 + $0x7f0] sm:$0xff]
      %v481 = vld [vmem:[%s212 + $0x7f8] sm:$0xff]
      %v482 = vld [vmem:[%s212 + $0x800] sm:$0xff]
      %v483 = vld [vmem:[%s212 + $0x808] sm:$0xff]
      %v484 = vld [vmem:[%s212 + $0x810] sm:$0xff]
      %v485 = vld [vmem:[%s212 + $0x818] sm:$0xff]
      %v486 = vld [vmem:[%s212 + $0x820] sm:$0xff]
      %v487 = vld [vmem:[%s212 + $0x828] sm:$0xff]
      %v488 = vld [vmem:[%s212 + $0x830] sm:$0xff]
      %v489 = vld [vmem:[%s212 + $0x838] sm:$0xff]
      %v490 = vld [vmem:[%s212 + $0x840] sm:$0xff]
      %v491 = vld [vmem:[%s212 + $0x848] sm:$0xff]
      %v492 = vld [vmem:[%s212 + $0x850] sm:$0xff]
      %v493 = vld [vmem:[%s212 + $0x858] sm:$0xff]
      %v494 = vld [vmem:[%s212 + $0x860] sm:$0xff]
      %v495 = vld [vmem:[%s212 + $0x868] sm:$0xff]
      %v496 = vld [vmem:[%s212 + $0x870] sm:$0xff]
      %v497 = vld [vmem:[%s212 + $0x878] sm:$0xff]
      %v498 = vld [vmem:[%s212 + $0x880] sm:$0xff]
      %v499 = vld [vmem:[%s212 + $0x888] sm:$0xff]
      %v500 = vld [vmem:[%s212 + $0x890] sm:$0xff]
      %v501 = vld [vmem:[%s212 + $0x898] sm:$0xff]
      %v502 = vld [vmem:[%s212 + $0x8a0] sm:$0xff]
      %v503 = vld [vmem:[%s212 + $0x8a8] sm:$0xff]
      %v504 = vld [vmem:[%s212 + $0x8b0] sm:$0xff]
      %v505 = vld [vmem:[%s212 + $0x8b8] sm:$0xff]
      %v506 = vld [vmem:[%s212 + $0x8c0] sm:$0xff]
      %v507 = vld [vmem:[%s212 + $0x8c8] sm:$0xff]
      %v508 = vld [vmem:[%s212 + $0x8d0] sm:$0xff]
      %v509 = vld [vmem:[%s212 + $0x8d8] sm:$0xff]
      %v510 = vld [vmem:[%s212 + $0x8e0] sm:$0xff]
      %v511 = vld [vmem:[%s212 + $0x8e8] sm:$0xff]
      %v512 = vld [vmem:[%s212 + $0x8f0] sm:$0xff]
      %v513 = vld [vmem:[%s212 + $0x8f8] sm:$0xff]
      %v514 = vld [vmem:[%s212 + $0x900] sm:$0xff]
      %v515 = vld [vmem:[%s212 + $0x908] sm:$0xff]
      %v516 = vld [vmem:[%s212 + $0x910] sm:$0xff]
      %v517 = vld [vmem:[%s212 + $0x918] sm:$0xff]
      %v518 = vld [vmem:[%s212 + $0x920] sm:$0xff]
      %v519 = vld [vmem:[%s212 + $0x928] sm:$0xff]
      %v520 = vld [vmem:[%s1] sm:$0xff]
      %v521 = vld [vmem:[%s1 + $0x8] sm:$0xff]
      %v522 = vld [vmem:[%s1 + $0x10] sm:$0xff]
      %v523 = vld [vmem:[%s1 + $0x18] sm:$0xff]
      %v524 = vld [vmem:[%s1 + $0x20] sm:$0xff]
      %v525 = vld [vmem:[%s1 + $0x28] sm:$0xff]
      %v526 = vld [vmem:[%s1 + $0x30] sm:$0xff]
      %v527 = vld [vmem:[%s1 + $0x38] sm:$0xff]
      %v528 = vld [vmem:[%s1 + $0x40] sm:$0xff]
      %v529 = vld [vmem:[%s1 + $0x48] sm:$0xff]
      %v530 = vld [vmem:[%s1 + $0x50] sm:$0xff]
      %v531 = vld [vmem:[%s1 + $0x58] sm:$0xff]
      %v532 = vld [vmem:[%s1 + $0x60] sm:$0xff]
      %v533 = vld [vmem:[%s1 + $0x68] sm:$0xff]
      %v534 = vld [vmem:[%s1 + $0x70] sm:$0xff]
      %v535 = vld [vmem:[%s1 + $0x78] sm:$0xff]
      %v536 = vld [vmem:[%s1 + $0x80] sm:$0xff]
      %v537 = vld [vmem:[%s1 + $0x88] sm:$0xff]
      %v538 = vld [vmem:[%s1 + $0x90] sm:$0xff]
      %v539 = vld [vmem:[%s1 + $0x98] sm:$0xff]
      %v540 = vld [vmem:[%s1 + $0xa0] sm:$0xff]
      %v541 = vld [vmem:[%s1 + $0xa8] sm:$0xff]
      %v542 = vld [vmem:[%s1 + $0xb0] sm:$0xff]
      %v543 = vld [vmem:[%s1 + $0xb8] sm:$0xff]
      %v544 = vld [vmem:[%s1 + $0xc0] sm:$0xff]
      %v545 = vld [vmem:[%s1 + $0xc8] sm:$0xff]
      %v546 = vld [vmem:[%s1 + $0xd0] sm:$0xff]
      %v547 = vld [vmem:[%s1 + $0xd8] sm:$0xff]
      %v548 = vld [vmem:[%s1 + $0xe0] sm:$0xff]
      %v549 = vld [vmem:[%s1 + $0xe8] sm:$0xff]
      %v550 = vld [vmem:[%s1 + $0xf0] sm:$0xff]
      %v551 = vld [vmem:[%s1 + $0xf8] sm:$0xff]
      %v552 = vld [vmem:[%s1 + $0x100] sm:$0xff]
      %v553 = vld [vmem:[%s1 + $0x108] sm:$0xff]
      %v554 = vld [vmem:[%s1 + $0x110] sm:$0xff]
      %v555 = vld [vmem:[%s1 + $0x118] sm:$0xff]
      %v556 = vld [vmem:[%s2] sm:$0x1]
      %v558 = vperm.slane %v556, 0
      %vm560 = vcmask 261120
      %v562 = vsel %vm560, %v228, 0
      %v565 = vsel %vm560, %v231, 0
      %v568 = vsel %vm560, %v234, 0
      %v571 = vsel %vm560, %v237, 0
      %v574 = vsel %vm560, %v240, 0
      %v577 = vsel %vm560, %v243, 0
      %v580 = vsel %vm560, %v246, 0
      %v583 = vsel %vm560, %v249, 0
      %v586 = vsel %vm560, %v252, 0
      %v589 = vsel %vm560, %v255, 0
      %v592 = vsel %vm560, %v258, 0
      %v595 = vsel %vm560, %v261, 0
      %v598 = vsel %vm560, %v264, 0
      %v601 = vsel %vm560, %v267, 0
      %v604 = vsel %vm560, %v270, 0
      %v607 = vsel %vm560, %v273, 0
      %v610 = vsel %vm560, %v276, 0
      %v613 = vsel %vm560, %v279, 0
      %v616 = vsel %vm560, %v282, 0
      %v619 = vsel %vm560, %v285, 0
      %v622 = vsel %vm560, %v288, 0
      %v625 = vsel %vm560, %v291, 0
      %v628 = vsel %vm560, %v294, 0
      %v631 = vsel %vm560, %v297, 0
      %v634 = vsel %vm560, %v300, 0
      %v637 = vsel %vm560, %v303, 0
      %v640 = vsel %vm560, %v306, 0
      %v643 = vsel %vm560, %v309, 0
      %v646 = vsel %vm560, %v312, 0
      %v649 = vsel %vm560, %v315, 0
      %v652 = vsel %vm560, %v318, 0
      %v655 = vsel %vm560, %v321, 0
      %v658 = vsel %vm560, %v324, 0
      %v661 = vsel %vm560, %v327, 0
      %v664 = vsel %vm560, %v330, 0
      %v667 = vsel %vm560, %v333, 0
      %v670 = vsel %vm560, %v336, 0
      %v673 = vsel %vm560, %v339, 0
      %v676 = vsel %vm560, %v342, 0
      %v679 = vsel %vm560, %v345, 0
      %v682 = vsel %vm560, %v348, 0
      %v685 = vsel %vm560, %v351, 0
      %v688 = vsel %vm560, %v354, 0
      %v691 = vsel %vm560, %v357, 0
      %v694 = vsel %vm560, %v360, 0
      %v697 = vsel %vm560, %v363, 0
      %v700 = vsel %vm560, %v366, 0
      %v703 = vsel %vm560, %v369, 0
      %v706 = vsel %vm560, %v372, 0
      %v709 = vsel %vm560, %v375, 0
      %v712 = vsel %vm560, %v378, 0
      %v715 = vsel %vm560, %v381, 0
      %v718 = vsel %vm560, %v384, 0
      %v721 = vsel %vm560, %v387, 0
      %v724 = vsel %vm560, %v390, 0
      %v727 = vsel %vm560, %v393, 0
      %v730 = vsel %vm560, %v396, 0
      %v733 = vsel %vm560, %v399, 0
      %v736 = vsel %vm560, %v402, 0
      %v739 = vsel %vm560, %v405, 0
      %v742 = vsel %vm560, %v408, 0
      %v745 = vsel %vm560, %v411, 0
      %v748 = vsel %vm560, %v414, 0
      %v751 = vsel %vm560, %v417, 0
      %v754 = vsel %vm560, %v420, 0
      %v757 = vsel %vm560, %v423, 0
      %v760 = vsel %vm560, %v426, 0
      %v763 = vsel %vm560, %v429, 0
      %v766 = vsel %vm560, %v432, 0
      %v769 = vsel %vm560, %v435, 0
      %v772 = vsel %vm560, %v438, 0
      %v775 = vsel %vm560, %v441, 0
      %v778 = vsel %vm560, %v444, 0
      %v781 = vsel %vm560, %v447, 0
      %v784 = vsel %vm560, %v450, 0
      %v787 = vsel %vm560, %v453, 0
      %v790 = vsel %vm560, %v456, 0
      %v793 = vsel %vm560, %v459, 0
      %v796 = vsel %vm560, %v462, 0
      %v799 = vsel %vm560, %v465, 0
      %v802 = vsel %vm560, %v468, 0
      %v805 = vsel %vm560, %v471, 0
      %v808 = vsel %vm560, %v474, 0
      %v811 = vsel %vm560, %v477, 0
      %v814 = vsel %vm560, %v480, 0
      %v817 = vsel %vm560, %v483, 0
      %v820 = vsel %vm560, %v486, 0
      %v823 = vsel %vm560, %v489, 0
      %v826 = vsel %vm560, %v492, 0
      %v829 = vsel %vm560, %v495, 0
      %v832 = vsel %vm560, %v498, 0
      %v835 = vsel %vm560, %v501, 0
      %v838 = vsel %vm560, %v504, 0
      %v841 = vsel %vm560, %v507, 0
      %v844 = vsel %vm560, %v510, 0
      %v847 = vsel %vm560, %v513, 0
      %v850 = vsel %vm560, %v516, 0
      %v853 = vsel %vm560, %v519, 0
      %855 = vmatpush.msra.mxu0 %v535
      %856 = vmatpush.msra.mxu0 %v534
      %857 = vmatpush.msra.mxu0 %v533
      %858 = vmatpush.msra.mxu0 %v532
      %859 = vmatpush.msra.mxu0 %v531
      %860 = vmatpush.msra.mxu0 %v530
      %861 = vmatpush.msra.mxu0 %v529
      %862 = vmatpush.msra.mxu0 %v528
      %863 = vmatpush.msra.mxu0 %v527
      %864 = vmatpush.msra.mxu0 %v526
      %865 = vmatpush.msra.mxu0 %v525
      %866 = vmatpush.msra.mxu0 %v524
      %867 = vmatpush.msra.mxu0 %v523
      %868 = vmatpush.msra.mxu0 %v522
      %869 = vmatpush.msra.mxu0 %v521
      %870 = vmatpush.msra.mxu0 %v520
      %871 = vmatmul.f32.gmra.mxu0 %v226
      %v872 = vpop.f32.mrf.mxu0
      %v873 = vadd.f32 %v558, %v872
      %874 = vmatmul.f32.gmra.mxu0 %v229
      %v875 = vpop.f32.mrf.mxu0
      %v876 = vadd.f32 %v558, %v875
      %877 = vmatmul.f32.gmra.mxu0 %v232
      %v878 = vpop.f32.mrf.mxu0
      %v879 = vadd.f32 %v558, %v878
      %880 = vmatmul.f32.gmra.mxu0 %v235
      %v881 = vpop.f32.mrf.mxu0
      %v882 = vadd.f32 %v558, %v881
      %883 = vmatmul.f32.gmra.mxu0 %v238
      %v884 = vpop.f32.mrf.mxu0
      %v885 = vadd.f32 %v558, %v884
      %886 = vmatmul.f32.gmra.mxu0 %v241
      %v887 = vpop.f32.mrf.mxu0
      %v888 = vadd.f32 %v558, %v887
      %889 = vmatmul.f32.gmra.mxu0 %v244
      %v890 = vpop.f32.mrf.mxu0
      %v891 = vadd.f32 %v558, %v890
      %892 = vmatmul.f32.gmra.mxu0 %v247
      %v893 = vpop.f32.mrf.mxu0
      %v894 = vadd.f32 %v558, %v893
      %895 = vmatmul.f32.gmra.mxu0 %v250
      %v896 = vpop.f32.mrf.mxu0
      %v897 = vadd.f32 %v558, %v896
      %898 = vmatmul.f32.gmra.mxu0 %v253
      %v899 = vpop.f32.mrf.mxu0
      %v900 = vadd.f32 %v558, %v899
      %901 = vmatmul.f32.gmra.mxu0 %v256
      %v902 = vpop.f32.mrf.mxu0
      %v903 = vadd.f32 %v558, %v902
      %904 = vmatmul.f32.gmra.mxu0 %v259
      %v905 = vpop.f32.mrf.mxu0
      %v906 = vadd.f32 %v558, %v905
      %907 = vmatmul.f32.gmra.mxu0 %v262
      %v908 = vpop.f32.mrf.mxu0
      %v909 = vadd.f32 %v558, %v908
      %910 = vmatmul.f32.gmra.mxu0 %v265
      %v911 = vpop.f32.mrf.mxu0
      %v912 = vadd.f32 %v558, %v911
      %913 = vmatmul.f32.gmra.mxu0 %v268
      %v914 = vpop.f32.mrf.mxu0
      %v915 = vadd.f32 %v558, %v914
      %916 = vmatmul.f32.gmra.mxu0 %v271
      %v917 = vpop.f32.mrf.mxu0
      %v918 = vadd.f32 %v558, %v917
      %919 = vmatmul.f32.gmra.mxu0 %v274
      %v920 = vpop.f32.mrf.mxu0
      %v921 = vadd.f32 %v558, %v920
      %922 = vmatmul.f32.gmra.mxu0 %v277
      %v923 = vpop.f32.mrf.mxu0
      %v924 = vadd.f32 %v558, %v923
      %925 = vmatmul.f32.gmra.mxu0 %v280
      %v926 = vpop.f32.mrf.mxu0
      %v927 = vadd.f32 %v558, %v926
      %928 = vmatmul.f32.gmra.mxu0 %v283
      %v929 = vpop.f32.mrf.mxu0
      %v930 = vadd.f32 %v558, %v929
      %931 = vmatmul.f32.gmra.mxu0 %v286
      %v932 = vpop.f32.mrf.mxu0
      %v933 = vadd.f32 %v558, %v932
      %934 = vmatmul.f32.gmra.mxu0 %v289
      %v935 = vpop.f32.mrf.mxu0
      %v936 = vadd.f32 %v558, %v935
      %937 = vmatmul.f32.gmra.mxu0 %v292
      %v938 = vpop.f32.mrf.mxu0
      %v939 = vadd.f32 %v558, %v938
      %940 = vmatmul.f32.gmra.mxu0 %v295
      %v941 = vpop.f32.mrf.mxu0
      %v942 = vadd.f32 %v558, %v941
      %943 = vmatmul.f32.gmra.mxu0 %v298
      %v944 = vpop.f32.mrf.mxu0
      %v945 = vadd.f32 %v558, %v944
      %946 = vmatmul.f32.gmra.mxu0 %v301
      %v947 = vpop.f32.mrf.mxu0
      %v948 = vadd.f32 %v558, %v947
      %949 = vmatmul.f32.gmra.mxu0 %v304
      %v950 = vpop.f32.mrf.mxu0
      %v951 = vadd.f32 %v558, %v950
      %952 = vmatmul.f32.gmra.mxu0 %v307
      %v953 = vpop.f32.mrf.mxu0
      %v954 = vadd.f32 %v558, %v953
      %955 = vmatmul.f32.gmra.mxu0 %v310
      %v956 = vpop.f32.mrf.mxu0
      %v957 = vadd.f32 %v558, %v956
      %958 = vmatmul.f32.gmra.mxu0 %v313
      %v959 = vpop.f32.mrf.mxu0
      %v960 = vadd.f32 %v558, %v959
      %961 = vmatmul.f32.gmra.mxu0 %v316
      %v962 = vpop.f32.mrf.mxu0
      %v963 = vadd.f32 %v558, %v962
      %964 = vmatmul.f32.gmra.mxu0 %v319
      %v965 = vpop.f32.mrf.mxu0
      %v966 = vadd.f32 %v558, %v965
      %967 = vmatmul.f32.gmra.mxu0 %v322
      %v968 = vpop.f32.mrf.mxu0
      %v969 = vadd.f32 %v558, %v968
      %970 = vmatmul.f32.gmra.mxu0 %v325
      %v971 = vpop.f32.mrf.mxu0
      %v972 = vadd.f32 %v558, %v971
      %973 = vmatmul.f32.gmra.mxu0 %v328
      %v974 = vpop.f32.mrf.mxu0
      %v975 = vadd.f32 %v558, %v974
      %976 = vmatmul.f32.gmra.mxu0 %v331
      %v977 = vpop.f32.mrf.mxu0
      %v978 = vadd.f32 %v558, %v977
      %979 = vmatmul.f32.gmra.mxu0 %v334
      %v980 = vpop.f32.mrf.mxu0
      %v981 = vadd.f32 %v558, %v980
      %982 = vmatmul.f32.gmra.mxu0 %v337
      %v983 = vpop.f32.mrf.mxu0
      %v984 = vadd.f32 %v558, %v983
      %985 = vmatmul.f32.gmra.mxu0 %v340
      %v986 = vpop.f32.mrf.mxu0
      %v987 = vadd.f32 %v558, %v986
      %988 = vmatmul.f32.gmra.mxu0 %v343
      %v989 = vpop.f32.mrf.mxu0
      %v990 = vadd.f32 %v558, %v989
      %991 = vmatmul.f32.gmra.mxu0 %v346
      %v992 = vpop.f32.mrf.mxu0
      %v993 = vadd.f32 %v558, %v992
      %994 = vmatmul.f32.gmra.mxu0 %v349
      %v995 = vpop.f32.mrf.mxu0
      %v996 = vadd.f32 %v558, %v995
      %997 = vmatmul.f32.gmra.mxu0 %v352
      %v998 = vpop.f32.mrf.mxu0
      %v999 = vadd.f32 %v558, %v998
      %1000 = vmatmul.f32.gmra.mxu0 %v355
      %v1001 = vpop.f32.mrf.mxu0
      %v1002 = vadd.f32 %v558, %v1001
      %1003 = vmatmul.f32.gmra.mxu0 %v358
      %v1004 = vpop.f32.mrf.mxu0
      %v1005 = vadd.f32 %v558, %v1004
      %1006 = vmatmul.f32.gmra.mxu0 %v361
      %v1007 = vpop.f32.mrf.mxu0
      %v1008 = vadd.f32 %v558, %v1007
      %1009 = vmatmul.f32.gmra.mxu0 %v364
      %v1010 = vpop.f32.mrf.mxu0
      %v1011 = vadd.f32 %v558, %v1010
      %1012 = vmatmul.f32.gmra.mxu0 %v367
      %v1013 = vpop.f32.mrf.mxu0
      %v1014 = vadd.f32 %v558, %v1013
      %1015 = vmatmul.f32.gmra.mxu0 %v370
      %v1016 = vpop.f32.mrf.mxu0
      %v1017 = vadd.f32 %v558, %v1016
      %1018 = vmatmul.f32.gmra.mxu0 %v373
      %v1019 = vpop.f32.mrf.mxu0
      %v1020 = vadd.f32 %v558, %v1019
      %1021 = vmatmul.f32.gmra.mxu0 %v376
      %v1022 = vpop.f32.mrf.mxu0
      %v1023 = vadd.f32 %v558, %v1022
      %1024 = vmatmul.f32.gmra.mxu0 %v379
      %v1025 = vpop.f32.mrf.mxu0
      %v1026 = vadd.f32 %v558, %v1025
      %1027 = vmatmul.f32.gmra.mxu0 %v382
      %v1028 = vpop.f32.mrf.mxu0
      %v1029 = vadd.f32 %v558, %v1028
      %1030 = vmatmul.f32.gmra.mxu0 %v385
      %v1031 = vpop.f32.mrf.mxu0
      %v1032 = vadd.f32 %v558, %v1031
      %1033 = vmatmul.f32.gmra.mxu0 %v388
      %v1034 = vpop.f32.mrf.mxu0
      %v1035 = vadd.f32 %v558, %v1034
      %1036 = vmatmul.f32.gmra.mxu0 %v391
      %v1037 = vpop.f32.mrf.mxu0
      %v1038 = vadd.f32 %v558, %v1037
      %1039 = vmatmul.f32.gmra.mxu0 %v394
      %v1040 = vpop.f32.mrf.mxu0
      %v1041 = vadd.f32 %v558, %v1040
      %1042 = vmatmul.f32.gmra.mxu0 %v397
      %v1043 = vpop.f32.mrf.mxu0
      %v1044 = vadd.f32 %v558, %v1043
      %1045 = vmatmul.f32.gmra.mxu0 %v400
      %v1046 = vpop.f32.mrf.mxu0
      %v1047 = vadd.f32 %v558, %v1046
      %1048 = vmatmul.f32.gmra.mxu0 %v403
      %v1049 = vpop.f32.mrf.mxu0
      %v1050 = vadd.f32 %v558, %v1049
      %1051 = vmatmul.f32.gmra.mxu0 %v406
      %v1052 = vpop.f32.mrf.mxu0
      %v1053 = vadd.f32 %v558, %v1052
      %1054 = vmatmul.f32.gmra.mxu0 %v409
      %v1055 = vpop.f32.mrf.mxu0
      %v1056 = vadd.f32 %v558, %v1055
      %1057 = vmatmul.f32.gmra.mxu0 %v412
      %v1058 = vpop.f32.mrf.mxu0
      %v1059 = vadd.f32 %v558, %v1058
      %1060 = vmatmul.f32.gmra.mxu0 %v415
      %v1061 = vpop.f32.mrf.mxu0
      %v1062 = vadd.f32 %v558, %v1061
      %1063 = vmatmul.f32.gmra.mxu0 %v418
      %v1064 = vpop.f32.mrf.mxu0
      %v1065 = vadd.f32 %v558, %v1064
      %1066 = vmatmul.f32.gmra.mxu0 %v421
      %v1067 = vpop.f32.mrf.mxu0
      %v1068 = vadd.f32 %v558, %v1067
      %1069 = vmatmul.f32.gmra.mxu0 %v424
      %v1070 = vpop.f32.mrf.mxu0
      %v1071 = vadd.f32 %v558, %v1070
      %1072 = vmatmul.f32.gmra.mxu0 %v427
      %v1073 = vpop.f32.mrf.mxu0
      %v1074 = vadd.f32 %v558, %v1073
      %1075 = vmatmul.f32.gmra.mxu0 %v430
      %v1076 = vpop.f32.mrf.mxu0
      %v1077 = vadd.f32 %v558, %v1076
      %1078 = vmatmul.f32.gmra.mxu0 %v433
      %v1079 = vpop.f32.mrf.mxu0
      %v1080 = vadd.f32 %v558, %v1079
      %1081 = vmatmul.f32.gmra.mxu0 %v436
      %v1082 = vpop.f32.mrf.mxu0
      %v1083 = vadd.f32 %v558, %v1082
      %1084 = vmatmul.f32.gmra.mxu0 %v439
      %v1085 = vpop.f32.mrf.mxu0
      %v1086 = vadd.f32 %v558, %v1085
      %1087 = vmatmul.f32.gmra.mxu0 %v442
      %v1088 = vpop.f32.mrf.mxu0
      %v1089 = vadd.f32 %v558, %v1088
      %1090 = vmatmul.f32.gmra.mxu0 %v445
      %v1091 = vpop.f32.mrf.mxu0
      %v1092 = vadd.f32 %v558, %v1091
      %1093 = vmatmul.f32.gmra.mxu0 %v448
      %v1094 = vpop.f32.mrf.mxu0
      %v1095 = vadd.f32 %v558, %v1094
      %1096 = vmatmul.f32.gmra.mxu0 %v451
      %v1097 = vpop.f32.mrf.mxu0
      %v1098 = vadd.f32 %v558, %v1097
      %1099 = vmatmul.f32.gmra.mxu0 %v454
      %v1100 = vpop.f32.mrf.mxu0
      %v1101 = vadd.f32 %v558, %v1100
      %1102 = vmatmul.f32.gmra.mxu0 %v457
      %v1103 = vpop.f32.mrf.mxu0
      %v1104 = vadd.f32 %v558, %v1103
      %1105 = vmatmul.f32.gmra.mxu0 %v460
      %v1106 = vpop.f32.mrf.mxu0
      %v1107 = vadd.f32 %v558, %v1106
      %1108 = vmatmul.f32.gmra.mxu0 %v463
      %v1109 = vpop.f32.mrf.mxu0
      %v1110 = vadd.f32 %v558, %v1109
      %1111 = vmatmul.f32.gmra.mxu0 %v466
      %v1112 = vpop.f32.mrf.mxu0
      %v1113 = vadd.f32 %v558, %v1112
      %1114 = vmatmul.f32.gmra.mxu0 %v469
      %v1115 = vpop.f32.mrf.mxu0
      %v1116 = vadd.f32 %v558, %v1115
      %1117 = vmatmul.f32.gmra.mxu0 %v472
      %v1118 = vpop.f32.mrf.mxu0
      %v1119 = vadd.f32 %v558, %v1118
      %1120 = vmatmul.f32.gmra.mxu0 %v475
      %v1121 = vpop.f32.mrf.mxu0
      %v1122 = vadd.f32 %v558, %v1121
      %1123 = vmatmul.f32.gmra.mxu0 %v478
      %v1124 = vpop.f32.mrf.mxu0
      %v1125 = vadd.f32 %v558, %v1124
      %1126 = vmatmul.f32.gmra.mxu0 %v481
      %v1127 = vpop.f32.mrf.mxu0
      %v1128 = vadd.f32 %v558, %v1127
      %1129 = vmatmul.f32.gmra.mxu0 %v484
      %v1130 = vpop.f32.mrf.mxu0
      %v1131 = vadd.f32 %v558, %v1130
      %1132 = vmatmul.f32.gmra.mxu0 %v487
      %v1133 = vpop.f32.mrf.mxu0
      %v1134 = vadd.f32 %v558, %v1133
      %1135 = vmatmul.f32.gmra.mxu0 %v490
      %v1136 = vpop.f32.mrf.mxu0
      %v1137 = vadd.f32 %v558, %v1136
      %1138 = vmatmul.f32.gmra.mxu0 %v493
      %v1139 = vpop.f32.mrf.mxu0
      %v1140 = vadd.f32 %v558, %v1139
      %1141 = vmatmul.f32.gmra.mxu0 %v496
      %v1142 = vpop.f32.mrf.mxu0
      %v1143 = vadd.f32 %v558, %v1142
      %1144 = vmatmul.f32.gmra.mxu0 %v499
      %v1145 = vpop.f32.mrf.mxu0
      %v1146 = vadd.f32 %v558, %v1145
      %1147 = vmatmul.f32.gmra.mxu0 %v502
      %v1148 = vpop.f32.mrf.mxu0
      %v1149 = vadd.f32 %v558, %v1148
      %1150 = vmatmul.f32.gmra.mxu0 %v505
      %v1151 = vpop.f32.mrf.mxu0
      %v1152 = vadd.f32 %v558, %v1151
      %1153 = vmatmul.f32.gmra.mxu0 %v508
      %v1154 = vpop.f32.mrf.mxu0
      %v1155 = vadd.f32 %v558, %v1154
      %1156 = vmatmul.f32.gmra.mxu0 %v511
      %v1157 = vpop.f32.mrf.mxu0
      %v1158 = vadd.f32 %v558, %v1157
      %1159 = vmatmul.f32.gmra.mxu0 %v514
      %v1160 = vpop.f32.mrf.mxu0
      %v1161 = vadd.f32 %v558, %v1160
      %1162 = vmatmul.f32.gmra.mxu0 %v517
      %v1163 = vpop.f32.mrf.mxu0
      %v1164 = vadd.f32 %v558, %v1163
      %1165 = vdwg.mxu0
      %1166 = vmatpush.msra.mxu0 %v551
      %1167 = vmatpush.msra.mxu0 %v550
      %1168 = vmatpush.msra.mxu0 %v549
      %1169 = vmatpush.msra.mxu0 %v548
      %1170 = vmatpush.msra.mxu0 %v547
      %1171 = vmatpush.msra.mxu0 %v546
      %1172 = vmatpush.msra.mxu0 %v545
      %1173 = vmatpush.msra.mxu0 %v544
      %1174 = vmatpush.msra.mxu0 %v543
      %1175 = vmatpush.msra.mxu0 %v542
      %1176 = vmatpush.msra.mxu0 %v541
      %1177 = vmatpush.msra.mxu0 %v540
      %1178 = vmatpush.msra.mxu0 %v539
      %1179 = vmatpush.msra.mxu0 %v538
      %1180 = vmatpush.msra.mxu0 %v537
      %1181 = vmatpush.msra.mxu0 %v536
      %1182 = vmatmul.f32.gmra.mxu0 %v227
      %v1183 = vpop.f32.mrf.mxu0
      %v1184 = vadd.f32 %v873, %v1183
      %1185 = vmatmul.f32.gmra.mxu0 %v230
      %v1186 = vpop.f32.mrf.mxu0
      %v1187 = vadd.f32 %v876, %v1186
      %1188 = vmatmul.f32.gmra.mxu0 %v233
      %v1189 = vpop.f32.mrf.mxu0
      %v1190 = vadd.f32 %v879, %v1189
      %1191 = vmatmul.f32.gmra.mxu0 %v236
      %v1192 = vpop.f32.mrf.mxu0
      %v1193 = vadd.f32 %v882, %v1192
      %1194 = vmatmul.f32.gmra.mxu0 %v239
      %v1195 = vpop.f32.mrf.mxu0
      %v1196 = vadd.f32 %v885, %v1195
      %1197 = vmatmul.f32.gmra.mxu0 %v242
      %v1198 = vpop.f32.mrf.mxu0
      %v1199 = vadd.f32 %v888, %v1198
      %1200 = vmatmul.f32.gmra.mxu0 %v245
      %v1201 = vpop.f32.mrf.mxu0
      %v1202 = vadd.f32 %v891, %v1201
      %1203 = vmatmul.f32.gmra.mxu0 %v248
      %v1204 = vpop.f32.mrf.mxu0
      %v1205 = vadd.f32 %v894, %v1204
      %1206 = vmatmul.f32.gmra.mxu0 %v251
      %v1207 = vpop.f32.mrf.mxu0
      %v1208 = vadd.f32 %v897, %v1207
      %1209 = vmatmul.f32.gmra.mxu0 %v254
      %v1210 = vpop.f32.mrf.mxu0
      %v1211 = vadd.f32 %v900, %v1210
      %1212 = vmatmul.f32.gmra.mxu0 %v257
      %v1213 = vpop.f32.mrf.mxu0
      %v1214 = vadd.f32 %v903, %v1213
      %1215 = vmatmul.f32.gmra.mxu0 %v260
      %v1216 = vpop.f32.mrf.mxu0
      %v1217 = vadd.f32 %v906, %v1216
      %1218 = vmatmul.f32.gmra.mxu0 %v263
      %v1219 = vpop.f32.mrf.mxu0
      %v1220 = vadd.f32 %v909, %v1219
      %1221 = vmatmul.f32.gmra.mxu0 %v266
      %v1222 = vpop.f32.mrf.mxu0
      %v1223 = vadd.f32 %v912, %v1222
      %1224 = vmatmul.f32.gmra.mxu0 %v269
      %v1225 = vpop.f32.mrf.mxu0
      %v1226 = vadd.f32 %v915, %v1225
      %1227 = vmatmul.f32.gmra.mxu0 %v272
      %v1228 = vpop.f32.mrf.mxu0
      %v1229 = vadd.f32 %v918, %v1228
      %1230 = vmatmul.f32.gmra.mxu0 %v275
      %v1231 = vpop.f32.mrf.mxu0
      %v1232 = vadd.f32 %v921, %v1231
      %1233 = vmatmul.f32.gmra.mxu0 %v278
      %v1234 = vpop.f32.mrf.mxu0
      %v1235 = vadd.f32 %v924, %v1234
      %1236 = vmatmul.f32.gmra.mxu0 %v281
      %v1237 = vpop.f32.mrf.mxu0
      %v1238 = vadd.f32 %v927, %v1237
      %1239 = vmatmul.f32.gmra.mxu0 %v284
      %v1240 = vpop.f32.mrf.mxu0
      %v1241 = vadd.f32 %v930, %v1240
      %1242 = vmatmul.f32.gmra.mxu0 %v287
      %v1243 = vpop.f32.mrf.mxu0
      %v1244 = vadd.f32 %v933, %v1243
      %1245 = vmatmul.f32.gmra.mxu0 %v290
      %v1246 = vpop.f32.mrf.mxu0
      %v1247 = vadd.f32 %v936, %v1246
      %1248 = vmatmul.f32.gmra.mxu0 %v293
      %v1249 = vpop.f32.mrf.mxu0
      %v1250 = vadd.f32 %v939, %v1249
      %1251 = vmatmul.f32.gmra.mxu0 %v296
      %v1252 = vpop.f32.mrf.mxu0
      %v1253 = vadd.f32 %v942, %v1252
      %1254 = vmatmul.f32.gmra.mxu0 %v299
      %v1255 = vpop.f32.mrf.mxu0
      %v1256 = vadd.f32 %v945, %v1255
      %1257 = vmatmul.f32.gmra.mxu0 %v302
      %v1258 = vpop.f32.mrf.mxu0
      %v1259 = vadd.f32 %v948, %v1258
      %1260 = vmatmul.f32.gmra.mxu0 %v305
      %v1261 = vpop.f32.mrf.mxu0
      %v1262 = vadd.f32 %v951, %v1261
      %1263 = vmatmul.f32.gmra.mxu0 %v308
      %v1264 = vpop.f32.mrf.mxu0
      %v1265 = vadd.f32 %v954, %v1264
      %1266 = vmatmul.f32.gmra.mxu0 %v311
      %v1267 = vpop.f32.mrf.mxu0
      %v1268 = vadd.f32 %v957, %v1267
      %1269 = vmatmul.f32.gmra.mxu0 %v314
      %v1270 = vpop.f32.mrf.mxu0
      %v1271 = vadd.f32 %v960, %v1270
      %1272 = vmatmul.f32.gmra.mxu0 %v317
      %v1273 = vpop.f32.mrf.mxu0
      %v1274 = vadd.f32 %v963, %v1273
      %1275 = vmatmul.f32.gmra.mxu0 %v320
      %v1276 = vpop.f32.mrf.mxu0
      %v1277 = vadd.f32 %v966, %v1276
      %1278 = vmatmul.f32.gmra.mxu0 %v323
      %v1279 = vpop.f32.mrf.mxu0
      %v1280 = vadd.f32 %v969, %v1279
      %1281 = vmatmul.f32.gmra.mxu0 %v326
      %v1282 = vpop.f32.mrf.mxu0
      %v1283 = vadd.f32 %v972, %v1282
      %1284 = vmatmul.f32.gmra.mxu0 %v329
      %v1285 = vpop.f32.mrf.mxu0
      %v1286 = vadd.f32 %v975, %v1285
      %1287 = vmatmul.f32.gmra.mxu0 %v332
      %v1288 = vpop.f32.mrf.mxu0
      %v1289 = vadd.f32 %v978, %v1288
      %1290 = vmatmul.f32.gmra.mxu0 %v335
      %v1291 = vpop.f32.mrf.mxu0
      %v1292 = vadd.f32 %v981, %v1291
      %1293 = vmatmul.f32.gmra.mxu0 %v338
      %v1294 = vpop.f32.mrf.mxu0
      %v1295 = vadd.f32 %v984, %v1294
      %1296 = vmatmul.f32.gmra.mxu0 %v341
      %v1297 = vpop.f32.mrf.mxu0
      %v1298 = vadd.f32 %v987, %v1297
      %1299 = vmatmul.f32.gmra.mxu0 %v344
      %v1300 = vpop.f32.mrf.mxu0
      %v1301 = vadd.f32 %v990, %v1300
      %1302 = vmatmul.f32.gmra.mxu0 %v347
      %v1303 = vpop.f32.mrf.mxu0
      %v1304 = vadd.f32 %v993, %v1303
      %1305 = vmatmul.f32.gmra.mxu0 %v350
      %v1306 = vpop.f32.mrf.mxu0
      %v1307 = vadd.f32 %v996, %v1306
      %1308 = vmatmul.f32.gmra.mxu0 %v353
      %v1309 = vpop.f32.mrf.mxu0
      %v1310 = vadd.f32 %v999, %v1309
      %1311 = vmatmul.f32.gmra.mxu0 %v356
      %v1312 = vpop.f32.mrf.mxu0
      %v1313 = vadd.f32 %v1002, %v1312
      %1314 = vmatmul.f32.gmra.mxu0 %v359
      %v1315 = vpop.f32.mrf.mxu0
      %v1316 = vadd.f32 %v1005, %v1315
      %1317 = vmatmul.f32.gmra.mxu0 %v362
      %v1318 = vpop.f32.mrf.mxu0
      %v1319 = vadd.f32 %v1008, %v1318
      %1320 = vmatmul.f32.gmra.mxu0 %v365
      %v1321 = vpop.f32.mrf.mxu0
      %v1322 = vadd.f32 %v1011, %v1321
      %1323 = vmatmul.f32.gmra.mxu0 %v368
      %v1324 = vpop.f32.mrf.mxu0
      %v1325 = vadd.f32 %v1014, %v1324
      %1326 = vmatmul.f32.gmra.mxu0 %v371
      %v1327 = vpop.f32.mrf.mxu0
      %v1328 = vadd.f32 %v1017, %v1327
      %1329 = vmatmul.f32.gmra.mxu0 %v374
      %v1330 = vpop.f32.mrf.mxu0
      %v1331 = vadd.f32 %v1020, %v1330
      %1332 = vmatmul.f32.gmra.mxu0 %v377
      %v1333 = vpop.f32.mrf.mxu0
      %v1334 = vadd.f32 %v1023, %v1333
      %1335 = vmatmul.f32.gmra.mxu0 %v380
      %v1336 = vpop.f32.mrf.mxu0
      %v1337 = vadd.f32 %v1026, %v1336
      %1338 = vmatmul.f32.gmra.mxu0 %v383
      %v1339 = vpop.f32.mrf.mxu0
      %v1340 = vadd.f32 %v1029, %v1339
      %1341 = vmatmul.f32.gmra.mxu0 %v386
      %v1342 = vpop.f32.mrf.mxu0
      %v1343 = vadd.f32 %v1032, %v1342
      %1344 = vmatmul.f32.gmra.mxu0 %v389
      %v1345 = vpop.f32.mrf.mxu0
      %v1346 = vadd.f32 %v1035, %v1345
      %1347 = vmatmul.f32.gmra.mxu0 %v392
      %v1348 = vpop.f32.mrf.mxu0
      %v1349 = vadd.f32 %v1038, %v1348
      %1350 = vmatmul.f32.gmra.mxu0 %v395
      %v1351 = vpop.f32.mrf.mxu0
      %v1352 = vadd.f32 %v1041, %v1351
      %1353 = vmatmul.f32.gmra.mxu0 %v398
      %v1354 = vpop.f32.mrf.mxu0
      %v1355 = vadd.f32 %v1044, %v1354
      %1356 = vmatmul.f32.gmra.mxu0 %v401
      %v1357 = vpop.f32.mrf.mxu0
      %v1358 = vadd.f32 %v1047, %v1357
      %1359 = vmatmul.f32.gmra.mxu0 %v404
      %v1360 = vpop.f32.mrf.mxu0
      %v1361 = vadd.f32 %v1050, %v1360
      %1362 = vmatmul.f32.gmra.mxu0 %v407
      %v1363 = vpop.f32.mrf.mxu0
      %v1364 = vadd.f32 %v1053, %v1363
      %1365 = vmatmul.f32.gmra.mxu0 %v410
      %v1366 = vpop.f32.mrf.mxu0
      %v1367 = vadd.f32 %v1056, %v1366
      %1368 = vmatmul.f32.gmra.mxu0 %v413
      %v1369 = vpop.f32.mrf.mxu0
      %v1370 = vadd.f32 %v1059, %v1369
      %1371 = vmatmul.f32.gmra.mxu0 %v416
      %v1372 = vpop.f32.mrf.mxu0
      %v1373 = vadd.f32 %v1062, %v1372
      %1374 = vmatmul.f32.gmra.mxu0 %v419
      %v1375 = vpop.f32.mrf.mxu0
      %v1376 = vadd.f32 %v1065, %v1375
      %1377 = vmatmul.f32.gmra.mxu0 %v422
      %v1378 = vpop.f32.mrf.mxu0
      %v1379 = vadd.f32 %v1068, %v1378
      %1380 = vmatmul.f32.gmra.mxu0 %v425
      %v1381 = vpop.f32.mrf.mxu0
      %v1382 = vadd.f32 %v1071, %v1381
      %1383 = vmatmul.f32.gmra.mxu0 %v428
      %v1384 = vpop.f32.mrf.mxu0
      %v1385 = vadd.f32 %v1074, %v1384
      %1386 = vmatmul.f32.gmra.mxu0 %v431
      %v1387 = vpop.f32.mrf.mxu0
      %v1388 = vadd.f32 %v1077, %v1387
      %1389 = vmatmul.f32.gmra.mxu0 %v434
      %v1390 = vpop.f32.mrf.mxu0
      %v1391 = vadd.f32 %v1080, %v1390
      %1392 = vmatmul.f32.gmra.mxu0 %v437
      %v1393 = vpop.f32.mrf.mxu0
      %v1394 = vadd.f32 %v1083, %v1393
      %1395 = vmatmul.f32.gmra.mxu0 %v440
      %v1396 = vpop.f32.mrf.mxu0
      %v1397 = vadd.f32 %v1086, %v1396
      %1398 = vmatmul.f32.gmra.mxu0 %v443
      %v1399 = vpop.f32.mrf.mxu0
      %v1400 = vadd.f32 %v1089, %v1399
      %1401 = vmatmul.f32.gmra.mxu0 %v446
      %v1402 = vpop.f32.mrf.mxu0
      %v1403 = vadd.f32 %v1092, %v1402
      %1404 = vmatmul.f32.gmra.mxu0 %v449
      %v1405 = vpop.f32.mrf.mxu0
      %v1406 = vadd.f32 %v1095, %v1405
      %1407 = vmatmul.f32.gmra.mxu0 %v452
      %v1408 = vpop.f32.mrf.mxu0
      %v1409 = vadd.f32 %v1098, %v1408
      %1410 = vmatmul.f32.gmra.mxu0 %v455
      %v1411 = vpop.f32.mrf.mxu0
      %v1412 = vadd.f32 %v1101, %v1411
      %1413 = vmatmul.f32.gmra.mxu0 %v458
      %v1414 = vpop.f32.mrf.mxu0
      %v1415 = vadd.f32 %v1104, %v1414
      %1416 = vmatmul.f32.gmra.mxu0 %v461
      %v1417 = vpop.f32.mrf.mxu0
      %v1418 = vadd.f32 %v1107, %v1417
      %1419 = vmatmul.f32.gmra.mxu0 %v464
      %v1420 = vpop.f32.mrf.mxu0
      %v1421 = vadd.f32 %v1110, %v1420
      %1422 = vmatmul.f32.gmra.mxu0 %v467
      %v1423 = vpop.f32.mrf.mxu0
      %v1424 = vadd.f32 %v1113, %v1423
      %1425 = vmatmul.f32.gmra.mxu0 %v470
      %v1426 = vpop.f32.mrf.mxu0
      %v1427 = vadd.f32 %v1116, %v1426
      %1428 = vmatmul.f32.gmra.mxu0 %v473
      %v1429 = vpop.f32.mrf.mxu0
      %v1430 = vadd.f32 %v1119, %v1429
      %1431 = vmatmul.f32.gmra.mxu0 %v476
      %v1432 = vpop.f32.mrf.mxu0
      %v1433 = vadd.f32 %v1122, %v1432
      %1434 = vmatmul.f32.gmra.mxu0 %v479
      %v1435 = vpop.f32.mrf.mxu0
      %v1436 = vadd.f32 %v1125, %v1435
      %1437 = vmatmul.f32.gmra.mxu0 %v482
      %v1438 = vpop.f32.mrf.mxu0
      %v1439 = vadd.f32 %v1128, %v1438
      %1440 = vmatmul.f32.gmra.mxu0 %v485
      %v1441 = vpop.f32.mrf.mxu0
      %v1442 = vadd.f32 %v1131, %v1441
      %1443 = vmatmul.f32.gmra.mxu0 %v488
      %v1444 = vpop.f32.mrf.mxu0
      %v1445 = vadd.f32 %v1134, %v1444
      %1446 = vmatmul.f32.gmra.mxu0 %v491
      %v1447 = vpop.f32.mrf.mxu0
      %v1448 = vadd.f32 %v1137, %v1447
      %1449 = vmatmul.f32.gmra.mxu0 %v494
      %v1450 = vpop.f32.mrf.mxu0
      %v1451 = vadd.f32 %v1140, %v1450
      %1452 = vmatmul.f32.gmra.mxu0 %v497
      %v1453 = vpop.f32.mrf.mxu0
      %v1454 = vadd.f32 %v1143, %v1453
      %1455 = vmatmul.f32.gmra.mxu0 %v500
      %v1456 = vpop.f32.mrf.mxu0
      %v1457 = vadd.f32 %v1146, %v1456
      %1458 = vmatmul.f32.gmra.mxu0 %v503
      %v1459 = vpop.f32.mrf.mxu0
      %v1460 = vadd.f32 %v1149, %v1459
      %1461 = vmatmul.f32.gmra.mxu0 %v506
      %v1462 = vpop.f32.mrf.mxu0
      %v1463 = vadd.f32 %v1152, %v1462
      %1464 = vmatmul.f32.gmra.mxu0 %v509
      %v1465 = vpop.f32.mrf.mxu0
      %v1466 = vadd.f32 %v1155, %v1465
      %1467 = vmatmul.f32.gmra.mxu0 %v512
      %v1468 = vpop.f32.mrf.mxu0
      %v1469 = vadd.f32 %v1158, %v1468
      %1470 = vmatmul.f32.gmra.mxu0 %v515
      %v1471 = vpop.f32.mrf.mxu0
      %v1472 = vadd.f32 %v1161, %v1471
      %1473 = vmatmul.f32.gmra.mxu0 %v518
      %v1474 = vpop.f32.mrf.mxu0
      %v1475 = vadd.f32 %v1164, %v1474
      %1476 = vdwg.mxu0
      %1477 = vmatpush.msra.mxu0 0.0
      %1478 = vmatpush.msra.mxu0 0.0
      %1479 = vmatpush.msra.mxu0 0.0
      %1480 = vmatpush.msra.mxu0 0.0
      %1481 = vmatpush.msra.mxu0 0.0
      %1482 = vmatpush.msra.mxu0 0.0
      %1483 = vmatpush.msra.mxu0 0.0
      %1484 = vmatpush.msra.mxu0 0.0
      %1485 = vmatpush.msra.mxu0 0.0
      %1486 = vmatpush.msra.mxu0 0.0
      %1487 = vmatpush.msra.mxu0 0.0
      %1488 = vmatpush.msra.mxu0 0.0
      %1489 = vmatpush.msra.mxu0 %v555
      %1490 = vmatpush.msra.mxu0 %v554
      %1491 = vmatpush.msra.mxu0 %v553
      %1492 = vmatpush.msra.mxu0 %v552
      %1493 = vmatmul.f32.gmra.mxu0 %v562
      %v1494 = vpop.f32.mrf.mxu0
      %v1495 = vadd.f32 %v1184, %v1494
      %1496 = vmatmul.f32.gmra.mxu0 %v565
      %v1497 = vpop.f32.mrf.mxu0
      %v1498 = vadd.f32 %v1187, %v1497
      %1499 = vmatmul.f32.gmra.mxu0 %v568
      %v1500 = vpop.f32.mrf.mxu0
      %v1501 = vadd.f32 %v1190, %v1500
      %1502 = vmatmul.f32.gmra.mxu0 %v571
      %v1503 = vpop.f32.mrf.mxu0
      %v1504 = vadd.f32 %v1193, %v1503
      %1505 = vmatmul.f32.gmra.mxu0 %v574
      %v1506 = vpop.f32.mrf.mxu0
      %v1507 = vadd.f32 %v1196, %v1506
      %1508 = vmatmul.f32.gmra.mxu0 %v577
      %v1509 = vpop.f32.mrf.mxu0
      %v1510 = vadd.f32 %v1199, %v1509
      %1511 = vmatmul.f32.gmra.mxu0 %v580
      %v1512 = vpop.f32.mrf.mxu0
      %v1513 = vadd.f32 %v1202, %v1512
      %1514 = vmatmul.f32.gmra.mxu0 %v583
      %v1515 = vpop.f32.mrf.mxu0
      %v1516 = vadd.f32 %v1205, %v1515
      %1517 = vmatmul.f32.gmra.mxu0 %v586
      %v1518 = vpop.f32.mrf.mxu0
      %v1519 = vadd.f32 %v1208, %v1518
      %1520 = vmatmul.f32.gmra.mxu0 %v589
      %v1521 = vpop.f32.mrf.mxu0
      %v1522 = vadd.f32 %v1211, %v1521
      %1523 = vmatmul.f32.gmra.mxu0 %v592
      %v1524 = vpop.f32.mrf.mxu0
      %v1525 = vadd.f32 %v1214, %v1524
      %1526 = vmatmul.f32.gmra.mxu0 %v595
      %v1527 = vpop.f32.mrf.mxu0
      %v1528 = vadd.f32 %v1217, %v1527
      %1529 = vmatmul.f32.gmra.mxu0 %v598
      %v1530 = vpop.f32.mrf.mxu0
      %v1531 = vadd.f32 %v1220, %v1530
      %1532 = vmatmul.f32.gmra.mxu0 %v601
      %v1533 = vpop.f32.mrf.mxu0
      %v1534 = vadd.f32 %v1223, %v1533
      %1535 = vmatmul.f32.gmra.mxu0 %v604
      %v1536 = vpop.f32.mrf.mxu0
      %v1537 = vadd.f32 %v1226, %v1536
      %1538 = vmatmul.f32.gmra.mxu0 %v607
      %v1539 = vpop.f32.mrf.mxu0
      %v1540 = vadd.f32 %v1229, %v1539
      %1541 = vmatmul.f32.gmra.mxu0 %v610
      %v1542 = vpop.f32.mrf.mxu0
      %v1543 = vadd.f32 %v1232, %v1542
      %1544 = vmatmul.f32.gmra.mxu0 %v613
      %v1545 = vpop.f32.mrf.mxu0
      %v1546 = vadd.f32 %v1235, %v1545
      %1547 = vmatmul.f32.gmra.mxu0 %v616
      %v1548 = vpop.f32.mrf.mxu0
      %v1549 = vadd.f32 %v1238, %v1548
      %1550 = vmatmul.f32.gmra.mxu0 %v619
      %v1551 = vpop.f32.mrf.mxu0
      %v1552 = vadd.f32 %v1241, %v1551
      %1553 = vmatmul.f32.gmra.mxu0 %v622
      %v1554 = vpop.f32.mrf.mxu0
      %v1555 = vadd.f32 %v1244, %v1554
      %1556 = vmatmul.f32.gmra.mxu0 %v625
      %v1557 = vpop.f32.mrf.mxu0
      %v1558 = vadd.f32 %v1247, %v1557
      %1559 = vmatmul.f32.gmra.mxu0 %v628
      %v1560 = vpop.f32.mrf.mxu0
      %v1561 = vadd.f32 %v1250, %v1560
      %1562 = vmatmul.f32.gmra.mxu0 %v631
      %v1563 = vpop.f32.mrf.mxu0
      %v1564 = vadd.f32 %v1253, %v1563
      %1565 = vmatmul.f32.gmra.mxu0 %v634
      %v1566 = vpop.f32.mrf.mxu0
      %v1567 = vadd.f32 %v1256, %v1566
      %1568 = vmatmul.f32.gmra.mxu0 %v637
      %v1569 = vpop.f32.mrf.mxu0
      %v1570 = vadd.f32 %v1259, %v1569
      %1571 = vmatmul.f32.gmra.mxu0 %v640
      %v1572 = vpop.f32.mrf.mxu0
      %v1573 = vadd.f32 %v1262, %v1572
      %1574 = vmatmul.f32.gmra.mxu0 %v643
      %v1575 = vpop.f32.mrf.mxu0
      %v1576 = vadd.f32 %v1265, %v1575
      %1577 = vmatmul.f32.gmra.mxu0 %v646
      %v1578 = vpop.f32.mrf.mxu0
      %v1579 = vadd.f32 %v1268, %v1578
      %1580 = vmatmul.f32.gmra.mxu0 %v649
      %v1581 = vpop.f32.mrf.mxu0
      %v1582 = vadd.f32 %v1271, %v1581
      %1583 = vmatmul.f32.gmra.mxu0 %v652
      %v1584 = vpop.f32.mrf.mxu0
      %v1585 = vadd.f32 %v1274, %v1584
      %1586 = vmatmul.f32.gmra.mxu0 %v655
      %v1587 = vpop.f32.mrf.mxu0
      %v1588 = vadd.f32 %v1277, %v1587
      %1589 = vmatmul.f32.gmra.mxu0 %v658
      %v1590 = vpop.f32.mrf.mxu0
      %v1591 = vadd.f32 %v1280, %v1590
      %1592 = vmatmul.f32.gmra.mxu0 %v661
      %v1593 = vpop.f32.mrf.mxu0
      %v1594 = vadd.f32 %v1283, %v1593
      %1595 = vmatmul.f32.gmra.mxu0 %v664
      %v1596 = vpop.f32.mrf.mxu0
      %v1597 = vadd.f32 %v1286, %v1596
      %1598 = vmatmul.f32.gmra.mxu0 %v667
      %v1599 = vpop.f32.mrf.mxu0
      %v1600 = vadd.f32 %v1289, %v1599
      %1601 = vmatmul.f32.gmra.mxu0 %v670
      %v1602 = vpop.f32.mrf.mxu0
      %v1603 = vadd.f32 %v1292, %v1602
      %1604 = vmatmul.f32.gmra.mxu0 %v673
      %v1605 = vpop.f32.mrf.mxu0
      %v1606 = vadd.f32 %v1295, %v1605
      %1607 = vmatmul.f32.gmra.mxu0 %v676
      %v1608 = vpop.f32.mrf.mxu0
      %v1609 = vadd.f32 %v1298, %v1608
      %1610 = vmatmul.f32.gmra.mxu0 %v679
      %v1611 = vpop.f32.mrf.mxu0
      %v1612 = vadd.f32 %v1301, %v1611
      %1613 = vmatmul.f32.gmra.mxu0 %v682
      %v1614 = vpop.f32.mrf.mxu0
      %v1615 = vadd.f32 %v1304, %v1614
      %1616 = vmatmul.f32.gmra.mxu0 %v685
      %v1617 = vpop.f32.mrf.mxu0
      %v1618 = vadd.f32 %v1307, %v1617
      %1619 = vmatmul.f32.gmra.mxu0 %v688
      %v1620 = vpop.f32.mrf.mxu0
      %v1621 = vadd.f32 %v1310, %v1620
      %1622 = vmatmul.f32.gmra.mxu0 %v691
      %v1623 = vpop.f32.mrf.mxu0
      %v1624 = vadd.f32 %v1313, %v1623
      %1625 = vmatmul.f32.gmra.mxu0 %v694
      %v1626 = vpop.f32.mrf.mxu0
      %v1627 = vadd.f32 %v1316, %v1626
      %1628 = vmatmul.f32.gmra.mxu0 %v697
      %v1629 = vpop.f32.mrf.mxu0
      %v1630 = vadd.f32 %v1319, %v1629
      %1631 = vmatmul.f32.gmra.mxu0 %v700
      %v1632 = vpop.f32.mrf.mxu0
      %v1633 = vadd.f32 %v1322, %v1632
      %1634 = vmatmul.f32.gmra.mxu0 %v703
      %v1635 = vpop.f32.mrf.mxu0
      %v1636 = vadd.f32 %v1325, %v1635
      %1637 = vmatmul.f32.gmra.mxu0 %v706
      %v1638 = vpop.f32.mrf.mxu0
      %v1639 = vadd.f32 %v1328, %v1638
      %1640 = vmatmul.f32.gmra.mxu0 %v709
      %v1641 = vpop.f32.mrf.mxu0
      %v1642 = vadd.f32 %v1331, %v1641
      %1643 = vmatmul.f32.gmra.mxu0 %v712
      %v1644 = vpop.f32.mrf.mxu0
      %v1645 = vadd.f32 %v1334, %v1644
      %1646 = vmatmul.f32.gmra.mxu0 %v715
      %v1647 = vpop.f32.mrf.mxu0
      %v1648 = vadd.f32 %v1337, %v1647
      %1649 = vmatmul.f32.gmra.mxu0 %v718
      %v1650 = vpop.f32.mrf.mxu0
      %v1651 = vadd.f32 %v1340, %v1650
      %1652 = vmatmul.f32.gmra.mxu0 %v721
      %v1653 = vpop.f32.mrf.mxu0
      %v1654 = vadd.f32 %v1343, %v1653
      %1655 = vmatmul.f32.gmra.mxu0 %v724
      %v1656 = vpop.f32.mrf.mxu0
      %v1657 = vadd.f32 %v1346, %v1656
      %1658 = vmatmul.f32.gmra.mxu0 %v727
      %v1659 = vpop.f32.mrf.mxu0
      %v1660 = vadd.f32 %v1349, %v1659
      %1661 = vmatmul.f32.gmra.mxu0 %v730
      %v1662 = vpop.f32.mrf.mxu0
      %v1663 = vadd.f32 %v1352, %v1662
      %1664 = vmatmul.f32.gmra.mxu0 %v733
      %v1665 = vpop.f32.mrf.mxu0
      %v1666 = vadd.f32 %v1355, %v1665
      %1667 = vmatmul.f32.gmra.mxu0 %v736
      %v1668 = vpop.f32.mrf.mxu0
      %v1669 = vadd.f32 %v1358, %v1668
      %1670 = vmatmul.f32.gmra.mxu0 %v739
      %v1671 = vpop.f32.mrf.mxu0
      %v1672 = vadd.f32 %v1361, %v1671
      %1673 = vmatmul.f32.gmra.mxu0 %v742
      %v1674 = vpop.f32.mrf.mxu0
      %v1675 = vadd.f32 %v1364, %v1674
      %1676 = vmatmul.f32.gmra.mxu0 %v745
      %v1677 = vpop.f32.mrf.mxu0
      %v1678 = vadd.f32 %v1367, %v1677
      %1679 = vmatmul.f32.gmra.mxu0 %v748
      %v1680 = vpop.f32.mrf.mxu0
      %v1681 = vadd.f32 %v1370, %v1680
      %1682 = vmatmul.f32.gmra.mxu0 %v751
      %v1683 = vpop.f32.mrf.mxu0
      %v1684 = vadd.f32 %v1373, %v1683
      %1685 = vmatmul.f32.gmra.mxu0 %v754
      %v1686 = vpop.f32.mrf.mxu0
      %v1687 = vadd.f32 %v1376, %v1686
      %1688 = vmatmul.f32.gmra.mxu0 %v757
      %v1689 = vpop.f32.mrf.mxu0
      %v1690 = vadd.f32 %v1379, %v1689
      %1691 = vmatmul.f32.gmra.mxu0 %v760
      %v1692 = vpop.f32.mrf.mxu0
      %v1693 = vadd.f32 %v1382, %v1692
      %1694 = vmatmul.f32.gmra.mxu0 %v763
      %v1695 = vpop.f32.mrf.mxu0
      %v1696 = vadd.f32 %v1385, %v1695
      %1697 = vmatmul.f32.gmra.mxu0 %v766
      %v1698 = vpop.f32.mrf.mxu0
      %v1699 = vadd.f32 %v1388, %v1698
      %1700 = vmatmul.f32.gmra.mxu0 %v769
      %v1701 = vpop.f32.mrf.mxu0
      %v1702 = vadd.f32 %v1391, %v1701
      %1703 = vmatmul.f32.gmra.mxu0 %v772
      %v1704 = vpop.f32.mrf.mxu0
      %v1705 = vadd.f32 %v1394, %v1704
      %1706 = vmatmul.f32.gmra.mxu0 %v775
      %v1707 = vpop.f32.mrf.mxu0
      %v1708 = vadd.f32 %v1397, %v1707
      %1709 = vmatmul.f32.gmra.mxu0 %v778
      %v1710 = vpop.f32.mrf.mxu0
      %v1711 = vadd.f32 %v1400, %v1710
      %1712 = vmatmul.f32.gmra.mxu0 %v781
      %v1713 = vpop.f32.mrf.mxu0
      %v1714 = vadd.f32 %v1403, %v1713
      %1715 = vmatmul.f32.gmra.mxu0 %v784
      %v1716 = vpop.f32.mrf.mxu0
      %v1717 = vadd.f32 %v1406, %v1716
      %1718 = vmatmul.f32.gmra.mxu0 %v787
      %v1719 = vpop.f32.mrf.mxu0
      %v1720 = vadd.f32 %v1409, %v1719
      %1721 = vmatmul.f32.gmra.mxu0 %v790
      %v1722 = vpop.f32.mrf.mxu0
      %v1723 = vadd.f32 %v1412, %v1722
      %1724 = vmatmul.f32.gmra.mxu0 %v793
      %v1725 = vpop.f32.mrf.mxu0
      %v1726 = vadd.f32 %v1415, %v1725
      %1727 = vmatmul.f32.gmra.mxu0 %v796
      %v1728 = vpop.f32.mrf.mxu0
      %v1729 = vadd.f32 %v1418, %v1728
      %1730 = vmatmul.f32.gmra.mxu0 %v799
      %v1731 = vpop.f32.mrf.mxu0
      %v1732 = vadd.f32 %v1421, %v1731
      %1733 = vmatmul.f32.gmra.mxu0 %v802
      %v1734 = vpop.f32.mrf.mxu0
      %v1735 = vadd.f32 %v1424, %v1734
      %1736 = vmatmul.f32.gmra.mxu0 %v805
      %v1737 = vpop.f32.mrf.mxu0
      %v1738 = vadd.f32 %v1427, %v1737
      %1739 = vmatmul.f32.gmra.mxu0 %v808
      %v1740 = vpop.f32.mrf.mxu0
      %v1741 = vadd.f32 %v1430, %v1740
      %1742 = vmatmul.f32.gmra.mxu0 %v811
      %v1743 = vpop.f32.mrf.mxu0
      %v1744 = vadd.f32 %v1433, %v1743
      %1745 = vmatmul.f32.gmra.mxu0 %v814
      %v1746 = vpop.f32.mrf.mxu0
      %v1747 = vadd.f32 %v1436, %v1746
      %1748 = vmatmul.f32.gmra.mxu0 %v817
      %v1749 = vpop.f32.mrf.mxu0
      %v1750 = vadd.f32 %v1439, %v1749
      %1751 = vmatmul.f32.gmra.mxu0 %v820
      %v1752 = vpop.f32.mrf.mxu0
      %v1753 = vadd.f32 %v1442, %v1752
      %1754 = vmatmul.f32.gmra.mxu0 %v823
      %v1755 = vpop.f32.mrf.mxu0
      %v1756 = vadd.f32 %v1445, %v1755
      %1757 = vmatmul.f32.gmra.mxu0 %v826
      %v1758 = vpop.f32.mrf.mxu0
      %v1759 = vadd.f32 %v1448, %v1758
      %1760 = vmatmul.f32.gmra.mxu0 %v829
      %v1761 = vpop.f32.mrf.mxu0
      %v1762 = vadd.f32 %v1451, %v1761
      %1763 = vmatmul.f32.gmra.mxu0 %v832
      %v1764 = vpop.f32.mrf.mxu0
      %v1765 = vadd.f32 %v1454, %v1764
      %1766 = vmatmul.f32.gmra.mxu0 %v835
      %v1767 = vpop.f32.mrf.mxu0
      %v1768 = vadd.f32 %v1457, %v1767
      %1769 = vmatmul.f32.gmra.mxu0 %v838
      %v1770 = vpop.f32.mrf.mxu0
      %v1771 = vadd.f32 %v1460, %v1770
      %1772 = vmatmul.f32.gmra.mxu0 %v841
      %v1773 = vpop.f32.mrf.mxu0
      %v1774 = vadd.f32 %v1463, %v1773
      %1775 = vmatmul.f32.gmra.mxu0 %v844
      %v1776 = vpop.f32.mrf.mxu0
      %v1777 = vadd.f32 %v1466, %v1776
      %1778 = vmatmul.f32.gmra.mxu0 %v847
      %v1779 = vpop.f32.mrf.mxu0
      %v1780 = vadd.f32 %v1469, %v1779
      %1781 = vmatmul.f32.gmra.mxu0 %v850
      %v1782 = vpop.f32.mrf.mxu0
      %v1783 = vadd.f32 %v1472, %v1782
      %1784 = vmatmul.f32.gmra.mxu0 %v853
      %v1785 = vpop.f32.mrf.mxu0
      %v1786 = vadd.f32 %v1475, %v1785
      %1787 = vdwg.mxu0
      %v1788 = vmax.f32 %v1495, 0.0
      %v1789 = vmax.f32 %v1498, 0.0
      %v1790 = vmax.f32 %v1501, 0.0
      %v1791 = vmax.f32 %v1504, 0.0
      %v1792 = vmax.f32 %v1507, 0.0
      %v1793 = vmax.f32 %v1510, 0.0
      %v1794 = vmax.f32 %v1513, 0.0
      %v1795 = vmax.f32 %v1516, 0.0
      %v1796 = vmax.f32 %v1519, 0.0
      %v1797 = vmax.f32 %v1522, 0.0
      %v1798 = vmax.f32 %v1525, 0.0
      %v1799 = vmax.f32 %v1528, 0.0
      %v1800 = vmax.f32 %v1531, 0.0
      %v1801 = vmax.f32 %v1534, 0.0
      %v1802 = vmax.f32 %v1537, 0.0
      %v1803 = vmax.f32 %v1540, 0.0
      %v1804 = vmax.f32 %v1543, 0.0
      %v1805 = vmax.f32 %v1546, 0.0
      %v1806 = vmax.f32 %v1549, 0.0
      %v1807 = vmax.f32 %v1552, 0.0
      %v1808 = vmax.f32 %v1555, 0.0
      %v1809 = vmax.f32 %v1558, 0.0
      %v1810 = vmax.f32 %v1561, 0.0
      %v1811 = vmax.f32 %v1564, 0.0
      %v1812 = vmax.f32 %v1567, 0.0
      %v1813 = vmax.f32 %v1570, 0.0
      %v1814 = vmax.f32 %v1573, 0.0
      %v1815 = vmax.f32 %v1576, 0.0
      %v1816 = vmax.f32 %v1579, 0.0
      %v1817 = vmax.f32 %v1582, 0.0
      %v1818 = vmax.f32 %v1585, 0.0
      %v1819 = vmax.f32 %v1588, 0.0
      %v1820 = vmax.f32 %v1591, 0.0
      %v1821 = vmax.f32 %v1594, 0.0
      %v1822 = vmax.f32 %v1597, 0.0
      %v1823 = vmax.f32 %v1600, 0.0
      %v1824 = vmax.f32 %v1603, 0.0
      %v1825 = vmax.f32 %v1606, 0.0
      %v1826 = vmax.f32 %v1609, 0.0
      %v1827 = vmax.f32 %v1612, 0.0
      %v1828 = vmax.f32 %v1615, 0.0
      %v1829 = vmax.f32 %v1618, 0.0
      %v1830 = vmax.f32 %v1621, 0.0
      %v1831 = vmax.f32 %v1624, 0.0
      %v1832 = vmax.f32 %v1627, 0.0
      %v1833 = vmax.f32 %v1630, 0.0
      %v1834 = vmax.f32 %v1633, 0.0
      %v1835 = vmax.f32 %v1636, 0.0
      %v1836 = vmax.f32 %v1639, 0.0
      %v1837 = vmax.f32 %v1642, 0.0
      %v1838 = vmax.f32 %v1645, 0.0
      %v1839 = vmax.f32 %v1648, 0.0
      %v1840 = vmax.f32 %v1651, 0.0
      %v1841 = vmax.f32 %v1654, 0.0
      %v1842 = vmax.f32 %v1657, 0.0
      %v1843 = vmax.f32 %v1660, 0.0
      %v1844 = vmax.f32 %v1663, 0.0
      %v1845 = vmax.f32 %v1666, 0.0
      %v1846 = vmax.f32 %v1669, 0.0
      %v1847 = vmax.f32 %v1672, 0.0
      %v1848 = vmax.f32 %v1675, 0.0
      %v1849 = vmax.f32 %v1678, 0.0
      %v1850 = vmax.f32 %v1681, 0.0
      %v1851 = vmax.f32 %v1684, 0.0
      %v1852 = vmax.f32 %v1687, 0.0
      %v1853 = vmax.f32 %v1690, 0.0
      %v1854 = vmax.f32 %v1693, 0.0
      %v1855 = vmax.f32 %v1696, 0.0
      %v1856 = vmax.f32 %v1699, 0.0
      %v1857 = vmax.f32 %v1702, 0.0
      %v1858 = vmax.f32 %v1705, 0.0
      %v1859 = vmax.f32 %v1708, 0.0
      %v1860 = vmax.f32 %v1711, 0.0
      %v1861 = vmax.f32 %v1714, 0.0
      %v1862 = vmax.f32 %v1717, 0.0
      %v1863 = vmax.f32 %v1720, 0.0
      %v1864 = vmax.f32 %v1723, 0.0
      %v1865 = vmax.f32 %v1726, 0.0
      %v1866 = vmax.f32 %v1729, 0.0
      %v1867 = vmax.f32 %v1732, 0.0
      %v1868 = vmax.f32 %v1735, 0.0
      %v1869 = vmax.f32 %v1738, 0.0
      %v1870 = vmax.f32 %v1741, 0.0
      %v1871 = vmax.f32 %v1744, 0.0
      %v1872 = vmax.f32 %v1747, 0.0
      %v1873 = vmax.f32 %v1750, 0.0
      %v1874 = vmax.f32 %v1753, 0.0
      %v1875 = vmax.f32 %v1756, 0.0
      %v1876 = vmax.f32 %v1759, 0.0
      %v1877 = vmax.f32 %v1762, 0.0
      %v1878 = vmax.f32 %v1765, 0.0
      %v1879 = vmax.f32 %v1768, 0.0
      %v1880 = vmax.f32 %v1771, 0.0
      %v1881 = vmax.f32 %v1774, 0.0
      %v1882 = vmax.f32 %v1777, 0.0
      %v1883 = vmax.f32 %v1780, 0.0
      %v1884 = vmax.f32 %v1783, 0.0
      %v1885 = vmax.f32 %v1786, 0.0
      %v1886 = vld [vmem:[%s218] sm:$0xff]
      %v1887 = vld [vmem:[%s218 + $0x8] sm:$0xff]
      %v1888 = vld [vmem:[%s218 + $0x10] sm:$0xff]
      %v1889 = vld [vmem:[%s218 + $0x18] sm:$0xff]
      %v1890 = vld [vmem:[%s218 + $0x20] sm:$0xff]
      %v1891 = vld [vmem:[%s218 + $0x28] sm:$0xff]
      %v1892 = vld [vmem:[%s218 + $0x30] sm:$0xff]
      %v1893 = vld [vmem:[%s218 + $0x38] sm:$0xff]
      %v1894 = vld [vmem:[%s218 + $0x40] sm:$0xff]
      %v1895 = vld [vmem:[%s218 + $0x48] sm:$0xff]
      %v1896 = vld [vmem:[%s218 + $0x50] sm:$0xff]
      %v1897 = vld [vmem:[%s218 + $0x58] sm:$0xff]
      %v1898 = vld [vmem:[%s218 + $0x60] sm:$0xff]
      %v1899 = vld [vmem:[%s218 + $0x68] sm:$0xff]
      %v1900 = vld [vmem:[%s218 + $0x70] sm:$0xff]
      %v1901 = vld [vmem:[%s218 + $0x78] sm:$0xff]
      %v1902 = vld [vmem:[%s218 + $0x80] sm:$0xff]
      %v1903 = vld [vmem:[%s218 + $0x88] sm:$0xff]
      %v1904 = vld [vmem:[%s218 + $0x90] sm:$0xff]
      %v1905 = vld [vmem:[%s218 + $0x98] sm:$0xff]
      %v1906 = vld [vmem:[%s218 + $0xa0] sm:$0xff]
      %v1907 = vld [vmem:[%s218 + $0xa8] sm:$0xff]
      %v1908 = vld [vmem:[%s218 + $0xb0] sm:$0xff]
      %v1909 = vld [vmem:[%s218 + $0xb8] sm:$0xff]
      %v1910 = vld [vmem:[%s218 + $0xc0] sm:$0xff]
      %v1911 = vld [vmem:[%s218 + $0xc8] sm:$0xff]
      %v1912 = vld [vmem:[%s218 + $0xd0] sm:$0xff]
      %v1913 = vld [vmem:[%s218 + $0xd8] sm:$0xff]
      %v1914 = vld [vmem:[%s218 + $0xe0] sm:$0xff]
      %v1915 = vld [vmem:[%s218 + $0xe8] sm:$0xff]
      %v1916 = vld [vmem:[%s218 + $0xf0] sm:$0xff]
      %v1917 = vld [vmem:[%s218 + $0xf8] sm:$0xff]
      %v1918 = vld [vmem:[%s218 + $0x100] sm:$0xff]
      %v1919 = vld [vmem:[%s218 + $0x108] sm:$0xff]
      %v1920 = vld [vmem:[%s218 + $0x110] sm:$0xff]
      %v1921 = vld [vmem:[%s218 + $0x118] sm:$0xff]
      %v1922 = vld [vmem:[%s218 + $0x120] sm:$0xff]
      %v1923 = vld [vmem:[%s218 + $0x128] sm:$0xff]
      %v1924 = vld [vmem:[%s218 + $0x130] sm:$0xff]
      %v1925 = vld [vmem:[%s218 + $0x138] sm:$0xff]
      %v1926 = vld [vmem:[%s218 + $0x140] sm:$0xff]
      %v1927 = vld [vmem:[%s218 + $0x148] sm:$0xff]
      %v1928 = vld [vmem:[%s218 + $0x150] sm:$0xff]
      %v1929 = vld [vmem:[%s218 + $0x158] sm:$0xff]
      %v1930 = vld [vmem:[%s218 + $0x160] sm:$0xff]
      %v1931 = vld [vmem:[%s218 + $0x168] sm:$0xff]
      %v1932 = vld [vmem:[%s218 + $0x170] sm:$0xff]
      %v1933 = vld [vmem:[%s218 + $0x178] sm:$0xff]
      %v1934 = vld [vmem:[%s218 + $0x180] sm:$0xff]
      %v1935 = vld [vmem:[%s218 + $0x188] sm:$0xff]
      %v1936 = vld [vmem:[%s218 + $0x190] sm:$0xff]
      %v1937 = vld [vmem:[%s218 + $0x198] sm:$0xff]
      %v1938 = vld [vmem:[%s218 + $0x1a0] sm:$0xff]
      %v1939 = vld [vmem:[%s218 + $0x1a8] sm:$0xff]
      %v1940 = vld [vmem:[%s218 + $0x1b0] sm:$0xff]
      %v1941 = vld [vmem:[%s218 + $0x1b8] sm:$0xff]
      %v1942 = vld [vmem:[%s218 + $0x1c0] sm:$0xff]
      %v1943 = vld [vmem:[%s218 + $0x1c8] sm:$0xff]
      %v1944 = vld [vmem:[%s218 + $0x1d0] sm:$0xff]
      %v1945 = vld [vmem:[%s218 + $0x1d8] sm:$0xff]
      %v1946 = vld [vmem:[%s218 + $0x1e0] sm:$0xff]
      %v1947 = vld [vmem:[%s218 + $0x1e8] sm:$0xff]
      %v1948 = vld [vmem:[%s218 + $0x1f0] sm:$0xff]
      %v1949 = vld [vmem:[%s218 + $0x1f8] sm:$0xff]
      %v1950 = vld [vmem:[%s218 + $0x200] sm:$0xff]
      %v1951 = vld [vmem:[%s218 + $0x208] sm:$0xff]
      %v1952 = vld [vmem:[%s218 + $0x210] sm:$0xff]
      %v1953 = vld [vmem:[%s218 + $0x218] sm:$0xff]
      %v1954 = vld [vmem:[%s218 + $0x220] sm:$0xff]
      %v1955 = vld [vmem:[%s218 + $0x228] sm:$0xff]
      %v1956 = vld [vmem:[%s218 + $0x230] sm:$0xff]
      %v1957 = vld [vmem:[%s218 + $0x238] sm:$0xff]
      %v1958 = vld [vmem:[%s218 + $0x240] sm:$0xff]
      %v1959 = vld [vmem:[%s218 + $0x248] sm:$0xff]
      %v1960 = vld [vmem:[%s218 + $0x250] sm:$0xff]
      %v1961 = vld [vmem:[%s218 + $0x258] sm:$0xff]
      %v1962 = vld [vmem:[%s218 + $0x260] sm:$0xff]
      %v1963 = vld [vmem:[%s218 + $0x268] sm:$0xff]
      %v1964 = vld [vmem:[%s218 + $0x270] sm:$0xff]
      %v1965 = vld [vmem:[%s218 + $0x278] sm:$0xff]
      %v1966 = vld [vmem:[%s218 + $0x280] sm:$0xff]
      %v1967 = vld [vmem:[%s218 + $0x288] sm:$0xff]
      %v1968 = vld [vmem:[%s218 + $0x290] sm:$0xff]
      %v1969 = vld [vmem:[%s218 + $0x298] sm:$0xff]
      %v1970 = vld [vmem:[%s218 + $0x2a0] sm:$0xff]
      %v1971 = vld [vmem:[%s218 + $0x2a8] sm:$0xff]
      %v1972 = vld [vmem:[%s218 + $0x2b0] sm:$0xff]
      %v1973 = vld [vmem:[%s218 + $0x2b8] sm:$0xff]
      %v1974 = vld [vmem:[%s218 + $0x2c0] sm:$0xff]
      %v1975 = vld [vmem:[%s218 + $0x2c8] sm:$0xff]
      %v1976 = vld [vmem:[%s218 + $0x2d0] sm:$0xff]
      %v1977 = vld [vmem:[%s218 + $0x2d8] sm:$0xff]
      %v1978 = vld [vmem:[%s218 + $0x2e0] sm:$0xff]
      %v1979 = vld [vmem:[%s218 + $0x2e8] sm:$0xff]
      %v1980 = vld [vmem:[%s218 + $0x2f0] sm:$0xff]
      %v1981 = vld [vmem:[%s218 + $0x2f8] sm:$0xff]
      %v1982 = vld [vmem:[%s218 + $0x300] sm:$0xff]
      %v1983 = vld [vmem:[%s218 + $0x308] sm:$0xff]
      %1985 = vset.pattern.permute.xlu0 0
      %1986 = vperm.xlu0 %1985, %v1886
      %v1987 = vpop.permute.xlu0 %1986
      %1990 = vset.pattern.permute.xlu0 0
      %1991 = vperm.xlu0 %1990, %v1887
      %v1992 = vpop.permute.xlu0 %1991
      %1995 = vset.pattern.permute.xlu0 0
      %1996 = vperm.xlu0 %1995, %v1888
      %v1997 = vpop.permute.xlu0 %1996
      %2000 = vset.pattern.permute.xlu0 0
      %2001 = vperm.xlu0 %2000, %v1889
      %v2002 = vpop.permute.xlu0 %2001
      %2005 = vset.pattern.permute.xlu0 0
      %2006 = vperm.xlu0 %2005, %v1890
      %v2007 = vpop.permute.xlu0 %2006
      %2010 = vset.pattern.permute.xlu0 0
      %2011 = vperm.xlu0 %2010, %v1891
      %v2012 = vpop.permute.xlu0 %2011
      %2015 = vset.pattern.permute.xlu0 0
      %2016 = vperm.xlu0 %2015, %v1892
      %v2017 = vpop.permute.xlu0 %2016
      %2020 = vset.pattern.permute.xlu0 0
      %2021 = vperm.xlu0 %2020, %v1893
      %v2022 = vpop.permute.xlu0 %2021
      %2025 = vset.pattern.permute.xlu0 0
      %2026 = vperm.xlu0 %2025, %v1894
      %v2027 = vpop.permute.xlu0 %2026
      %2030 = vset.pattern.permute.xlu0 0
      %2031 = vperm.xlu0 %2030, %v1895
      %v2032 = vpop.permute.xlu0 %2031
      %2035 = vset.pattern.permute.xlu0 0
      %2036 = vperm.xlu0 %2035, %v1896
      %v2037 = vpop.permute.xlu0 %2036
      %2040 = vset.pattern.permute.xlu0 0
      %2041 = vperm.xlu0 %2040, %v1897
      %v2042 = vpop.permute.xlu0 %2041
      %2045 = vset.pattern.permute.xlu0 0
      %2046 = vperm.xlu0 %2045, %v1898
      %v2047 = vpop.permute.xlu0 %2046
      %2050 = vset.pattern.permute.xlu0 0
      %2051 = vperm.xlu0 %2050, %v1899
      %v2052 = vpop.permute.xlu0 %2051
      %2055 = vset.pattern.permute.xlu0 0
      %2056 = vperm.xlu0 %2055, %v1900
      %v2057 = vpop.permute.xlu0 %2056
      %2060 = vset.pattern.permute.xlu0 0
      %2061 = vperm.xlu0 %2060, %v1901
      %v2062 = vpop.permute.xlu0 %2061
      %2065 = vset.pattern.permute.xlu0 0
      %2066 = vperm.xlu0 %2065, %v1902
      %v2067 = vpop.permute.xlu0 %2066
      %2070 = vset.pattern.permute.xlu0 0
      %2071 = vperm.xlu0 %2070, %v1903
      %v2072 = vpop.permute.xlu0 %2071
      %2075 = vset.pattern.permute.xlu0 0
      %2076 = vperm.xlu0 %2075, %v1904
      %v2077 = vpop.permute.xlu0 %2076
      %2080 = vset.pattern.permute.xlu0 0
      %2081 = vperm.xlu0 %2080, %v1905
      %v2082 = vpop.permute.xlu0 %2081
      %2085 = vset.pattern.permute.xlu0 0
      %2086 = vperm.xlu0 %2085, %v1906
      %v2087 = vpop.permute.xlu0 %2086
      %2090 = vset.pattern.permute.xlu0 0
      %2091 = vperm.xlu0 %2090, %v1907
      %v2092 = vpop.permute.xlu0 %2091
      %2095 = vset.pattern.permute.xlu0 0
      %2096 = vperm.xlu0 %2095, %v1908
      %v2097 = vpop.permute.xlu0 %2096
      %2100 = vset.pattern.permute.xlu0 0
      %2101 = vperm.xlu0 %2100, %v1909
      %v2102 = vpop.permute.xlu0 %2101
      %2105 = vset.pattern.permute.xlu0 0
      %2106 = vperm.xlu0 %2105, %v1910
      %v2107 = vpop.permute.xlu0 %2106
      %2110 = vset.pattern.permute.xlu0 0
      %2111 = vperm.xlu0 %2110, %v1911
      %v2112 = vpop.permute.xlu0 %2111
      %2115 = vset.pattern.permute.xlu0 0
      %2116 = vperm.xlu0 %2115, %v1912
      %v2117 = vpop.permute.xlu0 %2116
      %2120 = vset.pattern.permute.xlu0 0
      %2121 = vperm.xlu0 %2120, %v1913
      %v2122 = vpop.permute.xlu0 %2121
      %2125 = vset.pattern.permute.xlu0 0
      %2126 = vperm.xlu0 %2125, %v1914
      %v2127 = vpop.permute.xlu0 %2126
      %2130 = vset.pattern.permute.xlu0 0
      %2131 = vperm.xlu0 %2130, %v1915
      %v2132 = vpop.permute.xlu0 %2131
      %2135 = vset.pattern.permute.xlu0 0
      %2136 = vperm.xlu0 %2135, %v1916
      %v2137 = vpop.permute.xlu0 %2136
      %2140 = vset.pattern.permute.xlu0 0
      %2141 = vperm.xlu0 %2140, %v1917
      %v2142 = vpop.permute.xlu0 %2141
      %2145 = vset.pattern.permute.xlu0 0
      %2146 = vperm.xlu0 %2145, %v1918
      %v2147 = vpop.permute.xlu0 %2146
      %2150 = vset.pattern.permute.xlu0 0
      %2151 = vperm.xlu0 %2150, %v1919
      %v2152 = vpop.permute.xlu0 %2151
      %2155 = vset.pattern.permute.xlu0 0
      %2156 = vperm.xlu0 %2155, %v1920
      %v2157 = vpop.permute.xlu0 %2156
      %2160 = vset.pattern.permute.xlu0 0
      %2161 = vperm.xlu0 %2160, %v1921
      %v2162 = vpop.permute.xlu0 %2161
      %2165 = vset.pattern.permute.xlu0 0
      %2166 = vperm.xlu0 %2165, %v1922
      %v2167 = vpop.permute.xlu0 %2166
      %2170 = vset.pattern.permute.xlu0 0
      %2171 = vperm.xlu0 %2170, %v1923
      %v2172 = vpop.permute.xlu0 %2171
      %2175 = vset.pattern.permute.xlu0 0
      %2176 = vperm.xlu0 %2175, %v1924
      %v2177 = vpop.permute.xlu0 %2176
      %2180 = vset.pattern.permute.xlu0 0
      %2181 = vperm.xlu0 %2180, %v1925
      %v2182 = vpop.permute.xlu0 %2181
      %2185 = vset.pattern.permute.xlu0 0
      %2186 = vperm.xlu0 %2185, %v1926
      %v2187 = vpop.permute.xlu0 %2186
      %2190 = vset.pattern.permute.xlu0 0
      %2191 = vperm.xlu0 %2190, %v1927
      %v2192 = vpop.permute.xlu0 %2191
      %2195 = vset.pattern.permute.xlu0 0
      %2196 = vperm.xlu0 %2195, %v1928
      %v2197 = vpop.permute.xlu0 %2196
      %2200 = vset.pattern.permute.xlu0 0
      %2201 = vperm.xlu0 %2200, %v1929
      %v2202 = vpop.permute.xlu0 %2201
      %2205 = vset.pattern.permute.xlu0 0
      %2206 = vperm.xlu0 %2205, %v1930
      %v2207 = vpop.permute.xlu0 %2206
      %2210 = vset.pattern.permute.xlu0 0
      %2211 = vperm.xlu0 %2210, %v1931
      %v2212 = vpop.permute.xlu0 %2211
      %2215 = vset.pattern.permute.xlu0 0
      %2216 = vperm.xlu0 %2215, %v1932
      %v2217 = vpop.permute.xlu0 %2216
      %2220 = vset.pattern.permute.xlu0 0
      %2221 = vperm.xlu0 %2220, %v1933
      %v2222 = vpop.permute.xlu0 %2221
      %2225 = vset.pattern.permute.xlu0 0
      %2226 = vperm.xlu0 %2225, %v1934
      %v2227 = vpop.permute.xlu0 %2226
      %2230 = vset.pattern.permute.xlu0 0
      %2231 = vperm.xlu0 %2230, %v1935
      %v2232 = vpop.permute.xlu0 %2231
      %2235 = vset.pattern.permute.xlu0 0
      %2236 = vperm.xlu0 %2235, %v1936
      %v2237 = vpop.permute.xlu0 %2236
      %2240 = vset.pattern.permute.xlu0 0
      %2241 = vperm.xlu0 %2240, %v1937
      %v2242 = vpop.permute.xlu0 %2241
      %2245 = vset.pattern.permute.xlu0 0
      %2246 = vperm.xlu0 %2245, %v1938
      %v2247 = vpop.permute.xlu0 %2246
      %2250 = vset.pattern.permute.xlu0 0
      %2251 = vperm.xlu0 %2250, %v1939
      %v2252 = vpop.permute.xlu0 %2251
      %2255 = vset.pattern.permute.xlu0 0
      %2256 = vperm.xlu0 %2255, %v1940
      %v2257 = vpop.permute.xlu0 %2256
      %2260 = vset.pattern.permute.xlu0 0
      %2261 = vperm.xlu0 %2260, %v1941
      %v2262 = vpop.permute.xlu0 %2261
      %2265 = vset.pattern.permute.xlu0 0
      %2266 = vperm.xlu0 %2265, %v1942
      %v2267 = vpop.permute.xlu0 %2266
      %2270 = vset.pattern.permute.xlu0 0
      %2271 = vperm.xlu0 %2270, %v1943
      %v2272 = vpop.permute.xlu0 %2271
      %2275 = vset.pattern.permute.xlu0 0
      %2276 = vperm.xlu0 %2275, %v1944
      %v2277 = vpop.permute.xlu0 %2276
      %2280 = vset.pattern.permute.xlu0 0
      %2281 = vperm.xlu0 %2280, %v1945
      %v2282 = vpop.permute.xlu0 %2281
      %2285 = vset.pattern.permute.xlu0 0
      %2286 = vperm.xlu0 %2285, %v1946
      %v2287 = vpop.permute.xlu0 %2286
      %2290 = vset.pattern.permute.xlu0 0
      %2291 = vperm.xlu0 %2290, %v1947
      %v2292 = vpop.permute.xlu0 %2291
      %2295 = vset.pattern.permute.xlu0 0
      %2296 = vperm.xlu0 %2295, %v1948
      %v2297 = vpop.permute.xlu0 %2296
      %2300 = vset.pattern.permute.xlu0 0
      %2301 = vperm.xlu0 %2300, %v1949
      %v2302 = vpop.permute.xlu0 %2301
      %2305 = vset.pattern.permute.xlu0 0
      %2306 = vperm.xlu0 %2305, %v1950
      %v2307 = vpop.permute.xlu0 %2306
      %2310 = vset.pattern.permute.xlu0 0
      %2311 = vperm.xlu0 %2310, %v1951
      %v2312 = vpop.permute.xlu0 %2311
      %2315 = vset.pattern.permute.xlu0 0
      %2316 = vperm.xlu0 %2315, %v1952
      %v2317 = vpop.permute.xlu0 %2316
      %2320 = vset.pattern.permute.xlu0 0
      %2321 = vperm.xlu0 %2320, %v1953
      %v2322 = vpop.permute.xlu0 %2321
      %2325 = vset.pattern.permute.xlu0 0
      %2326 = vperm.xlu0 %2325, %v1954
      %v2327 = vpop.permute.xlu0 %2326
      %2330 = vset.pattern.permute.xlu0 0
      %2331 = vperm.xlu0 %2330, %v1955
      %v2332 = vpop.permute.xlu0 %2331
      %2335 = vset.pattern.permute.xlu0 0
      %2336 = vperm.xlu0 %2335, %v1956
      %v2337 = vpop.permute.xlu0 %2336
      %2340 = vset.pattern.permute.xlu0 0
      %2341 = vperm.xlu0 %2340, %v1957
      %v2342 = vpop.permute.xlu0 %2341
      %2345 = vset.pattern.permute.xlu0 0
      %2346 = vperm.xlu0 %2345, %v1958
      %v2347 = vpop.permute.xlu0 %2346
      %2350 = vset.pattern.permute.xlu0 0
      %2351 = vperm.xlu0 %2350, %v1959
      %v2352 = vpop.permute.xlu0 %2351
      %2355 = vset.pattern.permute.xlu0 0
      %2356 = vperm.xlu0 %2355, %v1960
      %v2357 = vpop.permute.xlu0 %2356
      %2360 = vset.pattern.permute.xlu0 0
      %2361 = vperm.xlu0 %2360, %v1961
      %v2362 = vpop.permute.xlu0 %2361
      %2365 = vset.pattern.permute.xlu0 0
      %2366 = vperm.xlu0 %2365, %v1962
      %v2367 = vpop.permute.xlu0 %2366
      %2370 = vset.pattern.permute.xlu0 0
      %2371 = vperm.xlu0 %2370, %v1963
      %v2372 = vpop.permute.xlu0 %2371
      %2375 = vset.pattern.permute.xlu0 0
      %2376 = vperm.xlu0 %2375, %v1964
      %v2377 = vpop.permute.xlu0 %2376
      %2380 = vset.pattern.permute.xlu0 0
      %2381 = vperm.xlu0 %2380, %v1965
      %v2382 = vpop.permute.xlu0 %2381
      %2385 = vset.pattern.permute.xlu0 0
      %2386 = vperm.xlu0 %2385, %v1966
      %v2387 = vpop.permute.xlu0 %2386
      %2390 = vset.pattern.permute.xlu0 0
      %2391 = vperm.xlu0 %2390, %v1967
      %v2392 = vpop.permute.xlu0 %2391
      %2395 = vset.pattern.permute.xlu0 0
      %2396 = vperm.xlu0 %2395, %v1968
      %v2397 = vpop.permute.xlu0 %2396
      %2400 = vset.pattern.permute.xlu0 0
      %2401 = vperm.xlu0 %2400, %v1969
      %v2402 = vpop.permute.xlu0 %2401
      %2405 = vset.pattern.permute.xlu0 0
      %2406 = vperm.xlu0 %2405, %v1970
      %v2407 = vpop.permute.xlu0 %2406
      %2410 = vset.pattern.permute.xlu0 0
      %2411 = vperm.xlu0 %2410, %v1971
      %v2412 = vpop.permute.xlu0 %2411
      %2415 = vset.pattern.permute.xlu0 0
      %2416 = vperm.xlu0 %2415, %v1972
      %v2417 = vpop.permute.xlu0 %2416
      %2420 = vset.pattern.permute.xlu0 0
      %2421 = vperm.xlu0 %2420, %v1973
      %v2422 = vpop.permute.xlu0 %2421
      %2425 = vset.pattern.permute.xlu0 0
      %2426 = vperm.xlu0 %2425, %v1974
      %v2427 = vpop.permute.xlu0 %2426
      %2430 = vset.pattern.permute.xlu0 0
      %2431 = vperm.xlu0 %2430, %v1975
      %v2432 = vpop.permute.xlu0 %2431
      %2435 = vset.pattern.permute.xlu0 0
      %2436 = vperm.xlu0 %2435, %v1976
      %v2437 = vpop.permute.xlu0 %2436
      %2440 = vset.pattern.permute.xlu0 0
      %2441 = vperm.xlu0 %2440, %v1977
      %v2442 = vpop.permute.xlu0 %2441
      %2445 = vset.pattern.permute.xlu0 0
      %2446 = vperm.xlu0 %2445, %v1978
      %v2447 = vpop.permute.xlu0 %2446
      %2450 = vset.pattern.permute.xlu0 0
      %2451 = vperm.xlu0 %2450, %v1979
      %v2452 = vpop.permute.xlu0 %2451
      %2455 = vset.pattern.permute.xlu0 0
      %2456 = vperm.xlu0 %2455, %v1980
      %v2457 = vpop.permute.xlu0 %2456
      %2460 = vset.pattern.permute.xlu0 0
      %2461 = vperm.xlu0 %2460, %v1981
      %v2462 = vpop.permute.xlu0 %2461
      %2465 = vset.pattern.permute.xlu0 0
      %2466 = vperm.xlu0 %2465, %v1982
      %v2467 = vpop.permute.xlu0 %2466
      %2470 = vset.pattern.permute.xlu0 0
      %2471 = vperm.xlu0 %2470, %v1983
      %v2472 = vpop.permute.xlu0 %2471
      %v2474 = vmul.f32 %v1788, %v1987
      %v2475 = vmul.f32 %v1789, %v1992
      %v2476 = vmul.f32 %v1790, %v1997
      %v2477 = vmul.f32 %v1791, %v2002
      %v2478 = vmul.f32 %v1792, %v2007
      %v2479 = vmul.f32 %v1793, %v2012
      %v2480 = vmul.f32 %v1794, %v2017
      %v2481 = vmul.f32 %v1795, %v2022
      %v2482 = vmul.f32 %v1796, %v2027
      %v2483 = vmul.f32 %v1797, %v2032
      %v2484 = vmul.f32 %v1798, %v2037
      %v2485 = vmul.f32 %v1799, %v2042
      %v2486 = vmul.f32 %v1800, %v2047
      %v2487 = vmul.f32 %v1801, %v2052
      %v2488 = vmul.f32 %v1802, %v2057
      %v2489 = vmul.f32 %v1803, %v2062
      %v2490 = vmul.f32 %v1804, %v2067
      %v2491 = vmul.f32 %v1805, %v2072
      %v2492 = vmul.f32 %v1806, %v2077
      %v2493 = vmul.f32 %v1807, %v2082
      %v2494 = vmul.f32 %v1808, %v2087
      %v2495 = vmul.f32 %v1809, %v2092
      %v2496 = vmul.f32 %v1810, %v2097
      %v2497 = vmul.f32 %v1811, %v2102
      %v2498 = vmul.f32 %v1812, %v2107
      %v2499 = vmul.f32 %v1813, %v2112
      %v2500 = vmul.f32 %v1814, %v2117
      %v2501 = vmul.f32 %v1815, %v2122
      %v2502 = vmul.f32 %v1816, %v2127
      %v2503 = vmul.f32 %v1817, %v2132
      %v2504 = vmul.f32 %v1818, %v2137
      %v2505 = vmul.f32 %v1819, %v2142
      %v2506 = vmul.f32 %v1820, %v2147
      %v2507 = vmul.f32 %v1821, %v2152
      %v2508 = vmul.f32 %v1822, %v2157
      %v2509 = vmul.f32 %v1823, %v2162
      %v2510 = vmul.f32 %v1824, %v2167
      %v2511 = vmul.f32 %v1825, %v2172
      %v2512 = vmul.f32 %v1826, %v2177
      %v2513 = vmul.f32 %v1827, %v2182
      %v2514 = vmul.f32 %v1828, %v2187
      %v2515 = vmul.f32 %v1829, %v2192
      %v2516 = vmul.f32 %v1830, %v2197
      %v2517 = vmul.f32 %v1831, %v2202
      %v2518 = vmul.f32 %v1832, %v2207
      %v2519 = vmul.f32 %v1833, %v2212
      %v2520 = vmul.f32 %v1834, %v2217
      %v2521 = vmul.f32 %v1835, %v2222
      %v2522 = vmul.f32 %v1836, %v2227
      %v2523 = vmul.f32 %v1837, %v2232
      %v2524 = vmul.f32 %v1838, %v2237
      %v2525 = vmul.f32 %v1839, %v2242
      %v2526 = vmul.f32 %v1840, %v2247
      %v2527 = vmul.f32 %v1841, %v2252
      %v2528 = vmul.f32 %v1842, %v2257
      %v2529 = vmul.f32 %v1843, %v2262
      %v2530 = vmul.f32 %v1844, %v2267
      %v2531 = vmul.f32 %v1845, %v2272
      %v2532 = vmul.f32 %v1846, %v2277
      %v2533 = vmul.f32 %v1847, %v2282
      %v2534 = vmul.f32 %v1848, %v2287
      %v2535 = vmul.f32 %v1849, %v2292
      %v2536 = vmul.f32 %v1850, %v2297
      %v2537 = vmul.f32 %v1851, %v2302
      %v2538 = vmul.f32 %v1852, %v2307
      %v2539 = vmul.f32 %v1853, %v2312
      %v2540 = vmul.f32 %v1854, %v2317
      %v2541 = vmul.f32 %v1855, %v2322
      %v2542 = vmul.f32 %v1856, %v2327
      %v2543 = vmul.f32 %v1857, %v2332
      %v2544 = vmul.f32 %v1858, %v2337
      %v2545 = vmul.f32 %v1859, %v2342
      %v2546 = vmul.f32 %v1860, %v2347
      %v2547 = vmul.f32 %v1861, %v2352
      %v2548 = vmul.f32 %v1862, %v2357
      %v2549 = vmul.f32 %v1863, %v2362
      %v2550 = vmul.f32 %v1864, %v2367
      %v2551 = vmul.f32 %v1865, %v2372
      %v2552 = vmul.f32 %v1866, %v2377
      %v2553 = vmul.f32 %v1867, %v2382
      %v2554 = vmul.f32 %v1868, %v2387
      %v2555 = vmul.f32 %v1869, %v2392
      %v2556 = vmul.f32 %v1870, %v2397
      %v2557 = vmul.f32 %v1871, %v2402
      %v2558 = vmul.f32 %v1872, %v2407
      %v2559 = vmul.f32 %v1873, %v2412
      %v2560 = vmul.f32 %v1874, %v2417
      %v2561 = vmul.f32 %v1875, %v2422
      %v2562 = vmul.f32 %v1876, %v2427
      %v2563 = vmul.f32 %v1877, %v2432
      %v2564 = vmul.f32 %v1878, %v2437
      %v2565 = vmul.f32 %v1879, %v2442
      %v2566 = vmul.f32 %v1880, %v2447
      %v2567 = vmul.f32 %v1881, %v2452
      %v2568 = vmul.f32 %v1882, %v2457
      %v2569 = vmul.f32 %v1883, %v2462
      %v2570 = vmul.f32 %v1884, %v2467
      %v2571 = vmul.f32 %v1885, %v2472
      %vm2572 = vcmask 523264
      %2573 = vst.msk [vmem:[%s224] sm:$0xff] %vm2572, %v2474
      %2574 = vst.msk [vmem:[%s224 + $0x8] sm:$0xff] %vm2572, %v2475
      %2575 = vst.msk [vmem:[%s224 + $0x10] sm:$0xff] %vm2572, %v2476
      %2576 = vst.msk [vmem:[%s224 + $0x18] sm:$0xff] %vm2572, %v2477
      %2577 = vst.msk [vmem:[%s224 + $0x20] sm:$0xff] %vm2572, %v2478
      %2578 = vst.msk [vmem:[%s224 + $0x28] sm:$0xff] %vm2572, %v2479
      %2579 = vst.msk [vmem:[%s224 + $0x30] sm:$0xff] %vm2572, %v2480
      %2580 = vst.msk [vmem:[%s224 + $0x38] sm:$0xff] %vm2572, %v2481
      %2581 = vst.msk [vmem:[%s224 + $0x40] sm:$0xff] %vm2572, %v2482
      %2582 = vst.msk [vmem:[%s224 + $0x48] sm:$0xff] %vm2572, %v2483
      %2583 = vst.msk [vmem:[%s224 + $0x50] sm:$0xff] %vm2572, %v2484
      %2584 = vst.msk [vmem:[%s224 + $0x58] sm:$0xff] %vm2572, %v2485
      %2585 = vst.msk [vmem:[%s224 + $0x60] sm:$0xff] %vm2572, %v2486
      %2586 = vst.msk [vmem:[%s224 + $0x68] sm:$0xff] %vm2572, %v2487
      %2587 = vst.msk [vmem:[%s224 + $0x70] sm:$0xff] %vm2572, %v2488
      %2588 = vst.msk [vmem:[%s224 + $0x78] sm:$0xff] %vm2572, %v2489
      %2589 = vst.msk [vmem:[%s224 + $0x80] sm:$0xff] %vm2572, %v2490
      %2590 = vst.msk [vmem:[%s224 + $0x88] sm:$0xff] %vm2572, %v2491
      %2591 = vst.msk [vmem:[%s224 + $0x90] sm:$0xff] %vm2572, %v2492
      %2592 = vst.msk [vmem:[%s224 + $0x98] sm:$0xff] %vm2572, %v2493
      %2593 = vst.msk [vmem:[%s224 + $0xa0] sm:$0xff] %vm2572, %v2494
      %2594 = vst.msk [vmem:[%s224 + $0xa8] sm:$0xff] %vm2572, %v2495
      %2595 = vst.msk [vmem:[%s224 + $0xb0] sm:$0xff] %vm2572, %v2496
      %2596 = vst.msk [vmem:[%s224 + $0xb8] sm:$0xff] %vm2572, %v2497
      %2597 = vst.msk [vmem:[%s224 + $0xc0] sm:$0xff] %vm2572, %v2498
      %2598 = vst.msk [vmem:[%s224 + $0xc8] sm:$0xff] %vm2572, %v2499
      %2599 = vst.msk [vmem:[%s224 + $0xd0] sm:$0xff] %vm2572, %v2500
      %2600 = vst.msk [vmem:[%s224 + $0xd8] sm:$0xff] %vm2572, %v2501
      %2601 = vst.msk [vmem:[%s224 + $0xe0] sm:$0xff] %vm2572, %v2502
      %2602 = vst.msk [vmem:[%s224 + $0xe8] sm:$0xff] %vm2572, %v2503
      %2603 = vst.msk [vmem:[%s224 + $0xf0] sm:$0xff] %vm2572, %v2504
      %2604 = vst.msk [vmem:[%s224 + $0xf8] sm:$0xff] %vm2572, %v2505
      %2605 = vst.msk [vmem:[%s224 + $0x100] sm:$0xff] %vm2572, %v2506
      %2606 = vst.msk [vmem:[%s224 + $0x108] sm:$0xff] %vm2572, %v2507
      %2607 = vst.msk [vmem:[%s224 + $0x110] sm:$0xff] %vm2572, %v2508
      %2608 = vst.msk [vmem:[%s224 + $0x118] sm:$0xff] %vm2572, %v2509
      %2609 = vst.msk [vmem:[%s224 + $0x120] sm:$0xff] %vm2572, %v2510
      %2610 = vst.msk [vmem:[%s224 + $0x128] sm:$0xff] %vm2572, %v2511
      %2611 = vst.msk [vmem:[%s224 + $0x130] sm:$0xff] %vm2572, %v2512
      %2612 = vst.msk [vmem:[%s224 + $0x138] sm:$0xff] %vm2572, %v2513
      %2613 = vst.msk [vmem:[%s224 + $0x140] sm:$0xff] %vm2572, %v2514
      %2614 = vst.msk [vmem:[%s224 + $0x148] sm:$0xff] %vm2572, %v2515
      %2615 = vst.msk [vmem:[%s224 + $0x150] sm:$0xff] %vm2572, %v2516
      %2616 = vst.msk [vmem:[%s224 + $0x158] sm:$0xff] %vm2572, %v2517
      %2617 = vst.msk [vmem:[%s224 + $0x160] sm:$0xff] %vm2572, %v2518
      %2618 = vst.msk [vmem:[%s224 + $0x168] sm:$0xff] %vm2572, %v2519
      %2619 = vst.msk [vmem:[%s224 + $0x170] sm:$0xff] %vm2572, %v2520
      %2620 = vst.msk [vmem:[%s224 + $0x178] sm:$0xff] %vm2572, %v2521
      %2621 = vst.msk [vmem:[%s224 + $0x180] sm:$0xff] %vm2572, %v2522
      %2622 = vst.msk [vmem:[%s224 + $0x188] sm:$0xff] %vm2572, %v2523
      %2623 = vst.msk [vmem:[%s224 + $0x190] sm:$0xff] %vm2572, %v2524
      %2624 = vst.msk [vmem:[%s224 + $0x198] sm:$0xff] %vm2572, %v2525
      %2625 = vst.msk [vmem:[%s224 + $0x1a0] sm:$0xff] %vm2572, %v2526
      %2626 = vst.msk [vmem:[%s224 + $0x1a8] sm:$0xff] %vm2572, %v2527
      %2627 = vst.msk [vmem:[%s224 + $0x1b0] sm:$0xff] %vm2572, %v2528
      %2628 = vst.msk [vmem:[%s224 + $0x1b8] sm:$0xff] %vm2572, %v2529
      %2629 = vst.msk [vmem:[%s224 + $0x1c0] sm:$0xff] %vm2572, %v2530
      %2630 = vst.msk [vmem:[%s224 + $0x1c8] sm:$0xff] %vm2572, %v2531
      %2631 = vst.msk [vmem:[%s224 + $0x1d0] sm:$0xff] %vm2572, %v2532
      %2632 = vst.msk [vmem:[%s224 + $0x1d8] sm:$0xff] %vm2572, %v2533
      %2633 = vst.msk [vmem:[%s224 + $0x1e0] sm:$0xff] %vm2572, %v2534
      %2634 = vst.msk [vmem:[%s224 + $0x1e8] sm:$0xff] %vm2572, %v2535
      %2635 = vst.msk [vmem:[%s224 + $0x1f0] sm:$0xff] %vm2572, %v2536
      %2636 = vst.msk [vmem:[%s224 + $0x1f8] sm:$0xff] %vm2572, %v2537
      %2637 = vst.msk [vmem:[%s224 + $0x200] sm:$0xff] %vm2572, %v2538
      %2638 = vst.msk [vmem:[%s224 + $0x208] sm:$0xff] %vm2572, %v2539
      %2639 = vst.msk [vmem:[%s224 + $0x210] sm:$0xff] %vm2572, %v2540
      %2640 = vst.msk [vmem:[%s224 + $0x218] sm:$0xff] %vm2572, %v2541
      %2641 = vst.msk [vmem:[%s224 + $0x220] sm:$0xff] %vm2572, %v2542
      %2642 = vst.msk [vmem:[%s224 + $0x228] sm:$0xff] %vm2572, %v2543
      %2643 = vst.msk [vmem:[%s224 + $0x230] sm:$0xff] %vm2572, %v2544
      %2644 = vst.msk [vmem:[%s224 + $0x238] sm:$0xff] %vm2572, %v2545
      %2645 = vst.msk [vmem:[%s224 + $0x240] sm:$0xff] %vm2572, %v2546
      %2646 = vst.msk [vmem:[%s224 + $0x248] sm:$0xff] %vm2572, %v2547
      %2647 = vst.msk [vmem:[%s224 + $0x250] sm:$0xff] %vm2572, %v2548
      %2648 = vst.msk [vmem:[%s224 + $0x258] sm:$0xff] %vm2572, %v2549
      %2649 = vst.msk [vmem:[%s224 + $0x260] sm:$0xff] %vm2572, %v2550
      %2650 = vst.msk [vmem:[%s224 + $0x268] sm:$0xff] %vm2572, %v2551
      %2651 = vst.msk [vmem:[%s224 + $0x270] sm:$0xff] %vm2572, %v2552
      %2652 = vst.msk [vmem:[%s224 + $0x278] sm:$0xff] %vm2572, %v2553
      %2653 = vst.msk [vmem:[%s224 + $0x280] sm:$0xff] %vm2572, %v2554
      %2654 = vst.msk [vmem:[%s224 + $0x288] sm:$0xff] %vm2572, %v2555
      %2655 = vst.msk [vmem:[%s224 + $0x290] sm:$0xff] %vm2572, %v2556
      %2656 = vst.msk [vmem:[%s224 + $0x298] sm:$0xff] %vm2572, %v2557
      %2657 = vst.msk [vmem:[%s224 + $0x2a0] sm:$0xff] %vm2572, %v2558
      %2658 = vst.msk [vmem:[%s224 + $0x2a8] sm:$0xff] %vm2572, %v2559
      %2659 = vst.msk [vmem:[%s224 + $0x2b0] sm:$0xff] %vm2572, %v2560
      %2660 = vst.msk [vmem:[%s224 + $0x2b8] sm:$0xff] %vm2572, %v2561
      %2661 = vst.msk [vmem:[%s224 + $0x2c0] sm:$0xff] %vm2572, %v2562
      %2662 = vst.msk [vmem:[%s224 + $0x2c8] sm:$0xff] %vm2572, %v2563
      %2663 = vst.msk [vmem:[%s224 + $0x2d0] sm:$0xff] %vm2572, %v2564
      %2664 = vst.msk [vmem:[%s224 + $0x2d8] sm:$0xff] %vm2572, %v2565
      %2665 = vst.msk [vmem:[%s224 + $0x2e0] sm:$0xff] %vm2572, %v2566
      %2666 = vst.msk [vmem:[%s224 + $0x2e8] sm:$0xff] %vm2572, %v2567
      %2667 = vst.msk [vmem:[%s224 + $0x2f0] sm:$0xff] %vm2572, %v2568
      %2668 = vst.msk [vmem:[%s224 + $0x2f8] sm:$0xff] %vm2572, %v2569
      %2669 = vst.msk [vmem:[%s224 + $0x300] sm:$0xff] %vm2572, %v2570
      %2670 = vst.msk [vmem:[%s224 + $0x308] sm:$0xff] %vm2572, %v2571
      %s2671 = smul.u32 98, %s15
      %p2672 = scmp.lt.s32.totalorder %s2671, 195
      %s2673 = scalar_select %p2672, %s2671, 195
      %s2674 = smul.addr %s2673, 8
      %s2675 = scalar_lea.vmem %s4, %s2674
      // Predicated region
      $region37: #{residual_net_ptq_forward.11} parent=35 // pred_check
        %p2676 = pneg %p127
      $region38: #{residual_net_ptq_forward.11} parent=35 // pred_check_branch
        %2678 = sbr.rel (%p2676) target = $region40
      $region39: #{residual_net_ptq_forward.11} parent=35 // pred_region
        %s2679 = smul.u32 98, %s15
      $region40: #{residual_net_ptq_forward.11} parent=35 // pred_fallthru
        _
    $region36: #{residual_net_ptq_forward.11} parent=5 // pred_fallthru
      _
    %p2680 = scmp.le.s32.totalorder 2, %s10
    // Predicated region
    $region41: #{residual_net_ptq_forward.11} parent=5 // pred_check
      %p2681 = pneg %p2680
    $region42: #{residual_net_ptq_forward.11} parent=5 // pred_check_branch
      %2683 = sbr.rel (%p2681) target = $region44
    $region43: #{residual_net_ptq_forward.11} parent=5 // pred_region
      %s2684 = ssub.s32 %s10, 2
      // Predicated region
      $region45: #{residual_net_ptq_forward.11} parent=43 // pred_check
        %p2685 = pneg %p133
      $region46: #{residual_net_ptq_forward.11} parent=43 // pred_check_branch
        %2687 = sbr.rel (%p2685) target = $region48
      $region47: #{residual_net_ptq_forward.11} parent=43 // pred_region
        %s2688 = smul.u32 98, %s16
        %p2689 = scmp.lt.s32.totalorder %s2688, 195
        %s2690 = scalar_select %p2689, %s2688, 195
        %s2691 = smul.addr %s2690, 8
        %s2692 = scalar_lea.vmem %s4, %s2691
      $region48: #{residual_net_ptq_forward.11} parent=43 // pred_fallthru
        _
    $region44: #{residual_net_ptq_forward.11} parent=5 // pred_fallthru
      _
  $region6: #{residual_net_ptq_forward.11} parent=0 // loop_footer
    %s14 = sadd.s32 1, %s10
  $region7: #{residual_net_ptq_forward.11} parent=0 // loop_footer_branch
    %9 = sbr.rel target = $region3
  $region8: #{residual_net_ptq_forward.11} parent=0 // loop_exit
    _

// kernel: residual_net_ptq_forward.12
$region0: #{residual_net_ptq_forward.12}
  #allocation0 [shape = 'u32[]', space=smem, size = 0x4, offset = 0x4, fixed_abs, tag = 'smem constant byte address 0x4 - core index']
  #allocation1 [shape = 'u32[72,128]{1,0:T(1,128)}', space=vmem, size = 0x9000, scoped, tag = 'internal scratch']
  %s0 = inlined_call_operand.vmem [shape: f32[392,256], index: 0, kind: input, shape index: {}]
  %s1 = inlined_call_operand.vmem [shape: f32[256,64], index: 1, kind: input, shape index: {}]
  %s2 = inlined_call_operand.vmem [shape: f32[1,64], index: 2, kind: input, shape index: {}]
  %s3 = inlined_call_operand.vmem [shape: f32[392,64], index: 3, kind: output, shape index: {}]
  %s4 = sld [smem:[#allocation0]]
  $region22: #{residual_net_ptq_forward.12} parent=0
    _
  %s6 = ssub.s32 1, %s4
  %s7 = scalar_select 0, %s6, %s4
  // Predicated region
  $region2: #{residual_net_ptq_forward.12} parent=0 // pred_check
    _
  $region3: #{residual_net_ptq_forward.12} parent=0 // pred_check_branch
    %9 = sbr.rel (0) target = $region5
  $region4: #{residual_net_ptq_forward.12} parent=0 // pred_region
    _
  $region5: #{residual_net_ptq_forward.12} parent=0 // pred_fallthru
    _
  // Predicated region
  $region6: #{residual_net_ptq_forward.12} parent=0 // pred_check
    _
  $region7: #{residual_net_ptq_forward.12} parent=0 // pred_check_branch
    %11 = sbr.rel (0) target = $region9
  $region8: #{residual_net_ptq_forward.12} parent=0 // pred_region
    _
  $region9: #{residual_net_ptq_forward.12} parent=0 // pred_fallthru
    _
  // Predicated region
  $region10: #{residual_net_ptq_forward.12} parent=0 // pred_check
    _
  $region11: #{residual_net_ptq_forward.12} parent=0 // pred_check_branch
    %13 = sbr.rel (0) target = $region13
  $region12: #{residual_net_ptq_forward.12} parent=0 // pred_region
    _
  $region13: #{residual_net_ptq_forward.12} parent=0 // pred_fallthru
    _
  %v14 = vld [vmem:[%s0] sm:$0xff]
  %v15 = vld [vmem:[%s0 + $0x8] sm:$0xff]
  %v16 = vld [vmem:[%s0 + $0x10] sm:$0xff]
  %v17 = vld [vmem:[%s0 + $0x18] sm:$0xff]
  %v18 = vld [vmem:[%s0 + $0x20] sm:$0xff]
  %v19 = vld [vmem:[%s0 + $0x28] sm:$0xff]
  %v20 = vld [vmem:[%s0 + $0x30] sm:$0xff]
  %v21 = vld [vmem:[%s0 + $0x38] sm:$0xff]
  %v22 = vld [vmem:[%s0 + $0x40] sm:$0xff]
  %v23 = vld [vmem:[%s0 + $0x48] sm:$0xff]
  %v24 = vld [vmem:[%s0 + $0x50] sm:$0xff]
  %v25 = vld [vmem:[%s0 + $0x58] sm:$0xff]
  %v26 = vld [vmem:[%s0 + $0x60] sm:$0xff]
  %v27 = vld [vmem:[%s0 + $0x68] sm:$0xff]
  %v28 = vld [vmem:[%s0 + $0x70] sm:$0xff]
  %v29 = vld [vmem:[%s0 + $0x78] sm:$0xff]
  %v30 = vld [vmem:[%s0 + $0x80] sm:$0xff]
  %v31 = vld [vmem:[%s0 + $0x88] sm:$0xff]
  %v32 = vld [vmem:[%s0 + $0x90] sm:$0xff]
  %v33 = vld [vmem:[%s0 + $0x98] sm:$0xff]
  %v34 = vld [vmem:[%s0 + $0xa0] sm:$0xff]
  %v35 = vld [vmem:[%s0 + $0xa8] sm:$0xff]
  %v36 = vld [vmem:[%s0 + $0xb0] sm:$0xff]
  %v37 = vld [vmem:[%s0 + $0xb8] sm:$0xff]
  %v38 = vld [vmem:[%s0 + $0xc0] sm:$0xff]
  %v39 = vld [vmem:[%s0 + $0xc8] sm:$0xff]
  %v40 = vld [vmem:[%s0 + $0xd0] sm:$0xff]
  %v41 = vld [vmem:[%s0 + $0xd8] sm:$0xff]
  %v42 = vld [vmem:[%s0 + $0xe0] sm:$0xff]
  %v43 = vld [vmem:[%s0 + $0xe8] sm:$0xff]
  %v44 = vld [vmem:[%s0 + $0xf0] sm:$0xff]
  %v45 = vld [vmem:[%s0 + $0xf8] sm:$0xff]
  %v46 = vld [vmem:[%s0 + $0x100] sm:$0xff]
  %v47 = vld [vmem:[%s0 + $0x108] sm:$0xff]
  %v48 = vld [vmem:[%s0 + $0x110] sm:$0xff]
  %v49 = vld [vmem:[%s0 + $0x118] sm:$0xff]
  %v50 = vld [vmem:[%s0 + $0x120] sm:$0xff]
  %v51 = vld [vmem:[%s0 + $0x128] sm:$0xff]
  %v52 = vld [vmem:[%s0 + $0x130] sm:$0xff]
  %v53 = vld [vmem:[%s0 + $0x138] sm:$0xff]
  %v54 = vld [vmem:[%s0 + $0x140] sm:$0xff]
  %v55 = vld [vmem:[%s0 + $0x148] sm:$0xff]
  %v56 = vld [vmem:[%s0 + $0x150] sm:$0xff]
  %v57 = vld [vmem:[%s0 + $0x158] sm:$0xff]
  %v58 = vld [vmem:[%s0 + $0x160] sm:$0xff]
  %v59 = vld [vmem:[%s0 + $0x168] sm:$0xff]
  %v60 = vld [vmem:[%s0 + $0x170] sm:$0xff]
  %v61 = vld [vmem:[%s0 + $0x178] sm:$0xff]
  %v62 = vld [vmem:[%s0 + $0x180] sm:$0xff]
  %v63 = vld [vmem:[%s0 + $0x188] sm:$0xff]
  %v64 = vld [vmem:[%s0 + $0x190] sm:$0xff]
  %v65 = vld [vmem:[%s0 + $0x198] sm:$0xff]
  %v66 = vld [vmem:[%s0 + $0x1a0] sm:$0xff]
  %v67 = vld [vmem:[%s0 + $0x1a8] sm:$0xff]
  %v68 = vld [vmem:[%s0 + $0x1b0] sm:$0xff]
  %v69 = vld [vmem:[%s0 + $0x1b8] sm:$0xff]
  %v70 = vld [vmem:[%s0 + $0x1c0] sm:$0xff]
  %v71 = vld [vmem:[%s0 + $0x1c8] sm:$0xff]
  %v72 = vld [vmem:[%s0 + $0x1d0] sm:$0xff]
  %v73 = vld [vmem:[%s0 + $0x1d8] sm:$0xff]
  %v74 = vld [vmem:[%s0 + $0x1e0] sm:$0xff]
  %v75 = vld [vmem:[%s0 + $0x1e8] sm:$0xff]
  %v76 = vld [vmem:[%s0 + $0x1f0] sm:$0xff]
  %v77 = vld [vmem:[%s0 + $0x1f8] sm:$0xff]
  %v78 = vld [vmem:[%s0 + $0x200] sm:$0xff]
  %v79 = vld [vmem:[%s0 + $0x208] sm:$0xff]
  %v80 = vld [vmem:[%s0 + $0x210] sm:$0xff]
  %v81 = vld [vmem:[%s0 + $0x218] sm:$0xff]
  %v82 = vld [vmem:[%s0 + $0x220] sm:$0xff]
  %v83 = vld [vmem:[%s0 + $0x228] sm:$0xff]
  %v84 = vld [vmem:[%s0 + $0x230] sm:$0xff]
  %v85 = vld [vmem:[%s0 + $0x238] sm:$0xff]
  %v86 = vld [vmem:[%s0 + $0x240] sm:$0xff]
  %v87 = vld [vmem:[%s0 + $0x248] sm:$0xff]
  %v88 = vld [vmem:[%s0 + $0x250] sm:$0xff]
  %v89 = vld [vmem:[%s0 + $0x258] sm:$0xff]
  %v90 = vld [vmem:[%s0 + $0x260] sm:$0xff]
  %v91 = vld [vmem:[%s0 + $0x268] sm:$0xff]
  %v92 = vld [vmem:[%s0 + $0x270] sm:$0xff]
  %v93 = vld [vmem:[%s0 + $0x278] sm:$0xff]
  %v94 = vld [vmem:[%s0 + $0x280] sm:$0xff]
  %v95 = vld [vmem:[%s0 + $0x288] sm:$0xff]
  %v96 = vld [vmem:[%s0 + $0x290] sm:$0xff]
  %v97 = vld [vmem:[%s0 + $0x298] sm:$0xff]
  %v98 = vld [vmem:[%s0 + $0x2a0] sm:$0xff]
  %v99 = vld [vmem:[%s0 + $0x2a8] sm:$0xff]
  %v100 = vld [vmem:[%s0 + $0x2b0] sm:$0xff]
  %v101 = vld [vmem:[%s0 + $0x2b8] sm:$0xff]
  %v102 = vld [vmem:[%s0 + $0x2c0] sm:$0xff]
  %v103 = vld [vmem:[%s0 + $0x2c8] sm:$0xff]
  %v104 = vld [vmem:[%s0 + $0x2d0] sm:$0xff]
  %v105 = vld [vmem:[%s0 + $0x2d8] sm:$0xff]
  %v106 = vld [vmem:[%s0 + $0x2e0] sm:$0xff]
  %v107 = vld [vmem:[%s0 + $0x2e8] sm:$0xff]
  %v108 = vld [vmem:[%s0 + $0x2f0] sm:$0xff]
  %v109 = vld [vmem:[%s0 + $0x2f8] sm:$0xff]
  %v110 = vld [vmem:[%s0 + $0x300] sm:$0xff]
  %v111 = vld [vmem:[%s0 + $0x308] sm:$0xff]
  %v112 = vld [vmem:[%s1] sm:$0xff]
  %v113 = vld [vmem:[%s1 + $0x8] sm:$0xff]
  %v114 = vld [vmem:[%s1 + $0x10] sm:$0xff]
  %v115 = vld [vmem:[%s1 + $0x18] sm:$0xff]
  %v116 = vld [vmem:[%s1 + $0x20] sm:$0xff]
  %v117 = vld [vmem:[%s1 + $0x28] sm:$0xff]
  %v118 = vld [vmem:[%s1 + $0x30] sm:$0xff]
  %v119 = vld [vmem:[%s1 + $0x38] sm:$0xff]
  %v120 = vld [vmem:[%s1 + $0x40] sm:$0xff]
  %v121 = vld [vmem:[%s1 + $0x48] sm:$0xff]
  %v122 = vld [vmem:[%s1 + $0x50] sm:$0xff]
  %v123 = vld [vmem:[%s1 + $0x58] sm:$0xff]
  %v124 = vld [vmem:[%s1 + $0x60] sm:$0xff]
  %v125 = vld [vmem:[%s1 + $0x68] sm:$0xff]
  %v126 = vld [vmem:[%s1 + $0x70] sm:$0xff]
  %v127 = vld [vmem:[%s1 + $0x78] sm:$0xff]
  %v128 = vld [vmem:[%s1 + $0x80] sm:$0xff]
  %v129 = vld [vmem:[%s1 + $0x88] sm:$0xff]
  %v130 = vld [vmem:[%s1 + $0x90] sm:$0xff]
  %v131 = vld [vmem:[%s1 + $0x98] sm:$0xff]
  %v132 = vld [vmem:[%s1 + $0xa0] sm:$0xff]
  %v133 = vld [vmem:[%s1 + $0xa8] sm:$0xff]
  %v134 = vld [vmem:[%s1 + $0xb0] sm:$0xff]
  %v135 = vld [vmem:[%s1 + $0xb8] sm:$0xff]
  %v136 = vld [vmem:[%s1 + $0xc0] sm:$0xff]
  %v137 = vld [vmem:[%s1 + $0xc8] sm:$0xff]
  %v138 = vld [vmem:[%s1 + $0xd0] sm:$0xff]
  %v139 = vld [vmem:[%s1 + $0xd8] sm:$0xff]
  %v140 = vld [vmem:[%s1 + $0xe0] sm:$0xff]
  %v141 = vld [vmem:[%s1 + $0xe8] sm:$0xff]
  %v142 = vld [vmem:[%s1 + $0xf0] sm:$0xff]
  %v143 = vld [vmem:[%s1 + $0xf8] sm:$0xff]
  %v144 = vld [vmem:[%s2] sm:$0x1]
  %v146 = vperm.slane %v144, 0
  %148 = vmatpush.msra.mxu0 %v127
  %149 = vmatpush.msra.mxu0 %v126
  %150 = vmatpush.msra.mxu0 %v125
  %151 = vmatpush.msra.mxu0 %v124
  %152 = vmatpush.msra.mxu0 %v123
  %153 = vmatpush.msra.mxu0 %v122
  %154 = vmatpush.msra.mxu0 %v121
  %155 = vmatpush.msra.mxu0 %v120
  %156 = vmatpush.msra.mxu0 %v119
  %157 = vmatpush.msra.mxu0 %v118
  %158 = vmatpush.msra.mxu0 %v117
  %159 = vmatpush.msra.mxu0 %v116
  %160 = vmatpush.msra.mxu0 %v115
  %161 = vmatpush.msra.mxu0 %v114
  %162 = vmatpush.msra.mxu0 %v113
  %163 = vmatpush.msra.mxu0 %v112
  %164 = vmatmul.f32.gmra.mxu0 %v14
  %v165 = vpop.f32.mrf.mxu0
  %v166 = vadd.f32 %v146, %v165
  %167 = vmatmul.f32.gmra.mxu0 %v16
  %v168 = vpop.f32.mrf.mxu0
  %v169 = vadd.f32 %v146, %v168
  %170 = vmatmul.f32.gmra.mxu0 %v18
  %v171 = vpop.f32.mrf.mxu0
  %v172 = vadd.f32 %v146, %v171
  %173 = vmatmul.f32.gmra.mxu0 %v20
  %v174 = vpop.f32.mrf.mxu0
  %v175 = vadd.f32 %v146, %v174
  %176 = vmatmul.f32.gmra.mxu0 %v22
  %v177 = vpop.f32.mrf.mxu0
  %v178 = vadd.f32 %v146, %v177
  %179 = vmatmul.f32.gmra.mxu0 %v24
  %v180 = vpop.f32.mrf.mxu0
  %v181 = vadd.f32 %v146, %v180
  %182 = vmatmul.f32.gmra.mxu0 %v26
  %v183 = vpop.f32.mrf.mxu0
  %v184 = vadd.f32 %v146, %v183
  %185 = vmatmul.f32.gmra.mxu0 %v28
  %v186 = vpop.f32.mrf.mxu0
  %v187 = vadd.f32 %v146, %v186
  %188 = vmatmul.f32.gmra.mxu0 %v30
  %v189 = vpop.f32.mrf.mxu0
  %v190 = vadd.f32 %v146, %v189
  %191 = vmatmul.f32.gmra.mxu0 %v32
  %v192 = vpop.f32.mrf.mxu0
  %v193 = vadd.f32 %v146, %v192
  %194 = vmatmul.f32.gmra.mxu0 %v34
  %v195 = vpop.f32.mrf.mxu0
  %v196 = vadd.f32 %v146, %v195
  %197 = vmatmul.f32.gmra.mxu0 %v36
  %v198 = vpop.f32.mrf.mxu0
  %v199 = vadd.f32 %v146, %v198
  %200 = vmatmul.f32.gmra.mxu0 %v38
  %v201 = vpop.f32.mrf.mxu0
  %v202 = vadd.f32 %v146, %v201
  %203 = vmatmul.f32.gmra.mxu0 %v40
  %v204 = vpop.f32.mrf.mxu0
  %v205 = vadd.f32 %v146, %v204
  %206 = vmatmul.f32.gmra.mxu0 %v42
  %v207 = vpop.f32.mrf.mxu0
  %v208 = vadd.f32 %v146, %v207
  %209 = vmatmul.f32.gmra.mxu0 %v44
  %v210 = vpop.f32.mrf.mxu0
  %v211 = vadd.f32 %v146, %v210
  %212 = vmatmul.f32.gmra.mxu0 %v46
  %v213 = vpop.f32.mrf.mxu0
  %v214 = vadd.f32 %v146, %v213
  %215 = vmatmul.f32.gmra.mxu0 %v48
  %v216 = vpop.f32.mrf.mxu0
  %v217 = vadd.f32 %v146, %v216
  %218 = vmatmul.f32.gmra.mxu0 %v50
  %v219 = vpop.f32.mrf.mxu0
  %v220 = vadd.f32 %v146, %v219
  %221 = vmatmul.f32.gmra.mxu0 %v52
  %v222 = vpop.f32.mrf.mxu0
  %v223 = vadd.f32 %v146, %v222
  %224 = vmatmul.f32.gmra.mxu0 %v54
  %v225 = vpop.f32.mrf.mxu0
  %v226 = vadd.f32 %v146, %v225
  %227 = vmatmul.f32.gmra.mxu0 %v56
  %v228 = vpop.f32.mrf.mxu0
  %v229 = vadd.f32 %v146, %v228
  %230 = vmatmul.f32.gmra.mxu0 %v58
  %v231 = vpop.f32.mrf.mxu0
  %v232 = vadd.f32 %v146, %v231
  %233 = vmatmul.f32.gmra.mxu0 %v60
  %v234 = vpop.f32.mrf.mxu0
  %v235 = vadd.f32 %v146, %v234
  %236 = vmatmul.f32.gmra.mxu0 %v62
  %v237 = vpop.f32.mrf.mxu0
  %v238 = vadd.f32 %v146, %v237
  %239 = vmatmul.f32.gmra.mxu0 %v64
  %v240 = vpop.f32.mrf.mxu0
  %v241 = vadd.f32 %v146, %v240
  %242 = vmatmul.f32.gmra.mxu0 %v66
  %v243 = vpop.f32.mrf.mxu0
  %v244 = vadd.f32 %v146, %v243
  %245 = vmatmul.f32.gmra.mxu0 %v68
  %v246 = vpop.f32.mrf.mxu0
  %v247 = vadd.f32 %v146, %v246
  %248 = vmatmul.f32.gmra.mxu0 %v70
  %v249 = vpop.f32.mrf.mxu0
  %v250 = vadd.f32 %v146, %v249
  %251 = vmatmul.f32.gmra.mxu0 %v72
  %v252 = vpop.f32.mrf.mxu0
  %v253 = vadd.f32 %v146, %v252
  %254 = vmatmul.f32.gmra.mxu0 %v74
  %v255 = vpop.f32.mrf.mxu0
  %v256 = vadd.f32 %v146, %v255
  %257 = vmatmul.f32.gmra.mxu0 %v76
  %v258 = vpop.f32.mrf.mxu0
  %v259 = vadd.f32 %v146, %v258
  %260 = vmatmul.f32.gmra.mxu0 %v78
  %v261 = vpop.f32.mrf.mxu0
  %v262 = vadd.f32 %v146, %v261
  %263 = vmatmul.f32.gmra.mxu0 %v80
  %v264 = vpop.f32.mrf.mxu0
  %v265 = vadd.f32 %v146, %v264
  %266 = vmatmul.f32.gmra.mxu0 %v82
  %v267 = vpop.f32.mrf.mxu0
  %v268 = vadd.f32 %v146, %v267
  %269 = vmatmul.f32.gmra.mxu0 %v84
  %v270 = vpop.f32.mrf.mxu0
  %v271 = vadd.f32 %v146, %v270
  %272 = vmatmul.f32.gmra.mxu0 %v86
  %v273 = vpop.f32.mrf.mxu0
  %v274 = vadd.f32 %v146, %v273
  %275 = vmatmul.f32.gmra.mxu0 %v88
  %v276 = vpop.f32.mrf.mxu0
  %v277 = vadd.f32 %v146, %v276
  %278 = vmatmul.f32.gmra.mxu0 %v90
  %v279 = vpop.f32.mrf.mxu0
  %v280 = vadd.f32 %v146, %v279
  %281 = vmatmul.f32.gmra.mxu0 %v92
  %v282 = vpop.f32.mrf.mxu0
  %v283 = vadd.f32 %v146, %v282
  %284 = vmatmul.f32.gmra.mxu0 %v94
  %v285 = vpop.f32.mrf.mxu0
  %v286 = vadd.f32 %v146, %v285
  %287 = vmatmul.f32.gmra.mxu0 %v96
  %v288 = vpop.f32.mrf.mxu0
  %v289 = vadd.f32 %v146, %v288
  %290 = vmatmul.f32.gmra.mxu0 %v98
  %v291 = vpop.f32.mrf.mxu0
  %v292 = vadd.f32 %v146, %v291
  %293 = vmatmul.f32.gmra.mxu0 %v100
  %v294 = vpop.f32.mrf.mxu0
  %v295 = vadd.f32 %v146, %v294
  %296 = vmatmul.f32.gmra.mxu0 %v102
  %v297 = vpop.f32.mrf.mxu0
  %v298 = vadd.f32 %v146, %v297
  %299 = vmatmul.f32.gmra.mxu0 %v104
  %v300 = vpop.f32.mrf.mxu0
  %v301 = vadd.f32 %v146, %v300
  %302 = vmatmul.f32.gmra.mxu0 %v106
  %v303 = vpop.f32.mrf.mxu0
  %v304 = vadd.f32 %v146, %v303
  %305 = vmatmul.f32.gmra.mxu0 %v108
  %v306 = vpop.f32.mrf.mxu0
  %v307 = vadd.f32 %v146, %v306
  %308 = vmatmul.f32.gmra.mxu0 %v110
  %v309 = vpop.f32.mrf.mxu0
  %v310 = vadd.f32 %v146, %v309
  %311 = vdwg.mxu0
  %312 = vmatpush.msra.mxu0 %v143
  %313 = vmatpush.msra.mxu0 %v142
  %314 = vmatpush.msra.mxu0 %v141
  %315 = vmatpush.msra.mxu0 %v140
  %316 = vmatpush.msra.mxu0 %v139
  %317 = vmatpush.msra.mxu0 %v138
  %318 = vmatpush.msra.mxu0 %v137
  %319 = vmatpush.msra.mxu0 %v136
  %320 = vmatpush.msra.mxu0 %v135
  %321 = vmatpush.msra.mxu0 %v134
  %322 = vmatpush.msra.mxu0 %v133
  %323 = vmatpush.msra.mxu0 %v132
  %324 = vmatpush.msra.mxu0 %v131
  %325 = vmatpush.msra.mxu0 %v130
  %326 = vmatpush.msra.mxu0 %v129
  %327 = vmatpush.msra.mxu0 %v128
  %328 = vmatmul.f32.gmra.mxu0 %v15
  %v329 = vpop.f32.mrf.mxu0
  %v330 = vadd.f32 %v166, %v329
  %331 = vmatmul.f32.gmra.mxu0 %v17
  %v332 = vpop.f32.mrf.mxu0
  %v333 = vadd.f32 %v169, %v332
  %334 = vmatmul.f32.gmra.mxu0 %v19
  %v335 = vpop.f32.mrf.mxu0
  %v336 = vadd.f32 %v172, %v335
  %337 = vmatmul.f32.gmra.mxu0 %v21
  %v338 = vpop.f32.mrf.mxu0
  %v339 = vadd.f32 %v175, %v338
  %340 = vmatmul.f32.gmra.mxu0 %v23
  %v341 = vpop.f32.mrf.mxu0
  %v342 = vadd.f32 %v178, %v341
  %343 = vmatmul.f32.gmra.mxu0 %v25
  %v344 = vpop.f32.mrf.mxu0
  %v345 = vadd.f32 %v181, %v344
  %346 = vmatmul.f32.gmra.mxu0 %v27
  %v347 = vpop.f32.mrf.mxu0
  %v348 = vadd.f32 %v184, %v347
  %349 = vmatmul.f32.gmra.mxu0 %v29
  %v350 = vpop.f32.mrf.mxu0
  %v351 = vadd.f32 %v187, %v350
  %352 = vmatmul.f32.gmra.mxu0 %v31
  %v353 = vpop.f32.mrf.mxu0
  %v354 = vadd.f32 %v190, %v353
  %355 = vmatmul.f32.gmra.mxu0 %v33
  %v356 = vpop.f32.mrf.mxu0
  %v357 = vadd.f32 %v193, %v356
  %358 = vmatmul.f32.gmra.mxu0 %v35
  %v359 = vpop.f32.mrf.mxu0
  %v360 = vadd.f32 %v196, %v359
  %361 = vmatmul.f32.gmra.mxu0 %v37
  %v362 = vpop.f32.mrf.mxu0
  %v363 = vadd.f32 %v199, %v362
  %364 = vmatmul.f32.gmra.mxu0 %v39
  %v365 = vpop.f32.mrf.mxu0
  %v366 = vadd.f32 %v202, %v365
  %367 = vmatmul.f32.gmra.mxu0 %v41
  %v368 = vpop.f32.mrf.mxu0
  %v369 = vadd.f32 %v205, %v368
  %370 = vmatmul.f32.gmra.mxu0 %v43
  %v371 = vpop.f32.mrf.mxu0
  %v372 = vadd.f32 %v208, %v371
  %373 = vmatmul.f32.gmra.mxu0 %v45
  %v374 = vpop.f32.mrf.mxu0
  %v375 = vadd.f32 %v211, %v374
  %376 = vmatmul.f32.gmra.mxu0 %v47
  %v377 = vpop.f32.mrf.mxu0
  %v378 = vadd.f32 %v214, %v377
  %379 = vmatmul.f32.gmra.mxu0 %v49
  %v380 = vpop.f32.mrf.mxu0
  %v381 = vadd.f32 %v217, %v380
  %382 = vmatmul.f32.gmra.mxu0 %v51
  %v383 = vpop.f32.mrf.mxu0
  %v384 = vadd.f32 %v220, %v383
  %385 = vmatmul.f32.gmra.mxu0 %v53
  %v386 = vpop.f32.mrf.mxu0
  %v387 = vadd.f32 %v223, %v386
  %388 = vmatmul.f32.gmra.mxu0 %v55
  %v389 = vpop.f32.mrf.mxu0
  %v390 = vadd.f32 %v226, %v389
  %391 = vmatmul.f32.gmra.mxu0 %v57
  %v392 = vpop.f32.mrf.mxu0
  %v393 = vadd.f32 %v229, %v392
  %394 = vmatmul.f32.gmra.mxu0 %v59
  %v395 = vpop.f32.mrf.mxu0
  %v396 = vadd.f32 %v232, %v395
  %397 = vmatmul.f32.gmra.mxu0 %v61
  %v398 = vpop.f32.mrf.mxu0
  %v399 = vadd.f32 %v235, %v398
  %400 = vmatmul.f32.gmra.mxu0 %v63
  %v401 = vpop.f32.mrf.mxu0
  %v402 = vadd.f32 %v238, %v401
  %403 = vmatmul.f32.gmra.mxu0 %v65
  %v404 = vpop.f32.mrf.mxu0
  %v405 = vadd.f32 %v241, %v404
  %406 = vmatmul.f32.gmra.mxu0 %v67
  %v407 = vpop.f32.mrf.mxu0
  %v408 = vadd.f32 %v244, %v407
  %409 = vmatmul.f32.gmra.mxu0 %v69
  %v410 = vpop.f32.mrf.mxu0
  %v411 = vadd.f32 %v247, %v410
  %412 = vmatmul.f32.gmra.mxu0 %v71
  %v413 = vpop.f32.mrf.mxu0
  %v414 = vadd.f32 %v250, %v413
  %415 = vmatmul.f32.gmra.mxu0 %v73
  %v416 = vpop.f32.mrf.mxu0
  %v417 = vadd.f32 %v253, %v416
  %418 = vmatmul.f32.gmra.mxu0 %v75
  %v419 = vpop.f32.mrf.mxu0
  %v420 = vadd.f32 %v256, %v419
  %421 = vmatmul.f32.gmra.mxu0 %v77
  %v422 = vpop.f32.mrf.mxu0
  %v423 = vadd.f32 %v259, %v422
  %424 = vmatmul.f32.gmra.mxu0 %v79
  %v425 = vpop.f32.mrf.mxu0
  %v426 = vadd.f32 %v262, %v425
  %427 = vmatmul.f32.gmra.mxu0 %v81
  %v428 = vpop.f32.mrf.mxu0
  %v429 = vadd.f32 %v265, %v428
  %430 = vmatmul.f32.gmra.mxu0 %v83
  %v431 = vpop.f32.mrf.mxu0
  %v432 = vadd.f32 %v268, %v431
  %433 = vmatmul.f32.gmra.mxu0 %v85
  %v434 = vpop.f32.mrf.mxu0
  %v435 = vadd.f32 %v271, %v434
  %436 = vmatmul.f32.gmra.mxu0 %v87
  %v437 = vpop.f32.mrf.mxu0
  %v438 = vadd.f32 %v274, %v437
  %439 = vmatmul.f32.gmra.mxu0 %v89
  %v440 = vpop.f32.mrf.mxu0
  %v441 = vadd.f32 %v277, %v440
  %442 = vmatmul.f32.gmra.mxu0 %v91
  %v443 = vpop.f32.mrf.mxu0
  %v444 = vadd.f32 %v280, %v443
  %445 = vmatmul.f32.gmra.mxu0 %v93
  %v446 = vpop.f32.mrf.mxu0
  %v447 = vadd.f32 %v283, %v446
  %448 = vmatmul.f32.gmra.mxu0 %v95
  %v449 = vpop.f32.mrf.mxu0
  %v450 = vadd.f32 %v286, %v449
  %451 = vmatmul.f32.gmra.mxu0 %v97
  %v452 = vpop.f32.mrf.mxu0
  %v453 = vadd.f32 %v289, %v452
  %454 = vmatmul.f32.gmra.mxu0 %v99
  %v455 = vpop.f32.mrf.mxu0
  %v456 = vadd.f32 %v292, %v455
  %457 = vmatmul.f32.gmra.mxu0 %v101
  %v458 = vpop.f32.mrf.mxu0
  %v459 = vadd.f32 %v295, %v458
  %460 = vmatmul.f32.gmra.mxu0 %v103
  %v461 = vpop.f32.mrf.mxu0
  %v462 = vadd.f32 %v298, %v461
  %463 = vmatmul.f32.gmra.mxu0 %v105
  %v464 = vpop.f32.mrf.mxu0
  %v465 = vadd.f32 %v301, %v464
  %466 = vmatmul.f32.gmra.mxu0 %v107
  %v467 = vpop.f32.mrf.mxu0
  %v468 = vadd.f32 %v304, %v467
  %469 = vmatmul.f32.gmra.mxu0 %v109
  %v470 = vpop.f32.mrf.mxu0
  %v471 = vadd.f32 %v307, %v470
  %472 = vmatmul.f32.gmra.mxu0 %v111
  %v473 = vpop.f32.mrf.mxu0
  %v474 = vadd.f32 %v310, %v473
  %475 = vdwg.mxu0
  %v476 = vmax.f32 %v330, 0.0
  %v477 = vmax.f32 %v333, 0.0
  %v478 = vmax.f32 %v336, 0.0
  %v479 = vmax.f32 %v339, 0.0
  %v480 = vmax.f32 %v342, 0.0
  %v481 = vmax.f32 %v345, 0.0
  %v482 = vmax.f32 %v348, 0.0
  %v483 = vmax.f32 %v351, 0.0
  %v484 = vmax.f32 %v354, 0.0
  %v485 = vmax.f32 %v357, 0.0
  %v486 = vmax.f32 %v360, 0.0
  %v487 = vmax.f32 %v363, 0.0
  %v488 = vmax.f32 %v366, 0.0
  %v489 = vmax.f32 %v369, 0.0
  %v490 = vmax.f32 %v372, 0.0
  %v491 = vmax.f32 %v375, 0.0
  %v492 = vmax.f32 %v378, 0.0
  %v493 = vmax.f32 %v381, 0.0
  %v494 = vmax.f32 %v384, 0.0
  %v495 = vmax.f32 %v387, 0.0
  %v496 = vmax.f32 %v390, 0.0
  %v497 = vmax.f32 %v393, 0.0
  %v498 = vmax.f32 %v396, 0.0
  %v499 = vmax.f32 %v399, 0.0
  %v500 = vmax.f32 %v402, 0.0
  %v501 = vmax.f32 %v405, 0.0
  %v502 = vmax.f32 %v408, 0.0
  %v503 = vmax.f32 %v411, 0.0
  %v504 = vmax.f32 %v414, 0.0
  %v505 = vmax.f32 %v417, 0.0
  %v506 = vmax.f32 %v420, 0.0
  %v507 = vmax.f32 %v423, 0.0
  %v508 = vmax.f32 %v426, 0.0
  %v509 = vmax.f32 %v429, 0.0
  %v510 = vmax.f32 %v432, 0.0
  %v511 = vmax.f32 %v435, 0.0
  %v512 = vmax.f32 %v438, 0.0
  %v513 = vmax.f32 %v441, 0.0
  %v514 = vmax.f32 %v444, 0.0
  %v515 = vmax.f32 %v447, 0.0
  %v516 = vmax.f32 %v450, 0.0
  %v517 = vmax.f32 %v453, 0.0
  %v518 = vmax.f32 %v456, 0.0
  %v519 = vmax.f32 %v459, 0.0
  %v520 = vmax.f32 %v462, 0.0
  %v521 = vmax.f32 %v465, 0.0
  %v522 = vmax.f32 %v468, 0.0
  %v523 = vmax.f32 %v471, 0.0
  %v524 = vmax.f32 %v474, 0.0
  %vm525 = vcmask 523264
  %526 = vst.msk [vmem:[%s3] sm:$0xff] %vm525, %v476
  %527 = vst.msk [vmem:[%s3 + $0x8] sm:$0xff] %vm525, %v477
  %528 = vst.msk [vmem:[%s3 + $0x10] sm:$0xff] %vm525, %v478
  %529 = vst.msk [vmem:[%s3 + $0x18] sm:$0xff] %vm525, %v479
  %530 = vst.msk [vmem:[%s3 + $0x20] sm:$0xff] %vm525, %v480
  %531 = vst.msk [vmem:[%s3 + $0x28] sm:$0xff] %vm525, %v481
  %532 = vst.msk [vmem:[%s3 + $0x30] sm:$0xff] %vm525, %v482
  %533 = vst.msk [vmem:[%s3 + $0x38] sm:$0xff] %vm525, %v483
  %534 = vst.msk [vmem:[%s3 + $0x40] sm:$0xff] %vm525, %v484
  %535 = vst.msk [vmem:[%s3 + $0x48] sm:$0xff] %vm525, %v485
  %536 = vst.msk [vmem:[%s3 + $0x50] sm:$0xff] %vm525, %v486
  %537 = vst.msk [vmem:[%s3 + $0x58] sm:$0xff] %vm525, %v487
  %538 = vst.msk [vmem:[%s3 + $0x60] sm:$0xff] %vm525, %v488
  %539 = vst.msk [vmem:[%s3 + $0x68] sm:$0xff] %vm525, %v489
  %540 = vst.msk [vmem:[%s3 + $0x70] sm:$0xff] %vm525, %v490
  %541 = vst.msk [vmem:[%s3 + $0x78] sm:$0xff] %vm525, %v491
  %542 = vst.msk [vmem:[%s3 + $0x80] sm:$0xff] %vm525, %v492
  %543 = vst.msk [vmem:[%s3 + $0x88] sm:$0xff] %vm525, %v493
  %544 = vst.msk [vmem:[%s3 + $0x90] sm:$0xff] %vm525, %v494
  %545 = vst.msk [vmem:[%s3 + $0x98] sm:$0xff] %vm525, %v495
  %546 = vst.msk [vmem:[%s3 + $0xa0] sm:$0xff] %vm525, %v496
  %547 = vst.msk [vmem:[%s3 + $0xa8] sm:$0xff] %vm525, %v497
  %548 = vst.msk [vmem:[%s3 + $0xb0] sm:$0xff] %vm525, %v498
  %549 = vst.msk [vmem:[%s3 + $0xb8] sm:$0xff] %vm525, %v499
  %550 = vst.msk [vmem:[%s3 + $0xc0] sm:$0xff] %vm525, %v500
  %551 = vst.msk [vmem:[%s3 + $0xc8] sm:$0xff] %vm525, %v501
  %552 = vst.msk [vmem:[%s3 + $0xd0] sm:$0xff] %vm525, %v502
  %553 = vst.msk [vmem:[%s3 + $0xd8] sm:$0xff] %vm525, %v503
  %554 = vst.msk [vmem:[%s3 + $0xe0] sm:$0xff] %vm525, %v504
  %555 = vst.msk [vmem:[%s3 + $0xe8] sm:$0xff] %vm525, %v505
  %556 = vst.msk [vmem:[%s3 + $0xf0] sm:$0xff] %vm525, %v506
  %557 = vst.msk [vmem:[%s3 + $0xf8] sm:$0xff] %vm525, %v507
  %558 = vst.msk [vmem:[%s3 + $0x100] sm:$0xff] %vm525, %v508
  %559 = vst.msk [vmem:[%s3 + $0x108] sm:$0xff] %vm525, %v509
  %560 = vst.msk [vmem:[%s3 + $0x110] sm:$0xff] %vm525, %v510
  %561 = vst.msk [vmem:[%s3 + $0x118] sm:$0xff] %vm525, %v511
  %562 = vst.msk [vmem:[%s3 + $0x120] sm:$0xff] %vm525, %v512
  %563 = vst.msk [vmem:[%s3 + $0x128] sm:$0xff] %vm525, %v513
  %564 = vst.msk [vmem:[%s3 + $0x130] sm:$0xff] %vm525, %v514
  %565 = vst.msk [vmem:[%s3 + $0x138] sm:$0xff] %vm525, %v515
  %566 = vst.msk [vmem:[%s3 + $0x140] sm:$0xff] %vm525, %v516
  %567 = vst.msk [vmem:[%s3 + $0x148] sm:$0xff] %vm525, %v517
  %568 = vst.msk [vmem:[%s3 + $0x150] sm:$0xff] %vm525, %v518
  %569 = vst.msk [vmem:[%s3 + $0x158] sm:$0xff] %vm525, %v519
  %570 = vst.msk [vmem:[%s3 + $0x160] sm:$0xff] %vm525, %v520
  %571 = vst.msk [vmem:[%s3 + $0x168] sm:$0xff] %vm525, %v521
  %572 = vst.msk [vmem:[%s3 + $0x170] sm:$0xff] %vm525, %v522
  %573 = vst.msk [vmem:[%s3 + $0x178] sm:$0xff] %vm525, %v523
  %574 = vst.msk [vmem:[%s3 + $0x180] sm:$0xff] %vm525, %v524
  // Predicated region
  $region14: #{residual_net_ptq_forward.12} parent=0 // pred_check
    _
  $region15: #{residual_net_ptq_forward.12} parent=0 // pred_check_branch
    %576 = sbr.rel (0) target = $region17
  $region16: #{residual_net_ptq_forward.12} parent=0 // pred_region
    _
  $region17: #{residual_net_ptq_forward.12} parent=0 // pred_fallthru
    _
  // Predicated region
  $region18: #{residual_net_ptq_forward.12} parent=0 // pred_check
    _
  $region19: #{residual_net_ptq_forward.12} parent=0 // pred_check_branch
    %578 = sbr.rel (0) target = $region21
  $region20: #{residual_net_ptq_forward.12} parent=0 // pred_region
    _
  $region21: #{residual_net_ptq_forward.12} parent=0 // pred_fallthru
    _

// kernel: residual_net_ptq_forward.13
$region0: #{residual_net_ptq_forward.13}
  #allocation0 [shape = 'u32[]', space=smem, size = 0x4, offset = 0x4, fixed_abs, tag = 'smem constant byte address 0x4 - core index']
  #allocation1 [shape = 'u32[72,128]{1,0:T(1,128)}', space=vmem, size = 0x9000, scoped, tag = 'internal scratch']
  %s0 = inlined_call_operand.vmem [shape: f32[104,256], index: 0, kind: input, shape index: {}]
  %s1 = inlined_call_operand.vmem [shape: f32[256,64], index: 1, kind: input, shape index: {}]
  %s2 = inlined_call_operand.vmem [shape: f32[1,64], index: 2, kind: input, shape index: {}]
  %s3 = inlined_call_operand.vmem [shape: f32[104,64], index: 3, kind: output, shape index: {}]
  %s4 = sld [smem:[#allocation0]]
  $region22: #{residual_net_ptq_forward.13} parent=0
    _
  %s6 = ssub.s32 1, %s4
  %s7 = scalar_select 0, %s6, %s4
  // Predicated region
  $region2: #{residual_net_ptq_forward.13} parent=0 // pred_check
    _
  $region3: #{residual_net_ptq_forward.13} parent=0 // pred_check_branch
    %9 = sbr.rel (0) target = $region5
  $region4: #{residual_net_ptq_forward.13} parent=0 // pred_region
    _
  $region5: #{residual_net_ptq_forward.13} parent=0 // pred_fallthru
    _
  // Predicated region
  $region6: #{residual_net_ptq_forward.13} parent=0 // pred_check
    _
  $region7: #{residual_net_ptq_forward.13} parent=0 // pred_check_branch
    %11 = sbr.rel (0) target = $region9
  $region8: #{residual_net_ptq_forward.13} parent=0 // pred_region
    _
  $region9: #{residual_net_ptq_forward.13} parent=0 // pred_fallthru
    _
  // Predicated region
  $region10: #{residual_net_ptq_forward.13} parent=0 // pred_check
    _
  $region11: #{residual_net_ptq_forward.13} parent=0 // pred_check_branch
    %13 = sbr.rel (0) target = $region13
  $region12: #{residual_net_ptq_forward.13} parent=0 // pred_region
    _
  $region13: #{residual_net_ptq_forward.13} parent=0 // pred_fallthru
    _
  %v14 = vld [vmem:[%s0] sm:$0xff]
  %v15 = vld [vmem:[%s0 + $0x8] sm:$0xff]
  %v16 = vld [vmem:[%s0 + $0x10] sm:$0xff]
  %v17 = vld [vmem:[%s0 + $0x18] sm:$0xff]
  %v18 = vld [vmem:[%s0 + $0x20] sm:$0xff]
  %v19 = vld [vmem:[%s0 + $0x28] sm:$0xff]
  %v20 = vld [vmem:[%s0 + $0x30] sm:$0xff]
  %v21 = vld [vmem:[%s0 + $0x38] sm:$0xff]
  %v22 = vld [vmem:[%s0 + $0x40] sm:$0xff]
  %v23 = vld [vmem:[%s0 + $0x48] sm:$0xff]
  %v24 = vld [vmem:[%s0 + $0x50] sm:$0xff]
  %v25 = vld [vmem:[%s0 + $0x58] sm:$0xff]
  %v26 = vld [vmem:[%s0 + $0x60] sm:$0xff]
  %v27 = vld [vmem:[%s0 + $0x68] sm:$0xff]
  %v28 = vld [vmem:[%s0 + $0x70] sm:$0xff]
  %v29 = vld [vmem:[%s0 + $0x78] sm:$0xff]
  %v30 = vld [vmem:[%s0 + $0x80] sm:$0xff]
  %v31 = vld [vmem:[%s0 + $0x88] sm:$0xff]
  %v32 = vld [vmem:[%s0 + $0x90] sm:$0xff]
  %v33 = vld [vmem:[%s0 + $0x98] sm:$0xff]
  %v34 = vld [vmem:[%s0 + $0xa0] sm:$0xff]
  %v35 = vld [vmem:[%s0 + $0xa8] sm:$0xff]
  %v36 = vld [vmem:[%s0 + $0xb0] sm:$0xff]
  %v37 = vld [vmem:[%s0 + $0xb8] sm:$0xff]
  %v38 = vld [vmem:[%s0 + $0xc0] sm:$0xff]
  %v39 = vld [vmem:[%s0 + $0xc8] sm:$0xff]
  %v40 = vld [vmem:[%s1] sm:$0xff]
  %v41 = vld [vmem:[%s1 + $0x8] sm:$0xff]
  %v42 = vld [vmem:[%s1 + $0x10] sm:$0xff]
  %v43 = vld [vmem:[%s1 + $0x18] sm:$0xff]
  %v44 = vld [vmem:[%s1 + $0x20] sm:$0xff]
  %v45 = vld [vmem:[%s1 + $0x28] sm:$0xff]
  %v46 = vld [vmem:[%s1 + $0x30] sm:$0xff]
  %v47 = vld [vmem:[%s1 + $0x38] sm:$0xff]
  %v48 = vld [vmem:[%s1 + $0x40] sm:$0xff]
  %v49 = vld [vmem:[%s1 + $0x48] sm:$0xff]
  %v50 = vld [vmem:[%s1 + $0x50] sm:$0xff]
  %v51 = vld [vmem:[%s1 + $0x58] sm:$0xff]
  %v52 = vld [vmem:[%s1 + $0x60] sm:$0xff]
  %v53 = vld [vmem:[%s1 + $0x68] sm:$0xff]
  %v54 = vld [vmem:[%s1 + $0x70] sm:$0xff]
  %v55 = vld [vmem:[%s1 + $0x78] sm:$0xff]
  %v56 = vld [vmem:[%s1 + $0x80] sm:$0xff]
  %v57 = vld [vmem:[%s1 + $0x88] sm:$0xff]
  %v58 = vld [vmem:[%s1 + $0x90] sm:$0xff]
  %v59 = vld [vmem:[%s1 + $0x98] sm:$0xff]
  %v60 = vld [vmem:[%s1 + $0xa0] sm:$0xff]
  %v61 = vld [vmem:[%s1 + $0xa8] sm:$0xff]
  %v62 = vld [vmem:[%s1 + $0xb0] sm:$0xff]
  %v63 = vld [vmem:[%s1 + $0xb8] sm:$0xff]
  %v64 = vld [vmem:[%s1 + $0xc0] sm:$0xff]
  %v65 = vld [vmem:[%s1 + $0xc8] sm:$0xff]
  %v66 = vld [vmem:[%s1 + $0xd0] sm:$0xff]
  %v67 = vld [vmem:[%s1 + $0xd8] sm:$0xff]
  %v68 = vld [vmem:[%s1 + $0xe0] sm:$0xff]
  %v69 = vld [vmem:[%s1 + $0xe8] sm:$0xff]
  %v70 = vld [vmem:[%s1 + $0xf0] sm:$0xff]
  %v71 = vld [vmem:[%s1 + $0xf8] sm:$0xff]
  %v72 = vld [vmem:[%s2] sm:$0x1]
  %v74 = vperm.slane %v72, 0
  %76 = vmatpush.msra.mxu0 %v55
  %77 = vmatpush.msra.mxu0 %v54
  %78 = vmatpush.msra.mxu0 %v53
  %79 = vmatpush.msra.mxu0 %v52
  %80 = vmatpush.msra.mxu0 %v51
  %81 = vmatpush.msra.mxu0 %v50
  %82 = vmatpush.msra.mxu0 %v49
  %83 = vmatpush.msra.mxu0 %v48
  %84 = vmatpush.msra.mxu0 %v47
  %85 = vmatpush.msra.mxu0 %v46
  %86 = vmatpush.msra.mxu0 %v45
  %87 = vmatpush.msra.mxu0 %v44
  %88 = vmatpush.msra.mxu0 %v43
  %89 = vmatpush.msra.mxu0 %v42
  %90 = vmatpush.msra.mxu0 %v41
  %91 = vmatpush.msra.mxu0 %v40
  %92 = vmatmul.f32.gmra.mxu0 %v14
  %v93 = vpop.f32.mrf.mxu0
  %v94 = vadd.f32 %v74, %v93
  %95 = vmatmul.f32.gmra.mxu0 %v16
  %v96 = vpop.f32.mrf.mxu0
  %v97 = vadd.f32 %v74, %v96
  %98 = vmatmul.f32.gmra.mxu0 %v18
  %v99 = vpop.f32.mrf.mxu0
  %v100 = vadd.f32 %v74, %v99
  %101 = vmatmul.f32.gmra.mxu0 %v20
  %v102 = vpop.f32.mrf.mxu0
  %v103 = vadd.f32 %v74, %v102
  %104 = vmatmul.f32.gmra.mxu0 %v22
  %v105 = vpop.f32.mrf.mxu0
  %v106 = vadd.f32 %v74, %v105
  %107 = vmatmul.f32.gmra.mxu0 %v24
  %v108 = vpop.f32.mrf.mxu0
  %v109 = vadd.f32 %v74, %v108
  %110 = vmatmul.f32.gmra.mxu0 %v26
  %v111 = vpop.f32.mrf.mxu0
  %v112 = vadd.f32 %v74, %v111
  %113 = vmatmul.f32.gmra.mxu0 %v28
  %v114 = vpop.f32.mrf.mxu0
  %v115 = vadd.f32 %v74, %v114
  %116 = vmatmul.f32.gmra.mxu0 %v30
  %v117 = vpop.f32.mrf.mxu0
  %v118 = vadd.f32 %v74, %v117
  %119 = vmatmul.f32.gmra.mxu0 %v32
  %v120 = vpop.f32.mrf.mxu0
  %v121 = vadd.f32 %v74, %v120
  %122 = vmatmul.f32.gmra.mxu0 %v34
  %v123 = vpop.f32.mrf.mxu0
  %v124 = vadd.f32 %v74, %v123
  %125 = vmatmul.f32.gmra.mxu0 %v36
  %v126 = vpop.f32.mrf.mxu0
  %v127 = vadd.f32 %v74, %v126
  %128 = vmatmul.f32.gmra.mxu0 %v38
  %v129 = vpop.f32.mrf.mxu0
  %v130 = vadd.f32 %v74, %v129
  %131 = vdwg.mxu0
  %132 = vmatpush.msra.mxu0 %v71
  %133 = vmatpush.msra.mxu0 %v70
  %134 = vmatpush.msra.mxu0 %v69
  %135 = vmatpush.msra.mxu0 %v68
  %136 = vmatpush.msra.mxu0 %v67
  %137 = vmatpush.msra.mxu0 %v66
  %138 = vmatpush.msra.mxu0 %v65
  %139 = vmatpush.msra.mxu0 %v64
  %140 = vmatpush.msra.mxu0 %v63
  %141 = vmatpush.msra.mxu0 %v62
  %142 = vmatpush.msra.mxu0 %v61
  %143 = vmatpush.msra.mxu0 %v60
  %144 = vmatpush.msra.mxu0 %v59
  %145 = vmatpush.msra.mxu0 %v58
  %146 = vmatpush.msra.mxu0 %v57
  %147 = vmatpush.msra.mxu0 %v56
  %148 = vmatmul.f32.gmra.mxu0 %v15
  %v149 = vpop.f32.mrf.mxu0
  %v150 = vadd.f32 %v94, %v149
  %151 = vmatmul.f32.gmra.mxu0 %v17
  %v152 = vpop.f32.mrf.mxu0
  %v153 = vadd.f32 %v97, %v152
  %154 = vmatmul.f32.gmra.mxu0 %v19
  %v155 = vpop.f32.mrf.mxu0
  %v156 = vadd.f32 %v100, %v155
  %157 = vmatmul.f32.gmra.mxu0 %v21
  %v158 = vpop.f32.mrf.mxu0
  %v159 = vadd.f32 %v103, %v158
  %160 = vmatmul.f32.gmra.mxu0 %v23
  %v161 = vpop.f32.mrf.mxu0
  %v162 = vadd.f32 %v106, %v161
  %163 = vmatmul.f32.gmra.mxu0 %v25
  %v164 = vpop.f32.mrf.mxu0
  %v165 = vadd.f32 %v109, %v164
  %166 = vmatmul.f32.gmra.mxu0 %v27
  %v167 = vpop.f32.mrf.mxu0
  %v168 = vadd.f32 %v112, %v167
  %169 = vmatmul.f32.gmra.mxu0 %v29
  %v170 = vpop.f32.mrf.mxu0
  %v171 = vadd.f32 %v115, %v170
  %172 = vmatmul.f32.gmra.mxu0 %v31
  %v173 = vpop.f32.mrf.mxu0
  %v174 = vadd.f32 %v118, %v173
  %175 = vmatmul.f32.gmra.mxu0 %v33
  %v176 = vpop.f32.mrf.mxu0
  %v177 = vadd.f32 %v121, %v176
  %178 = vmatmul.f32.gmra.mxu0 %v35
  %v179 = vpop.f32.mrf.mxu0
  %v180 = vadd.f32 %v124, %v179
  %181 = vmatmul.f32.gmra.mxu0 %v37
  %v182 = vpop.f32.mrf.mxu0
  %v183 = vadd.f32 %v127, %v182
  %184 = vmatmul.f32.gmra.mxu0 %v39
  %v185 = vpop.f32.mrf.mxu0
  %v186 = vadd.f32 %v130, %v185
  %187 = vdwg.mxu0
  %v188 = vmax.f32 %v150, 0.0
  %v189 = vmax.f32 %v153, 0.0
  %v190 = vmax.f32 %v156, 0.0
  %v191 = vmax.f32 %v159, 0.0
  %v192 = vmax.f32 %v162, 0.0
  %v193 = vmax.f32 %v165, 0.0
  %v194 = vmax.f32 %v168, 0.0
  %v195 = vmax.f32 %v171, 0.0
  %v196 = vmax.f32 %v174, 0.0
  %v197 = vmax.f32 %v177, 0.0
  %v198 = vmax.f32 %v180, 0.0
  %v199 = vmax.f32 %v183, 0.0
  %v200 = vmax.f32 %v186, 0.0
  %vm201 = vcmask 523264
  %202 = vst.msk [vmem:[%s3] sm:$0xff] %vm201, %v188
  %203 = vst.msk [vmem:[%s3 + $0x8] sm:$0xff] %vm201, %v189
  %204 = vst.msk [vmem:[%s3 + $0x10] sm:$0xff] %vm201, %v190
  %205 = vst.msk [vmem:[%s3 + $0x18] sm:$0xff] %vm201, %v191
  %206 = vst.msk [vmem:[%s3 + $0x20] sm:$0xff] %vm201, %v192
  %207 = vst.msk [vmem:[%s3 + $0x28] sm:$0xff] %vm201, %v193
  %208 = vst.msk [vmem:[%s3 + $0x30] sm:$0xff] %vm201, %v194
  %209 = vst.msk [vmem:[%s3 + $0x38] sm:$0xff] %vm201, %v195
  %210 = vst.msk [vmem:[%s3 + $0x40] sm:$0xff] %vm201, %v196
  %211 = vst.msk [vmem:[%s3 + $0x48] sm:$0xff] %vm201, %v197
  %212 = vst.msk [vmem:[%s3 + $0x50] sm:$0xff] %vm201, %v198
  %213 = vst.msk [vmem:[%s3 + $0x58] sm:$0xff] %vm201, %v199
  %214 = vst.msk [vmem:[%s3 + $0x60] sm:$0xff] %vm201, %v200
  // Predicated region
  $region14: #{residual_net_ptq_forward.13} parent=0 // pred_check
    _
  $region15: #{residual_net_ptq_forward.13} parent=0 // pred_check_branch
    %216 = sbr.rel (0) target = $region17
  $region16: #{residual_net_ptq_forward.13} parent=0 // pred_region
    _
  $region17: #{residual_net_ptq_forward.13} parent=0 // pred_fallthru
    _
  // Predicated region
  $region18: #{residual_net_ptq_forward.13} parent=0 // pred_check
    _
  $region19: #{residual_net_ptq_forward.13} parent=0 // pred_check_branch
    %218 = sbr.rel (0) target = $region21
  $region20: #{residual_net_ptq_forward.13} parent=0 // pred_region
    _
  $region21: #{residual_net_ptq_forward.13} parent=0 // pred_fallthru
    _

// kernel: residual_net_ptq_forward.15
$region0: #{residual_net_ptq_forward.15}
  #allocation0 [shape = 'u32[]', space=smem, size = 0x4, offset = 0x4, fixed_abs, tag = 'smem constant byte address 0x4 - core index']
  #allocation1 [shape = 'u32[72,128]{1,0:T(1,128)}', space=vmem, size = 0x9000, scoped, tag = 'internal scratch']
  %s0 = inlined_call_operand.vmem [shape: f32[8,1024], index: 0, kind: input, shape index: {}]
  %s1 = inlined_call_operand.vmem [shape: f32[1024,10], index: 1, kind: input, shape index: {}]
  %s2 = inlined_call_operand.vmem [shape: f32[1,10], index: 2, kind: input, shape index: {}]
  %s3 = inlined_call_operand.vmem [shape: f32[8,10], index: 3, kind: output, shape index: {}]
  %s4 = sld [smem:[#allocation0]]
  $region22: #{residual_net_ptq_forward.15} parent=0
    _
  %s6 = ssub.s32 1, %s4
  %s7 = scalar_select 0, %s6, %s4
  // Predicated region
  $region2: #{residual_net_ptq_forward.15} parent=0 // pred_check
    _
  $region3: #{residual_net_ptq_forward.15} parent=0 // pred_check_branch
    %9 = sbr.rel (0) target = $region5
  $region4: #{residual_net_ptq_forward.15} parent=0 // pred_region
    _
  $region5: #{residual_net_ptq_forward.15} parent=0 // pred_fallthru
    _
  // Predicated region
  $region6: #{residual_net_ptq_forward.15} parent=0 // pred_check
    _
  $region7: #{residual_net_ptq_forward.15} parent=0 // pred_check_branch
    %11 = sbr.rel (0) target = $region9
  $region8: #{residual_net_ptq_forward.15} parent=0 // pred_region
    _
  $region9: #{residual_net_ptq_forward.15} parent=0 // pred_fallthru
    _
  // Predicated region
  $region10: #{residual_net_ptq_forward.15} parent=0 // pred_check
    _
  $region11: #{residual_net_ptq_forward.15} parent=0 // pred_check_branch
    %13 = sbr.rel (0) target = $region13
  $region12: #{residual_net_ptq_forward.15} parent=0 // pred_region
    _
  $region13: #{residual_net_ptq_forward.15} parent=0 // pred_fallthru
    _
  %v14 = vld [vmem:[%s0] sm:$0xff]
  %v15 = vld [vmem:[%s0 + $0x8] sm:$0xff]
  %v16 = vld [vmem:[%s0 + $0x10] sm:$0xff]
  %v17 = vld [vmem:[%s0 + $0x18] sm:$0xff]
  %v18 = vld [vmem:[%s0 + $0x20] sm:$0xff]
  %v19 = vld [vmem:[%s0 + $0x28] sm:$0xff]
  %v20 = vld [vmem:[%s0 + $0x30] sm:$0xff]
  %v21 = vld [vmem:[%s0 + $0x38] sm:$0xff]
  %v22 = vld [vmem:[%s1] sm:$0xff]
  %v23 = vld [vmem:[%s1 + $0x8] sm:$0xff]
  %v24 = vld [vmem:[%s1 + $0x10] sm:$0xff]
  %v25 = vld [vmem:[%s1 + $0x18] sm:$0xff]
  %v26 = vld [vmem:[%s1 + $0x20] sm:$0xff]
  %v27 = vld [vmem:[%s1 + $0x28] sm:$0xff]
  %v28 = vld [vmem:[%s1 + $0x30] sm:$0xff]
  %v29 = vld [vmem:[%s1 + $0x38] sm:$0xff]
  %v30 = vld [vmem:[%s1 + $0x40] sm:$0xff]
  %v31 = vld [vmem:[%s1 + $0x48] sm:$0xff]
  %v32 = vld [vmem:[%s1 + $0x50] sm:$0xff]
  %v33 = vld [vmem:[%s1 + $0x58] sm:$0xff]
  %v34 = vld [vmem:[%s1 + $0x60] sm:$0xff]
  %v35 = vld [vmem:[%s1 + $0x68] sm:$0xff]
  %v36 = vld [vmem:[%s1 + $0x70] sm:$0xff]
  %v37 = vld [vmem:[%s1 + $0x78] sm:$0xff]
  %v38 = vld [vmem:[%s1 + $0x80] sm:$0xff]
  %v39 = vld [vmem:[%s1 + $0x88] sm:$0xff]
  %v40 = vld [vmem:[%s1 + $0x90] sm:$0xff]
  %v41 = vld [vmem:[%s1 + $0x98] sm:$0xff]
  %v42 = vld [vmem:[%s1 + $0xa0] sm:$0xff]
  %v43 = vld [vmem:[%s1 + $0xa8] sm:$0xff]
  %v44 = vld [vmem:[%s1 + $0xb0] sm:$0xff]
  %v45 = vld [vmem:[%s1 + $0xb8] sm:$0xff]
  %v46 = vld [vmem:[%s1 + $0xc0] sm:$0xff]
  %v47 = vld [vmem:[%s1 + $0xc8] sm:$0xff]
  %v48 = vld [vmem:[%s1 + $0xd0] sm:$0xff]
  %v49 = vld [vmem:[%s1 + $0xd8] sm:$0xff]
  %v50 = vld [vmem:[%s1 + $0xe0] sm:$0xff]
  %v51 = vld [vmem:[%s1 + $0xe8] sm:$0xff]
  %v52 = vld [vmem:[%s1 + $0xf0] sm:$0xff]
  %v53 = vld [vmem:[%s1 + $0xf8] sm:$0xff]
  %v54 = vld [vmem:[%s1 + $0x100] sm:$0xff]
  %v55 = vld [vmem:[%s1 + $0x108] sm:$0xff]
  %v56 = vld [vmem:[%s1 + $0x110] sm:$0xff]
  %v57 = vld [vmem:[%s1 + $0x118] sm:$0xff]
  %v58 = vld [vmem:[%s1 + $0x120] sm:$0xff]
  %v59 = vld [vmem:[%s1 + $0x128] sm:$0xff]
  %v60 = vld [vmem:[%s1 + $0x130] sm:$0xff]
  %v61 = vld [vmem:[%s1 + $0x138] sm:$0xff]
  %v62 = vld [vmem:[%s1 + $0x140] sm:$0xff]
  %v63 = vld [vmem:[%s1 + $0x148] sm:$0xff]
  %v64 = vld [vmem:[%s1 + $0x150] sm:$0xff]
  %v65 = vld [vmem:[%s1 + $0x158] sm:$0xff]
  %v66 = vld [vmem:[%s1 + $0x160] sm:$0xff]
  %v67 = vld [vmem:[%s1 + $0x168] sm:$0xff]
  %v68 = vld [vmem:[%s1 + $0x170] sm:$0xff]
  %v69 = vld [vmem:[%s1 + $0x178] sm:$0xff]
  %v70 = vld [vmem:[%s1 + $0x180] sm:$0xff]
  %v71 = vld [vmem:[%s1 + $0x188] sm:$0xff]
  %v72 = vld [vmem:[%s1 + $0x190] sm:$0xff]
  %v73 = vld [vmem:[%s1 + $0x198] sm:$0xff]
  %v74 = vld [vmem:[%s1 + $0x1a0] sm:$0xff]
  %v75 = vld [vmem:[%s1 + $0x1a8] sm:$0xff]
  %v76 = vld [vmem:[%s1 + $0x1b0] sm:$0xff]
  %v77 = vld [vmem:[%s1 + $0x1b8] sm:$0xff]
  %v78 = vld [vmem:[%s1 + $0x1c0] sm:$0xff]
  %v79 = vld [vmem:[%s1 + $0x1c8] sm:$0xff]
  %v80 = vld [vmem:[%s1 + $0x1d0] sm:$0xff]
  %v81 = vld [vmem:[%s1 + $0x1d8] sm:$0xff]
  %v82 = vld [vmem:[%s1 + $0x1e0] sm:$0xff]
  %v83 = vld [vmem:[%s1 + $0x1e8] sm:$0xff]
  %v84 = vld [vmem:[%s1 + $0x1f0] sm:$0xff]
  %v85 = vld [vmem:[%s1 + $0x1f8] sm:$0xff]
  %v86 = vld [vmem:[%s1 + $0x200] sm:$0xff]
  %v87 = vld [vmem:[%s1 + $0x208] sm:$0xff]
  %v88 = vld [vmem:[%s1 + $0x210] sm:$0xff]
  %v89 = vld [vmem:[%s1 + $0x218] sm:$0xff]
  %v90 = vld [vmem:[%s1 + $0x220] sm:$0xff]
  %v91 = vld [vmem:[%s1 + $0x228] sm:$0xff]
  %v92 = vld [vmem:[%s1 + $0x230] sm:$0xff]
  %v93 = vld [vmem:[%s1 + $0x238] sm:$0xff]
  %v94 = vld [vmem:[%s1 + $0x240] sm:$0xff]
  %v95 = vld [vmem:[%s1 + $0x248] sm:$0xff]
  %v96 = vld [vmem:[%s1 + $0x250] sm:$0xff]
  %v97 = vld [vmem:[%s1 + $0x258] sm:$0xff]
  %v98 = vld [vmem:[%s1 + $0x260] sm:$0xff]
  %v99 = vld [vmem:[%s1 + $0x268] sm:$0xff]
  %v100 = vld [vmem:[%s1 + $0x270] sm:$0xff]
  %v101 = vld [vmem:[%s1 + $0x278] sm:$0xff]
  %v102 = vld [vmem:[%s1 + $0x280] sm:$0xff]
  %v103 = vld [vmem:[%s1 + $0x288] sm:$0xff]
  %v104 = vld [vmem:[%s1 + $0x290] sm:$0xff]
  %v105 = vld [vmem:[%s1 + $0x298] sm:$0xff]
  %v106 = vld [vmem:[%s1 + $0x2a0] sm:$0xff]
  %v107 = vld [vmem:[%s1 + $0x2a8] sm:$0xff]
  %v108 = vld [vmem:[%s1 + $0x2b0] sm:$0xff]
  %v109 = vld [vmem:[%s1 + $0x2b8] sm:$0xff]
  %v110 = vld [vmem:[%s1 + $0x2c0] sm:$0xff]
  %v111 = vld [vmem:[%s1 + $0x2c8] sm:$0xff]
  %v112 = vld [vmem:[%s1 + $0x2d0] sm:$0xff]
  %v113 = vld [vmem:[%s1 + $0x2d8] sm:$0xff]
  %v114 = vld [vmem:[%s1 + $0x2e0] sm:$0xff]
  %v115 = vld [vmem:[%s1 + $0x2e8] sm:$0xff]
  %v116 = vld [vmem:[%s1 + $0x2f0] sm:$0xff]
  %v117 = vld [vmem:[%s1 + $0x2f8] sm:$0xff]
  %v118 = vld [vmem:[%s1 + $0x300] sm:$0xff]
  %v119 = vld [vmem:[%s1 + $0x308] sm:$0xff]
  %v120 = vld [vmem:[%s1 + $0x310] sm:$0xff]
  %v121 = vld [vmem:[%s1 + $0x318] sm:$0xff]
  %v122 = vld [vmem:[%s1 + $0x320] sm:$0xff]
  %v123 = vld [vmem:[%s1 + $0x328] sm:$0xff]
  %v124 = vld [vmem:[%s1 + $0x330] sm:$0xff]
  %v125 = vld [vmem:[%s1 + $0x338] sm:$0xff]
  %v126 = vld [vmem:[%s1 + $0x340] sm:$0xff]
  %v127 = vld [vmem:[%s1 + $0x348] sm:$0xff]
  %v128 = vld [vmem:[%s1 + $0x350] sm:$0xff]
  %v129 = vld [vmem:[%s1 + $0x358] sm:$0xff]
  %v130 = vld [vmem:[%s1 + $0x360] sm:$0xff]
  %v131 = vld [vmem:[%s1 + $0x368] sm:$0xff]
  %v132 = vld [vmem:[%s1 + $0x370] sm:$0xff]
  %v133 = vld [vmem:[%s1 + $0x378] sm:$0xff]
  %v134 = vld [vmem:[%s1 + $0x380] sm:$0xff]
  %v135 = vld [vmem:[%s1 + $0x388] sm:$0xff]
  %v136 = vld [vmem:[%s1 + $0x390] sm:$0xff]
  %v137 = vld [vmem:[%s1 + $0x398] sm:$0xff]
  %v138 = vld [vmem:[%s1 + $0x3a0] sm:$0xff]
  %v139 = vld [vmem:[%s1 + $0x3a8] sm:$0xff]
  %v140 = vld [vmem:[%s1 + $0x3b0] sm:$0xff]
  %v141 = vld [vmem:[%s1 + $0x3b8] sm:$0xff]
  %v142 = vld [vmem:[%s1 + $0x3c0] sm:$0xff]
  %v143 = vld [vmem:[%s1 + $0x3c8] sm:$0xff]
  %v144 = vld [vmem:[%s1 + $0x3d0] sm:$0xff]
  %v145 = vld [vmem:[%s1 + $0x3d8] sm:$0xff]
  %v146 = vld [vmem:[%s1 + $0x3e0] sm:$0xff]
  %v147 = vld [vmem:[%s1 + $0x3e8] sm:$0xff]
  %v148 = vld [vmem:[%s1 + $0x3f0] sm:$0xff]
  %v149 = vld [vmem:[%s1 + $0x3f8] sm:$0xff]
  %v150 = vld [vmem:[%s2] sm:$0x1]
  %v152 = vperm.slane %v150, 0
  %154 = vmatpush.msra.mxu0 %v37
  %155 = vmatpush.msra.mxu0 %v36
  %156 = vmatpush.msra.mxu0 %v35
  %157 = vmatpush.msra.mxu0 %v34
  %158 = vmatpush.msra.mxu0 %v33
  %159 = vmatpush.msra.mxu0 %v32
  %160 = vmatpush.msra.mxu0 %v31
  %161 = vmatpush.msra.mxu0 %v30
  %162 = vmatpush.msra.mxu0 %v29
  %163 = vmatpush.msra.mxu0 %v28
  %164 = vmatpush.msra.mxu0 %v27
  %165 = vmatpush.msra.mxu0 %v26
  %166 = vmatpush.msra.mxu0 %v25
  %167 = vmatpush.msra.mxu0 %v24
  %168 = vmatpush.msra.mxu0 %v23
  %169 = vmatpush.msra.mxu0 %v22
  %170 = vmatmul.f32.gmra.mxu0 %v14
  %v171 = vpop.f32.mrf.mxu0
  %v172 = vadd.f32 %v152, %v171
  %173 = vdwg.mxu0
  %174 = vmatpush.msra.mxu0 %v53
  %175 = vmatpush.msra.mxu0 %v52
  %176 = vmatpush.msra.mxu0 %v51
  %177 = vmatpush.msra.mxu0 %v50
  %178 = vmatpush.msra.mxu0 %v49
  %179 = vmatpush.msra.mxu0 %v48
  %180 = vmatpush.msra.mxu0 %v47
  %181 = vmatpush.msra.mxu0 %v46
  %182 = vmatpush.msra.mxu0 %v45
  %183 = vmatpush.msra.mxu0 %v44
  %184 = vmatpush.msra.mxu0 %v43
  %185 = vmatpush.msra.mxu0 %v42
  %186 = vmatpush.msra.mxu0 %v41
  %187 = vmatpush.msra.mxu0 %v40
  %188 = vmatpush.msra.mxu0 %v39
  %189 = vmatpush.msra.mxu0 %v38
  %190 = vmatmul.f32.gmra.mxu0 %v15
  %v191 = vpop.f32.mrf.mxu0
  %v192 = vadd.f32 %v172, %v191
  %193 = vdwg.mxu0
  %194 = vmatpush.msra.mxu0 %v69
  %195 = vmatpush.msra.mxu0 %v68
  %196 = vmatpush.msra.mxu0 %v67
  %197 = vmatpush.msra.mxu0 %v66
  %198 = vmatpush.msra.mxu0 %v65
  %199 = vmatpush.msra.mxu0 %v64
  %200 = vmatpush.msra.mxu0 %v63
  %201 = vmatpush.msra.mxu0 %v62
  %202 = vmatpush.msra.mxu0 %v61
  %203 = vmatpush.msra.mxu0 %v60
  %204 = vmatpush.msra.mxu0 %v59
  %205 = vmatpush.msra.mxu0 %v58
  %206 = vmatpush.msra.mxu0 %v57
  %207 = vmatpush.msra.mxu0 %v56
  %208 = vmatpush.msra.mxu0 %v55
  %209 = vmatpush.msra.mxu0 %v54
  %210 = vmatmul.f32.gmra.mxu0 %v16
  %v211 = vpop.f32.mrf.mxu0
  %v212 = vadd.f32 %v192, %v211
  %213 = vdwg.mxu0
  %214 = vmatpush.msra.mxu0 %v85
  %215 = vmatpush.msra.mxu0 %v84
  %216 = vmatpush.msra.mxu0 %v83
  %217 = vmatpush.msra.mxu0 %v82
  %218 = vmatpush.msra.mxu0 %v81
  %219 = vmatpush.msra.mxu0 %v80
  %220 = vmatpush.msra.mxu0 %v79
  %221 = vmatpush.msra.mxu0 %v78
  %222 = vmatpush.msra.mxu0 %v77
  %223 = vmatpush.msra.mxu0 %v76
  %224 = vmatpush.msra.mxu0 %v75
  %225 = vmatpush.msra.mxu0 %v74
  %226 = vmatpush.msra.mxu0 %v73
  %227 = vmatpush.msra.mxu0 %v72
  %228 = vmatpush.msra.mxu0 %v71
  %229 = vmatpush.msra.mxu0 %v70
  %230 = vmatmul.f32.gmra.mxu0 %v17
  %v231 = vpop.f32.mrf.mxu0
  %v232 = vadd.f32 %v212, %v231
  %233 = vdwg.mxu0
  %234 = vmatpush.msra.mxu0 %v101
  %235 = vmatpush.msra.mxu0 %v100
  %236 = vmatpush.msra.mxu0 %v99
  %237 = vmatpush.msra.mxu0 %v98
  %238 = vmatpush.msra.mxu0 %v97
  %239 = vmatpush.msra.mxu0 %v96
  %240 = vmatpush.msra.mxu0 %v95
  %241 = vmatpush.msra.mxu0 %v94
  %242 = vmatpush.msra.mxu0 %v93
  %243 = vmatpush.msra.mxu0 %v92
  %244 = vmatpush.msra.mxu0 %v91
  %245 = vmatpush.msra.mxu0 %v90
  %246 = vmatpush.msra.mxu0 %v89
  %247 = vmatpush.msra.mxu0 %v88
  %248 = vmatpush.msra.mxu0 %v87
  %249 = vmatpush.msra.mxu0 %v86
  %250 = vmatmul.f32.gmra.mxu0 %v18
  %v251 = vpop.f32.mrf.mxu0
  %v252 = vadd.f32 %v232, %v251
  %253 = vdwg.mxu0
  %254 = vmatpush.msra.mxu0 %v117
  %255 = vmatpush.msra.mxu0 %v116
  %256 = vmatpush.msra.mxu0 %v115
  %257 = vmatpush.msra.mxu0 %v114
  %258 = vmatpush.msra.mxu0 %v113
  %259 = vmatpush.msra.mxu0 %v112
  %260 = vmatpush.msra.mxu0 %v111
  %261 = vmatpush.msra.mxu0 %v110
  %262 = vmatpush.msra.mxu0 %v109
  %263 = vmatpush.msra.mxu0 %v108
  %264 = vmatpush.msra.mxu0 %v107
  %265 = vmatpush.msra.mxu0 %v106
  %266 = vmatpush.msra.mxu0 %v105
  %267 = vmatpush.msra.mxu0 %v104
  %268 = vmatpush.msra.mxu0 %v103
  %269 = vmatpush.msra.mxu0 %v102
  %270 = vmatmul.f32.gmra.mxu0 %v19
  %v271 = vpop.f32.mrf.mxu0
  %v272 = vadd.f32 %v252, %v271
  %273 = vdwg.mxu0
  %274 = vmatpush.msra.mxu0 %v133
  %275 = vmatpush.msra.mxu0 %v132
  %276 = vmatpush.msra.mxu0 %v131
  %277 = vmatpush.msra.mxu0 %v130
  %278 = vmatpush.msra.mxu0 %v129
  %279 = vmatpush.msra.mxu0 %v128
  %280 = vmatpush.msra.mxu0 %v127
  %281 = vmatpush.msra.mxu0 %v126
  %282 = vmatpush.msra.mxu0 %v125
  %283 = vmatpush.msra.mxu0 %v124
  %284 = vmatpush.msra.mxu0 %v123
  %285 = vmatpush.msra.mxu0 %v122
  %286 = vmatpush.msra.mxu0 %v121
  %287 = vmatpush.msra.mxu0 %v120
  %288 = vmatpush.msra.mxu0 %v119
  %289 = vmatpush.msra.mxu0 %v118
  %290 = vmatmul.f32.gmra.mxu0 %v20
  %v291 = vpop.f32.mrf.mxu0
  %v292 = vadd.f32 %v272, %v291
  %293 = vdwg.mxu0
  %294 = vmatpush.msra.mxu0 %v149
  %295 = vmatpush.msra.mxu0 %v148
  %296 = vmatpush.msra.mxu0 %v147
  %297 = vmatpush.msra.mxu0 %v146
  %298 = vmatpush.msra.mxu0 %v145
  %299 = vmatpush.msra.mxu0 %v144
  %300 = vmatpush.msra.mxu0 %v143
  %301 = vmatpush.msra.mxu0 %v142
  %302 = vmatpush.msra.mxu0 %v141
  %303 = vmatpush.msra.mxu0 %v140
  %304 = vmatpush.msra.mxu0 %v139
  %305 = vmatpush.msra.mxu0 %v138
  %306 = vmatpush.msra.mxu0 %v137
  %307 = vmatpush.msra.mxu0 %v136
  %308 = vmatpush.msra.mxu0 %v135
  %309 = vmatpush.msra.mxu0 %v134
  %310 = vmatmul.f32.gmra.mxu0 %v21
  %v311 = vpop.f32.mrf.mxu0
  %v312 = vadd.f32 %v292, %v311
  %313 = vdwg.mxu0
  %vm314 = vcmask 80896
  %315 = vst.msk [vmem:[%s3] sm:$0xff] %vm314, %v312
  // Predicated region
  $region14: #{residual_net_ptq_forward.15} parent=0 // pred_check
    _
  $region15: #{residual_net_ptq_forward.15} parent=0 // pred_check_branch
    %317 = sbr.rel (0) target = $region17
  $region16: #{residual_net_ptq_forward.15} parent=0 // pred_region
    _
  $region17: #{residual_net_ptq_forward.15} parent=0 // pred_fallthru
    _
  // Predicated region
  $region18: #{residual_net_ptq_forward.15} parent=0 // pred_check
    _
  $region19: #{residual_net_ptq_forward.15} parent=0 // pred_check_branch
    %319 = sbr.rel (0) target = $region21
  $region20: #{residual_net_ptq_forward.15} parent=0 // pred_region
    _
  $region21: #{residual_net_ptq_forward.15} parent=0 // pred_fallthru
    _

// kernel: residual_net_ptq_forward.14
$region0: #{residual_net_ptq_forward.14}
  #allocation0 [shape = 'u32[]', space=smem, size = 0x4, offset = 0x4, fixed_abs, tag = 'smem constant byte address 0x4 - core index']
  #allocation1 [shape = 'u32[72,128]{1,0:T(1,128)}', space=vmem, size = 0x9000, scoped, tag = 'internal scratch']
  %s0 = inlined_call_operand.vmem [shape: f32[32,576], index: 0, kind: input, shape index: {}]
  %s1 = inlined_call_operand.vmem [shape: f32[576,64], index: 1, kind: input, shape index: {}]
  %s2 = inlined_call_operand.vmem [shape: f32[1,64], index: 2, kind: input, shape index: {}]
  %s3 = inlined_call_operand.vmem [shape: f32[32,64], index: 3, kind: output, shape index: {}]
  %s4 = sld [smem:[#allocation0]]
  $region22: #{residual_net_ptq_forward.14} parent=0
    _
  %s6 = ssub.s32 1, %s4
  %s7 = scalar_select 0, %s6, %s4
  // Predicated region
  $region2: #{residual_net_ptq_forward.14} parent=0 // pred_check
    _
  $region3: #{residual_net_ptq_forward.14} parent=0 // pred_check_branch
    %9 = sbr.rel (0) target = $region5
  $region4: #{residual_net_ptq_forward.14} parent=0 // pred_region
    _
  $region5: #{residual_net_ptq_forward.14} parent=0 // pred_fallthru
    _
  // Predicated region
  $region6: #{residual_net_ptq_forward.14} parent=0 // pred_check
    _
  $region7: #{residual_net_ptq_forward.14} parent=0 // pred_check_branch
    %11 = sbr.rel (0) target = $region9
  $region8: #{residual_net_ptq_forward.14} parent=0 // pred_region
    _
  $region9: #{residual_net_ptq_forward.14} parent=0 // pred_fallthru
    _
  // Predicated region
  $region10: #{residual_net_ptq_forward.14} parent=0 // pred_check
    _
  $region11: #{residual_net_ptq_forward.14} parent=0 // pred_check_branch
    %13 = sbr.rel (0) target = $region13
  $region12: #{residual_net_ptq_forward.14} parent=0 // pred_region
    _
  $region13: #{residual_net_ptq_forward.14} parent=0 // pred_fallthru
    _
  %v14 = vld [vmem:[%s0] sm:$0xff]
  %v15 = vld [vmem:[%s0 + $0x8] sm:$0xff]
  %v16 = vld [vmem:[%s0 + $0x10] sm:$0xff]
  %v17 = vld [vmem:[%s0 + $0x18] sm:$0xff]
  %v18 = vld [vmem:[%s0 + $0x20] sm:$0xff]
  %v19 = vld [vmem:[%s0 + $0x28] sm:$0xff]
  %v20 = vld [vmem:[%s0 + $0x30] sm:$0xff]
  %v21 = vld [vmem:[%s0 + $0x38] sm:$0xff]
  %v22 = vld [vmem:[%s0 + $0x40] sm:$0xff]
  %v23 = vld [vmem:[%s0 + $0x48] sm:$0xff]
  %v24 = vld [vmem:[%s0 + $0x50] sm:$0xff]
  %v25 = vld [vmem:[%s0 + $0x58] sm:$0xff]
  %v26 = vld [vmem:[%s0 + $0x60] sm:$0xff]
  %v27 = vld [vmem:[%s0 + $0x68] sm:$0xff]
  %v28 = vld [vmem:[%s0 + $0x70] sm:$0xff]
  %v29 = vld [vmem:[%s0 + $0x78] sm:$0xff]
  %v30 = vld [vmem:[%s0 + $0x80] sm:$0xff]
  %v31 = vld [vmem:[%s0 + $0x88] sm:$0xff]
  %v32 = vld [vmem:[%s0 + $0x90] sm:$0xff]
  %v33 = vld [vmem:[%s0 + $0x98] sm:$0xff]
  %v34 = vld [vmem:[%s1] sm:$0xff]
  %v35 = vld [vmem:[%s1 + $0x8] sm:$0xff]
  %v36 = vld [vmem:[%s1 + $0x10] sm:$0xff]
  %v37 = vld [vmem:[%s1 + $0x18] sm:$0xff]
  %v38 = vld [vmem:[%s1 + $0x20] sm:$0xff]
  %v39 = vld [vmem:[%s1 + $0x28] sm:$0xff]
  %v40 = vld [vmem:[%s1 + $0x30] sm:$0xff]
  %v41 = vld [vmem:[%s1 + $0x38] sm:$0xff]
  %v42 = vld [vmem:[%s1 + $0x40] sm:$0xff]
  %v43 = vld [vmem:[%s1 + $0x48] sm:$0xff]
  %v44 = vld [vmem:[%s1 + $0x50] sm:$0xff]
  %v45 = vld [vmem:[%s1 + $0x58] sm:$0xff]
  %v46 = vld [vmem:[%s1 + $0x60] sm:$0xff]
  %v47 = vld [vmem:[%s1 + $0x68] sm:$0xff]
  %v48 = vld [vmem:[%s1 + $0x70] sm:$0xff]
  %v49 = vld [vmem:[%s1 + $0x78] sm:$0xff]
  %v50 = vld [vmem:[%s1 + $0x80] sm:$0xff]
  %v51 = vld [vmem:[%s1 + $0x88] sm:$0xff]
  %v52 = vld [vmem:[%s1 + $0x90] sm:$0xff]
  %v53 = vld [vmem:[%s1 + $0x98] sm:$0xff]
  %v54 = vld [vmem:[%s1 + $0xa0] sm:$0xff]
  %v55 = vld [vmem:[%s1 + $0xa8] sm:$0xff]
  %v56 = vld [vmem:[%s1 + $0xb0] sm:$0xff]
  %v57 = vld [vmem:[%s1 + $0xb8] sm:$0xff]
  %v58 = vld [vmem:[%s1 + $0xc0] sm:$0xff]
  %v59 = vld [vmem:[%s1 + $0xc8] sm:$0xff]
  %v60 = vld [vmem:[%s1 + $0xd0] sm:$0xff]
  %v61 = vld [vmem:[%s1 + $0xd8] sm:$0xff]
  %v62 = vld [vmem:[%s1 + $0xe0] sm:$0xff]
  %v63 = vld [vmem:[%s1 + $0xe8] sm:$0xff]
  %v64 = vld [vmem:[%s1 + $0xf0] sm:$0xff]
  %v65 = vld [vmem:[%s1 + $0xf8] sm:$0xff]
  %v66 = vld [vmem:[%s1 + $0x100] sm:$0xff]
  %v67 = vld [vmem:[%s1 + $0x108] sm:$0xff]
  %v68 = vld [vmem:[%s1 + $0x110] sm:$0xff]
  %v69 = vld [vmem:[%s1 + $0x118] sm:$0xff]
  %v70 = vld [vmem:[%s1 + $0x120] sm:$0xff]
  %v71 = vld [vmem:[%s1 + $0x128] sm:$0xff]
  %v72 = vld [vmem:[%s1 + $0x130] sm:$0xff]
  %v73 = vld [vmem:[%s1 + $0x138] sm:$0xff]
  %v74 = vld [vmem:[%s1 + $0x140] sm:$0xff]
  %v75 = vld [vmem:[%s1 + $0x148] sm:$0xff]
  %v76 = vld [vmem:[%s1 + $0x150] sm:$0xff]
  %v77 = vld [vmem:[%s1 + $0x158] sm:$0xff]
  %v78 = vld [vmem:[%s1 + $0x160] sm:$0xff]
  %v79 = vld [vmem:[%s1 + $0x168] sm:$0xff]
  %v80 = vld [vmem:[%s1 + $0x170] sm:$0xff]
  %v81 = vld [vmem:[%s1 + $0x178] sm:$0xff]
  %v82 = vld [vmem:[%s1 + $0x180] sm:$0xff]
  %v83 = vld [vmem:[%s1 + $0x188] sm:$0xff]
  %v84 = vld [vmem:[%s1 + $0x190] sm:$0xff]
  %v85 = vld [vmem:[%s1 + $0x198] sm:$0xff]
  %v86 = vld [vmem:[%s1 + $0x1a0] sm:$0xff]
  %v87 = vld [vmem:[%s1 + $0x1a8] sm:$0xff]
  %v88 = vld [vmem:[%s1 + $0x1b0] sm:$0xff]
  %v89 = vld [vmem:[%s1 + $0x1b8] sm:$0xff]
  %v90 = vld [vmem:[%s1 + $0x1c0] sm:$0xff]
  %v91 = vld [vmem:[%s1 + $0x1c8] sm:$0xff]
  %v92 = vld [vmem:[%s1 + $0x1d0] sm:$0xff]
  %v93 = vld [vmem:[%s1 + $0x1d8] sm:$0xff]
  %v94 = vld [vmem:[%s1 + $0x1e0] sm:$0xff]
  %v95 = vld [vmem:[%s1 + $0x1e8] sm:$0xff]
  %v96 = vld [vmem:[%s1 + $0x1f0] sm:$0xff]
  %v97 = vld [vmem:[%s1 + $0x1f8] sm:$0xff]
  %v98 = vld [vmem:[%s1 + $0x200] sm:$0xff]
  %v99 = vld [vmem:[%s1 + $0x208] sm:$0xff]
  %v100 = vld [vmem:[%s1 + $0x210] sm:$0xff]
  %v101 = vld [vmem:[%s1 + $0x218] sm:$0xff]
  %v102 = vld [vmem:[%s1 + $0x220] sm:$0xff]
  %v103 = vld [vmem:[%s1 + $0x228] sm:$0xff]
  %v104 = vld [vmem:[%s1 + $0x230] sm:$0xff]
  %v105 = vld [vmem:[%s1 + $0x238] sm:$0xff]
  %v106 = vld [vmem:[%s2] sm:$0x1]
  %v108 = vperm.slane %v106, 0
  %vm110 = vcmask 523264
  %v112 = vsel %vm110, %v18, 0
  %v115 = vsel %vm110, %v23, 0
  %v118 = vsel %vm110, %v28, 0
  %v121 = vsel %vm110, %v33, 0
  %123 = vmatpush.msra.mxu0 %v49
  %124 = vmatpush.msra.mxu0 %v48
  %125 = vmatpush.msra.mxu0 %v47
  %126 = vmatpush.msra.mxu0 %v46
  %127 = vmatpush.msra.mxu0 %v45
  %128 = vmatpush.msra.mxu0 %v44
  %129 = vmatpush.msra.mxu0 %v43
  %130 = vmatpush.msra.mxu0 %v42
  %131 = vmatpush.msra.mxu0 %v41
  %132 = vmatpush.msra.mxu0 %v40
  %133 = vmatpush.msra.mxu0 %v39
  %134 = vmatpush.msra.mxu0 %v38
  %135 = vmatpush.msra.mxu0 %v37
  %136 = vmatpush.msra.mxu0 %v36
  %137 = vmatpush.msra.mxu0 %v35
  %138 = vmatpush.msra.mxu0 %v34
  %139 = vmatmul.f32.gmra.mxu0 %v14
  %v140 = vpop.f32.mrf.mxu0
  %v141 = vadd.f32 %v108, %v140
  %142 = vmatmul.f32.gmra.mxu0 %v19
  %v143 = vpop.f32.mrf.mxu0
  %v144 = vadd.f32 %v108, %v143
  %145 = vmatmul.f32.gmra.mxu0 %v24
  %v146 = vpop.f32.mrf.mxu0
  %v147 = vadd.f32 %v108, %v146
  %148 = vmatmul.f32.gmra.mxu0 %v29
  %v149 = vpop.f32.mrf.mxu0
  %v150 = vadd.f32 %v108, %v149
  %151 = vdwg.mxu0
  %152 = vmatpush.msra.mxu0 %v65
  %153 = vmatpush.msra.mxu0 %v64
  %154 = vmatpush.msra.mxu0 %v63
  %155 = vmatpush.msra.mxu0 %v62
  %156 = vmatpush.msra.mxu0 %v61
  %157 = vmatpush.msra.mxu0 %v60
  %158 = vmatpush.msra.mxu0 %v59
  %159 = vmatpush.msra.mxu0 %v58
  %160 = vmatpush.msra.mxu0 %v57
  %161 = vmatpush.msra.mxu0 %v56
  %162 = vmatpush.msra.mxu0 %v55
  %163 = vmatpush.msra.mxu0 %v54
  %164 = vmatpush.msra.mxu0 %v53
  %165 = vmatpush.msra.mxu0 %v52
  %166 = vmatpush.msra.mxu0 %v51
  %167 = vmatpush.msra.mxu0 %v50
  %168 = vmatmul.f32.gmra.mxu0 %v15
  %v169 = vpop.f32.mrf.mxu0
  %v170 = vadd.f32 %v141, %v169
  %171 = vmatmul.f32.gmra.mxu0 %v20
  %v172 = vpop.f32.mrf.mxu0
  %v173 = vadd.f32 %v144, %v172
  %174 = vmatmul.f32.gmra.mxu0 %v25
  %v175 = vpop.f32.mrf.mxu0
  %v176 = vadd.f32 %v147, %v175
  %177 = vmatmul.f32.gmra.mxu0 %v30
  %v178 = vpop.f32.mrf.mxu0
  %v179 = vadd.f32 %v150, %v178
  %180 = vdwg.mxu0
  %181 = vmatpush.msra.mxu0 %v81
  %182 = vmatpush.msra.mxu0 %v80
  %183 = vmatpush.msra.mxu0 %v79
  %184 = vmatpush.msra.mxu0 %v78
  %185 = vmatpush.msra.mxu0 %v77
  %186 = vmatpush.msra.mxu0 %v76
  %187 = vmatpush.msra.mxu0 %v75
  %188 = vmatpush.msra.mxu0 %v74
  %189 = vmatpush.msra.mxu0 %v73
  %190 = vmatpush.msra.mxu0 %v72
  %191 = vmatpush.msra.mxu0 %v71
  %192 = vmatpush.msra.mxu0 %v70
  %193 = vmatpush.msra.mxu0 %v69
  %194 = vmatpush.msra.mxu0 %v68
  %195 = vmatpush.msra.mxu0 %v67
  %196 = vmatpush.msra.mxu0 %v66
  %197 = vmatmul.f32.gmra.mxu0 %v16
  %v198 = vpop.f32.mrf.mxu0
  %v199 = vadd.f32 %v170, %v198
  %200 = vmatmul.f32.gmra.mxu0 %v21
  %v201 = vpop.f32.mrf.mxu0
  %v202 = vadd.f32 %v173, %v201
  %203 = vmatmul.f32.gmra.mxu0 %v26
  %v204 = vpop.f32.mrf.mxu0
  %v205 = vadd.f32 %v176, %v204
  %206 = vmatmul.f32.gmra.mxu0 %v31
  %v207 = vpop.f32.mrf.mxu0
  %v208 = vadd.f32 %v179, %v207
  %209 = vdwg.mxu0
  %210 = vmatpush.msra.mxu0 %v97
  %211 = vmatpush.msra.mxu0 %v96
  %212 = vmatpush.msra.mxu0 %v95
  %213 = vmatpush.msra.mxu0 %v94
  %214 = vmatpush.msra.mxu0 %v93
  %215 = vmatpush.msra.mxu0 %v92
  %216 = vmatpush.msra.mxu0 %v91
  %217 = vmatpush.msra.mxu0 %v90
  %218 = vmatpush.msra.mxu0 %v89
  %219 = vmatpush.msra.mxu0 %v88
  %220 = vmatpush.msra.mxu0 %v87
  %221 = vmatpush.msra.mxu0 %v86
  %222 = vmatpush.msra.mxu0 %v85
  %223 = vmatpush.msra.mxu0 %v84
  %224 = vmatpush.msra.mxu0 %v83
  %225 = vmatpush.msra.mxu0 %v82
  %226 = vmatmul.f32.gmra.mxu0 %v17
  %v227 = vpop.f32.mrf.mxu0
  %v228 = vadd.f32 %v199, %v227
  %229 = vmatmul.f32.gmra.mxu0 %v22
  %v230 = vpop.f32.mrf.mxu0
  %v231 = vadd.f32 %v202, %v230
  %232 = vmatmul.f32.gmra.mxu0 %v27
  %v233 = vpop.f32.mrf.mxu0
  %v234 = vadd.f32 %v205, %v233
  %235 = vmatmul.f32.gmra.mxu0 %v32
  %v236 = vpop.f32.mrf.mxu0
  %v237 = vadd.f32 %v208, %v236
  %238 = vdwg.mxu0
  %239 = vmatpush.msra.mxu0 0.0
  %240 = vmatpush.msra.mxu0 0.0
  %241 = vmatpush.msra.mxu0 0.0
  %242 = vmatpush.msra.mxu0 0.0
  %243 = vmatpush.msra.mxu0 0.0
  %244 = vmatpush.msra.mxu0 0.0
  %245 = vmatpush.msra.mxu0 0.0
  %246 = vmatpush.msra.mxu0 0.0
  %247 = vmatpush.msra.mxu0 %v105
  %248 = vmatpush.msra.mxu0 %v104
  %249 = vmatpush.msra.mxu0 %v103
  %250 = vmatpush.msra.mxu0 %v102
  %251 = vmatpush.msra.mxu0 %v101
  %252 = vmatpush.msra.mxu0 %v100
  %253 = vmatpush.msra.mxu0 %v99
  %254 = vmatpush.msra.mxu0 %v98
  %255 = vmatmul.f32.gmra.mxu0 %v112
  %v256 = vpop.f32.mrf.mxu0
  %v257 = vadd.f32 %v228, %v256
  %258 = vmatmul.f32.gmra.mxu0 %v115
  %v259 = vpop.f32.mrf.mxu0
  %v260 = vadd.f32 %v231, %v259
  %261 = vmatmul.f32.gmra.mxu0 %v118
  %v262 = vpop.f32.mrf.mxu0
  %v263 = vadd.f32 %v234, %v262
  %264 = vmatmul.f32.gmra.mxu0 %v121
  %v265 = vpop.f32.mrf.mxu0
  %v266 = vadd.f32 %v237, %v265
  %267 = vdwg.mxu0
  %v268 = vmax.f32 %v257, 0.0
  %v269 = vmax.f32 %v260, 0.0
  %v270 = vmax.f32 %v263, 0.0
  %v271 = vmax.f32 %v266, 0.0
  %272 = vst.msk [vmem:[%s3] sm:$0xff] %vm110, %v268
  %273 = vst.msk [vmem:[%s3 + $0x8] sm:$0xff] %vm110, %v269
  %274 = vst.msk [vmem:[%s3 + $0x10] sm:$0xff] %vm110, %v270
  %275 = vst.msk [vmem:[%s3 + $0x18] sm:$0xff] %vm110, %v271
  // Predicated region
  $region14: #{residual_net_ptq_forward.14} parent=0 // pred_check
    _
  $region15: #{residual_net_ptq_forward.14} parent=0 // pred_check_branch
    %277 = sbr.rel (0) target = $region17
  $region16: #{residual_net_ptq_forward.14} parent=0 // pred_region
    _
  $region17: #{residual_net_ptq_forward.14} parent=0 // pred_fallthru
    _
  // Predicated region
  $region18: #{residual_net_ptq_forward.14} parent=0 // pred_check
    _
  $region19: #{residual_net_ptq_forward.14} parent=0 // pred_check_branch
    %279 = sbr.rel (0) target = $region21
  $region20: #{residual_net_ptq_forward.14} parent=0 // pred_region
    _
  $region21: #{residual_net_ptq_forward.14} parent=0 // pred_fallthru
    _

</llo_original>
